<compile_context>
chip_gen: v6e
topology: v6e:2x2x1
jax: 0.10.0
libtpu: 0.0.40
codegen_flags: <defaults>
</compile_context>

<pallas_src>
import math
import numpy as np
import jax
import jax.numpy as jnp
from jax import lax
from jax.experimental import pallas as pl
from jax.experimental.pallas import tpu as pltpu

POSENC_DEPTH = 4               # opt.posenc_depth
HIDDEN = 256                   # MLP width from define_network()
IN_DIM = 2 + 4 * POSENC_DEPTH  # 18 input features


# ----------------------------- Pallas kernel -------------------------------
def _make_kernel(H, W, tile_n, depth):
    fW, fH = float(W), float(H)
    sx_scale = fW / float(max(H, W))
    sy_scale = fH / float(max(H, W))
    pi = float(np.pi)

    def kernel(hm_ref, base_ref,                                  # SMEM: (B,9) homs, (nt,2) bases
               w1_ref, b1_ref, w2_ref, b2_ref, w3_ref, b3_ref,
               w4_ref, b4_ref, w5_ref, b5_ref, out_ref):
        b = pl.program_id(0)
        n = pl.program_id(1)

        # ---- pixel coordinates for this tile (exact for any image size) -----
        # The wrapper precomputes each tile's first-pixel (row, col) with Python
        # ints; in-kernel we only decompose the small intra-tile offset, so the
        # f32 divide below is exact (numerator < W + tile_n << 2^23).
        by = base_ref[n, 0].astype(jnp.float32)                   # first pixel row
        bx = base_ref[n, 1].astype(jnp.float32)                   # first pixel col
        q = lax.broadcasted_iota(jnp.int32, (1, tile_n), 1).astype(jnp.float32)
        col = bx + q                                              # un-wrapped column
        carry = jnp.floor(col / fW)                               # rows spilled inside tile
        xi = col - carry * fW                                     # pixel col in [0, W)
        yi = by + carry                                           # pixel row
        xn = ((xi + 0.5) / fW * 2.0 - 1.0) * sx_scale             # (1, T)
        yn = ((yi + 0.5) / fH * 2.0 - 1.0) * sy_scale             # (1, T)

        # ---- homography warp on the VPU (scalars from SMEM) -----------------
        h00 = hm_ref[b, 0]; h01 = hm_ref[b, 1]; h02 = hm_ref[b, 2]
        h10 = hm_ref[b, 3]; h11 = hm_ref[b, 4]; h12 = hm_ref[b, 5]
        h20 = hm_ref[b, 6]; h21 = hm_ref[b, 7]; h22 = hm_ref[b, 8]
        wx = h00 * xn + h01 * yn + h02
        wy = h10 * xn + h11 * yn + h12
        wz = h20 * xn + h21 * yn + h22
        inv_z = 1.0 / wz       # exact divide: posenc frequencies amplify coord error
        xw = wx * inv_z                                           # (1, T)
        yw = wy * inv_z                                           # (1, T)

        # ---- positional encoding: one broadcast multiply + one sin/cos pass --
        ik = lax.broadcasted_iota(jnp.int32, (depth, 1), 0)
        freq = jnp.left_shift(jnp.ones_like(ik), ik).astype(jnp.float32) * pi  # (d,1): pi*2^k
        spec = jnp.concatenate([xw * freq, yw * freq], axis=0)    # (2d, T), lane-dense
        s = jnp.sin(spec)
        c = jnp.cos(spec)
        feat = jnp.concatenate(
            [xw, yw, s[:depth], c[:depth], s[depth:], c[depth:]], axis=0)  # (2+4d, T)

        # ---- MLP: h = W @ x + b, points stay in lanes -------------------------
        # All layers: bf16 operands on the MXU, f32 accumulation, f32 ReLU (v5e-safe).
        feat16 = feat.astype(jnp.bfloat16)

        def dense(w_ref, b_ref, x):
            return (jnp.dot(w_ref[...], x, preferred_element_type=jnp.float32)
                    + b_ref[...])

        h = jnp.maximum(dense(w1_ref, b1_ref, feat16), 0.0).astype(jnp.bfloat16)
        h = jnp.maximum(dense(w2_ref, b2_ref, h), 0.0).astype(jnp.bfloat16)
        h = jnp.maximum(dense(w3_ref, b3_ref, h), 0.0).astype(jnp.bfloat16)
        h = jnp.maximum(dense(w4_ref, b4_ref, h), 0.0).astype(jnp.bfloat16)
        logits = dense(w5_ref, b5_ref, h)                         # (3, T)

        out_ref[0] = jax.nn.sigmoid(logits).astype(out_ref.dtype)  # lane-dense store

    return kernel


# ------------------------------- glue (JAX) ---------------------------------
def _round_up(x, m):
    return ((x + m - 1) // m) * m


def _pick_tile(N, want):
    """Tile size (multiple of 128, <= want) and padded point count (multiple of tile).

    Never falls back to tile=N for awkward sizes: the tail is padded and discarded,
    so VMEM use stays bounded regardless of image size (review item #2)."""
    want = max(128, (int(want) // 128) * 128)
    tn = min(want, _round_up(N, 128))
    return tn, _round_up(N, tn)


def homography_forward(Hmats, params, *, H, W, tile_n=1024):
    """pred.rgb (B, H*W, 3) and pred.rgb_map (B, 3, H, W) via one Pallas kernel.

    tile_n: points per grid step; 1024-2048 is the measured sweet spot."""
    B = Hmats.shape[0]
    N = H * W
    tn, N_pad = _pick_tile(N, tile_n)
    nt = N_pad // tn

    W1, b1, W2, b2, W3, b3, W4, b4, W5, b5 = params               # PyTorch-style (out, in)
    hm_flat = Hmats.reshape(B, 9).astype(jnp.float32)
    # per-tile first-pixel (row, col), computed exactly with Python ints
    base = np.asarray([[(t * tn) // W, (t * tn) % W] for t in range(nt)], dtype=np.int32)

    def wspec(shape):
        return pl.BlockSpec(shape, lambda b, n: (0, 0))           # VMEM-resident weights

    grid_spec = pltpu.PrefetchScalarGridSpec(
        num_scalar_prefetch=0,
        grid=(B, nt),
        in_specs=[
            pl.BlockSpec(memory_space=pltpu.MemorySpace.SMEM),    # (B, 9) homographies
            pl.BlockSpec(memory_space=pltpu.MemorySpace.SMEM),    # (nt, 2) tile bases
            wspec((HIDDEN, IN_DIM)), wspec((HIDDEN, 1)),
            wspec((HIDDEN, HIDDEN)), wspec((HIDDEN, 1)),
            wspec((HIDDEN, HIDDEN)), wspec((HIDDEN, 1)),
            wspec((HIDDEN, HIDDEN)), wspec((HIDDEN, 1)),
            wspec((3, HIDDEN)), wspec((3, 1)),
        ],
        out_specs=pl.BlockSpec((1, 3, tn), lambda b, n: (b, 0, n)),
    )

    rgb_t = pl.pallas_call(
        _make_kernel(H, W, tn, POSENC_DEPTH),
        out_shape=jax.ShapeDtypeStruct((B, 3, N_pad), jnp.float32),
        grid_spec=grid_spec,
        compiler_params=pltpu.CompilerParams(
            dimension_semantics=("parallel", "parallel"),         # v7x: shard over 2 TCs
            vmem_limit_bytes=32 * 1024 * 1024),
    )(hm_flat, jnp.asarray(base),
      W1.astype(jnp.bfloat16), b1.reshape(HIDDEN, 1).astype(jnp.float32),
      W2.astype(jnp.bfloat16), b2.reshape(HIDDEN, 1).astype(jnp.float32),
      W3.astype(jnp.bfloat16), b3.reshape(HIDDEN, 1).astype(jnp.float32),
      W4.astype(jnp.bfloat16), b4.reshape(HIDDEN, 1).astype(jnp.float32),
      W5.astype(jnp.bfloat16), b5.reshape(3, 1).astype(jnp.float32))

    if N_pad != N:
        rgb_t = rgb_t[:, :, :N]                  # discard padded tail points
    rgb_map = rgb_t.reshape(B, 3, H, W)          # NCHW pred.rgb_map: free reshape
    rgb = rgb_t.transpose(0, 2, 1)               # (B, H*W, 3) == pred.rgb
    return rgb, rgb_map


def get_normalized_pixel_grid(B, H, W):
    """Warp.get_normalized_pixel_grid (crop=False), BARF convention (reference path)."""
    y_range = ((jnp.arange(H, dtype=jnp.float32) + 0.5) / H * 2 - 1) * (H / max(H, W))
    x_range = ((jnp.arange(W, dtype=jnp.float32) + 0.5) / W * 2 - 1) * (W / max(H, W))
    Y, X = jnp.meshgrid(y_range, x_range, indexing="ij")
    xy = jnp.stack([X, Y], axis=-1).reshape(-1, 2)                # (H*W, 2)
    return jnp.broadcast_to(xy[None], (B, H * W, 2))


_SL3_BASIS = np.array(
    [[[0, 0, 1], [0, 0, 0], [0, 0, 0]],
     [[0, 0, 0], [0, 0, 1], [0, 0, 0]],
     [[0, 1, 0], [0, 0, 0], [0, 0, 0]],
     [[0, 0, 0], [1, 0, 0], [0, 0, 0]],
     [[1, 0, 0], [0, -1, 0], [0, 0, 0]],
     [[0, 0, 0], [0, -1, 0], [0, 0, 1]],
     [[0, 0, 0], [0, 0, 0], [1, 0, 0]],
     [[0, 0, 0], [0, 0, 0], [0, 1, 0]]], dtype=np.float32)


def sl3_to_SL3(w):  # w: (B, 8) -> (B, 3, 3)
    X = jnp.einsum("bk,kij->bij", w, jnp.asarray(_SL3_BASIS))
    return jax.vmap(jax.scipy.linalg.expm)(X)


def init_mlp_params(key, depth):
    """Deterministic Linear init (uniform +-1/sqrt(fan_in)), shapes from define_network()."""
    in_dim = 2 + 4 * depth
    dims = [(in_dim, HIDDEN), (HIDDEN, HIDDEN), (HIDDEN, HIDDEN), (HIDDEN, HIDDEN), (HIDDEN, 3)]
    params = []
    for k_in, k_out in dims:
        key, kw, kb = jax.random.split(key, 3)
        bound = 1.0 / math.sqrt(k_in)
        params.append(jax.random.uniform(kw, (k_out, k_in), jnp.float32, -bound, bound))
        params.append(jax.random.uniform(kb, (k_out,), jnp.float32, -bound, bound))
    return params  # [W1,b1,...,W5,b5], W stored PyTorch-style (out, in)


# ------------------------------ pure-JAX reference ---------------------------
def reference_forward(xy_grid, Hmats, params, depth):
    B, N, _ = xy_grid.shape
    hom = jnp.concatenate([xy_grid, jnp.ones((B, N, 1), jnp.float32)], -1)
    warped = jnp.einsum("bnk,bjk->bnj", hom, Hmats)
    coord = warped[..., :2] / warped[..., 2:3]
    freq = 2.0 ** jnp.arange(depth, dtype=jnp.float32) * np.pi
    spectrum = coord[..., None] * freq
    enc = jnp.stack([jnp.sin(spectrum), jnp.cos(spectrum)], axis=-2).reshape(B, N, -1)
    feat = jnp.concatenate([coord, enc], axis=-1)
    W1, b1, W2, b2, W3, b3, W4, b4, W5, b5 = params
    h = jax.nn.relu(feat @ W1.T + b1)
    h = jax.nn.relu(h @ W2.T + b2)
    h = jax.nn.relu(h @ W3.T + b3)
    h = jax.nn.relu(h @ W4.T + b4)
    return jax.nn.sigmoid(h @ W5.T + b5)


# ----------------------------------- main ------------------------------------
if __name__ == "__main__":
    key = jax.random.PRNGKey(0)
    kp, kw = jax.random.split(key)
    params = init_mlp_params(kp, POSENC_DEPTH)
    DOF = 8                        # opt.warp.dof (sl(3))

    # Case 1: 32x32 image, single 1024-point tile per image   -> grid (2, 1)
    # Case 2: 20x24 image, tile 256 -> N=480 padded to 512     -> grid (2, 2)
    #         exercises the padding/discard path, multi-tile SMEM bases, non-square W.
    for (B, H, W, tn) in [(2, 32, 32, 1024), (2, 20, 24, 256)]:
        # small non-identity warps to exercise the full homography path
        warp_param = 0.1 * jax.random.normal(kw, (B, DOF), jnp.float32)
        Hmats = sl3_to_SL3(warp_param)                 # (B, 3, 3)

        rgb, rgb_map = homography_forward(Hmats, params, H=H, W=W, tile_n=tn)
        jax.block_until_ready(rgb_map)

        xy_grid = get_normalized_pixel_grid(B, H, W)   # (B, H*W, 2) reference-path grid
        ref = reference_forward(xy_grid, Hmats, params, POSENC_DEPTH)

        assert rgb.shape == (B, H * W, 3) and rgb_map.shape == (B, 3, H, W)
        # all five layers use bf16 MXU operands with f32 accumulation
        np.testing.assert_allclose(np.asarray(rgb), np.asarray(ref), rtol=0, atol=1e-2)
        # rgb_map is an exact relayout of rgb
        np.testing.assert_array_equal(
            np.asarray(rgb_map.reshape(B, 3, -1).transpose(0, 2, 1)), np.asarray(rgb))

    # TODO(synk): barf_c2f coarse-to-fine posenc weighting (progress-dependent) is the
    # barf_c2f=None path here; loss/pyramid/Sobel/keypoint helpers (compute_loss etc.)
    # are training-time utilities outside forward() and are not reproduced.
    print("KERNEL_OK")
</pallas_src>

<mosaic_0001>
module attributes {stable_mosaic.version = 11 : i64} {
  func.func @kernel(%arg0: i32, %arg1: i32, %arg2: memref<2x9xf32, #tpu.memory_space<smem>>, %arg3: memref<1x2xi32, #tpu.memory_space<smem>>, %arg4: memref<256x18xbf16, #tpu.memory_space<vmem>>, %arg5: memref<256x1xf32, #tpu.memory_space<vmem>>, %arg6: memref<256x256xbf16, #tpu.memory_space<vmem>>, %arg7: memref<256x1xf32, #tpu.memory_space<vmem>>, %arg8: memref<256x256xbf16, #tpu.memory_space<vmem>>, %arg9: memref<256x1xf32, #tpu.memory_space<vmem>>, %arg10: memref<256x256xbf16, #tpu.memory_space<vmem>>, %arg11: memref<256x1xf32, #tpu.memory_space<vmem>>, %arg12: memref<3x256xbf16, #tpu.memory_space<vmem>>, %arg13: memref<3x1xf32, #tpu.memory_space<vmem>>, %arg14: memref<1x3x1024xf32, #tpu.memory_space<vmem>>) attributes {dimension_semantics = [#tpu.dimension_semantics<parallel>, #tpu.dimension_semantics<parallel>], iteration_bounds = array<i64: 2, 1>, scalar_prefetch = 0 : i64, scratch_operands = 0 : i64, tpu.core_type = #tpu.core_type<tc>, window_params = [{transform_indices = @transform_0, window_bounds = array<i64: 2, 9>}, {transform_indices = @transform_1, window_bounds = array<i64: 1, 2>}, {pipeline_mode = #tpu.pipeline_mode<synchronous>, transform_indices = @transform_2, window_bounds = array<i64: 256, 18>}, {pipeline_mode = #tpu.pipeline_mode<synchronous>, transform_indices = @transform_3, window_bounds = array<i64: 256, 1>}, {pipeline_mode = #tpu.pipeline_mode<synchronous>, transform_indices = @transform_4, window_bounds = array<i64: 256, 256>}, {pipeline_mode = #tpu.pipeline_mode<synchronous>, transform_indices = @transform_5, window_bounds = array<i64: 256, 1>}, {pipeline_mode = #tpu.pipeline_mode<synchronous>, transform_indices = @transform_6, window_bounds = array<i64: 256, 256>}, {pipeline_mode = #tpu.pipeline_mode<synchronous>, transform_indices = @transform_7, window_bounds = array<i64: 256, 1>}, {pipeline_mode = #tpu.pipeline_mode<synchronous>, transform_indices = @transform_8, window_bounds = array<i64: 256, 256>}, {pipeline_mode = #tpu.pipeline_mode<synchronous>, transform_indices = @transform_9, window_bounds = array<i64: 256, 1>}, {pipeline_mode = #tpu.pipeline_mode<synchronous>, transform_indices = @transform_10, window_bounds = array<i64: 3, 256>}, {pipeline_mode = #tpu.pipeline_mode<synchronous>, transform_indices = @transform_11, window_bounds = array<i64: 3, 1>}, {transform_indices = @transform_12, window_bounds = array<i64: 1, 3, 1024>}]} {
    %0 = arith.index_cast %arg1 : i32 to index
    %c0 = arith.constant 0 : index
    %1 = memref.load %arg3[%0, %c0] : memref<1x2xi32, #tpu.memory_space<smem>>
    %2 = arith.sitofp %1 : i32 to f32
    %3 = arith.index_cast %arg1 : i32 to index
    %c1 = arith.constant 1 : index
    %4 = memref.load %arg3[%3, %c1] : memref<1x2xi32, #tpu.memory_space<smem>>
    %5 = arith.sitofp %4 : i32 to f32
    %6 = tpu.iota {dimensions = array<i32: 1>} : vector<1x1024xi32>
    %7 = arith.sitofp %6 : vector<1x1024xi32> to vector<1x1024xf32>
    %8 = vector.broadcast %5 : f32 to vector<1x1024xf32>
    %9 = arith.addf %8, %7 : vector<1x1024xf32>
    %cst = arith.constant 3.200000e+01 : f32
    %10 = vector.broadcast %cst : f32 to vector<1x1024xf32>
    %11 = arith.divf %9, %10 : vector<1x1024xf32>
    %12 = math.floor %11 : vector<1x1024xf32>
    %cst_0 = arith.constant 3.200000e+01 : f32
    %13 = vector.broadcast %cst_0 : f32 to vector<1x1024xf32>
    %14 = arith.mulf %12, %13 : vector<1x1024xf32>
    %15 = arith.subf %9, %14 : vector<1x1024xf32>
    %16 = vector.broadcast %2 : f32 to vector<1x1024xf32>
    %17 = arith.addf %16, %12 : vector<1x1024xf32>
    %cst_1 = arith.constant 5.000000e-01 : f32
    %18 = vector.broadcast %cst_1 : f32 to vector<1x1024xf32>
    %19 = arith.addf %15, %18 : vector<1x1024xf32>
    %cst_2 = arith.constant 3.200000e+01 : f32
    %20 = vector.broadcast %cst_2 : f32 to vector<1x1024xf32>
    %21 = arith.divf %19, %20 : vector<1x1024xf32>
    %cst_3 = arith.constant 2.000000e+00 : f32
    %22 = vector.broadcast %cst_3 : f32 to vector<1x1024xf32>
    %23 = arith.mulf %21, %22 : vector<1x1024xf32>
    %cst_4 = arith.constant 1.000000e+00 : f32
    %24 = vector.broadcast %cst_4 : f32 to vector<1x1024xf32>
    %25 = arith.subf %23, %24 : vector<1x1024xf32>
    %cst_5 = arith.constant 1.000000e+00 : f32
    %26 = vector.broadcast %cst_5 : f32 to vector<1x1024xf32>
    %27 = arith.mulf %25, %26 : vector<1x1024xf32>
    %cst_6 = arith.constant 5.000000e-01 : f32
    %28 = vector.broadcast %cst_6 : f32 to vector<1x1024xf32>
    %29 = arith.addf %17, %28 : vector<1x1024xf32>
    %cst_7 = arith.constant 3.200000e+01 : f32
    %30 = vector.broadcast %cst_7 : f32 to vector<1x1024xf32>
    %31 = arith.divf %29, %30 : vector<1x1024xf32>
    %cst_8 = arith.constant 2.000000e+00 : f32
    %32 = vector.broadcast %cst_8 : f32 to vector<1x1024xf32>
    %33 = arith.mulf %31, %32 : vector<1x1024xf32>
    %cst_9 = arith.constant 1.000000e+00 : f32
    %34 = vector.broadcast %cst_9 : f32 to vector<1x1024xf32>
    %35 = arith.subf %33, %34 : vector<1x1024xf32>
    %cst_10 = arith.constant 1.000000e+00 : f32
    %36 = vector.broadcast %cst_10 : f32 to vector<1x1024xf32>
    %37 = arith.mulf %35, %36 : vector<1x1024xf32>
    %38 = arith.index_cast %arg0 : i32 to index
    %c0_11 = arith.constant 0 : index
    %39 = memref.load %arg2[%38, %c0_11] : memref<2x9xf32, #tpu.memory_space<smem>>
    %40 = arith.index_cast %arg0 : i32 to index
    %c1_12 = arith.constant 1 : index
    %41 = memref.load %arg2[%40, %c1_12] : memref<2x9xf32, #tpu.memory_space<smem>>
    %42 = arith.index_cast %arg0 : i32 to index
    %c2 = arith.constant 2 : index
    %43 = memref.load %arg2[%42, %c2] : memref<2x9xf32, #tpu.memory_space<smem>>
    %44 = arith.index_cast %arg0 : i32 to index
    %c3 = arith.constant 3 : index
    %45 = memref.load %arg2[%44, %c3] : memref<2x9xf32, #tpu.memory_space<smem>>
    %46 = arith.index_cast %arg0 : i32 to index
    %c4 = arith.constant 4 : index
    %47 = memref.load %arg2[%46, %c4] : memref<2x9xf32, #tpu.memory_space<smem>>
    %48 = arith.index_cast %arg0 : i32 to index
    %c5 = arith.constant 5 : index
    %49 = memref.load %arg2[%48, %c5] : memref<2x9xf32, #tpu.memory_space<smem>>
    %50 = arith.index_cast %arg0 : i32 to index
    %c6 = arith.constant 6 : index
    %51 = memref.load %arg2[%50, %c6] : memref<2x9xf32, #tpu.memory_space<smem>>
    %52 = arith.index_cast %arg0 : i32 to index
    %c7 = arith.constant 7 : index
    %53 = memref.load %arg2[%52, %c7] : memref<2x9xf32, #tpu.memory_space<smem>>
    %54 = arith.index_cast %arg0 : i32 to index
    %c8 = arith.constant 8 : index
    %55 = memref.load %arg2[%54, %c8] : memref<2x9xf32, #tpu.memory_space<smem>>
    %56 = vector.broadcast %39 : f32 to vector<1x1024xf32>
    %57 = arith.mulf %56, %27 : vector<1x1024xf32>
    %58 = vector.broadcast %41 : f32 to vector<1x1024xf32>
    %59 = arith.mulf %58, %37 : vector<1x1024xf32>
    %60 = arith.addf %57, %59 : vector<1x1024xf32>
    %61 = vector.broadcast %43 : f32 to vector<1x1024xf32>
    %62 = arith.addf %60, %61 : vector<1x1024xf32>
    %63 = vector.broadcast %45 : f32 to vector<1x1024xf32>
    %64 = arith.mulf %63, %27 : vector<1x1024xf32>
    %65 = vector.broadcast %47 : f32 to vector<1x1024xf32>
    %66 = arith.mulf %65, %37 : vector<1x1024xf32>
    %67 = arith.addf %64, %66 : vector<1x1024xf32>
    %68 = vector.broadcast %49 : f32 to vector<1x1024xf32>
    %69 = arith.addf %67, %68 : vector<1x1024xf32>
    %70 = vector.broadcast %51 : f32 to vector<1x1024xf32>
    %71 = arith.mulf %70, %27 : vector<1x1024xf32>
    %72 = vector.broadcast %53 : f32 to vector<1x1024xf32>
    %73 = arith.mulf %72, %37 : vector<1x1024xf32>
    %74 = arith.addf %71, %73 : vector<1x1024xf32>
    %75 = vector.broadcast %55 : f32 to vector<1x1024xf32>
    %76 = arith.addf %74, %75 : vector<1x1024xf32>
    %cst_13 = arith.constant 1.000000e+00 : f32
    %77 = vector.broadcast %cst_13 : f32 to vector<1x1024xf32>
    %78 = arith.divf %77, %76 : vector<1x1024xf32>
    %79 = arith.mulf %62, %78 : vector<1x1024xf32>
    %80 = arith.mulf %69, %78 : vector<1x1024xf32>
    %81 = tpu.iota {dimensions = array<i32: 0>} : vector<4x1xi32>
    %c1_i32 = arith.constant 1 : i32
    %82 = vector.broadcast %c1_i32 : i32 to vector<4x1xi32>
    %83 = arith.shli %82, %81 : vector<4x1xi32>
    %84 = arith.sitofp %83 : vector<4x1xi32> to vector<4x1xf32>
    %cst_14 = arith.constant 3.14159274 : f32
    %85 = vector.broadcast %cst_14 : f32 to vector<4x1xf32>
    %86 = arith.mulf %84, %85 : vector<4x1xf32>
    %87 = vector.broadcast %79 : vector<1x1024xf32> to vector<4x1024xf32>
    %88 = vector.broadcast %86 : vector<4x1xf32> to vector<4x1024xf32>
    %89 = arith.mulf %87, %88 : vector<4x1024xf32>
    %90 = vector.broadcast %80 : vector<1x1024xf32> to vector<4x1024xf32>
    %91 = vector.broadcast %86 : vector<4x1xf32> to vector<4x1024xf32>
    %92 = arith.mulf %90, %91 : vector<4x1024xf32>
    %93 = tpu.concatenate %89, %92 in 0 : vector<4x1024xf32>, vector<4x1024xf32> -> vector<8x1024xf32>
    %94 = math.sin %93 : vector<8x1024xf32>
    %95 = math.cos %93 : vector<8x1024xf32>
    %96 = vector.extract_strided_slice %94 {offsets = [0, 0], sizes = [4, 1024], strides = [1, 1]} : vector<8x1024xf32> to vector<4x1024xf32>
    %97 = vector.extract_strided_slice %95 {offsets = [0, 0], sizes = [4, 1024], strides = [1, 1]} : vector<8x1024xf32> to vector<4x1024xf32>
    %98 = vector.extract_strided_slice %94 {offsets = [4, 0], sizes = [4, 1024], strides = [1, 1]} : vector<8x1024xf32> to vector<4x1024xf32>
    %99 = vector.extract_strided_slice %95 {offsets = [4, 0], sizes = [4, 1024], strides = [1, 1]} : vector<8x1024xf32> to vector<4x1024xf32>
    %100 = tpu.concatenate %79, %80, %96, %97, %98, %99 in 0 : vector<1x1024xf32>, vector<1x1024xf32>, vector<4x1024xf32>, vector<4x1024xf32>, vector<4x1024xf32>, vector<4x1024xf32> -> vector<18x1024xf32>
    %101 = arith.truncf %100 : vector<18x1024xf32> to vector<18x1024xbf16>
    %c0_15 = arith.constant 0 : index
    %c0_16 = arith.constant 0 : index
    %102 = vector.load %arg4[%c0_15, %c0_16] : memref<256x18xbf16, #tpu.memory_space<vmem>>, vector<256x18xbf16>
    %cst_17 = arith.constant dense<0.000000e+00> : vector<256x1024xf32>
    %103 = tpu.matmul %102, %101, %cst_17 {dimension_numbers = #tpu.dot_dimension_numbers<[1], [0], [0], [1], [0, 0, 1, 1], [], []>} : vector<256x18xbf16>, vector<18x1024xbf16>, vector<256x1024xf32> -> vector<256x1024xf32>
    %c0_18 = arith.constant 0 : index
    %c0_19 = arith.constant 0 : index
    %104 = vector.load %arg5[%c0_18, %c0_19] : memref<256x1xf32, #tpu.memory_space<vmem>>, vector<256x1xf32>
    %105 = vector.broadcast %104 : vector<256x1xf32> to vector<256x1024xf32>
    %106 = arith.addf %103, %105 : vector<256x1024xf32>
    %cst_20 = arith.constant 0.000000e+00 : f32
    %107 = vector.broadcast %cst_20 : f32 to vector<256x1024xf32>
    %108 = arith.maximumf %106, %107 : vector<256x1024xf32>
    %109 = arith.truncf %108 : vector<256x1024xf32> to vector<256x1024xbf16>
    %c0_21 = arith.constant 0 : index
    %c0_22 = arith.constant 0 : index
    %110 = vector.load %arg6[%c0_21, %c0_22] : memref<256x256xbf16, #tpu.memory_space<vmem>>, vector<256x256xbf16>
    %cst_23 = arith.constant dense<0.000000e+00> : vector<256x1024xf32>
    %111 = tpu.matmul %110, %109, %cst_23 {dimension_numbers = #tpu.dot_dimension_numbers<[1], [0], [0], [1], [0, 0, 1, 1], [], []>} : vector<256x256xbf16>, vector<256x1024xbf16>, vector<256x1024xf32> -> vector<256x1024xf32>
    %c0_24 = arith.constant 0 : index
    %c0_25 = arith.constant 0 : index
    %112 = vector.load %arg7[%c0_24, %c0_25] : memref<256x1xf32, #tpu.memory_space<vmem>>, vector<256x1xf32>
    %113 = vector.broadcast %112 : vector<256x1xf32> to vector<256x1024xf32>
    %114 = arith.addf %111, %113 : vector<256x1024xf32>
    %cst_26 = arith.constant 0.000000e+00 : f32
    %115 = vector.broadcast %cst_26 : f32 to vector<256x1024xf32>
    %116 = arith.maximumf %114, %115 : vector<256x1024xf32>
    %117 = arith.truncf %116 : vector<256x1024xf32> to vector<256x1024xbf16>
    %c0_27 = arith.constant 0 : index
    %c0_28 = arith.constant 0 : index
    %118 = vector.load %arg8[%c0_27, %c0_28] : memref<256x256xbf16, #tpu.memory_space<vmem>>, vector<256x256xbf16>
    %cst_29 = arith.constant dense<0.000000e+00> : vector<256x1024xf32>
    %119 = tpu.matmul %118, %117, %cst_29 {dimension_numbers = #tpu.dot_dimension_numbers<[1], [0], [0], [1], [0, 0, 1, 1], [], []>} : vector<256x256xbf16>, vector<256x1024xbf16>, vector<256x1024xf32> -> vector<256x1024xf32>
    %c0_30 = arith.constant 0 : index
    %c0_31 = arith.constant 0 : index
    %120 = vector.load %arg9[%c0_30, %c0_31] : memref<256x1xf32, #tpu.memory_space<vmem>>, vector<256x1xf32>
    %121 = vector.broadcast %120 : vector<256x1xf32> to vector<256x1024xf32>
    %122 = arith.addf %119, %121 : vector<256x1024xf32>
    %cst_32 = arith.constant 0.000000e+00 : f32
    %123 = vector.broadcast %cst_32 : f32 to vector<256x1024xf32>
    %124 = arith.maximumf %122, %123 : vector<256x1024xf32>
    %125 = arith.truncf %124 : vector<256x1024xf32> to vector<256x1024xbf16>
    %c0_33 = arith.constant 0 : index
    %c0_34 = arith.constant 0 : index
    %126 = vector.load %arg10[%c0_33, %c0_34] : memref<256x256xbf16, #tpu.memory_space<vmem>>, vector<256x256xbf16>
    %cst_35 = arith.constant dense<0.000000e+00> : vector<256x1024xf32>
    %127 = tpu.matmul %126, %125, %cst_35 {dimension_numbers = #tpu.dot_dimension_numbers<[1], [0], [0], [1], [0, 0, 1, 1], [], []>} : vector<256x256xbf16>, vector<256x1024xbf16>, vector<256x1024xf32> -> vector<256x1024xf32>
    %c0_36 = arith.constant 0 : index
    %c0_37 = arith.constant 0 : index
    %128 = vector.load %arg11[%c0_36, %c0_37] : memref<256x1xf32, #tpu.memory_space<vmem>>, vector<256x1xf32>
    %129 = vector.broadcast %128 : vector<256x1xf32> to vector<256x1024xf32>
    %130 = arith.addf %127, %129 : vector<256x1024xf32>
    %cst_38 = arith.constant 0.000000e+00 : f32
    %131 = vector.broadcast %cst_38 : f32 to vector<256x1024xf32>
    %132 = arith.maximumf %130, %131 : vector<256x1024xf32>
    %133 = arith.truncf %132 : vector<256x1024xf32> to vector<256x1024xbf16>
    %c0_39 = arith.constant 0 : index
    %c0_40 = arith.constant 0 : index
    %134 = vector.load %arg12[%c0_39, %c0_40] : memref<3x256xbf16, #tpu.memory_space<vmem>>, vector<3x256xbf16>
    %cst_41 = arith.constant dense<0.000000e+00> : vector<3x1024xf32>
    %135 = tpu.matmul %134, %133, %cst_41 {dimension_numbers = #tpu.dot_dimension_numbers<[1], [0], [0], [1], [0, 0, 1, 1], [], []>} : vector<3x256xbf16>, vector<256x1024xbf16>, vector<3x1024xf32> -> vector<3x1024xf32>
    %c0_42 = arith.constant 0 : index
    %c0_43 = arith.constant 0 : index
    %136 = vector.load %arg13[%c0_42, %c0_43] : memref<3x1xf32, #tpu.memory_space<vmem>>, vector<3x1xf32>
    %137 = vector.broadcast %136 : vector<3x1xf32> to vector<3x1024xf32>
    %138 = arith.addf %135, %137 : vector<3x1024xf32>
    %139 = arith.negf %138 : vector<3x1024xf32>
    %140 = math.exp %139 : vector<3x1024xf32>
    %cst_44 = arith.constant 1.000000e+00 : f32
    %141 = vector.broadcast %cst_44 : f32 to vector<3x1024xf32>
    %142 = arith.addf %141, %140 : vector<3x1024xf32>
    %143 = arith.divf %141, %142 : vector<3x1024xf32>
    %c0_45 = arith.constant 0 : index
    %c0_46 = arith.constant 0 : index
    %c0_47 = arith.constant 0 : index
    %144 = vector.load %arg14[%c0_45, %c0_46, %c0_47] : memref<1x3x1024xf32, #tpu.memory_space<vmem>>, vector<1x3x1024xf32>
    %145 = vector.shape_cast %144 : vector<1x3x1024xf32> to vector<3x1024xf32>
    %146 = vector.shape_cast %143 : vector<3x1024xf32> to vector<1x3x1024xf32>
    tpu.vector_store %arg14[%c0_45, %c0_46, %c0_47], %146 {strides = array<i32>} : memref<1x3x1024xf32, #tpu.memory_space<vmem>>, vector<1x3x1024xf32>,
    return
  }
  func.func @transform_0(%arg0: i32, %arg1: i32) -> (i32, i32) {
    %c0_i32 = arith.constant 0 : i32
    %c0_i32_0 = arith.constant 0 : i32
    %c0_i32_1 = arith.constant 0 : i32
    return %c0_i32, %c0_i32_0 : i32, i32
  }
  func.func @transform_1(%arg0: i32, %arg1: i32) -> (i32, i32) {
    %c0_i32 = arith.constant 0 : i32
    %c0_i32_0 = arith.constant 0 : i32
    %c0_i32_1 = arith.constant 0 : i32
    return %c0_i32, %c0_i32_0 : i32, i32
  }
  func.func @transform_2(%arg0: i32, %arg1: i32) -> (i32, i32) {
    %c0_i32 = arith.constant 0 : i32
    %c0_i32_0 = arith.constant 0 : i32
    %c0_i32_1 = arith.constant 0 : i32
    return %c0_i32, %c0_i32_0 : i32, i32
  }
  func.func @transform_3(%arg0: i32, %arg1: i32) -> (i32, i32) {
    %c0_i32 = arith.constant 0 : i32
    %c0_i32_0 = arith.constant 0 : i32
    %c0_i32_1 = arith.constant 0 : i32
    return %c0_i32, %c0_i32_0 : i32, i32
  }
  func.func @transform_4(%arg0: i32, %arg1: i32) -> (i32, i32) {
    %c0_i32 = arith.constant 0 : i32
    %c0_i32_0 = arith.constant 0 : i32
    %c0_i32_1 = arith.constant 0 : i32
    return %c0_i32, %c0_i32_0 : i32, i32
  }
  func.func @transform_5(%arg0: i32, %arg1: i32) -> (i32, i32) {
    %c0_i32 = arith.constant 0 : i32
    %c0_i32_0 = arith.constant 0 : i32
    %c0_i32_1 = arith.constant 0 : i32
    return %c0_i32, %c0_i32_0 : i32, i32
  }
  func.func @transform_6(%arg0: i32, %arg1: i32) -> (i32, i32) {
    %c0_i32 = arith.constant 0 : i32
    %c0_i32_0 = arith.constant 0 : i32
    %c0_i32_1 = arith.constant 0 : i32
    return %c0_i32, %c0_i32_0 : i32, i32
  }
  func.func @transform_7(%arg0: i32, %arg1: i32) -> (i32, i32) {
    %c0_i32 = arith.constant 0 : i32
    %c0_i32_0 = arith.constant 0 : i32
    %c0_i32_1 = arith.constant 0 : i32
    return %c0_i32, %c0_i32_0 : i32, i32
  }
  func.func @transform_8(%arg0: i32, %arg1: i32) -> (i32, i32) {
    %c0_i32 = arith.constant 0 : i32
    %c0_i32_0 = arith.constant 0 : i32
    %c0_i32_1 = arith.constant 0 : i32
    return %c0_i32, %c0_i32_0 : i32, i32
  }
  func.func @transform_9(%arg0: i32, %arg1: i32) -> (i32, i32) {
    %c0_i32 = arith.constant 0 : i32
    %c0_i32_0 = arith.constant 0 : i32
    %c0_i32_1 = arith.constant 0 : i32
    return %c0_i32, %c0_i32_0 : i32, i32
  }
  func.func @transform_10(%arg0: i32, %arg1: i32) -> (i32, i32) {
    %c0_i32 = arith.constant 0 : i32
    %c0_i32_0 = arith.constant 0 : i32
    %c0_i32_1 = arith.constant 0 : i32
    return %c0_i32, %c0_i32_0 : i32, i32
  }
  func.func @transform_11(%arg0: i32, %arg1: i32) -> (i32, i32) {
    %c0_i32 = arith.constant 0 : i32
    %c0_i32_0 = arith.constant 0 : i32
    %c0_i32_1 = arith.constant 0 : i32
    return %c0_i32, %c0_i32_0 : i32, i32
  }
  func.func @transform_12(%arg0: i32, %arg1: i32) -> (i32, i32, i32) {
    %c0_i32 = arith.constant 0 : i32
    %c0_i32_0 = arith.constant 0 : i32
    return %arg0, %c0_i32, %arg1 : i32, i32, i32
  }
}

</mosaic_0001>

<llo_original>
// kernel: tpu_custom_call.1
$region0: #{tpu_custom_call.1}
  #allocation0 [shape = 'u32[]', space=smem, size = 0x4, offset = 0x4, fixed_abs, tag = 'smem constant byte address 0x4 - core index']
  #allocation1 [shape = 'u32[144,128]{1,0:T(1,128)}', space=vmem, size = 0x12000, scoped, tag = 'internal scratch']
  %s0 = inlined_call_operand.vmem [shape: f32[2,9], index: 0, kind: input, shape index: {}]
  %s1 = inlined_call_operand.vmem [shape: s32[1,2], index: 1, kind: input, shape index: {}]
  %s2 = inlined_call_operand.vmem [shape: bf16[256,18], index: 2, kind: input, shape index: {}]
  %s3 = inlined_call_operand.vmem [shape: f32[256,1], index: 3, kind: input, shape index: {}]
  %s4 = inlined_call_operand.vmem [shape: bf16[256,256], index: 4, kind: input, shape index: {}]
  %s5 = inlined_call_operand.vmem [shape: f32[256,1], index: 5, kind: input, shape index: {}]
  %s6 = inlined_call_operand.vmem [shape: bf16[256,256], index: 6, kind: input, shape index: {}]
  %s7 = inlined_call_operand.vmem [shape: f32[256,1], index: 7, kind: input, shape index: {}]
  %s8 = inlined_call_operand.vmem [shape: bf16[256,256], index: 8, kind: input, shape index: {}]
  %s9 = inlined_call_operand.vmem [shape: f32[256,1], index: 9, kind: input, shape index: {}]
  %s10 = inlined_call_operand.vmem [shape: bf16[3,256], index: 10, kind: input, shape index: {}]
  %s11 = inlined_call_operand.vmem [shape: f32[3,1], index: 11, kind: input, shape index: {}]
  %s12 = inlined_call_operand.vmem [shape: f32[2,3,1024], index: 12, kind: output, shape index: {}]
  %s13 = sld [smem:[#allocation0]]
  $region89: #{tpu_custom_call.1} parent=0
    _
  %s15 = ssub.s32 1, %s13
  %s16 = scalar_select 0, %s15, %s13
  $region1: #{tpu_custom_call.1} parent=0
    #allocation2 [shape = 'u8[1024]{0}', space=smem, size = 0x400, scoped, tag = 'input window, operand 0, single buffered']
    #allocation3 [shape = 's32[2]{0}', space=sflag, size = 0x8, scoped, tag = 'scoped memory for tpu_custom_call.1']
    #allocation4 [shape = 'u8[512]{0}', space=smem, size = 0x200, scoped, tag = 'input window, operand 1, single buffered']
    #allocation5 [shape = 's32[1]{0}', space=sflag, size = 0x4, scoped, tag = 'scoped memory for tpu_custom_call.1']
    %17 = vsyncpa [#allocation3], 0
    %18 = vsyncpa [#allocation5], 0
    loop: start=0, step=1, limit=4
    $region2: #{tpu_custom_call.1} parent=1 // loop_pre_header
      _
    $region3: #{tpu_custom_call.1} parent=1 // loop_header
      %s20 = sphi 0, %s24
      %p21 = scmp.ge.s32.totalorder %s20, 4
      %s27 = sphi 0, %s39
      %s28 = sphi 0, %s35
      %s29 = sphi 0, %s27
      %s30 = sphi 0, %s28
      %s31 = sphi 0, %s29
      %s32 = sphi 0, %s30
      %s40 = sphi 0, %s40
      %s42 = sphi 0, %s40
      %s43 = sphi 0, %s42
      %s57 = sphi 0, %s43
      %s61 = sphi 0, %s61
      %s63 = sphi 0, %s61
      %s64 = sphi 0, %s63
      %s78 = sphi 0, %s64
      %s82 = sphi 0, %s82
      %s84 = sphi 0, %s82
      %s85 = sphi 0, %s84
      %s99 = sphi 0, %s85
      %s103 = sphi 0, %s103
      %s105 = sphi 0, %s103
      %s106 = sphi 0, %s105
      %s120 = sphi 0, %s106
      %s124 = sphi 0, %s124
      %s126 = sphi 0, %s124
      %s127 = sphi 0, %s126
      %s141 = sphi 0, %s127
      %s145 = sphi 0, %s145
      %s147 = sphi 0, %s145
      %s148 = sphi 0, %s147
      %s162 = sphi 0, %s148
      %s166 = sphi 0, %s166
      %s168 = sphi 0, %s166
      %s169 = sphi 0, %s168
      %s183 = sphi 0, %s169
      %s187 = sphi 0, %s187
      %s189 = sphi 0, %s187
      %s190 = sphi 0, %s189
      %s204 = sphi 0, %s190
      %s208 = sphi 0, %s208
      %s210 = sphi 0, %s208
      %s211 = sphi 0, %s210
      %s225 = sphi 0, %s211
      %s229 = sphi 0, %s229
      %s231 = sphi 0, %s229
      %s232 = sphi 0, %s231
      %s246 = sphi 0, %s232
      %s250 = sphi 0, %s250
      %s252 = sphi 0, %s250
      %s253 = sphi 0, %s252
      %s267 = sphi 0, %s253
      %s271 = sphi 0, %s271
      %s273 = sphi 0, %s271
      %s274 = sphi 0, %s273
      %s288 = sphi 0, %s274
      %s296 = sphi 0, %s298
      %s299 = sphi 0, %s296
      %s300 = sphi 0, %s299
      %s316 = sphi 0, %s300
    $region4: #{tpu_custom_call.1} parent=1 // loop_header_branch
      %23 = sbr.rel (%p21) target = $region8
    $region5: #{tpu_custom_call.1} parent=1 // loop_body
      %s25 = ssub.s32 %s20, 1
      %s26 = ssub.s32 %s20, 2
      %s33 = sadd.s32 1, %s28
      %p34 = scmp.ge.s32.totalorder %s33, 1
      %s35 = scalar_select %p34, 0, %s33
      %s36 = sadd.s32 1, %s27
      %s37 = scalar_select %p34, %s36, %s27
      %p38 = scmp.ge.s32.totalorder %s37, 2
      %s39 = scalar_select %p38, 0, %s37
      %s41 = sadd.s32 %s40, 1
      %p44 = scmp.eq.s32.totalorder %s20, 1
      %p45 = scmp.ne.s32.totalorder %s40, %s42
      %p46 = scmp.eq.s32.totalorder %s20, 0
      %p47 = por %p45, %p46
      %p48 = scmp.ne.s32.totalorder %s40, %s42
      %p49 = scmp.eq.s32.totalorder %s25, 1
      %p50 = por %p48, %p49
      %p51 = scmp.ne.s32.totalorder %s42, %s43
      %p52 = scmp.eq.s32.totalorder %s25, 0
      %p53 = por %p51, %p52
      %p54 = scmp.ne.s32.totalorder %s42, %s43
      %p55 = scmp.eq.s32.totalorder %s26, 1
      %p56 = por %p54, %p55
      %p58 = scmp.ne.s32.totalorder %s43, %s57
      %p59 = scmp.eq.s32.totalorder %s26, 0
      %p60 = por %p58, %p59
      %s62 = sadd.s32 %s61, 1
      %p65 = scmp.eq.s32.totalorder %s20, 1
      %p66 = scmp.ne.s32.totalorder %s61, %s63
      %p67 = scmp.eq.s32.totalorder %s20, 0
      %p68 = por %p66, %p67
      %p69 = scmp.ne.s32.totalorder %s61, %s63
      %p70 = scmp.eq.s32.totalorder %s25, 1
      %p71 = por %p69, %p70
      %p72 = scmp.ne.s32.totalorder %s63, %s64
      %p73 = scmp.eq.s32.totalorder %s25, 0
      %p74 = por %p72, %p73
      %p75 = scmp.ne.s32.totalorder %s63, %s64
      %p76 = scmp.eq.s32.totalorder %s26, 1
      %p77 = por %p75, %p76
      %p79 = scmp.ne.s32.totalorder %s64, %s78
      %p80 = scmp.eq.s32.totalorder %s26, 0
      %p81 = por %p79, %p80
      %s83 = sadd.s32 %s82, 1
      %p86 = scmp.eq.s32.totalorder %s20, 1
      %p87 = scmp.ne.s32.totalorder %s82, %s84
      %p88 = scmp.eq.s32.totalorder %s20, 0
      %p89 = por %p87, %p88
      %p90 = scmp.ne.s32.totalorder %s82, %s84
      %p91 = scmp.eq.s32.totalorder %s25, 1
      %p92 = por %p90, %p91
      %p93 = scmp.ne.s32.totalorder %s84, %s85
      %p94 = scmp.eq.s32.totalorder %s25, 0
      %p95 = por %p93, %p94
      %p96 = scmp.ne.s32.totalorder %s84, %s85
      %p97 = scmp.eq.s32.totalorder %s26, 1
      %p98 = por %p96, %p97
      %p100 = scmp.ne.s32.totalorder %s85, %s99
      %p101 = scmp.eq.s32.totalorder %s26, 0
      %p102 = por %p100, %p101
      %s104 = sadd.s32 %s103, 1
      %p107 = scmp.eq.s32.totalorder %s20, 1
      %p108 = scmp.ne.s32.totalorder %s103, %s105
      %p109 = scmp.eq.s32.totalorder %s20, 0
      %p110 = por %p108, %p109
      %p111 = scmp.ne.s32.totalorder %s103, %s105
      %p112 = scmp.eq.s32.totalorder %s25, 1
      %p113 = por %p111, %p112
      %p114 = scmp.ne.s32.totalorder %s105, %s106
      %p115 = scmp.eq.s32.totalorder %s25, 0
      %p116 = por %p114, %p115
      %p117 = scmp.ne.s32.totalorder %s105, %s106
      %p118 = scmp.eq.s32.totalorder %s26, 1
      %p119 = por %p117, %p118
      %p121 = scmp.ne.s32.totalorder %s106, %s120
      %p122 = scmp.eq.s32.totalorder %s26, 0
      %p123 = por %p121, %p122
      %s125 = sadd.s32 %s124, 1
      %p128 = scmp.eq.s32.totalorder %s20, 1
      %p129 = scmp.ne.s32.totalorder %s124, %s126
      %p130 = scmp.eq.s32.totalorder %s20, 0
      %p131 = por %p129, %p130
      %p132 = scmp.ne.s32.totalorder %s124, %s126
      %p133 = scmp.eq.s32.totalorder %s25, 1
      %p134 = por %p132, %p133
      %p135 = scmp.ne.s32.totalorder %s126, %s127
      %p136 = scmp.eq.s32.totalorder %s25, 0
      %p137 = por %p135, %p136
      %p138 = scmp.ne.s32.totalorder %s126, %s127
      %p139 = scmp.eq.s32.totalorder %s26, 1
      %p140 = por %p138, %p139
      %p142 = scmp.ne.s32.totalorder %s127, %s141
      %p143 = scmp.eq.s32.totalorder %s26, 0
      %p144 = por %p142, %p143
      %s146 = sadd.s32 %s145, 1
      %p149 = scmp.eq.s32.totalorder %s20, 1
      %p150 = scmp.ne.s32.totalorder %s145, %s147
      %p151 = scmp.eq.s32.totalorder %s20, 0
      %p152 = por %p150, %p151
      %p153 = scmp.ne.s32.totalorder %s145, %s147
      %p154 = scmp.eq.s32.totalorder %s25, 1
      %p155 = por %p153, %p154
      %p156 = scmp.ne.s32.totalorder %s147, %s148
      %p157 = scmp.eq.s32.totalorder %s25, 0
      %p158 = por %p156, %p157
      %p159 = scmp.ne.s32.totalorder %s147, %s148
      %p160 = scmp.eq.s32.totalorder %s26, 1
      %p161 = por %p159, %p160
      %p163 = scmp.ne.s32.totalorder %s148, %s162
      %p164 = scmp.eq.s32.totalorder %s26, 0
      %p165 = por %p163, %p164
      %s167 = sadd.s32 %s166, 1
      %p170 = scmp.eq.s32.totalorder %s20, 1
      %p171 = scmp.ne.s32.totalorder %s166, %s168
      %p172 = scmp.eq.s32.totalorder %s20, 0
      %p173 = por %p171, %p172
      %p174 = scmp.ne.s32.totalorder %s166, %s168
      %p175 = scmp.eq.s32.totalorder %s25, 1
      %p176 = por %p174, %p175
      %p177 = scmp.ne.s32.totalorder %s168, %s169
      %p178 = scmp.eq.s32.totalorder %s25, 0
      %p179 = por %p177, %p178
      %p180 = scmp.ne.s32.totalorder %s168, %s169
      %p181 = scmp.eq.s32.totalorder %s26, 1
      %p182 = por %p180, %p181
      %p184 = scmp.ne.s32.totalorder %s169, %s183
      %p185 = scmp.eq.s32.totalorder %s26, 0
      %p186 = por %p184, %p185
      %s188 = sadd.s32 %s187, 1
      %p191 = scmp.eq.s32.totalorder %s20, 1
      %p192 = scmp.ne.s32.totalorder %s187, %s189
      %p193 = scmp.eq.s32.totalorder %s20, 0
      %p194 = por %p192, %p193
      %p195 = scmp.ne.s32.totalorder %s187, %s189
      %p196 = scmp.eq.s32.totalorder %s25, 1
      %p197 = por %p195, %p196
      %p198 = scmp.ne.s32.totalorder %s189, %s190
      %p199 = scmp.eq.s32.totalorder %s25, 0
      %p200 = por %p198, %p199
      %p201 = scmp.ne.s32.totalorder %s189, %s190
      %p202 = scmp.eq.s32.totalorder %s26, 1
      %p203 = por %p201, %p202
      %p205 = scmp.ne.s32.totalorder %s190, %s204
      %p206 = scmp.eq.s32.totalorder %s26, 0
      %p207 = por %p205, %p206
      %s209 = sadd.s32 %s208, 1
      %p212 = scmp.eq.s32.totalorder %s20, 1
      %p213 = scmp.ne.s32.totalorder %s208, %s210
      %p214 = scmp.eq.s32.totalorder %s20, 0
      %p215 = por %p213, %p214
      %p216 = scmp.ne.s32.totalorder %s208, %s210
      %p217 = scmp.eq.s32.totalorder %s25, 1
      %p218 = por %p216, %p217
      %p219 = scmp.ne.s32.totalorder %s210, %s211
      %p220 = scmp.eq.s32.totalorder %s25, 0
      %p221 = por %p219, %p220
      %p222 = scmp.ne.s32.totalorder %s210, %s211
      %p223 = scmp.eq.s32.totalorder %s26, 1
      %p224 = por %p222, %p223
      %p226 = scmp.ne.s32.totalorder %s211, %s225
      %p227 = scmp.eq.s32.totalorder %s26, 0
      %p228 = por %p226, %p227
      %s230 = sadd.s32 %s229, 1
      %p233 = scmp.eq.s32.totalorder %s20, 1
      %p234 = scmp.ne.s32.totalorder %s229, %s231
      %p235 = scmp.eq.s32.totalorder %s20, 0
      %p236 = por %p234, %p235
      %p237 = scmp.ne.s32.totalorder %s229, %s231
      %p238 = scmp.eq.s32.totalorder %s25, 1
      %p239 = por %p237, %p238
      %p240 = scmp.ne.s32.totalorder %s231, %s232
      %p241 = scmp.eq.s32.totalorder %s25, 0
      %p242 = por %p240, %p241
      %p243 = scmp.ne.s32.totalorder %s231, %s232
      %p244 = scmp.eq.s32.totalorder %s26, 1
      %p245 = por %p243, %p244
      %p247 = scmp.ne.s32.totalorder %s232, %s246
      %p248 = scmp.eq.s32.totalorder %s26, 0
      %p249 = por %p247, %p248
      %s251 = sadd.s32 %s250, 1
      %p254 = scmp.eq.s32.totalorder %s20, 1
      %p255 = scmp.ne.s32.totalorder %s250, %s252
      %p256 = scmp.eq.s32.totalorder %s20, 0
      %p257 = por %p255, %p256
      %p258 = scmp.ne.s32.totalorder %s250, %s252
      %p259 = scmp.eq.s32.totalorder %s25, 1
      %p260 = por %p258, %p259
      %p261 = scmp.ne.s32.totalorder %s252, %s253
      %p262 = scmp.eq.s32.totalorder %s25, 0
      %p263 = por %p261, %p262
      %p264 = scmp.ne.s32.totalorder %s252, %s253
      %p265 = scmp.eq.s32.totalorder %s26, 1
      %p266 = por %p264, %p265
      %p268 = scmp.ne.s32.totalorder %s253, %s267
      %p269 = scmp.eq.s32.totalorder %s26, 0
      %p270 = por %p268, %p269
      %s272 = sadd.s32 %s271, 1
      %p275 = scmp.eq.s32.totalorder %s20, 1
      %p276 = scmp.ne.s32.totalorder %s271, %s273
      %p277 = scmp.eq.s32.totalorder %s20, 0
      %p278 = por %p276, %p277
      %p279 = scmp.ne.s32.totalorder %s271, %s273
      %p280 = scmp.eq.s32.totalorder %s25, 1
      %p281 = por %p279, %p280
      %p282 = scmp.ne.s32.totalorder %s273, %s274
      %p283 = scmp.eq.s32.totalorder %s25, 0
      %p284 = por %p282, %p283
      %p285 = scmp.ne.s32.totalorder %s273, %s274
      %p286 = scmp.eq.s32.totalorder %s26, 1
      %p287 = por %p285, %p286
      %p289 = scmp.ne.s32.totalorder %s274, %s288
      %p290 = scmp.eq.s32.totalorder %s26, 0
      %p291 = por %p289, %p290
      %s292 = ssub.s32 %s27, %s39
      %s293 = ssub.s32 %s28, %s35
      %s294 = sor.u32 %s292, %s293
      %p295 = scmp.eq.s32.totalorder %s294, 0
      %s297 = sadd.s32 %s296, 1
      %s298 = scalar_select %p295, %s296, %s297
      %p301 = pneg %p295
      %p302 = scmp.eq.s32.totalorder %s20, 1
      %p303 = por %p301, %p302
      %p304 = scmp.ne.s32.totalorder %s296, %s299
      %p305 = scmp.eq.s32.totalorder %s20, 0
      %p306 = por %p304, %p305
      %p307 = scmp.ne.s32.totalorder %s296, %s299
      %p308 = scmp.eq.s32.totalorder %s25, 1
      %p309 = por %p307, %p308
      %p310 = scmp.ne.s32.totalorder %s299, %s300
      %p311 = scmp.eq.s32.totalorder %s25, 0
      %p312 = por %p310, %p311
      %p313 = scmp.ne.s32.totalorder %s299, %s300
      %p314 = scmp.eq.s32.totalorder %s26, 1
      %p315 = por %p313, %p314
      %p317 = scmp.ne.s32.totalorder %s300, %s316
      %p318 = scmp.eq.s32.totalorder %s26, 0
      %p319 = por %p317, %p318
      %p320 = scmp.le.s32.totalorder 1, %s20
      %p321 = scmp.lt.s32.totalorder %s20, 3
      %p322 = pnand %p320, %p321
      %p323 = pneg %p322
      // Predicated region
      $region9: #{tpu_custom_call.1} parent=5 // pred_check
        _
      $region10: #{tpu_custom_call.1} parent=5 // pred_check_branch
        %325 = sbr.rel (%p322) target = $region12
      $region11: #{tpu_custom_call.1} parent=5 // pred_region
        %s326 = ssub.s32 %s20, 1
        // Predicated region
        $region13: #{tpu_custom_call.1} parent=11 // pred_check
          %p327 = pneg %p53
        $region14: #{tpu_custom_call.1} parent=11 // pred_check_branch
          %329 = sbr.rel (%p327) target = $region16
        $region15: #{tpu_custom_call.1} parent=11 // pred_region
          %s331 = ssub.s32 32, 32
          %332 = vsyncadd [#allocation3], %s331
          %s334 = sshll.u32 %s0, 4
          %s335 = int_to_ptr.vmem [resolvable:$true] %s334
          %337 = dma.vmem_to_smem %s335, 32, [#allocation2], [#allocation3]
        $region16: #{tpu_custom_call.1} parent=11 // pred_fallthru
          _
        // Predicated region
        $region17: #{tpu_custom_call.1} parent=11 // pred_check
          %p338 = pneg %p74
        $region18: #{tpu_custom_call.1} parent=11 // pred_check_branch
          %340 = sbr.rel (%p338) target = $region20
        $region19: #{tpu_custom_call.1} parent=11 // pred_region
          %s342 = ssub.s32 16, 16
          %343 = vsyncadd [#allocation5], %s342
          %s345 = sshll.u32 %s1, 4
          %s346 = int_to_ptr.vmem [resolvable:$true] %s345
          %348 = dma.vmem_to_smem %s346, 16, [#allocation4], [#allocation5]
        $region20: #{tpu_custom_call.1} parent=11 // pred_fallthru
          _
        // Predicated region
        $region21: #{tpu_custom_call.1} parent=11 // pred_check
          %p349 = pneg %p95
        $region22: #{tpu_custom_call.1} parent=11 // pred_check_branch
          %351 = sbr.rel (%p349) target = $region24
        $region23: #{tpu_custom_call.1} parent=11 // pred_region
          _
        $region24: #{tpu_custom_call.1} parent=11 // pred_fallthru
          _
        // Predicated region
        $region25: #{tpu_custom_call.1} parent=11 // pred_check
          %p352 = pneg %p116
        $region26: #{tpu_custom_call.1} parent=11 // pred_check_branch
          %354 = sbr.rel (%p352) target = $region28
        $region27: #{tpu_custom_call.1} parent=11 // pred_region
          _
        $region28: #{tpu_custom_call.1} parent=11 // pred_fallthru
          _
        // Predicated region
        $region29: #{tpu_custom_call.1} parent=11 // pred_check
          %p355 = pneg %p137
        $region30: #{tpu_custom_call.1} parent=11 // pred_check_branch
          %357 = sbr.rel (%p355) target = $region32
        $region31: #{tpu_custom_call.1} parent=11 // pred_region
          _
        $region32: #{tpu_custom_call.1} parent=11 // pred_fallthru
          _
        // Predicated region
        $region33: #{tpu_custom_call.1} parent=11 // pred_check
          %p358 = pneg %p158
        $region34: #{tpu_custom_call.1} parent=11 // pred_check_branch
          %360 = sbr.rel (%p358) target = $region36
        $region35: #{tpu_custom_call.1} parent=11 // pred_region
          _
        $region36: #{tpu_custom_call.1} parent=11 // pred_fallthru
          _
        // Predicated region
        $region37: #{tpu_custom_call.1} parent=11 // pred_check
          %p361 = pneg %p179
        $region38: #{tpu_custom_call.1} parent=11 // pred_check_branch
          %363 = sbr.rel (%p361) target = $region40
        $region39: #{tpu_custom_call.1} parent=11 // pred_region
          _
        $region40: #{tpu_custom_call.1} parent=11 // pred_fallthru
          _
        // Predicated region
        $region41: #{tpu_custom_call.1} parent=11 // pred_check
          %p364 = pneg %p200
        $region42: #{tpu_custom_call.1} parent=11 // pred_check_branch
          %366 = sbr.rel (%p364) target = $region44
        $region43: #{tpu_custom_call.1} parent=11 // pred_region
          _
        $region44: #{tpu_custom_call.1} parent=11 // pred_fallthru
          _
        // Predicated region
        $region45: #{tpu_custom_call.1} parent=11 // pred_check
          %p367 = pneg %p221
        $region46: #{tpu_custom_call.1} parent=11 // pred_check_branch
          %369 = sbr.rel (%p367) target = $region48
        $region47: #{tpu_custom_call.1} parent=11 // pred_region
          _
        $region48: #{tpu_custom_call.1} parent=11 // pred_fallthru
          _
        // Predicated region
        $region49: #{tpu_custom_call.1} parent=11 // pred_check
          %p370 = pneg %p242
        $region50: #{tpu_custom_call.1} parent=11 // pred_check_branch
          %372 = sbr.rel (%p370) target = $region52
        $region51: #{tpu_custom_call.1} parent=11 // pred_region
          _
        $region52: #{tpu_custom_call.1} parent=11 // pred_fallthru
          _
        // Predicated region
        $region53: #{tpu_custom_call.1} parent=11 // pred_check
          %p373 = pneg %p263
        $region54: #{tpu_custom_call.1} parent=11 // pred_check_branch
          %375 = sbr.rel (%p373) target = $region56
        $region55: #{tpu_custom_call.1} parent=11 // pred_region
          _
        $region56: #{tpu_custom_call.1} parent=11 // pred_fallthru
          _
        // Predicated region
        $region57: #{tpu_custom_call.1} parent=11 // pred_check
          %p376 = pneg %p284
        $region58: #{tpu_custom_call.1} parent=11 // pred_check_branch
          %378 = sbr.rel (%p376) target = $region60
        $region59: #{tpu_custom_call.1} parent=11 // pred_region
          _
        $region60: #{tpu_custom_call.1} parent=11 // pred_fallthru
          _
      $region12: #{tpu_custom_call.1} parent=5 // pred_fallthru
        _
      %p379 = scmp.lt.s32.totalorder %s20, 2
      // Predicated region
      $region61: #{tpu_custom_call.1} parent=5 // pred_check
        %p380 = pneg %p379
      $region62: #{tpu_custom_call.1} parent=5 // pred_check_branch
        %382 = sbr.rel (%p380) target = $region64
      $region63: #{tpu_custom_call.1} parent=5 // pred_region
        _
      $region64: #{tpu_custom_call.1} parent=5 // pred_fallthru
        _
      %p383 = scmp.le.s32.totalorder 1, %s20
      %p384 = scmp.lt.s32.totalorder %s20, 3
      %p385 = pnand %p383, %p384
      %p386 = pneg %p385
      // Predicated region
      $region65: #{tpu_custom_call.1} parent=5 // pred_check
        _
      $region66: #{tpu_custom_call.1} parent=5 // pred_check_branch
        %388 = sbr.rel (%p385) target = $region68
      $region67: #{tpu_custom_call.1} parent=5 // pred_region
        %s389 = ssub.s32 %s20, 1
        // Predicated region
        $region69: #{tpu_custom_call.1} parent=67 // pred_check
          %p390 = pneg %p53
        $region70: #{tpu_custom_call.1} parent=67 // pred_check_branch
          %392 = sbr.rel (%p390) target = $region72
        $region71: #{tpu_custom_call.1} parent=67 // pred_region
          %393 = dma.done [#allocation3], 32
        $region72: #{tpu_custom_call.1} parent=67 // pred_fallthru
          _
        // Predicated region
        $region73: #{tpu_custom_call.1} parent=67 // pred_check
          %p394 = pneg %p74
        $region74: #{tpu_custom_call.1} parent=67 // pred_check_branch
          %396 = sbr.rel (%p394) target = $region76
        $region75: #{tpu_custom_call.1} parent=67 // pred_region
          %397 = dma.done [#allocation5], 16
        $region76: #{tpu_custom_call.1} parent=67 // pred_fallthru
          _
        %398 = sfence
        %p399 = pneg %p53
        %p400 = pneg %p50
        %p401 = pneg %p74
        %p402 = pneg %p71
        %p403 = pneg %p95
        %p404 = pneg %p92
        %p405 = pneg %p116
        %p406 = pneg %p113
        %p407 = pneg %p137
        %p408 = pneg %p134
        %p409 = pneg %p158
        %p410 = pneg %p155
        %p411 = pneg %p179
        %p412 = pneg %p176
        %p413 = pneg %p200
        %p414 = pneg %p197
        %p415 = pneg %p221
        %p416 = pneg %p218
        %p417 = pneg %p242
        %p418 = pneg %p239
        %p419 = pneg %p263
        %p420 = pneg %p260
        %p421 = pneg %p284
        %p422 = pneg %p281
        %p423 = pneg %p312
        %p424 = pneg %p309
        %s425 = smul.u32 8, %s30
        %p426 = scmp.lt.s32.totalorder %s29, 1
        %s427 = scalar_select %p426, %s29, 1
        %p428 = scmp.lt.s32.totalorder %s425, 7
        %s429 = scalar_select %p428, %s425, 7
        %s430 = smul.addr %s427, 8
        %s431 = sadd.s32 %s429, %s430
        %s432 = smul.addr %s431, 4
        %s433 = scalar_lea.vmem %s12, %s432
        %s434 = smul.u32 8, %s30
        %p435 = scmp.lt.s32.totalorder %s29, 1
        %s436 = scalar_select %p435, %s29, 1
        %p437 = scmp.lt.s32.totalorder %s434, 7
        %s438 = scalar_select %p437, %s434, 7
        %s439 = smul.addr %s436, 8
        %s440 = sadd.s32 %s438, %s439
        %s441 = smul.addr %s440, 4
        %s442 = scalar_lea.vmem %s12, %s441
        %s443 = smul.u32 8, %s30
        %s445 = smul.u32 %s30, 128
        %s446 = sld [smem:[#allocation4 + %s445]]
        %s447 = scvt.s32.f32 %s446
        %s448 = sadd.s32 %s445, 1
        %s449 = sld [smem:[#allocation4 + %s448]]
        %s450 = scvt.s32.f32 %s449
        %v451 = vlaneseq
        %v452 = vand.u32 %v451, 127
        %v453 = vadd.s32 %v452, 128
        %v454 = vadd.s32 %v452, 256
        %v455 = vadd.s32 %v452, 384
        %v456 = vadd.s32 %v452, 512
        %v457 = vadd.s32 %v452, 640
        %v458 = vadd.s32 %v452, 768
        %v459 = vadd.s32 %v452, 896
        %v460 = vcvt.s32.f32 %v452
        %v461 = vcvt.s32.f32 %v453
        %v462 = vcvt.s32.f32 %v454
        %v463 = vcvt.s32.f32 %v455
        %v464 = vcvt.s32.f32 %v456
        %v465 = vcvt.s32.f32 %v457
        %v466 = vcvt.s32.f32 %v458
        %v467 = vcvt.s32.f32 %v459
        %v468 = vstv %s450
        %v469 = vadd.f32 %v468, %v460
        %v470 = vadd.f32 %v468, %v461
        %v471 = vadd.f32 %v468, %v462
        %v472 = vadd.f32 %v468, %v463
        %v473 = vadd.f32 %v468, %v464
        %v474 = vadd.f32 %v468, %v465
        %v475 = vadd.f32 %v468, %v466
        %v476 = vadd.f32 %v468, %v467
        %v477 = vrcp.pop 32.0
        %v478 = vmul.f32 %v469, %v477
        %v479 = vmul.f32 %v470, %v477
        %v480 = vmul.f32 %v471, %v477
        %v481 = vmul.f32 %v472, %v477
        %v482 = vmul.f32 %v473, %v477
        %v483 = vmul.f32 %v474, %v477
        %v484 = vmul.f32 %v475, %v477
        %v485 = vmul.f32 %v476, %v477
        %v486 = vfloor.f32 %v478
        %v487 = vfloor.f32 %v479
        %v488 = vfloor.f32 %v480
        %v489 = vfloor.f32 %v481
        %v490 = vfloor.f32 %v482
        %v491 = vfloor.f32 %v483
        %v492 = vfloor.f32 %v484
        %v493 = vfloor.f32 %v485
        %v494 = vmul.f32 %v486, 32.0
        %v495 = vmul.f32 %v487, 32.0
        %v496 = vmul.f32 %v488, 32.0
        %v497 = vmul.f32 %v489, 32.0
        %v498 = vmul.f32 %v490, 32.0
        %v499 = vmul.f32 %v491, 32.0
        %v500 = vmul.f32 %v492, 32.0
        %v501 = vmul.f32 %v493, 32.0
        %v502 = vsub.f32 %v469, %v494
        %v503 = vsub.f32 %v470, %v495
        %v504 = vsub.f32 %v471, %v496
        %v505 = vsub.f32 %v472, %v497
        %v506 = vsub.f32 %v473, %v498
        %v507 = vsub.f32 %v474, %v499
        %v508 = vsub.f32 %v475, %v500
        %v509 = vsub.f32 %v476, %v501
        %v510 = vstv %s447
        %v511 = vadd.f32 %v510, %v486
        %v512 = vadd.f32 %v510, %v487
        %v513 = vadd.f32 %v510, %v488
        %v514 = vadd.f32 %v510, %v489
        %v515 = vadd.f32 %v510, %v490
        %v516 = vadd.f32 %v510, %v491
        %v517 = vadd.f32 %v510, %v492
        %v518 = vadd.f32 %v510, %v493
        %v519 = vadd.f32 %v502, 0.5
        %v520 = vadd.f32 %v503, 0.5
        %v521 = vadd.f32 %v504, 0.5
        %v522 = vadd.f32 %v505, 0.5
        %v523 = vadd.f32 %v506, 0.5
        %v524 = vadd.f32 %v507, 0.5
        %v525 = vadd.f32 %v508, 0.5
        %v526 = vadd.f32 %v509, 0.5
        %v527 = vmul.f32 %v519, %v477
        %v528 = vmul.f32 %v520, %v477
        %v529 = vmul.f32 %v521, %v477
        %v530 = vmul.f32 %v522, %v477
        %v531 = vmul.f32 %v523, %v477
        %v532 = vmul.f32 %v524, %v477
        %v533 = vmul.f32 %v525, %v477
        %v534 = vmul.f32 %v526, %v477
        %v535 = vmul.f32 %v527, 2.0
        %v536 = vmul.f32 %v528, 2.0
        %v537 = vmul.f32 %v529, 2.0
        %v538 = vmul.f32 %v530, 2.0
        %v539 = vmul.f32 %v531, 2.0
        %v540 = vmul.f32 %v532, 2.0
        %v541 = vmul.f32 %v533, 2.0
        %v542 = vmul.f32 %v534, 2.0
        %v543 = vsub.f32 %v535, 1.0
        %v544 = vsub.f32 %v536, 1.0
        %v545 = vsub.f32 %v537, 1.0
        %v546 = vsub.f32 %v538, 1.0
        %v547 = vsub.f32 %v539, 1.0
        %v548 = vsub.f32 %v540, 1.0
        %v549 = vsub.f32 %v541, 1.0
        %v550 = vsub.f32 %v542, 1.0
        %v551 = vadd.f32 %v511, 0.5
        %v552 = vadd.f32 %v512, 0.5
        %v553 = vadd.f32 %v513, 0.5
        %v554 = vadd.f32 %v514, 0.5
        %v555 = vadd.f32 %v515, 0.5
        %v556 = vadd.f32 %v516, 0.5
        %v557 = vadd.f32 %v517, 0.5
        %v558 = vadd.f32 %v518, 0.5
        %v559 = vmul.f32 %v551, %v477
        %v560 = vmul.f32 %v552, %v477
        %v561 = vmul.f32 %v553, %v477
        %v562 = vmul.f32 %v554, %v477
        %v563 = vmul.f32 %v555, %v477
        %v564 = vmul.f32 %v556, %v477
        %v565 = vmul.f32 %v557, %v477
        %v566 = vmul.f32 %v558, %v477
        %v567 = vmul.f32 %v559, 2.0
        %v568 = vmul.f32 %v560, 2.0
        %v569 = vmul.f32 %v561, 2.0
        %v570 = vmul.f32 %v562, 2.0
        %v571 = vmul.f32 %v563, 2.0
        %v572 = vmul.f32 %v564, 2.0
        %v573 = vmul.f32 %v565, 2.0
        %v574 = vmul.f32 %v566, 2.0
        %v575 = vsub.f32 %v567, 1.0
        %v576 = vsub.f32 %v568, 1.0
        %v577 = vsub.f32 %v569, 1.0
        %v578 = vsub.f32 %v570, 1.0
        %v579 = vsub.f32 %v571, 1.0
        %v580 = vsub.f32 %v572, 1.0
        %v581 = vsub.f32 %v573, 1.0
        %v582 = vsub.f32 %v574, 1.0
        %s583 = smul.u32 %s29, 128
        %s584 = sld [smem:[#allocation2 + %s583]]
        %s585 = sadd.s32 %s583, 1
        %s586 = sld [smem:[#allocation2 + %s585]]
        %s587 = sadd.s32 %s583, 2
        %s588 = sld [smem:[#allocation2 + %s587]]
        %s589 = sadd.s32 %s583, 3
        %s590 = sld [smem:[#allocation2 + %s589]]
        %s591 = sadd.s32 %s583, 4
        %s592 = sld [smem:[#allocation2 + %s591]]
        %s593 = sadd.s32 %s583, 5
        %s594 = sld [smem:[#allocation2 + %s593]]
        %s595 = sadd.s32 %s583, 6
        %s596 = sld [smem:[#allocation2 + %s595]]
        %s597 = sadd.s32 %s583, 7
        %s598 = sld [smem:[#allocation2 + %s597]]
        %s599 = sadd.s32 %s583, 8
        %s600 = sld [smem:[#allocation2 + %s599]]
        %v601 = vstv %s584
        %v602 = vmul.f32 %v601, %v543
        %v603 = vmul.f32 %v601, %v544
        %v604 = vmul.f32 %v601, %v545
        %v605 = vmul.f32 %v601, %v546
        %v606 = vmul.f32 %v601, %v547
        %v607 = vmul.f32 %v601, %v548
        %v608 = vmul.f32 %v601, %v549
        %v609 = vmul.f32 %v601, %v550
        %v610 = vstv %s586
        %v611 = vmul.f32 %v610, %v575
        %v612 = vmul.f32 %v610, %v576
        %v613 = vmul.f32 %v610, %v577
        %v614 = vmul.f32 %v610, %v578
        %v615 = vmul.f32 %v610, %v579
        %v616 = vmul.f32 %v610, %v580
        %v617 = vmul.f32 %v610, %v581
        %v618 = vmul.f32 %v610, %v582
        %v619 = vadd.f32 %v602, %v611
        %v620 = vadd.f32 %v603, %v612
        %v621 = vadd.f32 %v604, %v613
        %v622 = vadd.f32 %v605, %v614
        %v623 = vadd.f32 %v606, %v615
        %v624 = vadd.f32 %v607, %v616
        %v625 = vadd.f32 %v608, %v617
        %v626 = vadd.f32 %v609, %v618
        %v627 = vstv %s588
        %v628 = vadd.f32 %v619, %v627
        %v629 = vadd.f32 %v620, %v627
        %v630 = vadd.f32 %v621, %v627
        %v631 = vadd.f32 %v622, %v627
        %v632 = vadd.f32 %v623, %v627
        %v633 = vadd.f32 %v624, %v627
        %v634 = vadd.f32 %v625, %v627
        %v635 = vadd.f32 %v626, %v627
        %v636 = vstv %s590
        %v637 = vmul.f32 %v636, %v543
        %v638 = vmul.f32 %v636, %v544
        %v639 = vmul.f32 %v636, %v545
        %v640 = vmul.f32 %v636, %v546
        %v641 = vmul.f32 %v636, %v547
        %v642 = vmul.f32 %v636, %v548
        %v643 = vmul.f32 %v636, %v549
        %v644 = vmul.f32 %v636, %v550
        %v645 = vstv %s592
        %v646 = vmul.f32 %v645, %v575
        %v647 = vmul.f32 %v645, %v576
        %v648 = vmul.f32 %v645, %v577
        %v649 = vmul.f32 %v645, %v578
        %v650 = vmul.f32 %v645, %v579
        %v651 = vmul.f32 %v645, %v580
        %v652 = vmul.f32 %v645, %v581
        %v653 = vmul.f32 %v645, %v582
        %v654 = vadd.f32 %v637, %v646
        %v655 = vadd.f32 %v638, %v647
        %v656 = vadd.f32 %v639, %v648
        %v657 = vadd.f32 %v640, %v649
        %v658 = vadd.f32 %v641, %v650
        %v659 = vadd.f32 %v642, %v651
        %v660 = vadd.f32 %v643, %v652
        %v661 = vadd.f32 %v644, %v653
        %v662 = vstv %s594
        %v663 = vadd.f32 %v654, %v662
        %v664 = vadd.f32 %v655, %v662
        %v665 = vadd.f32 %v656, %v662
        %v666 = vadd.f32 %v657, %v662
        %v667 = vadd.f32 %v658, %v662
        %v668 = vadd.f32 %v659, %v662
        %v669 = vadd.f32 %v660, %v662
        %v670 = vadd.f32 %v661, %v662
        %v671 = vstv %s596
        %v672 = vmul.f32 %v671, %v543
        %v673 = vmul.f32 %v671, %v544
        %v674 = vmul.f32 %v671, %v545
        %v675 = vmul.f32 %v671, %v546
        %v676 = vmul.f32 %v671, %v547
        %v677 = vmul.f32 %v671, %v548
        %v678 = vmul.f32 %v671, %v549
        %v679 = vmul.f32 %v671, %v550
        %v680 = vstv %s598
        %v681 = vmul.f32 %v680, %v575
        %v682 = vmul.f32 %v680, %v576
        %v683 = vmul.f32 %v680, %v577
        %v684 = vmul.f32 %v680, %v578
        %v685 = vmul.f32 %v680, %v579
        %v686 = vmul.f32 %v680, %v580
        %v687 = vmul.f32 %v680, %v581
        %v688 = vmul.f32 %v680, %v582
        %v689 = vadd.f32 %v672, %v681
        %v690 = vadd.f32 %v673, %v682
        %v691 = vadd.f32 %v674, %v683
        %v692 = vadd.f32 %v675, %v684
        %v693 = vadd.f32 %v676, %v685
        %v694 = vadd.f32 %v677, %v686
        %v695 = vadd.f32 %v678, %v687
        %v696 = vadd.f32 %v679, %v688
        %v697 = vstv %s600
        %v698 = vadd.f32 %v689, %v697
        %v699 = vadd.f32 %v690, %v697
        %v700 = vadd.f32 %v691, %v697
        %v701 = vadd.f32 %v692, %v697
        %v702 = vadd.f32 %v693, %v697
        %v703 = vadd.f32 %v694, %v697
        %v704 = vadd.f32 %v695, %v697
        %v705 = vadd.f32 %v696, %v697
        %v706 = vrcp.pop %v698
        %v707 = vmul.f32 1.0, %v706
        %v708 = vrcp.pop %v699
        %v709 = vmul.f32 1.0, %v708
        %v710 = vrcp.pop %v700
        %v711 = vmul.f32 1.0, %v710
        %v712 = vrcp.pop %v701
        %v713 = vmul.f32 1.0, %v712
        %v714 = vrcp.pop %v702
        %v715 = vmul.f32 1.0, %v714
        %v716 = vrcp.pop %v703
        %v717 = vmul.f32 1.0, %v716
        %v718 = vrcp.pop %v704
        %v719 = vmul.f32 1.0, %v718
        %v720 = vrcp.pop %v705
        %v721 = vmul.f32 1.0, %v720
        %v722 = vmul.f32 %v628, %v707
        %v723 = vmul.f32 %v629, %v709
        %v724 = vmul.f32 %v630, %v711
        %v725 = vmul.f32 %v631, %v713
        %v726 = vmul.f32 %v632, %v715
        %v727 = vmul.f32 %v633, %v717
        %v728 = vmul.f32 %v634, %v719
        %v729 = vmul.f32 %v635, %v721
        %v730 = vmul.f32 %v663, %v707
        %v731 = vmul.f32 %v664, %v709
        %v732 = vmul.f32 %v665, %v711
        %v733 = vmul.f32 %v666, %v713
        %v734 = vmul.f32 %v667, %v715
        %v735 = vmul.f32 %v668, %v717
        %v736 = vmul.f32 %v669, %v719
        %v737 = vmul.f32 %v670, %v721
        %v738 = vlaneseq
        %v739 = vshrl.u32 %v738, 7
        %v740 = vshll.u32 1, %v739
        %v741 = vcvt.s32.f32 %v740
        %v742 = vmul.f32 %v741, 3.1415927
        %v743 = vmul.f32 %v722, %v742
        %v744 = vmul.f32 %v723, %v742
        %v745 = vmul.f32 %v724, %v742
        %v746 = vmul.f32 %v725, %v742
        %v747 = vmul.f32 %v726, %v742
        %v748 = vmul.f32 %v727, %v742
        %v749 = vmul.f32 %v728, %v742
        %v750 = vmul.f32 %v729, %v742
        %v751 = vmul.f32 %v730, %v742
        %v752 = vmul.f32 %v731, %v742
        %v753 = vmul.f32 %v732, %v742
        %v754 = vmul.f32 %v733, %v742
        %v755 = vmul.f32 %v734, %v742
        %v756 = vmul.f32 %v735, %v742
        %v757 = vmul.f32 %v736, %v742
        %v758 = vmul.f32 %v737, %v742
        %v767 = vrot.slane %v751, 4
        %v768 = vrot.slane %v752, 4
        %v769 = vrot.slane %v753, 4
        %v770 = vrot.slane %v754, 4
        %v771 = vrot.slane %v755, 4
        %v772 = vrot.slane %v756, 4
        %v773 = vrot.slane %v757, 4
        %v774 = vrot.slane %v758, 4
        %vm783 = vcmask 1043456
        %v784 = vsel %vm783, %v743, %v767
        %v785 = vsel %vm783, %v744, %v768
        %v786 = vsel %vm783, %v745, %v769
        %v787 = vsel %vm783, %v746, %v770
        %v788 = vsel %vm783, %v747, %v771
        %v789 = vsel %vm783, %v748, %v772
        %v790 = vsel %vm783, %v749, %v773
        %v791 = vsel %vm783, %v750, %v774
        %v792 = vand.u32 2147483647, %v784
        %vm793 = vcmp.le.f32.partialorder %v792, 0.7853982
        %vm794 = vcmp.lt.s32.totalorder %v784, 0
        %v795 = vand.u32 %v784, 2139095040
        %v796 = vshrl.u32 %v795, 23
        %v797 = vsub.s32 %v796, 127
        %v798 = vand.u32 2147483647, %v784
        %v799 = vand.u32 %v798, 8388607
        %v800 = vor.u32 %v799, 8388608
        %v801 = vsub.s32 0, %v800
        %v802 = vadd.s32 %v797, 1
        %vm803 = vcmp.gt.s32.totalorder %v802, 0
        %v804 = vsel %vm803, %v802, 0
        %v805 = vshrl.u32 %v804, 5
        %v806 = vand.u32 %v804, 31
        %v807 = vsub.s32 32, %v806
        %v808 = vshrl.u32 683565275, %v807
        %v809 = vshll.u32 683565275, %v806
        %v810 = vshrl.u32 2475754826, %v807
        %v811 = vor.u32 %v809, %v810
        %v812 = vshll.u32 2475754826, %v806
        %v813 = vshrl.u32 2131351028, %v807
        %v814 = vor.u32 %v812, %v813
        %v815 = vshll.u32 2131351028, %v806
        %v816 = vshrl.u32 2102212464, %v807
        %v817 = vor.u32 %v815, %v816
        %v818 = vshll.u32 2102212464, %v806
        %v819 = vshrl.u32 920167782, %v807
        %v820 = vor.u32 %v818, %v819
        %v821 = vshll.u32 920167782, %v806
        %v822 = vshrl.u32 1326507024, %v807
        %v823 = vor.u32 %v821, %v822
        %vm824 = vcmp.lt.s32.totalorder %v805, 1
        %vm825 = vcmp.lt.s32.totalorder %v805, 2
        %vm826 = vcmp.lt.s32.totalorder %v805, 3
        %vm827 = vcmp.lt.s32.totalorder %v805, 4
        %v828 = vsel %vm824, %v808, %v811
        %v829 = vsel %vm827, %v817, 2102212464
        %v830 = vsel %vm826, %v814, %v829
        %v831 = vsel %vm825, %v828, %v830
        %v832 = vsel %vm824, %v811, %v814
        %v833 = vsel %vm827, %v820, 920167782
        %v834 = vsel %vm826, %v817, %v833
        %v835 = vsel %vm825, %v832, %v834
        %v836 = vsel %vm824, %v814, %v817
        %v837 = vsel %vm827, %v823, 1326507024
        %v838 = vsel %vm826, %v820, %v837
        %v839 = vsel %vm825, %v836, %v838
        %v840 = vshll.u32 %v800, 8
        %v841 = vmul.u32.u64.compose %v840, %v839
        %v842 = vextract.low.u32 %v841
        %v843 = vextract.high.u32 %v841
        %v844 = vmul.u32.u64.compose %v840, %v835
        %v845 = vextract.low.u32 %v844
        %v846 = vextract.high.u32 %v844
        %v847 = vmul.u32 %v840, %v831
        %v848 = vadd.s32 %v843, %v845
        %vm849 = vc.u32 %v843, %v845
        %v850 = vadd.s32 %v846, 1
        %v851 = vsel %vm849, %v850, %v846
        %v852 = vadd.s32 %v847, %v851
        %v853 = vadd.s32 %v852, 536870912
        %v854 = vshrl.u32 %v853, 30
        %v855 = vshll.u32 %v854, 30
        %v856 = vsub.s32 %v852, %v855
        %vm857 = vcmp.lt.s32.totalorder %v856, 0
        %v858 = vsub.s32 0, %v856
        %v859 = vsel %vm857, %v858, %v856
        %v860 = vclz %v859
        %v861 = vsub.s32 %v860, 2
        %vm862 = vcmp.gt.s32.totalorder 0, %v861
        %v863 = vsel %vm862, 0, %v861
        %v864 = vsub.s32 32, %v863
        %v865 = vshll.u32 %v856, %v863
        %v866 = vshrl.u32 %v848, %v864
        %v867 = vor.u32 %v865, %v866
        %v868 = vsub.s32 4294967266, %v863
        %v869 = vadd.s32 %v868, 127
        %v870 = vshll.u32 %v869, 23
        %v871 = vor.u32 4788187, %v870
        %v872 = vand.u32 2147483647, %v871
        %v874 = vcvt.s32.f32 %v867
        %v875 = vmul.f32 %v874, %v872
        %v876 = vxor.u32 %v875, 2147483648
        %v877 = vsel %vm794, %v876, %v875
        %v878 = vsub.s32 4, %v854
        %v879 = vsel %vm794, %v878, %v854
        %v880 = vsel %vm793, %v784, %v877
        %v881 = vsel %vm793, 0, %v879
        %v882 = vcosq.f32.pop %v880
        %v883 = vsinq.f32.pop %v880
        %vm884 = vweird.f32 %v784
        %v885 = vadd.s32 %v881, 3
        %v886 = vand.u32 %v885, 3
        %vm887 = vcmp.lt.s32.totalorder %v886, 2
        %vm888 = vcmp.eq.s32.totalorder %v886, 0
        %v889 = vxor.u32 %v883, 2147483648
        %v890 = vsel %vm888, %v882, %v889
        %vm891 = vcmp.eq.s32.totalorder %v886, 2
        %v892 = vxor.u32 %v882, 2147483648
        %v893 = vsel %vm891, %v892, %v883
        %v894 = vsel %vm887, %v890, %v893
        %v895 = vsel %vm884, nan, %v894
        %v896 = vand.u32 2147483647, %v785
        %vm897 = vcmp.le.f32.partialorder %v896, 0.7853982
        %vm898 = vcmp.lt.s32.totalorder %v785, 0
        %v899 = vand.u32 %v785, 2139095040
        %v900 = vshrl.u32 %v899, 23
        %v901 = vsub.s32 %v900, 127
        %v902 = vand.u32 2147483647, %v785
        %v903 = vand.u32 %v902, 8388607
        %v904 = vor.u32 %v903, 8388608
        %v905 = vsub.s32 0, %v904
        %v906 = vadd.s32 %v901, 1
        %vm907 = vcmp.gt.s32.totalorder %v906, 0
        %v908 = vsel %vm907, %v906, 0
        %v909 = vshrl.u32 %v908, 5
        %v910 = vand.u32 %v908, 31
        %v911 = vsub.s32 32, %v910
        %v912 = vshrl.u32 683565275, %v911
        %v913 = vshll.u32 683565275, %v910
        %v914 = vshrl.u32 2475754826, %v911
        %v915 = vor.u32 %v913, %v914
        %v916 = vshll.u32 2475754826, %v910
        %v917 = vshrl.u32 2131351028, %v911
        %v918 = vor.u32 %v916, %v917
        %v919 = vshll.u32 2131351028, %v910
        %v920 = vshrl.u32 2102212464, %v911
        %v921 = vor.u32 %v919, %v920
        %v922 = vshll.u32 2102212464, %v910
        %v923 = vshrl.u32 920167782, %v911
        %v924 = vor.u32 %v922, %v923
        %v925 = vshll.u32 920167782, %v910
        %v926 = vshrl.u32 1326507024, %v911
        %v927 = vor.u32 %v925, %v926
        %vm928 = vcmp.lt.s32.totalorder %v909, 1
        %vm929 = vcmp.lt.s32.totalorder %v909, 2
        %vm930 = vcmp.lt.s32.totalorder %v909, 3
        %vm931 = vcmp.lt.s32.totalorder %v909, 4
        %v932 = vsel %vm928, %v912, %v915
        %v933 = vsel %vm931, %v921, 2102212464
        %v934 = vsel %vm930, %v918, %v933
        %v935 = vsel %vm929, %v932, %v934
        %v936 = vsel %vm928, %v915, %v918
        %v937 = vsel %vm931, %v924, 920167782
        %v938 = vsel %vm930, %v921, %v937
        %v939 = vsel %vm929, %v936, %v938
        %v940 = vsel %vm928, %v918, %v921
        %v941 = vsel %vm931, %v927, 1326507024
        %v942 = vsel %vm930, %v924, %v941
        %v943 = vsel %vm929, %v940, %v942
        %v944 = vshll.u32 %v904, 8
        %v945 = vmul.u32.u64.compose %v944, %v943
        %v946 = vextract.low.u32 %v945
        %v947 = vextract.high.u32 %v945
        %v948 = vmul.u32.u64.compose %v944, %v939
        %v949 = vextract.low.u32 %v948
        %v950 = vextract.high.u32 %v948
        %v951 = vmul.u32 %v944, %v935
        %v952 = vadd.s32 %v947, %v949
        %vm953 = vc.u32 %v947, %v949
        %v954 = vadd.s32 %v950, 1
        %v955 = vsel %vm953, %v954, %v950
        %v956 = vadd.s32 %v951, %v955
        %v957 = vadd.s32 %v956, 536870912
        %v958 = vshrl.u32 %v957, 30
        %v959 = vshll.u32 %v958, 30
        %v960 = vsub.s32 %v956, %v959
        %vm961 = vcmp.lt.s32.totalorder %v960, 0
        %v962 = vsub.s32 0, %v960
        %v963 = vsel %vm961, %v962, %v960
        %v964 = vclz %v963
        %v965 = vsub.s32 %v964, 2
        %vm966 = vcmp.gt.s32.totalorder 0, %v965
        %v967 = vsel %vm966, 0, %v965
        %v968 = vsub.s32 32, %v967
        %v969 = vshll.u32 %v960, %v967
        %v970 = vshrl.u32 %v952, %v968
        %v971 = vor.u32 %v969, %v970
        %v972 = vsub.s32 4294967266, %v967
        %v973 = vadd.s32 %v972, 127
        %v974 = vshll.u32 %v973, 23
        %v975 = vor.u32 4788187, %v974
        %v976 = vand.u32 2147483647, %v975
        %v978 = vcvt.s32.f32 %v971
        %v979 = vmul.f32 %v978, %v976
        %v980 = vxor.u32 %v979, 2147483648
        %v981 = vsel %vm898, %v980, %v979
        %v982 = vsub.s32 4, %v958
        %v983 = vsel %vm898, %v982, %v958
        %v984 = vsel %vm897, %v785, %v981
        %v985 = vsel %vm897, 0, %v983
        %v986 = vcosq.f32.pop %v984
        %v987 = vsinq.f32.pop %v984
        %vm988 = vweird.f32 %v785
        %v989 = vadd.s32 %v985, 3
        %v990 = vand.u32 %v989, 3
        %vm991 = vcmp.lt.s32.totalorder %v990, 2
        %vm992 = vcmp.eq.s32.totalorder %v990, 0
        %v993 = vxor.u32 %v987, 2147483648
        %v994 = vsel %vm992, %v986, %v993
        %vm995 = vcmp.eq.s32.totalorder %v990, 2
        %v996 = vxor.u32 %v986, 2147483648
        %v997 = vsel %vm995, %v996, %v987
        %v998 = vsel %vm991, %v994, %v997
        %v999 = vsel %vm988, nan, %v998
        %v1000 = vand.u32 2147483647, %v786
        %vm1001 = vcmp.le.f32.partialorder %v1000, 0.7853982
        %vm1002 = vcmp.lt.s32.totalorder %v786, 0
        %v1003 = vand.u32 %v786, 2139095040
        %v1004 = vshrl.u32 %v1003, 23
        %v1005 = vsub.s32 %v1004, 127
        %v1006 = vand.u32 2147483647, %v786
        %v1007 = vand.u32 %v1006, 8388607
        %v1008 = vor.u32 %v1007, 8388608
        %v1009 = vsub.s32 0, %v1008
        %v1010 = vadd.s32 %v1005, 1
        %vm1011 = vcmp.gt.s32.totalorder %v1010, 0
        %v1012 = vsel %vm1011, %v1010, 0
        %v1013 = vshrl.u32 %v1012, 5
        %v1014 = vand.u32 %v1012, 31
        %v1015 = vsub.s32 32, %v1014
        %v1016 = vshrl.u32 683565275, %v1015
        %v1017 = vshll.u32 683565275, %v1014
        %v1018 = vshrl.u32 2475754826, %v1015
        %v1019 = vor.u32 %v1017, %v1018
        %v1020 = vshll.u32 2475754826, %v1014
        %v1021 = vshrl.u32 2131351028, %v1015
        %v1022 = vor.u32 %v1020, %v1021
        %v1023 = vshll.u32 2131351028, %v1014
        %v1024 = vshrl.u32 2102212464, %v1015
        %v1025 = vor.u32 %v1023, %v1024
        %v1026 = vshll.u32 2102212464, %v1014
        %v1027 = vshrl.u32 920167782, %v1015
        %v1028 = vor.u32 %v1026, %v1027
        %v1029 = vshll.u32 920167782, %v1014
        %v1030 = vshrl.u32 1326507024, %v1015
        %v1031 = vor.u32 %v1029, %v1030
        %vm1032 = vcmp.lt.s32.totalorder %v1013, 1
        %vm1033 = vcmp.lt.s32.totalorder %v1013, 2
        %vm1034 = vcmp.lt.s32.totalorder %v1013, 3
        %vm1035 = vcmp.lt.s32.totalorder %v1013, 4
        %v1036 = vsel %vm1032, %v1016, %v1019
        %v1037 = vsel %vm1035, %v1025, 2102212464
        %v1038 = vsel %vm1034, %v1022, %v1037
        %v1039 = vsel %vm1033, %v1036, %v1038
        %v1040 = vsel %vm1032, %v1019, %v1022
        %v1041 = vsel %vm1035, %v1028, 920167782
        %v1042 = vsel %vm1034, %v1025, %v1041
        %v1043 = vsel %vm1033, %v1040, %v1042
        %v1044 = vsel %vm1032, %v1022, %v1025
        %v1045 = vsel %vm1035, %v1031, 1326507024
        %v1046 = vsel %vm1034, %v1028, %v1045
        %v1047 = vsel %vm1033, %v1044, %v1046
        %v1048 = vshll.u32 %v1008, 8
        %v1049 = vmul.u32.u64.compose %v1048, %v1047
        %v1050 = vextract.low.u32 %v1049
        %v1051 = vextract.high.u32 %v1049
        %v1052 = vmul.u32.u64.compose %v1048, %v1043
        %v1053 = vextract.low.u32 %v1052
        %v1054 = vextract.high.u32 %v1052
        %v1055 = vmul.u32 %v1048, %v1039
        %v1056 = vadd.s32 %v1051, %v1053
        %vm1057 = vc.u32 %v1051, %v1053
        %v1058 = vadd.s32 %v1054, 1
        %v1059 = vsel %vm1057, %v1058, %v1054
        %v1060 = vadd.s32 %v1055, %v1059
        %v1061 = vadd.s32 %v1060, 536870912
        %v1062 = vshrl.u32 %v1061, 30
        %v1063 = vshll.u32 %v1062, 30
        %v1064 = vsub.s32 %v1060, %v1063
        %vm1065 = vcmp.lt.s32.totalorder %v1064, 0
        %v1066 = vsub.s32 0, %v1064
        %v1067 = vsel %vm1065, %v1066, %v1064
        %v1068 = vclz %v1067
        %v1069 = vsub.s32 %v1068, 2
        %vm1070 = vcmp.gt.s32.totalorder 0, %v1069
        %v1071 = vsel %vm1070, 0, %v1069
        %v1072 = vsub.s32 32, %v1071
        %v1073 = vshll.u32 %v1064, %v1071
        %v1074 = vshrl.u32 %v1056, %v1072
        %v1075 = vor.u32 %v1073, %v1074
        %v1076 = vsub.s32 4294967266, %v1071
        %v1077 = vadd.s32 %v1076, 127
        %v1078 = vshll.u32 %v1077, 23
        %v1079 = vor.u32 4788187, %v1078
        %v1080 = vand.u32 2147483647, %v1079
        %v1082 = vcvt.s32.f32 %v1075
        %v1083 = vmul.f32 %v1082, %v1080
        %v1084 = vxor.u32 %v1083, 2147483648
        %v1085 = vsel %vm1002, %v1084, %v1083
        %v1086 = vsub.s32 4, %v1062
        %v1087 = vsel %vm1002, %v1086, %v1062
        %v1088 = vsel %vm1001, %v786, %v1085
        %v1089 = vsel %vm1001, 0, %v1087
        %v1090 = vcosq.f32.pop %v1088
        %v1091 = vsinq.f32.pop %v1088
        %vm1092 = vweird.f32 %v786
        %v1093 = vadd.s32 %v1089, 3
        %v1094 = vand.u32 %v1093, 3
        %vm1095 = vcmp.lt.s32.totalorder %v1094, 2
        %vm1096 = vcmp.eq.s32.totalorder %v1094, 0
        %v1097 = vxor.u32 %v1091, 2147483648
        %v1098 = vsel %vm1096, %v1090, %v1097
        %vm1099 = vcmp.eq.s32.totalorder %v1094, 2
        %v1100 = vxor.u32 %v1090, 2147483648
        %v1101 = vsel %vm1099, %v1100, %v1091
        %v1102 = vsel %vm1095, %v1098, %v1101
        %v1103 = vsel %vm1092, nan, %v1102
        %v1104 = vand.u32 2147483647, %v787
        %vm1105 = vcmp.le.f32.partialorder %v1104, 0.7853982
        %vm1106 = vcmp.lt.s32.totalorder %v787, 0
        %v1107 = vand.u32 %v787, 2139095040
        %v1108 = vshrl.u32 %v1107, 23
        %v1109 = vsub.s32 %v1108, 127
        %v1110 = vand.u32 2147483647, %v787
        %v1111 = vand.u32 %v1110, 8388607
        %v1112 = vor.u32 %v1111, 8388608
        %v1113 = vsub.s32 0, %v1112
        %v1114 = vadd.s32 %v1109, 1
        %vm1115 = vcmp.gt.s32.totalorder %v1114, 0
        %v1116 = vsel %vm1115, %v1114, 0
        %v1117 = vshrl.u32 %v1116, 5
        %v1118 = vand.u32 %v1116, 31
        %v1119 = vsub.s32 32, %v1118
        %v1120 = vshrl.u32 683565275, %v1119
        %v1121 = vshll.u32 683565275, %v1118
        %v1122 = vshrl.u32 2475754826, %v1119
        %v1123 = vor.u32 %v1121, %v1122
        %v1124 = vshll.u32 2475754826, %v1118
        %v1125 = vshrl.u32 2131351028, %v1119
        %v1126 = vor.u32 %v1124, %v1125
        %v1127 = vshll.u32 2131351028, %v1118
        %v1128 = vshrl.u32 2102212464, %v1119
        %v1129 = vor.u32 %v1127, %v1128
        %v1130 = vshll.u32 2102212464, %v1118
        %v1131 = vshrl.u32 920167782, %v1119
        %v1132 = vor.u32 %v1130, %v1131
        %v1133 = vshll.u32 920167782, %v1118
        %v1134 = vshrl.u32 1326507024, %v1119
        %v1135 = vor.u32 %v1133, %v1134
        %vm1136 = vcmp.lt.s32.totalorder %v1117, 1
        %vm1137 = vcmp.lt.s32.totalorder %v1117, 2
        %vm1138 = vcmp.lt.s32.totalorder %v1117, 3
        %vm1139 = vcmp.lt.s32.totalorder %v1117, 4
        %v1140 = vsel %vm1136, %v1120, %v1123
        %v1141 = vsel %vm1139, %v1129, 2102212464
        %v1142 = vsel %vm1138, %v1126, %v1141
        %v1143 = vsel %vm1137, %v1140, %v1142
        %v1144 = vsel %vm1136, %v1123, %v1126
        %v1145 = vsel %vm1139, %v1132, 920167782
        %v1146 = vsel %vm1138, %v1129, %v1145
        %v1147 = vsel %vm1137, %v1144, %v1146
        %v1148 = vsel %vm1136, %v1126, %v1129
        %v1149 = vsel %vm1139, %v1135, 1326507024
        %v1150 = vsel %vm1138, %v1132, %v1149
        %v1151 = vsel %vm1137, %v1148, %v1150
        %v1152 = vshll.u32 %v1112, 8
        %v1153 = vmul.u32.u64.compose %v1152, %v1151
        %v1154 = vextract.low.u32 %v1153
        %v1155 = vextract.high.u32 %v1153
        %v1156 = vmul.u32.u64.compose %v1152, %v1147
        %v1157 = vextract.low.u32 %v1156
        %v1158 = vextract.high.u32 %v1156
        %v1159 = vmul.u32 %v1152, %v1143
        %v1160 = vadd.s32 %v1155, %v1157
        %vm1161 = vc.u32 %v1155, %v1157
        %v1162 = vadd.s32 %v1158, 1
        %v1163 = vsel %vm1161, %v1162, %v1158
        %v1164 = vadd.s32 %v1159, %v1163
        %v1165 = vadd.s32 %v1164, 536870912
        %v1166 = vshrl.u32 %v1165, 30
        %v1167 = vshll.u32 %v1166, 30
        %v1168 = vsub.s32 %v1164, %v1167
        %vm1169 = vcmp.lt.s32.totalorder %v1168, 0
        %v1170 = vsub.s32 0, %v1168
        %v1171 = vsel %vm1169, %v1170, %v1168
        %v1172 = vclz %v1171
        %v1173 = vsub.s32 %v1172, 2
        %vm1174 = vcmp.gt.s32.totalorder 0, %v1173
        %v1175 = vsel %vm1174, 0, %v1173
        %v1176 = vsub.s32 32, %v1175
        %v1177 = vshll.u32 %v1168, %v1175
        %v1178 = vshrl.u32 %v1160, %v1176
        %v1179 = vor.u32 %v1177, %v1178
        %v1180 = vsub.s32 4294967266, %v1175
        %v1181 = vadd.s32 %v1180, 127
        %v1182 = vshll.u32 %v1181, 23
        %v1183 = vor.u32 4788187, %v1182
        %v1184 = vand.u32 2147483647, %v1183
        %v1186 = vcvt.s32.f32 %v1179
        %v1187 = vmul.f32 %v1186, %v1184
        %v1188 = vxor.u32 %v1187, 2147483648
        %v1189 = vsel %vm1106, %v1188, %v1187
        %v1190 = vsub.s32 4, %v1166
        %v1191 = vsel %vm1106, %v1190, %v1166
        %v1192 = vsel %vm1105, %v787, %v1189
        %v1193 = vsel %vm1105, 0, %v1191
        %v1194 = vcosq.f32.pop %v1192
        %v1195 = vsinq.f32.pop %v1192
        %vm1196 = vweird.f32 %v787
        %v1197 = vadd.s32 %v1193, 3
        %v1198 = vand.u32 %v1197, 3
        %vm1199 = vcmp.lt.s32.totalorder %v1198, 2
        %vm1200 = vcmp.eq.s32.totalorder %v1198, 0
        %v1201 = vxor.u32 %v1195, 2147483648
        %v1202 = vsel %vm1200, %v1194, %v1201
        %vm1203 = vcmp.eq.s32.totalorder %v1198, 2
        %v1204 = vxor.u32 %v1194, 2147483648
        %v1205 = vsel %vm1203, %v1204, %v1195
        %v1206 = vsel %vm1199, %v1202, %v1205
        %v1207 = vsel %vm1196, nan, %v1206
        %v1208 = vand.u32 2147483647, %v788
        %vm1209 = vcmp.le.f32.partialorder %v1208, 0.7853982
        %vm1210 = vcmp.lt.s32.totalorder %v788, 0
        %v1211 = vand.u32 %v788, 2139095040
        %v1212 = vshrl.u32 %v1211, 23
        %v1213 = vsub.s32 %v1212, 127
        %v1214 = vand.u32 2147483647, %v788
        %v1215 = vand.u32 %v1214, 8388607
        %v1216 = vor.u32 %v1215, 8388608
        %v1217 = vsub.s32 0, %v1216
        %v1218 = vadd.s32 %v1213, 1
        %vm1219 = vcmp.gt.s32.totalorder %v1218, 0
        %v1220 = vsel %vm1219, %v1218, 0
        %v1221 = vshrl.u32 %v1220, 5
        %v1222 = vand.u32 %v1220, 31
        %v1223 = vsub.s32 32, %v1222
        %v1224 = vshrl.u32 683565275, %v1223
        %v1225 = vshll.u32 683565275, %v1222
        %v1226 = vshrl.u32 2475754826, %v1223
        %v1227 = vor.u32 %v1225, %v1226
        %v1228 = vshll.u32 2475754826, %v1222
        %v1229 = vshrl.u32 2131351028, %v1223
        %v1230 = vor.u32 %v1228, %v1229
        %v1231 = vshll.u32 2131351028, %v1222
        %v1232 = vshrl.u32 2102212464, %v1223
        %v1233 = vor.u32 %v1231, %v1232
        %v1234 = vshll.u32 2102212464, %v1222
        %v1235 = vshrl.u32 920167782, %v1223
        %v1236 = vor.u32 %v1234, %v1235
        %v1237 = vshll.u32 920167782, %v1222
        %v1238 = vshrl.u32 1326507024, %v1223
        %v1239 = vor.u32 %v1237, %v1238
        %vm1240 = vcmp.lt.s32.totalorder %v1221, 1
        %vm1241 = vcmp.lt.s32.totalorder %v1221, 2
        %vm1242 = vcmp.lt.s32.totalorder %v1221, 3
        %vm1243 = vcmp.lt.s32.totalorder %v1221, 4
        %v1244 = vsel %vm1240, %v1224, %v1227
        %v1245 = vsel %vm1243, %v1233, 2102212464
        %v1246 = vsel %vm1242, %v1230, %v1245
        %v1247 = vsel %vm1241, %v1244, %v1246
        %v1248 = vsel %vm1240, %v1227, %v1230
        %v1249 = vsel %vm1243, %v1236, 920167782
        %v1250 = vsel %vm1242, %v1233, %v1249
        %v1251 = vsel %vm1241, %v1248, %v1250
        %v1252 = vsel %vm1240, %v1230, %v1233
        %v1253 = vsel %vm1243, %v1239, 1326507024
        %v1254 = vsel %vm1242, %v1236, %v1253
        %v1255 = vsel %vm1241, %v1252, %v1254
        %v1256 = vshll.u32 %v1216, 8
        %v1257 = vmul.u32.u64.compose %v1256, %v1255
        %v1258 = vextract.low.u32 %v1257
        %v1259 = vextract.high.u32 %v1257
        %v1260 = vmul.u32.u64.compose %v1256, %v1251
        %v1261 = vextract.low.u32 %v1260
        %v1262 = vextract.high.u32 %v1260
        %v1263 = vmul.u32 %v1256, %v1247
        %v1264 = vadd.s32 %v1259, %v1261
        %vm1265 = vc.u32 %v1259, %v1261
        %v1266 = vadd.s32 %v1262, 1
        %v1267 = vsel %vm1265, %v1266, %v1262
        %v1268 = vadd.s32 %v1263, %v1267
        %v1269 = vadd.s32 %v1268, 536870912
        %v1270 = vshrl.u32 %v1269, 30
        %v1271 = vshll.u32 %v1270, 30
        %v1272 = vsub.s32 %v1268, %v1271
        %vm1273 = vcmp.lt.s32.totalorder %v1272, 0
        %v1274 = vsub.s32 0, %v1272
        %v1275 = vsel %vm1273, %v1274, %v1272
        %v1276 = vclz %v1275
        %v1277 = vsub.s32 %v1276, 2
        %vm1278 = vcmp.gt.s32.totalorder 0, %v1277
        %v1279 = vsel %vm1278, 0, %v1277
        %v1280 = vsub.s32 32, %v1279
        %v1281 = vshll.u32 %v1272, %v1279
        %v1282 = vshrl.u32 %v1264, %v1280
        %v1283 = vor.u32 %v1281, %v1282
        %v1284 = vsub.s32 4294967266, %v1279
        %v1285 = vadd.s32 %v1284, 127
        %v1286 = vshll.u32 %v1285, 23
        %v1287 = vor.u32 4788187, %v1286
        %v1288 = vand.u32 2147483647, %v1287
        %v1290 = vcvt.s32.f32 %v1283
        %v1291 = vmul.f32 %v1290, %v1288
        %v1292 = vxor.u32 %v1291, 2147483648
        %v1293 = vsel %vm1210, %v1292, %v1291
        %v1294 = vsub.s32 4, %v1270
        %v1295 = vsel %vm1210, %v1294, %v1270
        %v1296 = vsel %vm1209, %v788, %v1293
        %v1297 = vsel %vm1209, 0, %v1295
        %v1298 = vcosq.f32.pop %v1296
        %v1299 = vsinq.f32.pop %v1296
        %vm1300 = vweird.f32 %v788
        %v1301 = vadd.s32 %v1297, 3
        %v1302 = vand.u32 %v1301, 3
        %vm1303 = vcmp.lt.s32.totalorder %v1302, 2
        %vm1304 = vcmp.eq.s32.totalorder %v1302, 0
        %v1305 = vxor.u32 %v1299, 2147483648
        %v1306 = vsel %vm1304, %v1298, %v1305
        %vm1307 = vcmp.eq.s32.totalorder %v1302, 2
        %v1308 = vxor.u32 %v1298, 2147483648
        %v1309 = vsel %vm1307, %v1308, %v1299
        %v1310 = vsel %vm1303, %v1306, %v1309
        %v1311 = vsel %vm1300, nan, %v1310
        %v1312 = vand.u32 2147483647, %v789
        %vm1313 = vcmp.le.f32.partialorder %v1312, 0.7853982
        %vm1314 = vcmp.lt.s32.totalorder %v789, 0
        %v1315 = vand.u32 %v789, 2139095040
        %v1316 = vshrl.u32 %v1315, 23
        %v1317 = vsub.s32 %v1316, 127
        %v1318 = vand.u32 2147483647, %v789
        %v1319 = vand.u32 %v1318, 8388607
        %v1320 = vor.u32 %v1319, 8388608
        %v1321 = vsub.s32 0, %v1320
        %v1322 = vadd.s32 %v1317, 1
        %vm1323 = vcmp.gt.s32.totalorder %v1322, 0
        %v1324 = vsel %vm1323, %v1322, 0
        %v1325 = vshrl.u32 %v1324, 5
        %v1326 = vand.u32 %v1324, 31
        %v1327 = vsub.s32 32, %v1326
        %v1328 = vshrl.u32 683565275, %v1327
        %v1329 = vshll.u32 683565275, %v1326
        %v1330 = vshrl.u32 2475754826, %v1327
        %v1331 = vor.u32 %v1329, %v1330
        %v1332 = vshll.u32 2475754826, %v1326
        %v1333 = vshrl.u32 2131351028, %v1327
        %v1334 = vor.u32 %v1332, %v1333
        %v1335 = vshll.u32 2131351028, %v1326
        %v1336 = vshrl.u32 2102212464, %v1327
        %v1337 = vor.u32 %v1335, %v1336
        %v1338 = vshll.u32 2102212464, %v1326
        %v1339 = vshrl.u32 920167782, %v1327
        %v1340 = vor.u32 %v1338, %v1339
        %v1341 = vshll.u32 920167782, %v1326
        %v1342 = vshrl.u32 1326507024, %v1327
        %v1343 = vor.u32 %v1341, %v1342
        %vm1344 = vcmp.lt.s32.totalorder %v1325, 1
        %vm1345 = vcmp.lt.s32.totalorder %v1325, 2
        %vm1346 = vcmp.lt.s32.totalorder %v1325, 3
        %vm1347 = vcmp.lt.s32.totalorder %v1325, 4
        %v1348 = vsel %vm1344, %v1328, %v1331
        %v1349 = vsel %vm1347, %v1337, 2102212464
        %v1350 = vsel %vm1346, %v1334, %v1349
        %v1351 = vsel %vm1345, %v1348, %v1350
        %v1352 = vsel %vm1344, %v1331, %v1334
        %v1353 = vsel %vm1347, %v1340, 920167782
        %v1354 = vsel %vm1346, %v1337, %v1353
        %v1355 = vsel %vm1345, %v1352, %v1354
        %v1356 = vsel %vm1344, %v1334, %v1337
        %v1357 = vsel %vm1347, %v1343, 1326507024
        %v1358 = vsel %vm1346, %v1340, %v1357
        %v1359 = vsel %vm1345, %v1356, %v1358
        %v1360 = vshll.u32 %v1320, 8
        %v1361 = vmul.u32.u64.compose %v1360, %v1359
        %v1362 = vextract.low.u32 %v1361
        %v1363 = vextract.high.u32 %v1361
        %v1364 = vmul.u32.u64.compose %v1360, %v1355
        %v1365 = vextract.low.u32 %v1364
        %v1366 = vextract.high.u32 %v1364
        %v1367 = vmul.u32 %v1360, %v1351
        %v1368 = vadd.s32 %v1363, %v1365
        %vm1369 = vc.u32 %v1363, %v1365
        %v1370 = vadd.s32 %v1366, 1
        %v1371 = vsel %vm1369, %v1370, %v1366
        %v1372 = vadd.s32 %v1367, %v1371
        %v1373 = vadd.s32 %v1372, 536870912
        %v1374 = vshrl.u32 %v1373, 30
        %v1375 = vshll.u32 %v1374, 30
        %v1376 = vsub.s32 %v1372, %v1375
        %vm1377 = vcmp.lt.s32.totalorder %v1376, 0
        %v1378 = vsub.s32 0, %v1376
        %v1379 = vsel %vm1377, %v1378, %v1376
        %v1380 = vclz %v1379
        %v1381 = vsub.s32 %v1380, 2
        %vm1382 = vcmp.gt.s32.totalorder 0, %v1381
        %v1383 = vsel %vm1382, 0, %v1381
        %v1384 = vsub.s32 32, %v1383
        %v1385 = vshll.u32 %v1376, %v1383
        %v1386 = vshrl.u32 %v1368, %v1384
        %v1387 = vor.u32 %v1385, %v1386
        %v1388 = vsub.s32 4294967266, %v1383
        %v1389 = vadd.s32 %v1388, 127
        %v1390 = vshll.u32 %v1389, 23
        %v1391 = vor.u32 4788187, %v1390
        %v1392 = vand.u32 2147483647, %v1391
        %v1394 = vcvt.s32.f32 %v1387
        %v1395 = vmul.f32 %v1394, %v1392
        %v1396 = vxor.u32 %v1395, 2147483648
        %v1397 = vsel %vm1314, %v1396, %v1395
        %v1398 = vsub.s32 4, %v1374
        %v1399 = vsel %vm1314, %v1398, %v1374
        %v1400 = vsel %vm1313, %v789, %v1397
        %v1401 = vsel %vm1313, 0, %v1399
        %v1402 = vcosq.f32.pop %v1400
        %v1403 = vsinq.f32.pop %v1400
        %vm1404 = vweird.f32 %v789
        %v1405 = vadd.s32 %v1401, 3
        %v1406 = vand.u32 %v1405, 3
        %vm1407 = vcmp.lt.s32.totalorder %v1406, 2
        %vm1408 = vcmp.eq.s32.totalorder %v1406, 0
        %v1409 = vxor.u32 %v1403, 2147483648
        %v1410 = vsel %vm1408, %v1402, %v1409
        %vm1411 = vcmp.eq.s32.totalorder %v1406, 2
        %v1412 = vxor.u32 %v1402, 2147483648
        %v1413 = vsel %vm1411, %v1412, %v1403
        %v1414 = vsel %vm1407, %v1410, %v1413
        %v1415 = vsel %vm1404, nan, %v1414
        %v1416 = vand.u32 2147483647, %v790
        %vm1417 = vcmp.le.f32.partialorder %v1416, 0.7853982
        %vm1418 = vcmp.lt.s32.totalorder %v790, 0
        %v1419 = vand.u32 %v790, 2139095040
        %v1420 = vshrl.u32 %v1419, 23
        %v1421 = vsub.s32 %v1420, 127
        %v1422 = vand.u32 2147483647, %v790
        %v1423 = vand.u32 %v1422, 8388607
        %v1424 = vor.u32 %v1423, 8388608
        %v1425 = vsub.s32 0, %v1424
        %v1426 = vadd.s32 %v1421, 1
        %vm1427 = vcmp.gt.s32.totalorder %v1426, 0
        %v1428 = vsel %vm1427, %v1426, 0
        %v1429 = vshrl.u32 %v1428, 5
        %v1430 = vand.u32 %v1428, 31
        %v1431 = vsub.s32 32, %v1430
        %v1432 = vshrl.u32 683565275, %v1431
        %v1433 = vshll.u32 683565275, %v1430
        %v1434 = vshrl.u32 2475754826, %v1431
        %v1435 = vor.u32 %v1433, %v1434
        %v1436 = vshll.u32 2475754826, %v1430
        %v1437 = vshrl.u32 2131351028, %v1431
        %v1438 = vor.u32 %v1436, %v1437
        %v1439 = vshll.u32 2131351028, %v1430
        %v1440 = vshrl.u32 2102212464, %v1431
        %v1441 = vor.u32 %v1439, %v1440
        %v1442 = vshll.u32 2102212464, %v1430
        %v1443 = vshrl.u32 920167782, %v1431
        %v1444 = vor.u32 %v1442, %v1443
        %v1445 = vshll.u32 920167782, %v1430
        %v1446 = vshrl.u32 1326507024, %v1431
        %v1447 = vor.u32 %v1445, %v1446
        %vm1448 = vcmp.lt.s32.totalorder %v1429, 1
        %vm1449 = vcmp.lt.s32.totalorder %v1429, 2
        %vm1450 = vcmp.lt.s32.totalorder %v1429, 3
        %vm1451 = vcmp.lt.s32.totalorder %v1429, 4
        %v1452 = vsel %vm1448, %v1432, %v1435
        %v1453 = vsel %vm1451, %v1441, 2102212464
        %v1454 = vsel %vm1450, %v1438, %v1453
        %v1455 = vsel %vm1449, %v1452, %v1454
        %v1456 = vsel %vm1448, %v1435, %v1438
        %v1457 = vsel %vm1451, %v1444, 920167782
        %v1458 = vsel %vm1450, %v1441, %v1457
        %v1459 = vsel %vm1449, %v1456, %v1458
        %v1460 = vsel %vm1448, %v1438, %v1441
        %v1461 = vsel %vm1451, %v1447, 1326507024
        %v1462 = vsel %vm1450, %v1444, %v1461
        %v1463 = vsel %vm1449, %v1460, %v1462
        %v1464 = vshll.u32 %v1424, 8
        %v1465 = vmul.u32.u64.compose %v1464, %v1463
        %v1466 = vextract.low.u32 %v1465
        %v1467 = vextract.high.u32 %v1465
        %v1468 = vmul.u32.u64.compose %v1464, %v1459
        %v1469 = vextract.low.u32 %v1468
        %v1470 = vextract.high.u32 %v1468
        %v1471 = vmul.u32 %v1464, %v1455
        %v1472 = vadd.s32 %v1467, %v1469
        %vm1473 = vc.u32 %v1467, %v1469
        %v1474 = vadd.s32 %v1470, 1
        %v1475 = vsel %vm1473, %v1474, %v1470
        %v1476 = vadd.s32 %v1471, %v1475
        %v1477 = vadd.s32 %v1476, 536870912
        %v1478 = vshrl.u32 %v1477, 30
        %v1479 = vshll.u32 %v1478, 30
        %v1480 = vsub.s32 %v1476, %v1479
        %vm1481 = vcmp.lt.s32.totalorder %v1480, 0
        %v1482 = vsub.s32 0, %v1480
        %v1483 = vsel %vm1481, %v1482, %v1480
        %v1484 = vclz %v1483
        %v1485 = vsub.s32 %v1484, 2
        %vm1486 = vcmp.gt.s32.totalorder 0, %v1485
        %v1487 = vsel %vm1486, 0, %v1485
        %v1488 = vsub.s32 32, %v1487
        %v1489 = vshll.u32 %v1480, %v1487
        %v1490 = vshrl.u32 %v1472, %v1488
        %v1491 = vor.u32 %v1489, %v1490
        %v1492 = vsub.s32 4294967266, %v1487
        %v1493 = vadd.s32 %v1492, 127
        %v1494 = vshll.u32 %v1493, 23
        %v1495 = vor.u32 4788187, %v1494
        %v1496 = vand.u32 2147483647, %v1495
        %v1498 = vcvt.s32.f32 %v1491
        %v1499 = vmul.f32 %v1498, %v1496
        %v1500 = vxor.u32 %v1499, 2147483648
        %v1501 = vsel %vm1418, %v1500, %v1499
        %v1502 = vsub.s32 4, %v1478
        %v1503 = vsel %vm1418, %v1502, %v1478
        %v1504 = vsel %vm1417, %v790, %v1501
        %v1505 = vsel %vm1417, 0, %v1503
        %v1506 = vcosq.f32.pop %v1504
        %v1507 = vsinq.f32.pop %v1504
        %vm1508 = vweird.f32 %v790
        %v1509 = vadd.s32 %v1505, 3
        %v1510 = vand.u32 %v1509, 3
        %vm1511 = vcmp.lt.s32.totalorder %v1510, 2
        %vm1512 = vcmp.eq.s32.totalorder %v1510, 0
        %v1513 = vxor.u32 %v1507, 2147483648
        %v1514 = vsel %vm1512, %v1506, %v1513
        %vm1515 = vcmp.eq.s32.totalorder %v1510, 2
        %v1516 = vxor.u32 %v1506, 2147483648
        %v1517 = vsel %vm1515, %v1516, %v1507
        %v1518 = vsel %vm1511, %v1514, %v1517
        %v1519 = vsel %vm1508, nan, %v1518
        %v1520 = vand.u32 2147483647, %v791
        %vm1521 = vcmp.le.f32.partialorder %v1520, 0.7853982
        %vm1522 = vcmp.lt.s32.totalorder %v791, 0
        %v1523 = vand.u32 %v791, 2139095040
        %v1524 = vshrl.u32 %v1523, 23
        %v1525 = vsub.s32 %v1524, 127
        %v1526 = vand.u32 2147483647, %v791
        %v1527 = vand.u32 %v1526, 8388607
        %v1528 = vor.u32 %v1527, 8388608
        %v1529 = vsub.s32 0, %v1528
        %v1530 = vadd.s32 %v1525, 1
        %vm1531 = vcmp.gt.s32.totalorder %v1530, 0
        %v1532 = vsel %vm1531, %v1530, 0
        %v1533 = vshrl.u32 %v1532, 5
        %v1534 = vand.u32 %v1532, 31
        %v1535 = vsub.s32 32, %v1534
        %v1536 = vshrl.u32 683565275, %v1535
        %v1537 = vshll.u32 683565275, %v1534
        %v1538 = vshrl.u32 2475754826, %v1535
        %v1539 = vor.u32 %v1537, %v1538
        %v1540 = vshll.u32 2475754826, %v1534
        %v1541 = vshrl.u32 2131351028, %v1535
        %v1542 = vor.u32 %v1540, %v1541
        %v1543 = vshll.u32 2131351028, %v1534
        %v1544 = vshrl.u32 2102212464, %v1535
        %v1545 = vor.u32 %v1543, %v1544
        %v1546 = vshll.u32 2102212464, %v1534
        %v1547 = vshrl.u32 920167782, %v1535
        %v1548 = vor.u32 %v1546, %v1547
        %v1549 = vshll.u32 920167782, %v1534
        %v1550 = vshrl.u32 1326507024, %v1535
        %v1551 = vor.u32 %v1549, %v1550
        %vm1552 = vcmp.lt.s32.totalorder %v1533, 1
        %vm1553 = vcmp.lt.s32.totalorder %v1533, 2
        %vm1554 = vcmp.lt.s32.totalorder %v1533, 3
        %vm1555 = vcmp.lt.s32.totalorder %v1533, 4
        %v1556 = vsel %vm1552, %v1536, %v1539
        %v1557 = vsel %vm1555, %v1545, 2102212464
        %v1558 = vsel %vm1554, %v1542, %v1557
        %v1559 = vsel %vm1553, %v1556, %v1558
        %v1560 = vsel %vm1552, %v1539, %v1542
        %v1561 = vsel %vm1555, %v1548, 920167782
        %v1562 = vsel %vm1554, %v1545, %v1561
        %v1563 = vsel %vm1553, %v1560, %v1562
        %v1564 = vsel %vm1552, %v1542, %v1545
        %v1565 = vsel %vm1555, %v1551, 1326507024
        %v1566 = vsel %vm1554, %v1548, %v1565
        %v1567 = vsel %vm1553, %v1564, %v1566
        %v1568 = vshll.u32 %v1528, 8
        %v1569 = vmul.u32.u64.compose %v1568, %v1567
        %v1570 = vextract.low.u32 %v1569
        %v1571 = vextract.high.u32 %v1569
        %v1572 = vmul.u32.u64.compose %v1568, %v1563
        %v1573 = vextract.low.u32 %v1572
        %v1574 = vextract.high.u32 %v1572
        %v1575 = vmul.u32 %v1568, %v1559
        %v1576 = vadd.s32 %v1571, %v1573
        %vm1577 = vc.u32 %v1571, %v1573
        %v1578 = vadd.s32 %v1574, 1
        %v1579 = vsel %vm1577, %v1578, %v1574
        %v1580 = vadd.s32 %v1575, %v1579
        %v1581 = vadd.s32 %v1580, 536870912
        %v1582 = vshrl.u32 %v1581, 30
        %v1583 = vshll.u32 %v1582, 30
        %v1584 = vsub.s32 %v1580, %v1583
        %vm1585 = vcmp.lt.s32.totalorder %v1584, 0
        %v1586 = vsub.s32 0, %v1584
        %v1587 = vsel %vm1585, %v1586, %v1584
        %v1588 = vclz %v1587
        %v1589 = vsub.s32 %v1588, 2
        %vm1590 = vcmp.gt.s32.totalorder 0, %v1589
        %v1591 = vsel %vm1590, 0, %v1589
        %v1592 = vsub.s32 32, %v1591
        %v1593 = vshll.u32 %v1584, %v1591
        %v1594 = vshrl.u32 %v1576, %v1592
        %v1595 = vor.u32 %v1593, %v1594
        %v1596 = vsub.s32 4294967266, %v1591
        %v1597 = vadd.s32 %v1596, 127
        %v1598 = vshll.u32 %v1597, 23
        %v1599 = vor.u32 4788187, %v1598
        %v1600 = vand.u32 2147483647, %v1599
        %v1602 = vcvt.s32.f32 %v1595
        %v1603 = vmul.f32 %v1602, %v1600
        %v1604 = vxor.u32 %v1603, 2147483648
        %v1605 = vsel %vm1522, %v1604, %v1603
        %v1606 = vsub.s32 4, %v1582
        %v1607 = vsel %vm1522, %v1606, %v1582
        %v1608 = vsel %vm1521, %v791, %v1605
        %v1609 = vsel %vm1521, 0, %v1607
        %v1610 = vcosq.f32.pop %v1608
        %v1611 = vsinq.f32.pop %v1608
        %vm1612 = vweird.f32 %v791
        %v1613 = vadd.s32 %v1609, 3
        %v1614 = vand.u32 %v1613, 3
        %vm1615 = vcmp.lt.s32.totalorder %v1614, 2
        %vm1616 = vcmp.eq.s32.totalorder %v1614, 0
        %v1617 = vxor.u32 %v1611, 2147483648
        %v1618 = vsel %vm1616, %v1610, %v1617
        %vm1619 = vcmp.eq.s32.totalorder %v1614, 2
        %v1620 = vxor.u32 %v1610, 2147483648
        %v1621 = vsel %vm1619, %v1620, %v1611
        %v1622 = vsel %vm1615, %v1618, %v1621
        %v1623 = vsel %vm1612, nan, %v1622
        %v1624 = vand.u32 2147483647, %v784
        %vm1625 = vcmp.le.f32.partialorder %v1624, 0.7853982
        %vm1626 = vcmp.lt.s32.totalorder %v784, 0
        %v1627 = vand.u32 %v784, 2139095040
        %v1628 = vshrl.u32 %v1627, 23
        %v1629 = vsub.s32 %v1628, 127
        %v1630 = vand.u32 2147483647, %v784
        %v1631 = vand.u32 %v1630, 8388607
        %v1632 = vor.u32 %v1631, 8388608
        %v1633 = vsub.s32 0, %v1632
        %v1634 = vadd.s32 %v1629, 1
        %vm1635 = vcmp.gt.s32.totalorder %v1634, 0
        %v1636 = vsel %vm1635, %v1634, 0
        %v1637 = vshrl.u32 %v1636, 5
        %v1638 = vand.u32 %v1636, 31
        %v1639 = vsub.s32 32, %v1638
        %v1640 = vshrl.u32 683565275, %v1639
        %v1641 = vshll.u32 683565275, %v1638
        %v1642 = vshrl.u32 2475754826, %v1639
        %v1643 = vor.u32 %v1641, %v1642
        %v1644 = vshll.u32 2475754826, %v1638
        %v1645 = vshrl.u32 2131351028, %v1639
        %v1646 = vor.u32 %v1644, %v1645
        %v1647 = vshll.u32 2131351028, %v1638
        %v1648 = vshrl.u32 2102212464, %v1639
        %v1649 = vor.u32 %v1647, %v1648
        %v1650 = vshll.u32 2102212464, %v1638
        %v1651 = vshrl.u32 920167782, %v1639
        %v1652 = vor.u32 %v1650, %v1651
        %v1653 = vshll.u32 920167782, %v1638
        %v1654 = vshrl.u32 1326507024, %v1639
        %v1655 = vor.u32 %v1653, %v1654
        %vm1656 = vcmp.lt.s32.totalorder %v1637, 1
        %vm1657 = vcmp.lt.s32.totalorder %v1637, 2
        %vm1658 = vcmp.lt.s32.totalorder %v1637, 3
        %vm1659 = vcmp.lt.s32.totalorder %v1637, 4
        %v1660 = vsel %vm1656, %v1640, %v1643
        %v1661 = vsel %vm1659, %v1649, 2102212464
        %v1662 = vsel %vm1658, %v1646, %v1661
        %v1663 = vsel %vm1657, %v1660, %v1662
        %v1664 = vsel %vm1656, %v1643, %v1646
        %v1665 = vsel %vm1659, %v1652, 920167782
        %v1666 = vsel %vm1658, %v1649, %v1665
        %v1667 = vsel %vm1657, %v1664, %v1666
        %v1668 = vsel %vm1656, %v1646, %v1649
        %v1669 = vsel %vm1659, %v1655, 1326507024
        %v1670 = vsel %vm1658, %v1652, %v1669
        %v1671 = vsel %vm1657, %v1668, %v1670
        %v1672 = vshll.u32 %v1632, 8
        %v1673 = vmul.u32.u64.compose %v1672, %v1671
        %v1674 = vextract.low.u32 %v1673
        %v1675 = vextract.high.u32 %v1673
        %v1676 = vmul.u32.u64.compose %v1672, %v1667
        %v1677 = vextract.low.u32 %v1676
        %v1678 = vextract.high.u32 %v1676
        %v1679 = vmul.u32 %v1672, %v1663
        %v1680 = vadd.s32 %v1675, %v1677
        %vm1681 = vc.u32 %v1675, %v1677
        %v1682 = vadd.s32 %v1678, 1
        %v1683 = vsel %vm1681, %v1682, %v1678
        %v1684 = vadd.s32 %v1679, %v1683
        %v1685 = vadd.s32 %v1684, 536870912
        %v1686 = vshrl.u32 %v1685, 30
        %v1687 = vshll.u32 %v1686, 30
        %v1688 = vsub.s32 %v1684, %v1687
        %vm1689 = vcmp.lt.s32.totalorder %v1688, 0
        %v1690 = vsub.s32 0, %v1688
        %v1691 = vsel %vm1689, %v1690, %v1688
        %v1692 = vclz %v1691
        %v1693 = vsub.s32 %v1692, 2
        %vm1694 = vcmp.gt.s32.totalorder 0, %v1693
        %v1695 = vsel %vm1694, 0, %v1693
        %v1696 = vsub.s32 32, %v1695
        %v1697 = vshll.u32 %v1688, %v1695
        %v1698 = vshrl.u32 %v1680, %v1696
        %v1699 = vor.u32 %v1697, %v1698
        %v1700 = vsub.s32 4294967266, %v1695
        %v1701 = vadd.s32 %v1700, 127
        %v1702 = vshll.u32 %v1701, 23
        %v1703 = vor.u32 4788187, %v1702
        %v1704 = vand.u32 2147483647, %v1703
        %v1706 = vcvt.s32.f32 %v1699
        %v1707 = vmul.f32 %v1706, %v1704
        %v1708 = vxor.u32 %v1707, 2147483648
        %v1709 = vsel %vm1626, %v1708, %v1707
        %v1710 = vsub.s32 4, %v1686
        %v1711 = vsel %vm1626, %v1710, %v1686
        %v1712 = vsel %vm1625, %v784, %v1709
        %v1713 = vsel %vm1625, 0, %v1711
        %v1714 = vcosq.f32.pop %v1712
        %v1715 = vsinq.f32.pop %v1712
        %vm1716 = vweird.f32 %v784
        %v1717 = vand.u32 %v1713, 3
        %vm1718 = vcmp.lt.s32.totalorder %v1717, 2
        %vm1719 = vcmp.eq.s32.totalorder %v1717, 0
        %v1720 = vxor.u32 %v1715, 2147483648
        %v1721 = vsel %vm1719, %v1714, %v1720
        %vm1722 = vcmp.eq.s32.totalorder %v1717, 2
        %v1723 = vxor.u32 %v1714, 2147483648
        %v1724 = vsel %vm1722, %v1723, %v1715
        %v1725 = vsel %vm1718, %v1721, %v1724
        %v1726 = vsel %vm1716, nan, %v1725
        %v1727 = vand.u32 2147483647, %v785
        %vm1728 = vcmp.le.f32.partialorder %v1727, 0.7853982
        %vm1729 = vcmp.lt.s32.totalorder %v785, 0
        %v1730 = vand.u32 %v785, 2139095040
        %v1731 = vshrl.u32 %v1730, 23
        %v1732 = vsub.s32 %v1731, 127
        %v1733 = vand.u32 2147483647, %v785
        %v1734 = vand.u32 %v1733, 8388607
        %v1735 = vor.u32 %v1734, 8388608
        %v1736 = vsub.s32 0, %v1735
        %v1737 = vadd.s32 %v1732, 1
        %vm1738 = vcmp.gt.s32.totalorder %v1737, 0
        %v1739 = vsel %vm1738, %v1737, 0
        %v1740 = vshrl.u32 %v1739, 5
        %v1741 = vand.u32 %v1739, 31
        %v1742 = vsub.s32 32, %v1741
        %v1743 = vshrl.u32 683565275, %v1742
        %v1744 = vshll.u32 683565275, %v1741
        %v1745 = vshrl.u32 2475754826, %v1742
        %v1746 = vor.u32 %v1744, %v1745
        %v1747 = vshll.u32 2475754826, %v1741
        %v1748 = vshrl.u32 2131351028, %v1742
        %v1749 = vor.u32 %v1747, %v1748
        %v1750 = vshll.u32 2131351028, %v1741
        %v1751 = vshrl.u32 2102212464, %v1742
        %v1752 = vor.u32 %v1750, %v1751
        %v1753 = vshll.u32 2102212464, %v1741
        %v1754 = vshrl.u32 920167782, %v1742
        %v1755 = vor.u32 %v1753, %v1754
        %v1756 = vshll.u32 920167782, %v1741
        %v1757 = vshrl.u32 1326507024, %v1742
        %v1758 = vor.u32 %v1756, %v1757
        %vm1759 = vcmp.lt.s32.totalorder %v1740, 1
        %vm1760 = vcmp.lt.s32.totalorder %v1740, 2
        %vm1761 = vcmp.lt.s32.totalorder %v1740, 3
        %vm1762 = vcmp.lt.s32.totalorder %v1740, 4
        %v1763 = vsel %vm1759, %v1743, %v1746
        %v1764 = vsel %vm1762, %v1752, 2102212464
        %v1765 = vsel %vm1761, %v1749, %v1764
        %v1766 = vsel %vm1760, %v1763, %v1765
        %v1767 = vsel %vm1759, %v1746, %v1749
        %v1768 = vsel %vm1762, %v1755, 920167782
        %v1769 = vsel %vm1761, %v1752, %v1768
        %v1770 = vsel %vm1760, %v1767, %v1769
        %v1771 = vsel %vm1759, %v1749, %v1752
        %v1772 = vsel %vm1762, %v1758, 1326507024
        %v1773 = vsel %vm1761, %v1755, %v1772
        %v1774 = vsel %vm1760, %v1771, %v1773
        %v1775 = vshll.u32 %v1735, 8
        %v1776 = vmul.u32.u64.compose %v1775, %v1774
        %v1777 = vextract.low.u32 %v1776
        %v1778 = vextract.high.u32 %v1776
        %v1779 = vmul.u32.u64.compose %v1775, %v1770
        %v1780 = vextract.low.u32 %v1779
        %v1781 = vextract.high.u32 %v1779
        %v1782 = vmul.u32 %v1775, %v1766
        %v1783 = vadd.s32 %v1778, %v1780
        %vm1784 = vc.u32 %v1778, %v1780
        %v1785 = vadd.s32 %v1781, 1
        %v1786 = vsel %vm1784, %v1785, %v1781
        %v1787 = vadd.s32 %v1782, %v1786
        %v1788 = vadd.s32 %v1787, 536870912
        %v1789 = vshrl.u32 %v1788, 30
        %v1790 = vshll.u32 %v1789, 30
        %v1791 = vsub.s32 %v1787, %v1790
        %vm1792 = vcmp.lt.s32.totalorder %v1791, 0
        %v1793 = vsub.s32 0, %v1791
        %v1794 = vsel %vm1792, %v1793, %v1791
        %v1795 = vclz %v1794
        %v1796 = vsub.s32 %v1795, 2
        %vm1797 = vcmp.gt.s32.totalorder 0, %v1796
        %v1798 = vsel %vm1797, 0, %v1796
        %v1799 = vsub.s32 32, %v1798
        %v1800 = vshll.u32 %v1791, %v1798
        %v1801 = vshrl.u32 %v1783, %v1799
        %v1802 = vor.u32 %v1800, %v1801
        %v1803 = vsub.s32 4294967266, %v1798
        %v1804 = vadd.s32 %v1803, 127
        %v1805 = vshll.u32 %v1804, 23
        %v1806 = vor.u32 4788187, %v1805
        %v1807 = vand.u32 2147483647, %v1806
        %v1809 = vcvt.s32.f32 %v1802
        %v1810 = vmul.f32 %v1809, %v1807
        %v1811 = vxor.u32 %v1810, 2147483648
        %v1812 = vsel %vm1729, %v1811, %v1810
        %v1813 = vsub.s32 4, %v1789
        %v1814 = vsel %vm1729, %v1813, %v1789
        %v1815 = vsel %vm1728, %v785, %v1812
        %v1816 = vsel %vm1728, 0, %v1814
        %v1817 = vcosq.f32.pop %v1815
        %v1818 = vsinq.f32.pop %v1815
        %vm1819 = vweird.f32 %v785
        %v1820 = vand.u32 %v1816, 3
        %vm1821 = vcmp.lt.s32.totalorder %v1820, 2
        %vm1822 = vcmp.eq.s32.totalorder %v1820, 0
        %v1823 = vxor.u32 %v1818, 2147483648
        %v1824 = vsel %vm1822, %v1817, %v1823
        %vm1825 = vcmp.eq.s32.totalorder %v1820, 2
        %v1826 = vxor.u32 %v1817, 2147483648
        %v1827 = vsel %vm1825, %v1826, %v1818
        %v1828 = vsel %vm1821, %v1824, %v1827
        %v1829 = vsel %vm1819, nan, %v1828
        %v1830 = vand.u32 2147483647, %v786
        %vm1831 = vcmp.le.f32.partialorder %v1830, 0.7853982
        %vm1832 = vcmp.lt.s32.totalorder %v786, 0
        %v1833 = vand.u32 %v786, 2139095040
        %v1834 = vshrl.u32 %v1833, 23
        %v1835 = vsub.s32 %v1834, 127
        %v1836 = vand.u32 2147483647, %v786
        %v1837 = vand.u32 %v1836, 8388607
        %v1838 = vor.u32 %v1837, 8388608
        %v1839 = vsub.s32 0, %v1838
        %v1840 = vadd.s32 %v1835, 1
        %vm1841 = vcmp.gt.s32.totalorder %v1840, 0
        %v1842 = vsel %vm1841, %v1840, 0
        %v1843 = vshrl.u32 %v1842, 5
        %v1844 = vand.u32 %v1842, 31
        %v1845 = vsub.s32 32, %v1844
        %v1846 = vshrl.u32 683565275, %v1845
        %v1847 = vshll.u32 683565275, %v1844
        %v1848 = vshrl.u32 2475754826, %v1845
        %v1849 = vor.u32 %v1847, %v1848
        %v1850 = vshll.u32 2475754826, %v1844
        %v1851 = vshrl.u32 2131351028, %v1845
        %v1852 = vor.u32 %v1850, %v1851
        %v1853 = vshll.u32 2131351028, %v1844
        %v1854 = vshrl.u32 2102212464, %v1845
        %v1855 = vor.u32 %v1853, %v1854
        %v1856 = vshll.u32 2102212464, %v1844
        %v1857 = vshrl.u32 920167782, %v1845
        %v1858 = vor.u32 %v1856, %v1857
        %v1859 = vshll.u32 920167782, %v1844
        %v1860 = vshrl.u32 1326507024, %v1845
        %v1861 = vor.u32 %v1859, %v1860
        %vm1862 = vcmp.lt.s32.totalorder %v1843, 1
        %vm1863 = vcmp.lt.s32.totalorder %v1843, 2
        %vm1864 = vcmp.lt.s32.totalorder %v1843, 3
        %vm1865 = vcmp.lt.s32.totalorder %v1843, 4
        %v1866 = vsel %vm1862, %v1846, %v1849
        %v1867 = vsel %vm1865, %v1855, 2102212464
        %v1868 = vsel %vm1864, %v1852, %v1867
        %v1869 = vsel %vm1863, %v1866, %v1868
        %v1870 = vsel %vm1862, %v1849, %v1852
        %v1871 = vsel %vm1865, %v1858, 920167782
        %v1872 = vsel %vm1864, %v1855, %v1871
        %v1873 = vsel %vm1863, %v1870, %v1872
        %v1874 = vsel %vm1862, %v1852, %v1855
        %v1875 = vsel %vm1865, %v1861, 1326507024
        %v1876 = vsel %vm1864, %v1858, %v1875
        %v1877 = vsel %vm1863, %v1874, %v1876
        %v1878 = vshll.u32 %v1838, 8
        %v1879 = vmul.u32.u64.compose %v1878, %v1877
        %v1880 = vextract.low.u32 %v1879
        %v1881 = vextract.high.u32 %v1879
        %v1882 = vmul.u32.u64.compose %v1878, %v1873
        %v1883 = vextract.low.u32 %v1882
        %v1884 = vextract.high.u32 %v1882
        %v1885 = vmul.u32 %v1878, %v1869
        %v1886 = vadd.s32 %v1881, %v1883
        %vm1887 = vc.u32 %v1881, %v1883
        %v1888 = vadd.s32 %v1884, 1
        %v1889 = vsel %vm1887, %v1888, %v1884
        %v1890 = vadd.s32 %v1885, %v1889
        %v1891 = vadd.s32 %v1890, 536870912
        %v1892 = vshrl.u32 %v1891, 30
        %v1893 = vshll.u32 %v1892, 30
        %v1894 = vsub.s32 %v1890, %v1893
        %vm1895 = vcmp.lt.s32.totalorder %v1894, 0
        %v1896 = vsub.s32 0, %v1894
        %v1897 = vsel %vm1895, %v1896, %v1894
        %v1898 = vclz %v1897
        %v1899 = vsub.s32 %v1898, 2
        %vm1900 = vcmp.gt.s32.totalorder 0, %v1899
        %v1901 = vsel %vm1900, 0, %v1899
        %v1902 = vsub.s32 32, %v1901
        %v1903 = vshll.u32 %v1894, %v1901
        %v1904 = vshrl.u32 %v1886, %v1902
        %v1905 = vor.u32 %v1903, %v1904
        %v1906 = vsub.s32 4294967266, %v1901
        %v1907 = vadd.s32 %v1906, 127
        %v1908 = vshll.u32 %v1907, 23
        %v1909 = vor.u32 4788187, %v1908
        %v1910 = vand.u32 2147483647, %v1909
        %v1912 = vcvt.s32.f32 %v1905
        %v1913 = vmul.f32 %v1912, %v1910
        %v1914 = vxor.u32 %v1913, 2147483648
        %v1915 = vsel %vm1832, %v1914, %v1913
        %v1916 = vsub.s32 4, %v1892
        %v1917 = vsel %vm1832, %v1916, %v1892
        %v1918 = vsel %vm1831, %v786, %v1915
        %v1919 = vsel %vm1831, 0, %v1917
        %v1920 = vcosq.f32.pop %v1918
        %v1921 = vsinq.f32.pop %v1918
        %vm1922 = vweird.f32 %v786
        %v1923 = vand.u32 %v1919, 3
        %vm1924 = vcmp.lt.s32.totalorder %v1923, 2
        %vm1925 = vcmp.eq.s32.totalorder %v1923, 0
        %v1926 = vxor.u32 %v1921, 2147483648
        %v1927 = vsel %vm1925, %v1920, %v1926
        %vm1928 = vcmp.eq.s32.totalorder %v1923, 2
        %v1929 = vxor.u32 %v1920, 2147483648
        %v1930 = vsel %vm1928, %v1929, %v1921
        %v1931 = vsel %vm1924, %v1927, %v1930
        %v1932 = vsel %vm1922, nan, %v1931
        %v1933 = vand.u32 2147483647, %v787
        %vm1934 = vcmp.le.f32.partialorder %v1933, 0.7853982
        %vm1935 = vcmp.lt.s32.totalorder %v787, 0
        %v1936 = vand.u32 %v787, 2139095040
        %v1937 = vshrl.u32 %v1936, 23
        %v1938 = vsub.s32 %v1937, 127
        %v1939 = vand.u32 2147483647, %v787
        %v1940 = vand.u32 %v1939, 8388607
        %v1941 = vor.u32 %v1940, 8388608
        %v1942 = vsub.s32 0, %v1941
        %v1943 = vadd.s32 %v1938, 1
        %vm1944 = vcmp.gt.s32.totalorder %v1943, 0
        %v1945 = vsel %vm1944, %v1943, 0
        %v1946 = vshrl.u32 %v1945, 5
        %v1947 = vand.u32 %v1945, 31
        %v1948 = vsub.s32 32, %v1947
        %v1949 = vshrl.u32 683565275, %v1948
        %v1950 = vshll.u32 683565275, %v1947
        %v1951 = vshrl.u32 2475754826, %v1948
        %v1952 = vor.u32 %v1950, %v1951
        %v1953 = vshll.u32 2475754826, %v1947
        %v1954 = vshrl.u32 2131351028, %v1948
        %v1955 = vor.u32 %v1953, %v1954
        %v1956 = vshll.u32 2131351028, %v1947
        %v1957 = vshrl.u32 2102212464, %v1948
        %v1958 = vor.u32 %v1956, %v1957
        %v1959 = vshll.u32 2102212464, %v1947
        %v1960 = vshrl.u32 920167782, %v1948
        %v1961 = vor.u32 %v1959, %v1960
        %v1962 = vshll.u32 920167782, %v1947
        %v1963 = vshrl.u32 1326507024, %v1948
        %v1964 = vor.u32 %v1962, %v1963
        %vm1965 = vcmp.lt.s32.totalorder %v1946, 1
        %vm1966 = vcmp.lt.s32.totalorder %v1946, 2
        %vm1967 = vcmp.lt.s32.totalorder %v1946, 3
        %vm1968 = vcmp.lt.s32.totalorder %v1946, 4
        %v1969 = vsel %vm1965, %v1949, %v1952
        %v1970 = vsel %vm1968, %v1958, 2102212464
        %v1971 = vsel %vm1967, %v1955, %v1970
        %v1972 = vsel %vm1966, %v1969, %v1971
        %v1973 = vsel %vm1965, %v1952, %v1955
        %v1974 = vsel %vm1968, %v1961, 920167782
        %v1975 = vsel %vm1967, %v1958, %v1974
        %v1976 = vsel %vm1966, %v1973, %v1975
        %v1977 = vsel %vm1965, %v1955, %v1958
        %v1978 = vsel %vm1968, %v1964, 1326507024
        %v1979 = vsel %vm1967, %v1961, %v1978
        %v1980 = vsel %vm1966, %v1977, %v1979
        %v1981 = vshll.u32 %v1941, 8
        %v1982 = vmul.u32.u64.compose %v1981, %v1980
        %v1983 = vextract.low.u32 %v1982
        %v1984 = vextract.high.u32 %v1982
        %v1985 = vmul.u32.u64.compose %v1981, %v1976
        %v1986 = vextract.low.u32 %v1985
        %v1987 = vextract.high.u32 %v1985
        %v1988 = vmul.u32 %v1981, %v1972
        %v1989 = vadd.s32 %v1984, %v1986
        %vm1990 = vc.u32 %v1984, %v1986
        %v1991 = vadd.s32 %v1987, 1
        %v1992 = vsel %vm1990, %v1991, %v1987
        %v1993 = vadd.s32 %v1988, %v1992
        %v1994 = vadd.s32 %v1993, 536870912
        %v1995 = vshrl.u32 %v1994, 30
        %v1996 = vshll.u32 %v1995, 30
        %v1997 = vsub.s32 %v1993, %v1996
        %vm1998 = vcmp.lt.s32.totalorder %v1997, 0
        %v1999 = vsub.s32 0, %v1997
        %v2000 = vsel %vm1998, %v1999, %v1997
        %v2001 = vclz %v2000
        %v2002 = vsub.s32 %v2001, 2
        %vm2003 = vcmp.gt.s32.totalorder 0, %v2002
        %v2004 = vsel %vm2003, 0, %v2002
        %v2005 = vsub.s32 32, %v2004
        %v2006 = vshll.u32 %v1997, %v2004
        %v2007 = vshrl.u32 %v1989, %v2005
        %v2008 = vor.u32 %v2006, %v2007
        %v2009 = vsub.s32 4294967266, %v2004
        %v2010 = vadd.s32 %v2009, 127
        %v2011 = vshll.u32 %v2010, 23
        %v2012 = vor.u32 4788187, %v2011
        %v2013 = vand.u32 2147483647, %v2012
        %v2015 = vcvt.s32.f32 %v2008
        %v2016 = vmul.f32 %v2015, %v2013
        %v2017 = vxor.u32 %v2016, 2147483648
        %v2018 = vsel %vm1935, %v2017, %v2016
        %v2019 = vsub.s32 4, %v1995
        %v2020 = vsel %vm1935, %v2019, %v1995
        %v2021 = vsel %vm1934, %v787, %v2018
        %v2022 = vsel %vm1934, 0, %v2020
        %v2023 = vcosq.f32.pop %v2021
        %v2024 = vsinq.f32.pop %v2021
        %vm2025 = vweird.f32 %v787
        %v2026 = vand.u32 %v2022, 3
        %vm2027 = vcmp.lt.s32.totalorder %v2026, 2
        %vm2028 = vcmp.eq.s32.totalorder %v2026, 0
        %v2029 = vxor.u32 %v2024, 2147483648
        %v2030 = vsel %vm2028, %v2023, %v2029
        %vm2031 = vcmp.eq.s32.totalorder %v2026, 2
        %v2032 = vxor.u32 %v2023, 2147483648
        %v2033 = vsel %vm2031, %v2032, %v2024
        %v2034 = vsel %vm2027, %v2030, %v2033
        %v2035 = vsel %vm2025, nan, %v2034
        %v2036 = vand.u32 2147483647, %v788
        %vm2037 = vcmp.le.f32.partialorder %v2036, 0.7853982
        %vm2038 = vcmp.lt.s32.totalorder %v788, 0
        %v2039 = vand.u32 %v788, 2139095040
        %v2040 = vshrl.u32 %v2039, 23
        %v2041 = vsub.s32 %v2040, 127
        %v2042 = vand.u32 2147483647, %v788
        %v2043 = vand.u32 %v2042, 8388607
        %v2044 = vor.u32 %v2043, 8388608
        %v2045 = vsub.s32 0, %v2044
        %v2046 = vadd.s32 %v2041, 1
        %vm2047 = vcmp.gt.s32.totalorder %v2046, 0
        %v2048 = vsel %vm2047, %v2046, 0
        %v2049 = vshrl.u32 %v2048, 5
        %v2050 = vand.u32 %v2048, 31
        %v2051 = vsub.s32 32, %v2050
        %v2052 = vshrl.u32 683565275, %v2051
        %v2053 = vshll.u32 683565275, %v2050
        %v2054 = vshrl.u32 2475754826, %v2051
        %v2055 = vor.u32 %v2053, %v2054
        %v2056 = vshll.u32 2475754826, %v2050
        %v2057 = vshrl.u32 2131351028, %v2051
        %v2058 = vor.u32 %v2056, %v2057
        %v2059 = vshll.u32 2131351028, %v2050
        %v2060 = vshrl.u32 2102212464, %v2051
        %v2061 = vor.u32 %v2059, %v2060
        %v2062 = vshll.u32 2102212464, %v2050
        %v2063 = vshrl.u32 920167782, %v2051
        %v2064 = vor.u32 %v2062, %v2063
        %v2065 = vshll.u32 920167782, %v2050
        %v2066 = vshrl.u32 1326507024, %v2051
        %v2067 = vor.u32 %v2065, %v2066
        %vm2068 = vcmp.lt.s32.totalorder %v2049, 1
        %vm2069 = vcmp.lt.s32.totalorder %v2049, 2
        %vm2070 = vcmp.lt.s32.totalorder %v2049, 3
        %vm2071 = vcmp.lt.s32.totalorder %v2049, 4
        %v2072 = vsel %vm2068, %v2052, %v2055
        %v2073 = vsel %vm2071, %v2061, 2102212464
        %v2074 = vsel %vm2070, %v2058, %v2073
        %v2075 = vsel %vm2069, %v2072, %v2074
        %v2076 = vsel %vm2068, %v2055, %v2058
        %v2077 = vsel %vm2071, %v2064, 920167782
        %v2078 = vsel %vm2070, %v2061, %v2077
        %v2079 = vsel %vm2069, %v2076, %v2078
        %v2080 = vsel %vm2068, %v2058, %v2061
        %v2081 = vsel %vm2071, %v2067, 1326507024
        %v2082 = vsel %vm2070, %v2064, %v2081
        %v2083 = vsel %vm2069, %v2080, %v2082
        %v2084 = vshll.u32 %v2044, 8
        %v2085 = vmul.u32.u64.compose %v2084, %v2083
        %v2086 = vextract.low.u32 %v2085
        %v2087 = vextract.high.u32 %v2085
        %v2088 = vmul.u32.u64.compose %v2084, %v2079
        %v2089 = vextract.low.u32 %v2088
        %v2090 = vextract.high.u32 %v2088
        %v2091 = vmul.u32 %v2084, %v2075
        %v2092 = vadd.s32 %v2087, %v2089
        %vm2093 = vc.u32 %v2087, %v2089
        %v2094 = vadd.s32 %v2090, 1
        %v2095 = vsel %vm2093, %v2094, %v2090
        %v2096 = vadd.s32 %v2091, %v2095
        %v2097 = vadd.s32 %v2096, 536870912
        %v2098 = vshrl.u32 %v2097, 30
        %v2099 = vshll.u32 %v2098, 30
        %v2100 = vsub.s32 %v2096, %v2099
        %vm2101 = vcmp.lt.s32.totalorder %v2100, 0
        %v2102 = vsub.s32 0, %v2100
        %v2103 = vsel %vm2101, %v2102, %v2100
        %v2104 = vclz %v2103
        %v2105 = vsub.s32 %v2104, 2
        %vm2106 = vcmp.gt.s32.totalorder 0, %v2105
        %v2107 = vsel %vm2106, 0, %v2105
        %v2108 = vsub.s32 32, %v2107
        %v2109 = vshll.u32 %v2100, %v2107
        %v2110 = vshrl.u32 %v2092, %v2108
        %v2111 = vor.u32 %v2109, %v2110
        %v2112 = vsub.s32 4294967266, %v2107
        %v2113 = vadd.s32 %v2112, 127
        %v2114 = vshll.u32 %v2113, 23
        %v2115 = vor.u32 4788187, %v2114
        %v2116 = vand.u32 2147483647, %v2115
        %v2118 = vcvt.s32.f32 %v2111
        %v2119 = vmul.f32 %v2118, %v2116
        %v2120 = vxor.u32 %v2119, 2147483648
        %v2121 = vsel %vm2038, %v2120, %v2119
        %v2122 = vsub.s32 4, %v2098
        %v2123 = vsel %vm2038, %v2122, %v2098
        %v2124 = vsel %vm2037, %v788, %v2121
        %v2125 = vsel %vm2037, 0, %v2123
        %v2126 = vcosq.f32.pop %v2124
        %v2127 = vsinq.f32.pop %v2124
        %vm2128 = vweird.f32 %v788
        %v2129 = vand.u32 %v2125, 3
        %vm2130 = vcmp.lt.s32.totalorder %v2129, 2
        %vm2131 = vcmp.eq.s32.totalorder %v2129, 0
        %v2132 = vxor.u32 %v2127, 2147483648
        %v2133 = vsel %vm2131, %v2126, %v2132
        %vm2134 = vcmp.eq.s32.totalorder %v2129, 2
        %v2135 = vxor.u32 %v2126, 2147483648
        %v2136 = vsel %vm2134, %v2135, %v2127
        %v2137 = vsel %vm2130, %v2133, %v2136
        %v2138 = vsel %vm2128, nan, %v2137
        %v2139 = vand.u32 2147483647, %v789
        %vm2140 = vcmp.le.f32.partialorder %v2139, 0.7853982
        %vm2141 = vcmp.lt.s32.totalorder %v789, 0
        %v2142 = vand.u32 %v789, 2139095040
        %v2143 = vshrl.u32 %v2142, 23
        %v2144 = vsub.s32 %v2143, 127
        %v2145 = vand.u32 2147483647, %v789
        %v2146 = vand.u32 %v2145, 8388607
        %v2147 = vor.u32 %v2146, 8388608
        %v2148 = vsub.s32 0, %v2147
        %v2149 = vadd.s32 %v2144, 1
        %vm2150 = vcmp.gt.s32.totalorder %v2149, 0
        %v2151 = vsel %vm2150, %v2149, 0
        %v2152 = vshrl.u32 %v2151, 5
        %v2153 = vand.u32 %v2151, 31
        %v2154 = vsub.s32 32, %v2153
        %v2155 = vshrl.u32 683565275, %v2154
        %v2156 = vshll.u32 683565275, %v2153
        %v2157 = vshrl.u32 2475754826, %v2154
        %v2158 = vor.u32 %v2156, %v2157
        %v2159 = vshll.u32 2475754826, %v2153
        %v2160 = vshrl.u32 2131351028, %v2154
        %v2161 = vor.u32 %v2159, %v2160
        %v2162 = vshll.u32 2131351028, %v2153
        %v2163 = vshrl.u32 2102212464, %v2154
        %v2164 = vor.u32 %v2162, %v2163
        %v2165 = vshll.u32 2102212464, %v2153
        %v2166 = vshrl.u32 920167782, %v2154
        %v2167 = vor.u32 %v2165, %v2166
        %v2168 = vshll.u32 920167782, %v2153
        %v2169 = vshrl.u32 1326507024, %v2154
        %v2170 = vor.u32 %v2168, %v2169
        %vm2171 = vcmp.lt.s32.totalorder %v2152, 1
        %vm2172 = vcmp.lt.s32.totalorder %v2152, 2
        %vm2173 = vcmp.lt.s32.totalorder %v2152, 3
        %vm2174 = vcmp.lt.s32.totalorder %v2152, 4
        %v2175 = vsel %vm2171, %v2155, %v2158
        %v2176 = vsel %vm2174, %v2164, 2102212464
        %v2177 = vsel %vm2173, %v2161, %v2176
        %v2178 = vsel %vm2172, %v2175, %v2177
        %v2179 = vsel %vm2171, %v2158, %v2161
        %v2180 = vsel %vm2174, %v2167, 920167782
        %v2181 = vsel %vm2173, %v2164, %v2180
        %v2182 = vsel %vm2172, %v2179, %v2181
        %v2183 = vsel %vm2171, %v2161, %v2164
        %v2184 = vsel %vm2174, %v2170, 1326507024
        %v2185 = vsel %vm2173, %v2167, %v2184
        %v2186 = vsel %vm2172, %v2183, %v2185
        %v2187 = vshll.u32 %v2147, 8
        %v2188 = vmul.u32.u64.compose %v2187, %v2186
        %v2189 = vextract.low.u32 %v2188
        %v2190 = vextract.high.u32 %v2188
        %v2191 = vmul.u32.u64.compose %v2187, %v2182
        %v2192 = vextract.low.u32 %v2191
        %v2193 = vextract.high.u32 %v2191
        %v2194 = vmul.u32 %v2187, %v2178
        %v2195 = vadd.s32 %v2190, %v2192
        %vm2196 = vc.u32 %v2190, %v2192
        %v2197 = vadd.s32 %v2193, 1
        %v2198 = vsel %vm2196, %v2197, %v2193
        %v2199 = vadd.s32 %v2194, %v2198
        %v2200 = vadd.s32 %v2199, 536870912
        %v2201 = vshrl.u32 %v2200, 30
        %v2202 = vshll.u32 %v2201, 30
        %v2203 = vsub.s32 %v2199, %v2202
        %vm2204 = vcmp.lt.s32.totalorder %v2203, 0
        %v2205 = vsub.s32 0, %v2203
        %v2206 = vsel %vm2204, %v2205, %v2203
        %v2207 = vclz %v2206
        %v2208 = vsub.s32 %v2207, 2
        %vm2209 = vcmp.gt.s32.totalorder 0, %v2208
        %v2210 = vsel %vm2209, 0, %v2208
        %v2211 = vsub.s32 32, %v2210
        %v2212 = vshll.u32 %v2203, %v2210
        %v2213 = vshrl.u32 %v2195, %v2211
        %v2214 = vor.u32 %v2212, %v2213
        %v2215 = vsub.s32 4294967266, %v2210
        %v2216 = vadd.s32 %v2215, 127
        %v2217 = vshll.u32 %v2216, 23
        %v2218 = vor.u32 4788187, %v2217
        %v2219 = vand.u32 2147483647, %v2218
        %v2221 = vcvt.s32.f32 %v2214
        %v2222 = vmul.f32 %v2221, %v2219
        %v2223 = vxor.u32 %v2222, 2147483648
        %v2224 = vsel %vm2141, %v2223, %v2222
        %v2225 = vsub.s32 4, %v2201
        %v2226 = vsel %vm2141, %v2225, %v2201
        %v2227 = vsel %vm2140, %v789, %v2224
        %v2228 = vsel %vm2140, 0, %v2226
        %v2229 = vcosq.f32.pop %v2227
        %v2230 = vsinq.f32.pop %v2227
        %vm2231 = vweird.f32 %v789
        %v2232 = vand.u32 %v2228, 3
        %vm2233 = vcmp.lt.s32.totalorder %v2232, 2
        %vm2234 = vcmp.eq.s32.totalorder %v2232, 0
        %v2235 = vxor.u32 %v2230, 2147483648
        %v2236 = vsel %vm2234, %v2229, %v2235
        %vm2237 = vcmp.eq.s32.totalorder %v2232, 2
        %v2238 = vxor.u32 %v2229, 2147483648
        %v2239 = vsel %vm2237, %v2238, %v2230
        %v2240 = vsel %vm2233, %v2236, %v2239
        %v2241 = vsel %vm2231, nan, %v2240
        %v2242 = vand.u32 2147483647, %v790
        %vm2243 = vcmp.le.f32.partialorder %v2242, 0.7853982
        %vm2244 = vcmp.lt.s32.totalorder %v790, 0
        %v2245 = vand.u32 %v790, 2139095040
        %v2246 = vshrl.u32 %v2245, 23
        %v2247 = vsub.s32 %v2246, 127
        %v2248 = vand.u32 2147483647, %v790
        %v2249 = vand.u32 %v2248, 8388607
        %v2250 = vor.u32 %v2249, 8388608
        %v2251 = vsub.s32 0, %v2250
        %v2252 = vadd.s32 %v2247, 1
        %vm2253 = vcmp.gt.s32.totalorder %v2252, 0
        %v2254 = vsel %vm2253, %v2252, 0
        %v2255 = vshrl.u32 %v2254, 5
        %v2256 = vand.u32 %v2254, 31
        %v2257 = vsub.s32 32, %v2256
        %v2258 = vshrl.u32 683565275, %v2257
        %v2259 = vshll.u32 683565275, %v2256
        %v2260 = vshrl.u32 2475754826, %v2257
        %v2261 = vor.u32 %v2259, %v2260
        %v2262 = vshll.u32 2475754826, %v2256
        %v2263 = vshrl.u32 2131351028, %v2257
        %v2264 = vor.u32 %v2262, %v2263
        %v2265 = vshll.u32 2131351028, %v2256
        %v2266 = vshrl.u32 2102212464, %v2257
        %v2267 = vor.u32 %v2265, %v2266
        %v2268 = vshll.u32 2102212464, %v2256
        %v2269 = vshrl.u32 920167782, %v2257
        %v2270 = vor.u32 %v2268, %v2269
        %v2271 = vshll.u32 920167782, %v2256
        %v2272 = vshrl.u32 1326507024, %v2257
        %v2273 = vor.u32 %v2271, %v2272
        %vm2274 = vcmp.lt.s32.totalorder %v2255, 1
        %vm2275 = vcmp.lt.s32.totalorder %v2255, 2
        %vm2276 = vcmp.lt.s32.totalorder %v2255, 3
        %vm2277 = vcmp.lt.s32.totalorder %v2255, 4
        %v2278 = vsel %vm2274, %v2258, %v2261
        %v2279 = vsel %vm2277, %v2267, 2102212464
        %v2280 = vsel %vm2276, %v2264, %v2279
        %v2281 = vsel %vm2275, %v2278, %v2280
        %v2282 = vsel %vm2274, %v2261, %v2264
        %v2283 = vsel %vm2277, %v2270, 920167782
        %v2284 = vsel %vm2276, %v2267, %v2283
        %v2285 = vsel %vm2275, %v2282, %v2284
        %v2286 = vsel %vm2274, %v2264, %v2267
        %v2287 = vsel %vm2277, %v2273, 1326507024
        %v2288 = vsel %vm2276, %v2270, %v2287
        %v2289 = vsel %vm2275, %v2286, %v2288
        %v2290 = vshll.u32 %v2250, 8
        %v2291 = vmul.u32.u64.compose %v2290, %v2289
        %v2292 = vextract.low.u32 %v2291
        %v2293 = vextract.high.u32 %v2291
        %v2294 = vmul.u32.u64.compose %v2290, %v2285
        %v2295 = vextract.low.u32 %v2294
        %v2296 = vextract.high.u32 %v2294
        %v2297 = vmul.u32 %v2290, %v2281
        %v2298 = vadd.s32 %v2293, %v2295
        %vm2299 = vc.u32 %v2293, %v2295
        %v2300 = vadd.s32 %v2296, 1
        %v2301 = vsel %vm2299, %v2300, %v2296
        %v2302 = vadd.s32 %v2297, %v2301
        %v2303 = vadd.s32 %v2302, 536870912
        %v2304 = vshrl.u32 %v2303, 30
        %v2305 = vshll.u32 %v2304, 30
        %v2306 = vsub.s32 %v2302, %v2305
        %vm2307 = vcmp.lt.s32.totalorder %v2306, 0
        %v2308 = vsub.s32 0, %v2306
        %v2309 = vsel %vm2307, %v2308, %v2306
        %v2310 = vclz %v2309
        %v2311 = vsub.s32 %v2310, 2
        %vm2312 = vcmp.gt.s32.totalorder 0, %v2311
        %v2313 = vsel %vm2312, 0, %v2311
        %v2314 = vsub.s32 32, %v2313
        %v2315 = vshll.u32 %v2306, %v2313
        %v2316 = vshrl.u32 %v2298, %v2314
        %v2317 = vor.u32 %v2315, %v2316
        %v2318 = vsub.s32 4294967266, %v2313
        %v2319 = vadd.s32 %v2318, 127
        %v2320 = vshll.u32 %v2319, 23
        %v2321 = vor.u32 4788187, %v2320
        %v2322 = vand.u32 2147483647, %v2321
        %v2324 = vcvt.s32.f32 %v2317
        %v2325 = vmul.f32 %v2324, %v2322
        %v2326 = vxor.u32 %v2325, 2147483648
        %v2327 = vsel %vm2244, %v2326, %v2325
        %v2328 = vsub.s32 4, %v2304
        %v2329 = vsel %vm2244, %v2328, %v2304
        %v2330 = vsel %vm2243, %v790, %v2327
        %v2331 = vsel %vm2243, 0, %v2329
        %v2332 = vcosq.f32.pop %v2330
        %v2333 = vsinq.f32.pop %v2330
        %vm2334 = vweird.f32 %v790
        %v2335 = vand.u32 %v2331, 3
        %vm2336 = vcmp.lt.s32.totalorder %v2335, 2
        %vm2337 = vcmp.eq.s32.totalorder %v2335, 0
        %v2338 = vxor.u32 %v2333, 2147483648
        %v2339 = vsel %vm2337, %v2332, %v2338
        %vm2340 = vcmp.eq.s32.totalorder %v2335, 2
        %v2341 = vxor.u32 %v2332, 2147483648
        %v2342 = vsel %vm2340, %v2341, %v2333
        %v2343 = vsel %vm2336, %v2339, %v2342
        %v2344 = vsel %vm2334, nan, %v2343
        %v2345 = vand.u32 2147483647, %v791
        %vm2346 = vcmp.le.f32.partialorder %v2345, 0.7853982
        %vm2347 = vcmp.lt.s32.totalorder %v791, 0
        %v2348 = vand.u32 %v791, 2139095040
        %v2349 = vshrl.u32 %v2348, 23
        %v2350 = vsub.s32 %v2349, 127
        %v2351 = vand.u32 2147483647, %v791
        %v2352 = vand.u32 %v2351, 8388607
        %v2353 = vor.u32 %v2352, 8388608
        %v2354 = vsub.s32 0, %v2353
        %v2355 = vadd.s32 %v2350, 1
        %vm2356 = vcmp.gt.s32.totalorder %v2355, 0
        %v2357 = vsel %vm2356, %v2355, 0
        %v2358 = vshrl.u32 %v2357, 5
        %v2359 = vand.u32 %v2357, 31
        %v2360 = vsub.s32 32, %v2359
        %v2361 = vshrl.u32 683565275, %v2360
        %v2362 = vshll.u32 683565275, %v2359
        %v2363 = vshrl.u32 2475754826, %v2360
        %v2364 = vor.u32 %v2362, %v2363
        %v2365 = vshll.u32 2475754826, %v2359
        %v2366 = vshrl.u32 2131351028, %v2360
        %v2367 = vor.u32 %v2365, %v2366
        %v2368 = vshll.u32 2131351028, %v2359
        %v2369 = vshrl.u32 2102212464, %v2360
        %v2370 = vor.u32 %v2368, %v2369
        %v2371 = vshll.u32 2102212464, %v2359
        %v2372 = vshrl.u32 920167782, %v2360
        %v2373 = vor.u32 %v2371, %v2372
        %v2374 = vshll.u32 920167782, %v2359
        %v2375 = vshrl.u32 1326507024, %v2360
        %v2376 = vor.u32 %v2374, %v2375
        %vm2377 = vcmp.lt.s32.totalorder %v2358, 1
        %vm2378 = vcmp.lt.s32.totalorder %v2358, 2
        %vm2379 = vcmp.lt.s32.totalorder %v2358, 3
        %vm2380 = vcmp.lt.s32.totalorder %v2358, 4
        %v2381 = vsel %vm2377, %v2361, %v2364
        %v2382 = vsel %vm2380, %v2370, 2102212464
        %v2383 = vsel %vm2379, %v2367, %v2382
        %v2384 = vsel %vm2378, %v2381, %v2383
        %v2385 = vsel %vm2377, %v2364, %v2367
        %v2386 = vsel %vm2380, %v2373, 920167782
        %v2387 = vsel %vm2379, %v2370, %v2386
        %v2388 = vsel %vm2378, %v2385, %v2387
        %v2389 = vsel %vm2377, %v2367, %v2370
        %v2390 = vsel %vm2380, %v2376, 1326507024
        %v2391 = vsel %vm2379, %v2373, %v2390
        %v2392 = vsel %vm2378, %v2389, %v2391
        %v2393 = vshll.u32 %v2353, 8
        %v2394 = vmul.u32.u64.compose %v2393, %v2392
        %v2395 = vextract.low.u32 %v2394
        %v2396 = vextract.high.u32 %v2394
        %v2397 = vmul.u32.u64.compose %v2393, %v2388
        %v2398 = vextract.low.u32 %v2397
        %v2399 = vextract.high.u32 %v2397
        %v2400 = vmul.u32 %v2393, %v2384
        %v2401 = vadd.s32 %v2396, %v2398
        %vm2402 = vc.u32 %v2396, %v2398
        %v2403 = vadd.s32 %v2399, 1
        %v2404 = vsel %vm2402, %v2403, %v2399
        %v2405 = vadd.s32 %v2400, %v2404
        %v2406 = vadd.s32 %v2405, 536870912
        %v2407 = vshrl.u32 %v2406, 30
        %v2408 = vshll.u32 %v2407, 30
        %v2409 = vsub.s32 %v2405, %v2408
        %vm2410 = vcmp.lt.s32.totalorder %v2409, 0
        %v2411 = vsub.s32 0, %v2409
        %v2412 = vsel %vm2410, %v2411, %v2409
        %v2413 = vclz %v2412
        %v2414 = vsub.s32 %v2413, 2
        %vm2415 = vcmp.gt.s32.totalorder 0, %v2414
        %v2416 = vsel %vm2415, 0, %v2414
        %v2417 = vsub.s32 32, %v2416
        %v2418 = vshll.u32 %v2409, %v2416
        %v2419 = vshrl.u32 %v2401, %v2417
        %v2420 = vor.u32 %v2418, %v2419
        %v2421 = vsub.s32 4294967266, %v2416
        %v2422 = vadd.s32 %v2421, 127
        %v2423 = vshll.u32 %v2422, 23
        %v2424 = vor.u32 4788187, %v2423
        %v2425 = vand.u32 2147483647, %v2424
        %v2427 = vcvt.s32.f32 %v2420
        %v2428 = vmul.f32 %v2427, %v2425
        %v2429 = vxor.u32 %v2428, 2147483648
        %v2430 = vsel %vm2347, %v2429, %v2428
        %v2431 = vsub.s32 4, %v2407
        %v2432 = vsel %vm2347, %v2431, %v2407
        %v2433 = vsel %vm2346, %v791, %v2430
        %v2434 = vsel %vm2346, 0, %v2432
        %v2435 = vcosq.f32.pop %v2433
        %v2436 = vsinq.f32.pop %v2433
        %vm2437 = vweird.f32 %v791
        %v2438 = vand.u32 %v2434, 3
        %vm2439 = vcmp.lt.s32.totalorder %v2438, 2
        %vm2440 = vcmp.eq.s32.totalorder %v2438, 0
        %v2441 = vxor.u32 %v2436, 2147483648
        %v2442 = vsel %vm2440, %v2435, %v2441
        %vm2443 = vcmp.eq.s32.totalorder %v2438, 2
        %v2444 = vxor.u32 %v2435, 2147483648
        %v2445 = vsel %vm2443, %v2444, %v2436
        %v2446 = vsel %vm2439, %v2442, %v2445
        %v2447 = vsel %vm2437, nan, %v2446
        %v2456 = vrot.slane %v895, 6
        %v2457 = vrot.slane %v999, 6
        %v2458 = vrot.slane %v1103, 6
        %v2459 = vrot.slane %v1207, 6
        %v2460 = vrot.slane %v1311, 6
        %v2461 = vrot.slane %v1415, 6
        %v2462 = vrot.slane %v1519, 6
        %v2463 = vrot.slane %v1623, 6
        %v2480 = vrot.slane %v1726, 2
        %v2481 = vrot.slane %v1829, 2
        %v2482 = vrot.slane %v1932, 2
        %v2483 = vrot.slane %v2035, 2
        %v2484 = vrot.slane %v2138, 2
        %v2485 = vrot.slane %v2241, 2
        %v2486 = vrot.slane %v2344, 2
        %v2487 = vrot.slane %v2447, 2
        %v2496 = vrot.slane %v895, 2
        %v2497 = vrot.slane %v999, 2
        %v2498 = vrot.slane %v1103, 2
        %v2499 = vrot.slane %v1207, 2
        %v2500 = vrot.slane %v1311, 2
        %v2501 = vrot.slane %v1415, 2
        %v2502 = vrot.slane %v1519, 2
        %v2503 = vrot.slane %v1623, 2
        %v2512 = vrot.slane %v1726, 6
        %v2513 = vrot.slane %v1829, 6
        %v2514 = vrot.slane %v1932, 6
        %v2515 = vrot.slane %v2035, 6
        %v2516 = vrot.slane %v2138, 6
        %v2517 = vrot.slane %v2241, 6
        %v2518 = vrot.slane %v2344, 6
        %v2519 = vrot.slane %v2447, 6
        %vm2528 = vcmask 1040384
        %v2529 = vsel %vm2528, %v722, %v730
        %v2530 = vsel %vm2528, %v723, %v731
        %v2531 = vsel %vm2528, %v724, %v732
        %v2532 = vsel %vm2528, %v725, %v733
        %v2533 = vsel %vm2528, %v726, %v734
        %v2534 = vsel %vm2528, %v727, %v735
        %v2535 = vsel %vm2528, %v728, %v736
        %v2536 = vsel %vm2528, %v729, %v737
        %vm2537 = vcmask 1041408
        %v2538 = vsel %vm2537, %v2529, %v2456
        %v2539 = vsel %vm2537, %v2530, %v2457
        %v2540 = vsel %vm2537, %v2531, %v2458
        %v2541 = vsel %vm2537, %v2532, %v2459
        %v2542 = vsel %vm2537, %v2533, %v2460
        %v2543 = vsel %vm2537, %v2534, %v2461
        %v2544 = vsel %vm2537, %v2535, %v2462
        %v2545 = vsel %vm2537, %v2536, %v2463
        %vm2546 = vcmask 1045504
        %v2547 = vsel %vm2546, %v2538, %v2480
        %v2548 = vsel %vm2546, %v2539, %v2481
        %v2549 = vsel %vm2546, %v2540, %v2482
        %v2550 = vsel %vm2546, %v2541, %v2483
        %v2551 = vsel %vm2546, %v2542, %v2484
        %v2552 = vsel %vm2546, %v2543, %v2485
        %v2553 = vsel %vm2546, %v2544, %v2486
        %v2554 = vsel %vm2546, %v2545, %v2487
        %v2555 = vsel %vm2537, %v2480, %v2496
        %v2556 = vsel %vm2537, %v2481, %v2497
        %v2557 = vsel %vm2537, %v2482, %v2498
        %v2558 = vsel %vm2537, %v2483, %v2499
        %v2559 = vsel %vm2537, %v2484, %v2500
        %v2560 = vsel %vm2537, %v2485, %v2501
        %v2561 = vsel %vm2537, %v2486, %v2502
        %v2562 = vsel %vm2537, %v2487, %v2503
        %v2563 = vsel %vm2546, %v2555, %v2512
        %v2564 = vsel %vm2546, %v2556, %v2513
        %v2565 = vsel %vm2546, %v2557, %v2514
        %v2566 = vsel %vm2546, %v2558, %v2515
        %v2567 = vsel %vm2546, %v2559, %v2516
        %v2568 = vsel %vm2546, %v2560, %v2517
        %v2569 = vsel %vm2546, %v2561, %v2518
        %v2570 = vsel %vm2546, %v2562, %v2519
        %v2571 = vpack.c.bf16 %v2563, %v2547
        %v2572 = vpack.c.bf16 %v2564, %v2548
        %v2573 = vpack.c.bf16 %v2565, %v2549
        %v2574 = vpack.c.bf16 %v2566, %v2550
        %v2575 = vpack.c.bf16 %v2567, %v2551
        %v2576 = vpack.c.bf16 %v2568, %v2552
        %v2577 = vpack.c.bf16 %v2569, %v2553
        %v2578 = vpack.c.bf16 %v2570, %v2554
        %v2579 = vpack.c.bf16 %v2512, %v2512
        %v2580 = vpack.c.bf16 %v2513, %v2513
        %v2581 = vpack.c.bf16 %v2514, %v2514
        %v2582 = vpack.c.bf16 %v2515, %v2515
        %v2583 = vpack.c.bf16 %v2516, %v2516
        %v2584 = vpack.c.bf16 %v2517, %v2517
        %v2585 = vpack.c.bf16 %v2518, %v2518
        %v2586 = vpack.c.bf16 %v2519, %v2519
        %v2587 = vld [vmem:[%s2] sm:$0xf]
        %v2588 = vld [vmem:[%s2 + $0x4] sm:$0xf]
        %v2589 = vld [vmem:[%s2 + $0x8] sm:$0xf]
        %v2590 = vld [vmem:[%s2 + $0xc] sm:$0xf]
        %v2591 = vld [vmem:[%s2 + $0x10] sm:$0xf]
        %v2592 = vld [vmem:[%s2 + $0x14] sm:$0xf]
        %v2593 = vld [vmem:[%s2 + $0x18] sm:$0xf]
        %v2594 = vld [vmem:[%s2 + $0x1c] sm:$0xf]
        %v2595 = vld [vmem:[%s2 + $0x20] sm:$0xf]
        %v2596 = vld [vmem:[%s2 + $0x24] sm:$0xf]
        %v2597 = vld [vmem:[%s2 + $0x28] sm:$0xf]
        %v2598 = vld [vmem:[%s2 + $0x2c] sm:$0xf]
        %v2599 = vld [vmem:[%s2 + $0x30] sm:$0xf]
        %v2600 = vld [vmem:[%s2 + $0x34] sm:$0xf]
        %v2601 = vld [vmem:[%s2 + $0x38] sm:$0xf]
        %v2602 = vld [vmem:[%s2 + $0x3c] sm:$0xf]
        %v2603 = vld [vmem:[%s2 + $0x40] sm:$0xf]
        %v2604 = vld [vmem:[%s2 + $0x44] sm:$0xf]
        %v2605 = vld [vmem:[%s2 + $0x48] sm:$0xf]
        %v2606 = vld [vmem:[%s2 + $0x4c] sm:$0xf]
        %v2607 = vld [vmem:[%s2 + $0x50] sm:$0xf]
        %v2608 = vld [vmem:[%s2 + $0x54] sm:$0xf]
        %v2609 = vld [vmem:[%s2 + $0x58] sm:$0xf]
        %v2610 = vld [vmem:[%s2 + $0x5c] sm:$0xf]
        %v2611 = vld [vmem:[%s2 + $0x60] sm:$0xf]
        %v2612 = vld [vmem:[%s2 + $0x64] sm:$0xf]
        %v2613 = vld [vmem:[%s2 + $0x68] sm:$0xf]
        %v2614 = vld [vmem:[%s2 + $0x6c] sm:$0xf]
        %v2615 = vld [vmem:[%s2 + $0x70] sm:$0xf]
        %v2616 = vld [vmem:[%s2 + $0x74] sm:$0xf]
        %v2617 = vld [vmem:[%s2 + $0x78] sm:$0xf]
        %v2618 = vld [vmem:[%s2 + $0x7c] sm:$0xf]
        %v2619 = vld [vmem:[%s3] sm:$0xff]
        %v2620 = vld [vmem:[%s3 + $0x8] sm:$0xff]
        %v2621 = vld [vmem:[%s3 + $0x10] sm:$0xff]
        %v2622 = vld [vmem:[%s3 + $0x18] sm:$0xff]
        %v2623 = vld [vmem:[%s3 + $0x20] sm:$0xff]
        %v2624 = vld [vmem:[%s3 + $0x28] sm:$0xff]
        %v2625 = vld [vmem:[%s3 + $0x30] sm:$0xff]
        %v2626 = vld [vmem:[%s3 + $0x38] sm:$0xff]
        %v2627 = vld [vmem:[%s3 + $0x40] sm:$0xff]
        %v2628 = vld [vmem:[%s3 + $0x48] sm:$0xff]
        %v2629 = vld [vmem:[%s3 + $0x50] sm:$0xff]
        %v2630 = vld [vmem:[%s3 + $0x58] sm:$0xff]
        %v2631 = vld [vmem:[%s3 + $0x60] sm:$0xff]
        %v2632 = vld [vmem:[%s3 + $0x68] sm:$0xff]
        %v2633 = vld [vmem:[%s3 + $0x70] sm:$0xff]
        %v2634 = vld [vmem:[%s3 + $0x78] sm:$0xff]
        %v2635 = vld [vmem:[%s3 + $0x80] sm:$0xff]
        %v2636 = vld [vmem:[%s3 + $0x88] sm:$0xff]
        %v2637 = vld [vmem:[%s3 + $0x90] sm:$0xff]
        %v2638 = vld [vmem:[%s3 + $0x98] sm:$0xff]
        %v2639 = vld [vmem:[%s3 + $0xa0] sm:$0xff]
        %v2640 = vld [vmem:[%s3 + $0xa8] sm:$0xff]
        %v2641 = vld [vmem:[%s3 + $0xb0] sm:$0xff]
        %v2642 = vld [vmem:[%s3 + $0xb8] sm:$0xff]
        %v2643 = vld [vmem:[%s3 + $0xc0] sm:$0xff]
        %v2644 = vld [vmem:[%s3 + $0xc8] sm:$0xff]
        %v2645 = vld [vmem:[%s3 + $0xd0] sm:$0xff]
        %v2646 = vld [vmem:[%s3 + $0xd8] sm:$0xff]
        %v2647 = vld [vmem:[%s3 + $0xe0] sm:$0xff]
        %v2648 = vld [vmem:[%s3 + $0xe8] sm:$0xff]
        %v2649 = vld [vmem:[%s3 + $0xf0] sm:$0xff]
        %v2650 = vld [vmem:[%s3 + $0xf8] sm:$0xff]
        %2652 = vset.pattern.permute.xlu0 0
        %2653 = vperm.xlu0 %2652, %v2619
        %v2654 = vpop.permute.xlu0 %2653
        %2657 = vset.pattern.permute.xlu0 0
        %2658 = vperm.xlu0 %2657, %v2620
        %v2659 = vpop.permute.xlu0 %2658
        %2662 = vset.pattern.permute.xlu0 0
        %2663 = vperm.xlu0 %2662, %v2621
        %v2664 = vpop.permute.xlu0 %2663
        %2667 = vset.pattern.permute.xlu0 0
        %2668 = vperm.xlu0 %2667, %v2622
        %v2669 = vpop.permute.xlu0 %2668
        %2672 = vset.pattern.permute.xlu0 0
        %2673 = vperm.xlu0 %2672, %v2623
        %v2674 = vpop.permute.xlu0 %2673
        %2677 = vset.pattern.permute.xlu0 0
        %2678 = vperm.xlu0 %2677, %v2624
        %v2679 = vpop.permute.xlu0 %2678
        %2682 = vset.pattern.permute.xlu0 0
        %2683 = vperm.xlu0 %2682, %v2625
        %v2684 = vpop.permute.xlu0 %2683
        %2687 = vset.pattern.permute.xlu0 0
        %2688 = vperm.xlu0 %2687, %v2626
        %v2689 = vpop.permute.xlu0 %2688
        %2692 = vset.pattern.permute.xlu0 0
        %2693 = vperm.xlu0 %2692, %v2627
        %v2694 = vpop.permute.xlu0 %2693
        %2697 = vset.pattern.permute.xlu0 0
        %2698 = vperm.xlu0 %2697, %v2628
        %v2699 = vpop.permute.xlu0 %2698
        %2702 = vset.pattern.permute.xlu0 0
        %2703 = vperm.xlu0 %2702, %v2629
        %v2704 = vpop.permute.xlu0 %2703
        %2707 = vset.pattern.permute.xlu0 0
        %2708 = vperm.xlu0 %2707, %v2630
        %v2709 = vpop.permute.xlu0 %2708
        %2712 = vset.pattern.permute.xlu0 0
        %2713 = vperm.xlu0 %2712, %v2631
        %v2714 = vpop.permute.xlu0 %2713
        %2717 = vset.pattern.permute.xlu0 0
        %2718 = vperm.xlu0 %2717, %v2632
        %v2719 = vpop.permute.xlu0 %2718
        %2722 = vset.pattern.permute.xlu0 0
        %2723 = vperm.xlu0 %2722, %v2633
        %v2724 = vpop.permute.xlu0 %2723
        %2727 = vset.pattern.permute.xlu0 0
        %2728 = vperm.xlu0 %2727, %v2634
        %v2729 = vpop.permute.xlu0 %2728
        %2732 = vset.pattern.permute.xlu0 0
        %2733 = vperm.xlu0 %2732, %v2635
        %v2734 = vpop.permute.xlu0 %2733
        %2737 = vset.pattern.permute.xlu0 0
        %2738 = vperm.xlu0 %2737, %v2636
        %v2739 = vpop.permute.xlu0 %2738
        %2742 = vset.pattern.permute.xlu0 0
        %2743 = vperm.xlu0 %2742, %v2637
        %v2744 = vpop.permute.xlu0 %2743
        %2747 = vset.pattern.permute.xlu0 0
        %2748 = vperm.xlu0 %2747, %v2638
        %v2749 = vpop.permute.xlu0 %2748
        %2752 = vset.pattern.permute.xlu0 0
        %2753 = vperm.xlu0 %2752, %v2639
        %v2754 = vpop.permute.xlu0 %2753
        %2757 = vset.pattern.permute.xlu0 0
        %2758 = vperm.xlu0 %2757, %v2640
        %v2759 = vpop.permute.xlu0 %2758
        %2762 = vset.pattern.permute.xlu0 0
        %2763 = vperm.xlu0 %2762, %v2641
        %v2764 = vpop.permute.xlu0 %2763
        %2767 = vset.pattern.permute.xlu0 0
        %2768 = vperm.xlu0 %2767, %v2642
        %v2769 = vpop.permute.xlu0 %2768
        %2772 = vset.pattern.permute.xlu0 0
        %2773 = vperm.xlu0 %2772, %v2643
        %v2774 = vpop.permute.xlu0 %2773
        %2777 = vset.pattern.permute.xlu0 0
        %2778 = vperm.xlu0 %2777, %v2644
        %v2779 = vpop.permute.xlu0 %2778
        %2782 = vset.pattern.permute.xlu0 0
        %2783 = vperm.xlu0 %2782, %v2645
        %v2784 = vpop.permute.xlu0 %2783
        %2787 = vset.pattern.permute.xlu0 0
        %2788 = vperm.xlu0 %2787, %v2646
        %v2789 = vpop.permute.xlu0 %2788
        %2792 = vset.pattern.permute.xlu0 0
        %2793 = vperm.xlu0 %2792, %v2647
        %v2794 = vpop.permute.xlu0 %2793
        %2797 = vset.pattern.permute.xlu0 0
        %2798 = vperm.xlu0 %2797, %v2648
        %v2799 = vpop.permute.xlu0 %2798
        %2802 = vset.pattern.permute.xlu0 0
        %2803 = vperm.xlu0 %2802, %v2649
        %v2804 = vpop.permute.xlu0 %2803
        %2807 = vset.pattern.permute.xlu0 0
        %2808 = vperm.xlu0 %2807, %v2650
        %v2809 = vpop.permute.xlu0 %2808
        %v2843 = vunpack.c.l.b16 %v2587
        %v2844 = vunpack.c.l.b16 %v2588
        %v2845 = vunpack.c.l.b16 %v2589
        %v2846 = vunpack.c.l.b16 %v2590
        %v2847 = vunpack.c.l.b16 %v2591
        %v2848 = vunpack.c.l.b16 %v2592
        %v2849 = vunpack.c.l.b16 %v2593
        %v2850 = vunpack.c.l.b16 %v2594
        %v2851 = vunpack.c.l.b16 %v2595
        %v2852 = vunpack.c.l.b16 %v2596
        %v2853 = vunpack.c.l.b16 %v2597
        %v2854 = vunpack.c.l.b16 %v2598
        %v2855 = vunpack.c.l.b16 %v2599
        %v2856 = vunpack.c.l.b16 %v2600
        %v2857 = vunpack.c.l.b16 %v2601
        %v2858 = vunpack.c.l.b16 %v2602
        %v2859 = vunpack.c.l.b16 %v2603
        %v2860 = vunpack.c.l.b16 %v2604
        %v2861 = vunpack.c.l.b16 %v2605
        %v2862 = vunpack.c.l.b16 %v2606
        %v2863 = vunpack.c.l.b16 %v2607
        %v2864 = vunpack.c.l.b16 %v2608
        %v2865 = vunpack.c.l.b16 %v2609
        %v2866 = vunpack.c.l.b16 %v2610
        %v2867 = vunpack.c.l.b16 %v2611
        %v2868 = vunpack.c.l.b16 %v2612
        %v2869 = vunpack.c.l.b16 %v2613
        %v2870 = vunpack.c.l.b16 %v2614
        %v2871 = vunpack.c.l.b16 %v2615
        %v2872 = vunpack.c.l.b16 %v2616
        %v2873 = vunpack.c.l.b16 %v2617
        %v2874 = vunpack.c.l.b16 %v2618
        %v2875 = vpack.c.b16 %v2844, %v2843
        %v2876 = vpack.c.b16 %v2846, %v2845
        %v2877 = vpack.c.b16 %v2848, %v2847
        %v2878 = vpack.c.b16 %v2850, %v2849
        %v2879 = vpack.c.b16 %v2852, %v2851
        %v2880 = vpack.c.b16 %v2854, %v2853
        %v2881 = vpack.c.b16 %v2856, %v2855
        %v2882 = vpack.c.b16 %v2858, %v2857
        %v2883 = vpack.c.b16 %v2860, %v2859
        %v2884 = vpack.c.b16 %v2862, %v2861
        %v2885 = vpack.c.b16 %v2864, %v2863
        %v2886 = vpack.c.b16 %v2866, %v2865
        %v2887 = vpack.c.b16 %v2868, %v2867
        %v2888 = vpack.c.b16 %v2870, %v2869
        %v2889 = vpack.c.b16 %v2872, %v2871
        %v2890 = vpack.c.b16 %v2874, %v2873
        %vm2891 = vcmask 146432
        %v2893 = vsel %vm2891, %v2875, 0
        %v2896 = vsel %vm2891, %v2876, 0
        %v2899 = vsel %vm2891, %v2877, 0
        %v2902 = vsel %vm2891, %v2878, 0
        %v2905 = vsel %vm2891, %v2879, 0
        %v2908 = vsel %vm2891, %v2880, 0
        %v2911 = vsel %vm2891, %v2881, 0
        %v2914 = vsel %vm2891, %v2882, 0
        %v2917 = vsel %vm2891, %v2883, 0
        %v2920 = vsel %vm2891, %v2884, 0
        %v2923 = vsel %vm2891, %v2885, 0
        %v2926 = vsel %vm2891, %v2886, 0
        %v2929 = vsel %vm2891, %v2887, 0
        %v2932 = vsel %vm2891, %v2888, 0
        %v2935 = vsel %vm2891, %v2889, 0
        %v2938 = vsel %vm2891, %v2890, 0
        %v2941 = vsel %vm2528, %v2579, 0
        %v2944 = vsel %vm2528, %v2580, 0
        %v2947 = vsel %vm2528, %v2581, 0
        %v2950 = vsel %vm2528, %v2582, 0
        %v2953 = vsel %vm2528, %v2583, 0
        %v2956 = vsel %vm2528, %v2584, 0
        %v2959 = vsel %vm2528, %v2585, 0
        %v2962 = vsel %vm2528, %v2586, 0
        %2964 = vmatprep.subr.bf16.mxu0 0
        %2965 = vmatpush1.bf16.msra.mxu0 0
        %2966 = vmatprep.subr.bf16.mxu0 0
        %2967 = vmatpush1.bf16.msra.mxu0 0
        %2968 = vmatprep.subr.bf16.mxu0 0
        %2969 = vmatpush1.bf16.msra.mxu0 0
        %2970 = vmatprep.subr.bf16.mxu0 0
        %2971 = vmatpush1.bf16.msra.mxu0 0
        %2972 = vmatprep.subr.bf16.mxu0 0
        %2973 = vmatpush1.bf16.msra.mxu0 0
        %2974 = vmatprep.subr.bf16.mxu0 0
        %2975 = vmatpush1.bf16.msra.mxu0 0
        %2976 = vmatprep.subr.bf16.mxu0 %v2944
        %2977 = vmatpush1.bf16.msra.mxu0 %v2941
        %2978 = vmatprep.subr.bf16.mxu0 %v2572
        %2979 = vmatpush1.bf16.msra.mxu0 %v2571
        %2980 = vmatprep.subr.bf16.mxu0 0
        %2981 = vmatpush2.bf16.msra.mxu0 0
        %2982 = vmatprep.subr.bf16.mxu0 0
        %2983 = vmatpush2.bf16.msra.mxu0 0
        %2984 = vmatprep.subr.bf16.mxu0 0
        %2985 = vmatpush2.bf16.msra.mxu0 0
        %2986 = vmatprep.subr.bf16.mxu0 0
        %2987 = vmatpush2.bf16.msra.mxu0 0
        %2988 = vmatprep.subr.bf16.mxu0 0
        %2989 = vmatpush2.bf16.msra.mxu0 0
        %2990 = vmatprep.subr.bf16.mxu0 0
        %2991 = vmatpush2.bf16.msra.mxu0 0
        %2992 = vmatprep.subr.bf16.mxu0 0
        %2993 = vmatpush2.bf16.msra.mxu0 0
        %2994 = vmatprep.subr.bf16.mxu0 0
        %2995 = vmatpush2.bf16.msra.mxu0 0
        %2996 = vmatprep.mubr.bf16.mxu0 0
        %2997 = vmatmul.mubr.bf16.gmra.mxu0 %v2893
        %v2998 = vpop.f32.mrf.mxu0
        %v2999 = vadd.f32 %v2654, %v2998
        %v3000 = vpop.f32.mrf.mxu0
        %v3001 = vadd.f32 %v2654, %v3000
        %v3002 = vpop.f32.mrf.mxu0
        %v3003 = vadd.f32 %v2659, %v3002
        %v3004 = vpop.f32.mrf.mxu0
        %v3005 = vadd.f32 %v2659, %v3004
        %3006 = vmatprep.mubr.bf16.mxu0 0
        %3007 = vmatmul.mubr.bf16.gmra.mxu0 %v2896
        %v3008 = vpop.f32.mrf.mxu0
        %v3009 = vadd.f32 %v2664, %v3008
        %v3010 = vpop.f32.mrf.mxu0
        %v3011 = vadd.f32 %v2664, %v3010
        %v3012 = vpop.f32.mrf.mxu0
        %v3013 = vadd.f32 %v2669, %v3012
        %v3014 = vpop.f32.mrf.mxu0
        %v3015 = vadd.f32 %v2669, %v3014
        %3016 = vmatprep.mubr.bf16.mxu0 0
        %3017 = vmatmul.mubr.bf16.gmra.mxu0 %v2899
        %v3018 = vpop.f32.mrf.mxu0
        %v3019 = vadd.f32 %v2674, %v3018
        %v3020 = vpop.f32.mrf.mxu0
        %v3021 = vadd.f32 %v2674, %v3020
        %v3022 = vpop.f32.mrf.mxu0
        %v3023 = vadd.f32 %v2679, %v3022
        %v3024 = vpop.f32.mrf.mxu0
        %v3025 = vadd.f32 %v2679, %v3024
        %3026 = vmatprep.mubr.bf16.mxu0 0
        %3027 = vmatmul.mubr.bf16.gmra.mxu0 %v2902
        %v3028 = vpop.f32.mrf.mxu0
        %v3029 = vadd.f32 %v2684, %v3028
        %v3030 = vpop.f32.mrf.mxu0
        %v3031 = vadd.f32 %v2684, %v3030
        %v3032 = vpop.f32.mrf.mxu0
        %v3033 = vadd.f32 %v2689, %v3032
        %v3034 = vpop.f32.mrf.mxu0
        %v3035 = vadd.f32 %v2689, %v3034
        %3036 = vmatprep.mubr.bf16.mxu0 0
        %3037 = vmatmul.mubr.bf16.gmra.mxu0 %v2905
        %v3038 = vpop.f32.mrf.mxu0
        %v3039 = vadd.f32 %v2694, %v3038
        %v3040 = vpop.f32.mrf.mxu0
        %v3041 = vadd.f32 %v2694, %v3040
        %v3042 = vpop.f32.mrf.mxu0
        %v3043 = vadd.f32 %v2699, %v3042
        %v3044 = vpop.f32.mrf.mxu0
        %v3045 = vadd.f32 %v2699, %v3044
        %3046 = vmatprep.mubr.bf16.mxu0 0
        %3047 = vmatmul.mubr.bf16.gmra.mxu0 %v2908
        %v3048 = vpop.f32.mrf.mxu0
        %v3049 = vadd.f32 %v2704, %v3048
        %v3050 = vpop.f32.mrf.mxu0
        %v3051 = vadd.f32 %v2704, %v3050
        %v3052 = vpop.f32.mrf.mxu0
        %v3053 = vadd.f32 %v2709, %v3052
        %v3054 = vpop.f32.mrf.mxu0
        %v3055 = vadd.f32 %v2709, %v3054
        %3056 = vmatprep.mubr.bf16.mxu0 0
        %3057 = vmatmul.mubr.bf16.gmra.mxu0 %v2911
        %v3058 = vpop.f32.mrf.mxu0
        %v3059 = vadd.f32 %v2714, %v3058
        %v3060 = vpop.f32.mrf.mxu0
        %v3061 = vadd.f32 %v2714, %v3060
        %v3062 = vpop.f32.mrf.mxu0
        %v3063 = vadd.f32 %v2719, %v3062
        %v3064 = vpop.f32.mrf.mxu0
        %v3065 = vadd.f32 %v2719, %v3064
        %3066 = vmatprep.mubr.bf16.mxu0 0
        %3067 = vmatmul.mubr.bf16.gmra.mxu0 %v2914
        %v3068 = vpop.f32.mrf.mxu0
        %v3069 = vadd.f32 %v2724, %v3068
        %v3070 = vpop.f32.mrf.mxu0
        %v3071 = vadd.f32 %v2724, %v3070
        %v3072 = vpop.f32.mrf.mxu0
        %v3073 = vadd.f32 %v2729, %v3072
        %v3074 = vpop.f32.mrf.mxu0
        %v3075 = vadd.f32 %v2729, %v3074
        %3076 = vmatprep.mubr.bf16.mxu0 0
        %3077 = vmatmul.mubr.bf16.gmra.mxu0 %v2917
        %v3078 = vpop.f32.mrf.mxu0
        %v3079 = vadd.f32 %v2734, %v3078
        %v3080 = vpop.f32.mrf.mxu0
        %v3081 = vadd.f32 %v2734, %v3080
        %v3082 = vpop.f32.mrf.mxu0
        %v3083 = vadd.f32 %v2739, %v3082
        %v3084 = vpop.f32.mrf.mxu0
        %v3085 = vadd.f32 %v2739, %v3084
        %3086 = vmatprep.mubr.bf16.mxu0 0
        %3087 = vmatmul.mubr.bf16.gmra.mxu0 %v2920
        %v3088 = vpop.f32.mrf.mxu0
        %v3089 = vadd.f32 %v2744, %v3088
        %v3090 = vpop.f32.mrf.mxu0
        %v3091 = vadd.f32 %v2744, %v3090
        %v3092 = vpop.f32.mrf.mxu0
        %v3093 = vadd.f32 %v2749, %v3092
        %v3094 = vpop.f32.mrf.mxu0
        %v3095 = vadd.f32 %v2749, %v3094
        %3096 = vmatprep.mubr.bf16.mxu0 0
        %3097 = vmatmul.mubr.bf16.gmra.mxu0 %v2923
        %v3098 = vpop.f32.mrf.mxu0
        %v3099 = vadd.f32 %v2754, %v3098
        %v3100 = vpop.f32.mrf.mxu0
        %v3101 = vadd.f32 %v2754, %v3100
        %v3102 = vpop.f32.mrf.mxu0
        %v3103 = vadd.f32 %v2759, %v3102
        %v3104 = vpop.f32.mrf.mxu0
        %v3105 = vadd.f32 %v2759, %v3104
        %3106 = vmatprep.mubr.bf16.mxu0 0
        %3107 = vmatmul.mubr.bf16.gmra.mxu0 %v2926
        %v3108 = vpop.f32.mrf.mxu0
        %v3109 = vadd.f32 %v2764, %v3108
        %v3110 = vpop.f32.mrf.mxu0
        %v3111 = vadd.f32 %v2764, %v3110
        %v3112 = vpop.f32.mrf.mxu0
        %v3113 = vadd.f32 %v2769, %v3112
        %v3114 = vpop.f32.mrf.mxu0
        %v3115 = vadd.f32 %v2769, %v3114
        %3116 = vmatprep.mubr.bf16.mxu0 0
        %3117 = vmatmul.mubr.bf16.gmra.mxu0 %v2929
        %v3118 = vpop.f32.mrf.mxu0
        %v3119 = vadd.f32 %v2774, %v3118
        %v3120 = vpop.f32.mrf.mxu0
        %v3121 = vadd.f32 %v2774, %v3120
        %v3122 = vpop.f32.mrf.mxu0
        %v3123 = vadd.f32 %v2779, %v3122
        %v3124 = vpop.f32.mrf.mxu0
        %v3125 = vadd.f32 %v2779, %v3124
        %3126 = vmatprep.mubr.bf16.mxu0 0
        %3127 = vmatmul.mubr.bf16.gmra.mxu0 %v2932
        %v3128 = vpop.f32.mrf.mxu0
        %v3129 = vadd.f32 %v2784, %v3128
        %v3130 = vpop.f32.mrf.mxu0
        %v3131 = vadd.f32 %v2784, %v3130
        %v3132 = vpop.f32.mrf.mxu0
        %v3133 = vadd.f32 %v2789, %v3132
        %v3134 = vpop.f32.mrf.mxu0
        %v3135 = vadd.f32 %v2789, %v3134
        %3136 = vmatprep.mubr.bf16.mxu0 0
        %3137 = vmatmul.mubr.bf16.gmra.mxu0 %v2935
        %v3138 = vpop.f32.mrf.mxu0
        %v3139 = vadd.f32 %v2794, %v3138
        %v3140 = vpop.f32.mrf.mxu0
        %v3141 = vadd.f32 %v2794, %v3140
        %v3142 = vpop.f32.mrf.mxu0
        %v3143 = vadd.f32 %v2799, %v3142
        %v3144 = vpop.f32.mrf.mxu0
        %v3145 = vadd.f32 %v2799, %v3144
        %3146 = vmatprep.mubr.bf16.mxu0 0
        %3147 = vmatmul.mubr.bf16.gmra.mxu0 %v2938
        %v3148 = vpop.f32.mrf.mxu0
        %v3149 = vadd.f32 %v2804, %v3148
        %v3150 = vpop.f32.mrf.mxu0
        %v3151 = vadd.f32 %v2804, %v3150
        %v3152 = vpop.f32.mrf.mxu0
        %v3153 = vadd.f32 %v2809, %v3152
        %v3154 = vpop.f32.mrf.mxu0
        %v3155 = vadd.f32 %v2809, %v3154
        %3156 = vdwg.mxu0
        %3157 = vmatprep.subr.bf16.mxu0 0
        %3158 = vmatpush1.bf16.msra.mxu0 0
        %3159 = vmatprep.subr.bf16.mxu0 0
        %3160 = vmatpush1.bf16.msra.mxu0 0
        %3161 = vmatprep.subr.bf16.mxu0 0
        %3162 = vmatpush1.bf16.msra.mxu0 0
        %3163 = vmatprep.subr.bf16.mxu0 0
        %3164 = vmatpush1.bf16.msra.mxu0 0
        %3165 = vmatprep.subr.bf16.mxu0 0
        %3166 = vmatpush1.bf16.msra.mxu0 0
        %3167 = vmatprep.subr.bf16.mxu0 0
        %3168 = vmatpush1.bf16.msra.mxu0 0
        %3169 = vmatprep.subr.bf16.mxu0 %v2950
        %3170 = vmatpush1.bf16.msra.mxu0 %v2947
        %3171 = vmatprep.subr.bf16.mxu0 %v2574
        %3172 = vmatpush1.bf16.msra.mxu0 %v2573
        %3173 = vmatprep.subr.bf16.mxu0 0
        %3174 = vmatpush2.bf16.msra.mxu0 0
        %3175 = vmatprep.subr.bf16.mxu0 0
        %3176 = vmatpush2.bf16.msra.mxu0 0
        %3177 = vmatprep.subr.bf16.mxu0 0
        %3178 = vmatpush2.bf16.msra.mxu0 0
        %3179 = vmatprep.subr.bf16.mxu0 0
        %3180 = vmatpush2.bf16.msra.mxu0 0
        %3181 = vmatprep.subr.bf16.mxu0 0
        %3182 = vmatpush2.bf16.msra.mxu0 0
        %3183 = vmatprep.subr.bf16.mxu0 0
        %3184 = vmatpush2.bf16.msra.mxu0 0
        %3185 = vmatprep.subr.bf16.mxu0 0
        %3186 = vmatpush2.bf16.msra.mxu0 0
        %3187 = vmatprep.subr.bf16.mxu0 0
        %3188 = vmatpush2.bf16.msra.mxu0 0
        %3189 = vmatprep.mubr.bf16.mxu0 0
        %3190 = vmatmul.mubr.bf16.gmra.mxu0 %v2893
        %v3191 = vpop.f32.mrf.mxu0
        %v3192 = vadd.f32 %v2654, %v3191
        %v3193 = vpop.f32.mrf.mxu0
        %v3194 = vadd.f32 %v2654, %v3193
        %v3195 = vpop.f32.mrf.mxu0
        %v3196 = vadd.f32 %v2659, %v3195
        %v3197 = vpop.f32.mrf.mxu0
        %v3198 = vadd.f32 %v2659, %v3197
        %3199 = vmatprep.mubr.bf16.mxu0 0
        %3200 = vmatmul.mubr.bf16.gmra.mxu0 %v2896
        %v3201 = vpop.f32.mrf.mxu0
        %v3202 = vadd.f32 %v2664, %v3201
        %v3203 = vpop.f32.mrf.mxu0
        %v3204 = vadd.f32 %v2664, %v3203
        %v3205 = vpop.f32.mrf.mxu0
        %v3206 = vadd.f32 %v2669, %v3205
        %v3207 = vpop.f32.mrf.mxu0
        %v3208 = vadd.f32 %v2669, %v3207
        %3209 = vmatprep.mubr.bf16.mxu0 0
        %3210 = vmatmul.mubr.bf16.gmra.mxu0 %v2899
        %v3211 = vpop.f32.mrf.mxu0
        %v3212 = vadd.f32 %v2674, %v3211
        %v3213 = vpop.f32.mrf.mxu0
        %v3214 = vadd.f32 %v2674, %v3213
        %v3215 = vpop.f32.mrf.mxu0
        %v3216 = vadd.f32 %v2679, %v3215
        %v3217 = vpop.f32.mrf.mxu0
        %v3218 = vadd.f32 %v2679, %v3217
        %3219 = vmatprep.mubr.bf16.mxu0 0
        %3220 = vmatmul.mubr.bf16.gmra.mxu0 %v2902
        %v3221 = vpop.f32.mrf.mxu0
        %v3222 = vadd.f32 %v2684, %v3221
        %v3223 = vpop.f32.mrf.mxu0
        %v3224 = vadd.f32 %v2684, %v3223
        %v3225 = vpop.f32.mrf.mxu0
        %v3226 = vadd.f32 %v2689, %v3225
        %v3227 = vpop.f32.mrf.mxu0
        %v3228 = vadd.f32 %v2689, %v3227
        %3229 = vmatprep.mubr.bf16.mxu0 0
        %3230 = vmatmul.mubr.bf16.gmra.mxu0 %v2905
        %v3231 = vpop.f32.mrf.mxu0
        %v3232 = vadd.f32 %v2694, %v3231
        %v3233 = vpop.f32.mrf.mxu0
        %v3234 = vadd.f32 %v2694, %v3233
        %v3235 = vpop.f32.mrf.mxu0
        %v3236 = vadd.f32 %v2699, %v3235
        %v3237 = vpop.f32.mrf.mxu0
        %v3238 = vadd.f32 %v2699, %v3237
        %3239 = vmatprep.mubr.bf16.mxu0 0
        %3240 = vmatmul.mubr.bf16.gmra.mxu0 %v2908
        %v3241 = vpop.f32.mrf.mxu0
        %v3242 = vadd.f32 %v2704, %v3241
        %v3243 = vpop.f32.mrf.mxu0
        %v3244 = vadd.f32 %v2704, %v3243
        %v3245 = vpop.f32.mrf.mxu0
        %v3246 = vadd.f32 %v2709, %v3245
        %v3247 = vpop.f32.mrf.mxu0
        %v3248 = vadd.f32 %v2709, %v3247
        %3249 = vmatprep.mubr.bf16.mxu0 0
        %3250 = vmatmul.mubr.bf16.gmra.mxu0 %v2911
        %v3251 = vpop.f32.mrf.mxu0
        %v3252 = vadd.f32 %v2714, %v3251
        %v3253 = vpop.f32.mrf.mxu0
        %v3254 = vadd.f32 %v2714, %v3253
        %v3255 = vpop.f32.mrf.mxu0
        %v3256 = vadd.f32 %v2719, %v3255
        %v3257 = vpop.f32.mrf.mxu0
        %v3258 = vadd.f32 %v2719, %v3257
        %3259 = vmatprep.mubr.bf16.mxu0 0
        %3260 = vmatmul.mubr.bf16.gmra.mxu0 %v2914
        %v3261 = vpop.f32.mrf.mxu0
        %v3262 = vadd.f32 %v2724, %v3261
        %v3263 = vpop.f32.mrf.mxu0
        %v3264 = vadd.f32 %v2724, %v3263
        %v3265 = vpop.f32.mrf.mxu0
        %v3266 = vadd.f32 %v2729, %v3265
        %v3267 = vpop.f32.mrf.mxu0
        %v3268 = vadd.f32 %v2729, %v3267
        %3269 = vmatprep.mubr.bf16.mxu0 0
        %3270 = vmatmul.mubr.bf16.gmra.mxu0 %v2917
        %v3271 = vpop.f32.mrf.mxu0
        %v3272 = vadd.f32 %v2734, %v3271
        %v3273 = vpop.f32.mrf.mxu0
        %v3274 = vadd.f32 %v2734, %v3273
        %v3275 = vpop.f32.mrf.mxu0
        %v3276 = vadd.f32 %v2739, %v3275
        %v3277 = vpop.f32.mrf.mxu0
        %v3278 = vadd.f32 %v2739, %v3277
        %3279 = vmatprep.mubr.bf16.mxu0 0
        %3280 = vmatmul.mubr.bf16.gmra.mxu0 %v2920
        %v3281 = vpop.f32.mrf.mxu0
        %v3282 = vadd.f32 %v2744, %v3281
        %v3283 = vpop.f32.mrf.mxu0
        %v3284 = vadd.f32 %v2744, %v3283
        %v3285 = vpop.f32.mrf.mxu0
        %v3286 = vadd.f32 %v2749, %v3285
        %v3287 = vpop.f32.mrf.mxu0
        %v3288 = vadd.f32 %v2749, %v3287
        %3289 = vmatprep.mubr.bf16.mxu0 0
        %3290 = vmatmul.mubr.bf16.gmra.mxu0 %v2923
        %v3291 = vpop.f32.mrf.mxu0
        %v3292 = vadd.f32 %v2754, %v3291
        %v3293 = vpop.f32.mrf.mxu0
        %v3294 = vadd.f32 %v2754, %v3293
        %v3295 = vpop.f32.mrf.mxu0
        %v3296 = vadd.f32 %v2759, %v3295
        %v3297 = vpop.f32.mrf.mxu0
        %v3298 = vadd.f32 %v2759, %v3297
        %3299 = vmatprep.mubr.bf16.mxu0 0
        %3300 = vmatmul.mubr.bf16.gmra.mxu0 %v2926
        %v3301 = vpop.f32.mrf.mxu0
        %v3302 = vadd.f32 %v2764, %v3301
        %v3303 = vpop.f32.mrf.mxu0
        %v3304 = vadd.f32 %v2764, %v3303
        %v3305 = vpop.f32.mrf.mxu0
        %v3306 = vadd.f32 %v2769, %v3305
        %v3307 = vpop.f32.mrf.mxu0
        %v3308 = vadd.f32 %v2769, %v3307
        %3309 = vmatprep.mubr.bf16.mxu0 0
        %3310 = vmatmul.mubr.bf16.gmra.mxu0 %v2929
        %v3311 = vpop.f32.mrf.mxu0
        %v3312 = vadd.f32 %v2774, %v3311
        %v3313 = vpop.f32.mrf.mxu0
        %v3314 = vadd.f32 %v2774, %v3313
        %v3315 = vpop.f32.mrf.mxu0
        %v3316 = vadd.f32 %v2779, %v3315
        %v3317 = vpop.f32.mrf.mxu0
        %v3318 = vadd.f32 %v2779, %v3317
        %3319 = vmatprep.mubr.bf16.mxu0 0
        %3320 = vmatmul.mubr.bf16.gmra.mxu0 %v2932
        %v3321 = vpop.f32.mrf.mxu0
        %v3322 = vadd.f32 %v2784, %v3321
        %v3323 = vpop.f32.mrf.mxu0
        %v3324 = vadd.f32 %v2784, %v3323
        %v3325 = vpop.f32.mrf.mxu0
        %v3326 = vadd.f32 %v2789, %v3325
        %v3327 = vpop.f32.mrf.mxu0
        %v3328 = vadd.f32 %v2789, %v3327
        %3329 = vmatprep.mubr.bf16.mxu0 0
        %3330 = vmatmul.mubr.bf16.gmra.mxu0 %v2935
        %v3331 = vpop.f32.mrf.mxu0
        %v3332 = vadd.f32 %v2794, %v3331
        %v3333 = vpop.f32.mrf.mxu0
        %v3334 = vadd.f32 %v2794, %v3333
        %v3335 = vpop.f32.mrf.mxu0
        %v3336 = vadd.f32 %v2799, %v3335
        %v3337 = vpop.f32.mrf.mxu0
        %v3338 = vadd.f32 %v2799, %v3337
        %3339 = vmatprep.mubr.bf16.mxu0 0
        %3340 = vmatmul.mubr.bf16.gmra.mxu0 %v2938
        %v3341 = vpop.f32.mrf.mxu0
        %v3342 = vadd.f32 %v2804, %v3341
        %v3343 = vpop.f32.mrf.mxu0
        %v3344 = vadd.f32 %v2804, %v3343
        %v3345 = vpop.f32.mrf.mxu0
        %v3346 = vadd.f32 %v2809, %v3345
        %v3347 = vpop.f32.mrf.mxu0
        %v3348 = vadd.f32 %v2809, %v3347
        %3349 = vdwg.mxu0
        %3350 = vmatprep.subr.bf16.mxu0 0
        %3351 = vmatpush1.bf16.msra.mxu0 0
        %3352 = vmatprep.subr.bf16.mxu0 0
        %3353 = vmatpush1.bf16.msra.mxu0 0
        %3354 = vmatprep.subr.bf16.mxu0 0
        %3355 = vmatpush1.bf16.msra.mxu0 0
        %3356 = vmatprep.subr.bf16.mxu0 0
        %3357 = vmatpush1.bf16.msra.mxu0 0
        %3358 = vmatprep.subr.bf16.mxu0 0
        %3359 = vmatpush1.bf16.msra.mxu0 0
        %3360 = vmatprep.subr.bf16.mxu0 0
        %3361 = vmatpush1.bf16.msra.mxu0 0
        %3362 = vmatprep.subr.bf16.mxu0 %v2956
        %3363 = vmatpush1.bf16.msra.mxu0 %v2953
        %3364 = vmatprep.subr.bf16.mxu0 %v2576
        %3365 = vmatpush1.bf16.msra.mxu0 %v2575
        %3366 = vmatprep.subr.bf16.mxu0 0
        %3367 = vmatpush2.bf16.msra.mxu0 0
        %3368 = vmatprep.subr.bf16.mxu0 0
        %3369 = vmatpush2.bf16.msra.mxu0 0
        %3370 = vmatprep.subr.bf16.mxu0 0
        %3371 = vmatpush2.bf16.msra.mxu0 0
        %3372 = vmatprep.subr.bf16.mxu0 0
        %3373 = vmatpush2.bf16.msra.mxu0 0
        %3374 = vmatprep.subr.bf16.mxu0 0
        %3375 = vmatpush2.bf16.msra.mxu0 0
        %3376 = vmatprep.subr.bf16.mxu0 0
        %3377 = vmatpush2.bf16.msra.mxu0 0
        %3378 = vmatprep.subr.bf16.mxu0 0
        %3379 = vmatpush2.bf16.msra.mxu0 0
        %3380 = vmatprep.subr.bf16.mxu0 0
        %3381 = vmatpush2.bf16.msra.mxu0 0
        %3382 = vmatprep.mubr.bf16.mxu0 0
        %3383 = vmatmul.mubr.bf16.gmra.mxu0 %v2893
        %v3384 = vpop.f32.mrf.mxu0
        %v3385 = vadd.f32 %v2654, %v3384
        %v3386 = vpop.f32.mrf.mxu0
        %v3387 = vadd.f32 %v2654, %v3386
        %v3388 = vpop.f32.mrf.mxu0
        %v3389 = vadd.f32 %v2659, %v3388
        %v3390 = vpop.f32.mrf.mxu0
        %v3391 = vadd.f32 %v2659, %v3390
        %3392 = vmatprep.mubr.bf16.mxu0 0
        %3393 = vmatmul.mubr.bf16.gmra.mxu0 %v2896
        %v3394 = vpop.f32.mrf.mxu0
        %v3395 = vadd.f32 %v2664, %v3394
        %v3396 = vpop.f32.mrf.mxu0
        %v3397 = vadd.f32 %v2664, %v3396
        %v3398 = vpop.f32.mrf.mxu0
        %v3399 = vadd.f32 %v2669, %v3398
        %v3400 = vpop.f32.mrf.mxu0
        %v3401 = vadd.f32 %v2669, %v3400
        %3402 = vmatprep.mubr.bf16.mxu0 0
        %3403 = vmatmul.mubr.bf16.gmra.mxu0 %v2899
        %v3404 = vpop.f32.mrf.mxu0
        %v3405 = vadd.f32 %v2674, %v3404
        %v3406 = vpop.f32.mrf.mxu0
        %v3407 = vadd.f32 %v2674, %v3406
        %v3408 = vpop.f32.mrf.mxu0
        %v3409 = vadd.f32 %v2679, %v3408
        %v3410 = vpop.f32.mrf.mxu0
        %v3411 = vadd.f32 %v2679, %v3410
        %3412 = vmatprep.mubr.bf16.mxu0 0
        %3413 = vmatmul.mubr.bf16.gmra.mxu0 %v2902
        %v3414 = vpop.f32.mrf.mxu0
        %v3415 = vadd.f32 %v2684, %v3414
        %v3416 = vpop.f32.mrf.mxu0
        %v3417 = vadd.f32 %v2684, %v3416
        %v3418 = vpop.f32.mrf.mxu0
        %v3419 = vadd.f32 %v2689, %v3418
        %v3420 = vpop.f32.mrf.mxu0
        %v3421 = vadd.f32 %v2689, %v3420
        %3422 = vmatprep.mubr.bf16.mxu0 0
        %3423 = vmatmul.mubr.bf16.gmra.mxu0 %v2905
        %v3424 = vpop.f32.mrf.mxu0
        %v3425 = vadd.f32 %v2694, %v3424
        %v3426 = vpop.f32.mrf.mxu0
        %v3427 = vadd.f32 %v2694, %v3426
        %v3428 = vpop.f32.mrf.mxu0
        %v3429 = vadd.f32 %v2699, %v3428
        %v3430 = vpop.f32.mrf.mxu0
        %v3431 = vadd.f32 %v2699, %v3430
        %3432 = vmatprep.mubr.bf16.mxu0 0
        %3433 = vmatmul.mubr.bf16.gmra.mxu0 %v2908
        %v3434 = vpop.f32.mrf.mxu0
        %v3435 = vadd.f32 %v2704, %v3434
        %v3436 = vpop.f32.mrf.mxu0
        %v3437 = vadd.f32 %v2704, %v3436
        %v3438 = vpop.f32.mrf.mxu0
        %v3439 = vadd.f32 %v2709, %v3438
        %v3440 = vpop.f32.mrf.mxu0
        %v3441 = vadd.f32 %v2709, %v3440
        %3442 = vmatprep.mubr.bf16.mxu0 0
        %3443 = vmatmul.mubr.bf16.gmra.mxu0 %v2911
        %v3444 = vpop.f32.mrf.mxu0
        %v3445 = vadd.f32 %v2714, %v3444
        %v3446 = vpop.f32.mrf.mxu0
        %v3447 = vadd.f32 %v2714, %v3446
        %v3448 = vpop.f32.mrf.mxu0
        %v3449 = vadd.f32 %v2719, %v3448
        %v3450 = vpop.f32.mrf.mxu0
        %v3451 = vadd.f32 %v2719, %v3450
        %3452 = vmatprep.mubr.bf16.mxu0 0
        %3453 = vmatmul.mubr.bf16.gmra.mxu0 %v2914
        %v3454 = vpop.f32.mrf.mxu0
        %v3455 = vadd.f32 %v2724, %v3454
        %v3456 = vpop.f32.mrf.mxu0
        %v3457 = vadd.f32 %v2724, %v3456
        %v3458 = vpop.f32.mrf.mxu0
        %v3459 = vadd.f32 %v2729, %v3458
        %v3460 = vpop.f32.mrf.mxu0
        %v3461 = vadd.f32 %v2729, %v3460
        %3462 = vmatprep.mubr.bf16.mxu0 0
        %3463 = vmatmul.mubr.bf16.gmra.mxu0 %v2917
        %v3464 = vpop.f32.mrf.mxu0
        %v3465 = vadd.f32 %v2734, %v3464
        %v3466 = vpop.f32.mrf.mxu0
        %v3467 = vadd.f32 %v2734, %v3466
        %v3468 = vpop.f32.mrf.mxu0
        %v3469 = vadd.f32 %v2739, %v3468
        %v3470 = vpop.f32.mrf.mxu0
        %v3471 = vadd.f32 %v2739, %v3470
        %3472 = vmatprep.mubr.bf16.mxu0 0
        %3473 = vmatmul.mubr.bf16.gmra.mxu0 %v2920
        %v3474 = vpop.f32.mrf.mxu0
        %v3475 = vadd.f32 %v2744, %v3474
        %v3476 = vpop.f32.mrf.mxu0
        %v3477 = vadd.f32 %v2744, %v3476
        %v3478 = vpop.f32.mrf.mxu0
        %v3479 = vadd.f32 %v2749, %v3478
        %v3480 = vpop.f32.mrf.mxu0
        %v3481 = vadd.f32 %v2749, %v3480
        %3482 = vmatprep.mubr.bf16.mxu0 0
        %3483 = vmatmul.mubr.bf16.gmra.mxu0 %v2923
        %v3484 = vpop.f32.mrf.mxu0
        %v3485 = vadd.f32 %v2754, %v3484
        %v3486 = vpop.f32.mrf.mxu0
        %v3487 = vadd.f32 %v2754, %v3486
        %v3488 = vpop.f32.mrf.mxu0
        %v3489 = vadd.f32 %v2759, %v3488
        %v3490 = vpop.f32.mrf.mxu0
        %v3491 = vadd.f32 %v2759, %v3490
        %3492 = vmatprep.mubr.bf16.mxu0 0
        %3493 = vmatmul.mubr.bf16.gmra.mxu0 %v2926
        %v3494 = vpop.f32.mrf.mxu0
        %v3495 = vadd.f32 %v2764, %v3494
        %v3496 = vpop.f32.mrf.mxu0
        %v3497 = vadd.f32 %v2764, %v3496
        %v3498 = vpop.f32.mrf.mxu0
        %v3499 = vadd.f32 %v2769, %v3498
        %v3500 = vpop.f32.mrf.mxu0
        %v3501 = vadd.f32 %v2769, %v3500
        %3502 = vmatprep.mubr.bf16.mxu0 0
        %3503 = vmatmul.mubr.bf16.gmra.mxu0 %v2929
        %v3504 = vpop.f32.mrf.mxu0
        %v3505 = vadd.f32 %v2774, %v3504
        %v3506 = vpop.f32.mrf.mxu0
        %v3507 = vadd.f32 %v2774, %v3506
        %v3508 = vpop.f32.mrf.mxu0
        %v3509 = vadd.f32 %v2779, %v3508
        %v3510 = vpop.f32.mrf.mxu0
        %v3511 = vadd.f32 %v2779, %v3510
        %3512 = vmatprep.mubr.bf16.mxu0 0
        %3513 = vmatmul.mubr.bf16.gmra.mxu0 %v2932
        %v3514 = vpop.f32.mrf.mxu0
        %v3515 = vadd.f32 %v2784, %v3514
        %v3516 = vpop.f32.mrf.mxu0
        %v3517 = vadd.f32 %v2784, %v3516
        %v3518 = vpop.f32.mrf.mxu0
        %v3519 = vadd.f32 %v2789, %v3518
        %v3520 = vpop.f32.mrf.mxu0
        %v3521 = vadd.f32 %v2789, %v3520
        %3522 = vmatprep.mubr.bf16.mxu0 0
        %3523 = vmatmul.mubr.bf16.gmra.mxu0 %v2935
        %v3524 = vpop.f32.mrf.mxu0
        %v3525 = vadd.f32 %v2794, %v3524
        %v3526 = vpop.f32.mrf.mxu0
        %v3527 = vadd.f32 %v2794, %v3526
        %v3528 = vpop.f32.mrf.mxu0
        %v3529 = vadd.f32 %v2799, %v3528
        %v3530 = vpop.f32.mrf.mxu0
        %v3531 = vadd.f32 %v2799, %v3530
        %3532 = vmatprep.mubr.bf16.mxu0 0
        %3533 = vmatmul.mubr.bf16.gmra.mxu0 %v2938
        %v3534 = vpop.f32.mrf.mxu0
        %v3535 = vadd.f32 %v2804, %v3534
        %v3536 = vpop.f32.mrf.mxu0
        %v3537 = vadd.f32 %v2804, %v3536
        %v3538 = vpop.f32.mrf.mxu0
        %v3539 = vadd.f32 %v2809, %v3538
        %v3540 = vpop.f32.mrf.mxu0
        %v3541 = vadd.f32 %v2809, %v3540
        %3542 = vdwg.mxu0
        %3543 = vmatprep.subr.bf16.mxu0 0
        %3544 = vmatpush1.bf16.msra.mxu0 0
        %3545 = vmatprep.subr.bf16.mxu0 0
        %3546 = vmatpush1.bf16.msra.mxu0 0
        %3547 = vmatprep.subr.bf16.mxu0 0
        %3548 = vmatpush1.bf16.msra.mxu0 0
        %3549 = vmatprep.subr.bf16.mxu0 0
        %3550 = vmatpush1.bf16.msra.mxu0 0
        %3551 = vmatprep.subr.bf16.mxu0 0
        %3552 = vmatpush1.bf16.msra.mxu0 0
        %3553 = vmatprep.subr.bf16.mxu0 0
        %3554 = vmatpush1.bf16.msra.mxu0 0
        %3555 = vmatprep.subr.bf16.mxu0 %v2962
        %3556 = vmatpush1.bf16.msra.mxu0 %v2959
        %3557 = vmatprep.subr.bf16.mxu0 %v2578
        %3558 = vmatpush1.bf16.msra.mxu0 %v2577
        %3559 = vmatprep.subr.bf16.mxu0 0
        %3560 = vmatpush2.bf16.msra.mxu0 0
        %3561 = vmatprep.subr.bf16.mxu0 0
        %3562 = vmatpush2.bf16.msra.mxu0 0
        %3563 = vmatprep.subr.bf16.mxu0 0
        %3564 = vmatpush2.bf16.msra.mxu0 0
        %3565 = vmatprep.subr.bf16.mxu0 0
        %3566 = vmatpush2.bf16.msra.mxu0 0
        %3567 = vmatprep.subr.bf16.mxu0 0
        %3568 = vmatpush2.bf16.msra.mxu0 0
        %3569 = vmatprep.subr.bf16.mxu0 0
        %3570 = vmatpush2.bf16.msra.mxu0 0
        %3571 = vmatprep.subr.bf16.mxu0 0
        %3572 = vmatpush2.bf16.msra.mxu0 0
        %3573 = vmatprep.subr.bf16.mxu0 0
        %3574 = vmatpush2.bf16.msra.mxu0 0
        %3575 = vmatprep.mubr.bf16.mxu0 0
        %3576 = vmatmul.mubr.bf16.gmra.mxu0 %v2893
        %v3577 = vpop.f32.mrf.mxu0
        %v3578 = vadd.f32 %v2654, %v3577
        %v3579 = vpop.f32.mrf.mxu0
        %v3580 = vadd.f32 %v2654, %v3579
        %v3581 = vpop.f32.mrf.mxu0
        %v3582 = vadd.f32 %v2659, %v3581
        %v3583 = vpop.f32.mrf.mxu0
        %v3584 = vadd.f32 %v2659, %v3583
        %3585 = vmatprep.mubr.bf16.mxu0 0
        %3586 = vmatmul.mubr.bf16.gmra.mxu0 %v2896
        %v3587 = vpop.f32.mrf.mxu0
        %v3588 = vadd.f32 %v2664, %v3587
        %v3589 = vpop.f32.mrf.mxu0
        %v3590 = vadd.f32 %v2664, %v3589
        %v3591 = vpop.f32.mrf.mxu0
        %v3592 = vadd.f32 %v2669, %v3591
        %v3593 = vpop.f32.mrf.mxu0
        %v3594 = vadd.f32 %v2669, %v3593
        %3595 = vmatprep.mubr.bf16.mxu0 0
        %3596 = vmatmul.mubr.bf16.gmra.mxu0 %v2899
        %v3597 = vpop.f32.mrf.mxu0
        %v3598 = vadd.f32 %v2674, %v3597
        %v3599 = vpop.f32.mrf.mxu0
        %v3600 = vadd.f32 %v2674, %v3599
        %v3601 = vpop.f32.mrf.mxu0
        %v3602 = vadd.f32 %v2679, %v3601
        %v3603 = vpop.f32.mrf.mxu0
        %v3604 = vadd.f32 %v2679, %v3603
        %3605 = vmatprep.mubr.bf16.mxu0 0
        %3606 = vmatmul.mubr.bf16.gmra.mxu0 %v2902
        %v3607 = vpop.f32.mrf.mxu0
        %v3608 = vadd.f32 %v2684, %v3607
        %v3609 = vpop.f32.mrf.mxu0
        %v3610 = vadd.f32 %v2684, %v3609
        %v3611 = vpop.f32.mrf.mxu0
        %v3612 = vadd.f32 %v2689, %v3611
        %v3613 = vpop.f32.mrf.mxu0
        %v3614 = vadd.f32 %v2689, %v3613
        %3615 = vmatprep.mubr.bf16.mxu0 0
        %3616 = vmatmul.mubr.bf16.gmra.mxu0 %v2905
        %v3617 = vpop.f32.mrf.mxu0
        %v3618 = vadd.f32 %v2694, %v3617
        %v3619 = vpop.f32.mrf.mxu0
        %v3620 = vadd.f32 %v2694, %v3619
        %v3621 = vpop.f32.mrf.mxu0
        %v3622 = vadd.f32 %v2699, %v3621
        %v3623 = vpop.f32.mrf.mxu0
        %v3624 = vadd.f32 %v2699, %v3623
        %3625 = vmatprep.mubr.bf16.mxu0 0
        %3626 = vmatmul.mubr.bf16.gmra.mxu0 %v2908
        %v3627 = vpop.f32.mrf.mxu0
        %v3628 = vadd.f32 %v2704, %v3627
        %v3629 = vpop.f32.mrf.mxu0
        %v3630 = vadd.f32 %v2704, %v3629
        %v3631 = vpop.f32.mrf.mxu0
        %v3632 = vadd.f32 %v2709, %v3631
        %v3633 = vpop.f32.mrf.mxu0
        %v3634 = vadd.f32 %v2709, %v3633
        %3635 = vmatprep.mubr.bf16.mxu0 0
        %3636 = vmatmul.mubr.bf16.gmra.mxu0 %v2911
        %v3637 = vpop.f32.mrf.mxu0
        %v3638 = vadd.f32 %v2714, %v3637
        %v3639 = vpop.f32.mrf.mxu0
        %v3640 = vadd.f32 %v2714, %v3639
        %v3641 = vpop.f32.mrf.mxu0
        %v3642 = vadd.f32 %v2719, %v3641
        %v3643 = vpop.f32.mrf.mxu0
        %v3644 = vadd.f32 %v2719, %v3643
        %3645 = vmatprep.mubr.bf16.mxu0 0
        %3646 = vmatmul.mubr.bf16.gmra.mxu0 %v2914
        %v3647 = vpop.f32.mrf.mxu0
        %v3648 = vadd.f32 %v2724, %v3647
        %v3649 = vpop.f32.mrf.mxu0
        %v3650 = vadd.f32 %v2724, %v3649
        %v3651 = vpop.f32.mrf.mxu0
        %v3652 = vadd.f32 %v2729, %v3651
        %v3653 = vpop.f32.mrf.mxu0
        %v3654 = vadd.f32 %v2729, %v3653
        %3655 = vmatprep.mubr.bf16.mxu0 0
        %3656 = vmatmul.mubr.bf16.gmra.mxu0 %v2917
        %v3657 = vpop.f32.mrf.mxu0
        %v3658 = vadd.f32 %v2734, %v3657
        %v3659 = vpop.f32.mrf.mxu0
        %v3660 = vadd.f32 %v2734, %v3659
        %v3661 = vpop.f32.mrf.mxu0
        %v3662 = vadd.f32 %v2739, %v3661
        %v3663 = vpop.f32.mrf.mxu0
        %v3664 = vadd.f32 %v2739, %v3663
        %3665 = vmatprep.mubr.bf16.mxu0 0
        %3666 = vmatmul.mubr.bf16.gmra.mxu0 %v2920
        %v3667 = vpop.f32.mrf.mxu0
        %v3668 = vadd.f32 %v2744, %v3667
        %v3669 = vpop.f32.mrf.mxu0
        %v3670 = vadd.f32 %v2744, %v3669
        %v3671 = vpop.f32.mrf.mxu0
        %v3672 = vadd.f32 %v2749, %v3671
        %v3673 = vpop.f32.mrf.mxu0
        %v3674 = vadd.f32 %v2749, %v3673
        %3675 = vmatprep.mubr.bf16.mxu0 0
        %3676 = vmatmul.mubr.bf16.gmra.mxu0 %v2923
        %v3677 = vpop.f32.mrf.mxu0
        %v3678 = vadd.f32 %v2754, %v3677
        %v3679 = vpop.f32.mrf.mxu0
        %v3680 = vadd.f32 %v2754, %v3679
        %v3681 = vpop.f32.mrf.mxu0
        %v3682 = vadd.f32 %v2759, %v3681
        %v3683 = vpop.f32.mrf.mxu0
        %v3684 = vadd.f32 %v2759, %v3683
        %3685 = vmatprep.mubr.bf16.mxu0 0
        %3686 = vmatmul.mubr.bf16.gmra.mxu0 %v2926
        %v3687 = vpop.f32.mrf.mxu0
        %v3688 = vadd.f32 %v2764, %v3687
        %v3689 = vpop.f32.mrf.mxu0
        %v3690 = vadd.f32 %v2764, %v3689
        %v3691 = vpop.f32.mrf.mxu0
        %v3692 = vadd.f32 %v2769, %v3691
        %v3693 = vpop.f32.mrf.mxu0
        %v3694 = vadd.f32 %v2769, %v3693
        %3695 = vmatprep.mubr.bf16.mxu0 0
        %3696 = vmatmul.mubr.bf16.gmra.mxu0 %v2929
        %v3697 = vpop.f32.mrf.mxu0
        %v3698 = vadd.f32 %v2774, %v3697
        %v3699 = vpop.f32.mrf.mxu0
        %v3700 = vadd.f32 %v2774, %v3699
        %v3701 = vpop.f32.mrf.mxu0
        %v3702 = vadd.f32 %v2779, %v3701
        %v3703 = vpop.f32.mrf.mxu0
        %v3704 = vadd.f32 %v2779, %v3703
        %3705 = vmatprep.mubr.bf16.mxu0 0
        %3706 = vmatmul.mubr.bf16.gmra.mxu0 %v2932
        %v3707 = vpop.f32.mrf.mxu0
        %v3708 = vadd.f32 %v2784, %v3707
        %v3709 = vpop.f32.mrf.mxu0
        %v3710 = vadd.f32 %v2784, %v3709
        %v3711 = vpop.f32.mrf.mxu0
        %v3712 = vadd.f32 %v2789, %v3711
        %v3713 = vpop.f32.mrf.mxu0
        %v3714 = vadd.f32 %v2789, %v3713
        %3715 = vmatprep.mubr.bf16.mxu0 0
        %3716 = vmatmul.mubr.bf16.gmra.mxu0 %v2935
        %v3717 = vpop.f32.mrf.mxu0
        %v3718 = vadd.f32 %v2794, %v3717
        %v3719 = vpop.f32.mrf.mxu0
        %v3720 = vadd.f32 %v2794, %v3719
        %v3721 = vpop.f32.mrf.mxu0
        %v3722 = vadd.f32 %v2799, %v3721
        %v3723 = vpop.f32.mrf.mxu0
        %v3724 = vadd.f32 %v2799, %v3723
        %3725 = vmatprep.mubr.bf16.mxu0 0
        %3726 = vmatmul.mubr.bf16.gmra.mxu0 %v2938
        %v3727 = vpop.f32.mrf.mxu0
        %v3728 = vadd.f32 %v2804, %v3727
        %v3729 = vpop.f32.mrf.mxu0
        %v3730 = vadd.f32 %v2804, %v3729
        %v3731 = vpop.f32.mrf.mxu0
        %v3732 = vadd.f32 %v2809, %v3731
        %v3733 = vpop.f32.mrf.mxu0
        %v3734 = vadd.f32 %v2809, %v3733
        %3735 = vdwg.mxu0
        %v3736 = vmax.f32 %v2999, 0.0
        %v3737 = vmax.f32 %v3001, 0.0
        %v3738 = vmax.f32 %v3192, 0.0
        %v3739 = vmax.f32 %v3194, 0.0
        %v3740 = vmax.f32 %v3385, 0.0
        %v3741 = vmax.f32 %v3387, 0.0
        %v3742 = vmax.f32 %v3578, 0.0
        %v3743 = vmax.f32 %v3580, 0.0
        %v3744 = vmax.f32 %v3003, 0.0
        %v3745 = vmax.f32 %v3005, 0.0
        %v3746 = vmax.f32 %v3196, 0.0
        %v3747 = vmax.f32 %v3198, 0.0
        %v3748 = vmax.f32 %v3389, 0.0
        %v3749 = vmax.f32 %v3391, 0.0
        %v3750 = vmax.f32 %v3582, 0.0
        %v3751 = vmax.f32 %v3584, 0.0
        %v3752 = vmax.f32 %v3009, 0.0
        %v3753 = vmax.f32 %v3011, 0.0
        %v3754 = vmax.f32 %v3202, 0.0
        %v3755 = vmax.f32 %v3204, 0.0
        %v3756 = vmax.f32 %v3395, 0.0
        %v3757 = vmax.f32 %v3397, 0.0
        %v3758 = vmax.f32 %v3588, 0.0
        %v3759 = vmax.f32 %v3590, 0.0
        %v3760 = vmax.f32 %v3013, 0.0
        %v3761 = vmax.f32 %v3015, 0.0
        %v3762 = vmax.f32 %v3206, 0.0
        %v3763 = vmax.f32 %v3208, 0.0
        %v3764 = vmax.f32 %v3399, 0.0
        %v3765 = vmax.f32 %v3401, 0.0
        %v3766 = vmax.f32 %v3592, 0.0
        %v3767 = vmax.f32 %v3594, 0.0
        %v3768 = vmax.f32 %v3019, 0.0
        %v3769 = vmax.f32 %v3021, 0.0
        %v3770 = vmax.f32 %v3212, 0.0
        %v3771 = vmax.f32 %v3214, 0.0
        %v3772 = vmax.f32 %v3405, 0.0
        %v3773 = vmax.f32 %v3407, 0.0
        %v3774 = vmax.f32 %v3598, 0.0
        %v3775 = vmax.f32 %v3600, 0.0
        %v3776 = vmax.f32 %v3023, 0.0
        %v3777 = vmax.f32 %v3025, 0.0
        %v3778 = vmax.f32 %v3216, 0.0
        %v3779 = vmax.f32 %v3218, 0.0
        %v3780 = vmax.f32 %v3409, 0.0
        %v3781 = vmax.f32 %v3411, 0.0
        %v3782 = vmax.f32 %v3602, 0.0
        %v3783 = vmax.f32 %v3604, 0.0
        %v3784 = vmax.f32 %v3029, 0.0
        %v3785 = vmax.f32 %v3031, 0.0
        %v3786 = vmax.f32 %v3222, 0.0
        %v3787 = vmax.f32 %v3224, 0.0
        %v3788 = vmax.f32 %v3415, 0.0
        %v3789 = vmax.f32 %v3417, 0.0
        %v3790 = vmax.f32 %v3608, 0.0
        %v3791 = vmax.f32 %v3610, 0.0
        %v3792 = vmax.f32 %v3033, 0.0
        %v3793 = vmax.f32 %v3035, 0.0
        %v3794 = vmax.f32 %v3226, 0.0
        %v3795 = vmax.f32 %v3228, 0.0
        %v3796 = vmax.f32 %v3419, 0.0
        %v3797 = vmax.f32 %v3421, 0.0
        %v3798 = vmax.f32 %v3612, 0.0
        %v3799 = vmax.f32 %v3614, 0.0
        %v3800 = vmax.f32 %v3039, 0.0
        %v3801 = vmax.f32 %v3041, 0.0
        %v3802 = vmax.f32 %v3232, 0.0
        %v3803 = vmax.f32 %v3234, 0.0
        %v3804 = vmax.f32 %v3425, 0.0
        %v3805 = vmax.f32 %v3427, 0.0
        %v3806 = vmax.f32 %v3618, 0.0
        %v3807 = vmax.f32 %v3620, 0.0
        %v3808 = vmax.f32 %v3043, 0.0
        %v3809 = vmax.f32 %v3045, 0.0
        %v3810 = vmax.f32 %v3236, 0.0
        %v3811 = vmax.f32 %v3238, 0.0
        %v3812 = vmax.f32 %v3429, 0.0
        %v3813 = vmax.f32 %v3431, 0.0
        %v3814 = vmax.f32 %v3622, 0.0
        %v3815 = vmax.f32 %v3624, 0.0
        %v3816 = vmax.f32 %v3049, 0.0
        %v3817 = vmax.f32 %v3051, 0.0
        %v3818 = vmax.f32 %v3242, 0.0
        %v3819 = vmax.f32 %v3244, 0.0
        %v3820 = vmax.f32 %v3435, 0.0
        %v3821 = vmax.f32 %v3437, 0.0
        %v3822 = vmax.f32 %v3628, 0.0
        %v3823 = vmax.f32 %v3630, 0.0
        %v3824 = vmax.f32 %v3053, 0.0
        %v3825 = vmax.f32 %v3055, 0.0
        %v3826 = vmax.f32 %v3246, 0.0
        %v3827 = vmax.f32 %v3248, 0.0
        %v3828 = vmax.f32 %v3439, 0.0
        %v3829 = vmax.f32 %v3441, 0.0
        %v3830 = vmax.f32 %v3632, 0.0
        %v3831 = vmax.f32 %v3634, 0.0
        %v3832 = vmax.f32 %v3059, 0.0
        %v3833 = vmax.f32 %v3061, 0.0
        %v3834 = vmax.f32 %v3252, 0.0
        %v3835 = vmax.f32 %v3254, 0.0
        %v3836 = vmax.f32 %v3445, 0.0
        %v3837 = vmax.f32 %v3447, 0.0
        %v3838 = vmax.f32 %v3638, 0.0
        %v3839 = vmax.f32 %v3640, 0.0
        %v3840 = vmax.f32 %v3063, 0.0
        %v3841 = vmax.f32 %v3065, 0.0
        %v3842 = vmax.f32 %v3256, 0.0
        %v3843 = vmax.f32 %v3258, 0.0
        %v3844 = vmax.f32 %v3449, 0.0
        %v3845 = vmax.f32 %v3451, 0.0
        %v3846 = vmax.f32 %v3642, 0.0
        %v3847 = vmax.f32 %v3644, 0.0
        %v3848 = vmax.f32 %v3069, 0.0
        %v3849 = vmax.f32 %v3071, 0.0
        %v3850 = vmax.f32 %v3262, 0.0
        %v3851 = vmax.f32 %v3264, 0.0
        %v3852 = vmax.f32 %v3455, 0.0
        %v3853 = vmax.f32 %v3457, 0.0
        %v3854 = vmax.f32 %v3648, 0.0
        %v3855 = vmax.f32 %v3650, 0.0
        %v3856 = vmax.f32 %v3073, 0.0
        %v3857 = vmax.f32 %v3075, 0.0
        %v3858 = vmax.f32 %v3266, 0.0
        %v3859 = vmax.f32 %v3268, 0.0
        %v3860 = vmax.f32 %v3459, 0.0
        %v3861 = vmax.f32 %v3461, 0.0
        %v3862 = vmax.f32 %v3652, 0.0
        %v3863 = vmax.f32 %v3654, 0.0
        %v3864 = vmax.f32 %v3079, 0.0
        %v3865 = vmax.f32 %v3081, 0.0
        %v3866 = vmax.f32 %v3272, 0.0
        %v3867 = vmax.f32 %v3274, 0.0
        %v3868 = vmax.f32 %v3465, 0.0
        %v3869 = vmax.f32 %v3467, 0.0
        %v3870 = vmax.f32 %v3658, 0.0
        %v3871 = vmax.f32 %v3660, 0.0
        %v3872 = vmax.f32 %v3083, 0.0
        %v3873 = vmax.f32 %v3085, 0.0
        %v3874 = vmax.f32 %v3276, 0.0
        %v3875 = vmax.f32 %v3278, 0.0
        %v3876 = vmax.f32 %v3469, 0.0
        %v3877 = vmax.f32 %v3471, 0.0
        %v3878 = vmax.f32 %v3662, 0.0
        %v3879 = vmax.f32 %v3664, 0.0
        %v3880 = vmax.f32 %v3089, 0.0
        %v3881 = vmax.f32 %v3091, 0.0
        %v3882 = vmax.f32 %v3282, 0.0
        %v3883 = vmax.f32 %v3284, 0.0
        %v3884 = vmax.f32 %v3475, 0.0
        %v3885 = vmax.f32 %v3477, 0.0
        %v3886 = vmax.f32 %v3668, 0.0
        %v3887 = vmax.f32 %v3670, 0.0
        %v3888 = vmax.f32 %v3093, 0.0
        %v3889 = vmax.f32 %v3095, 0.0
        %v3890 = vmax.f32 %v3286, 0.0
        %v3891 = vmax.f32 %v3288, 0.0
        %v3892 = vmax.f32 %v3479, 0.0
        %v3893 = vmax.f32 %v3481, 0.0
        %v3894 = vmax.f32 %v3672, 0.0
        %v3895 = vmax.f32 %v3674, 0.0
        %v3896 = vmax.f32 %v3099, 0.0
        %v3897 = vmax.f32 %v3101, 0.0
        %v3898 = vmax.f32 %v3292, 0.0
        %v3899 = vmax.f32 %v3294, 0.0
        %v3900 = vmax.f32 %v3485, 0.0
        %v3901 = vmax.f32 %v3487, 0.0
        %v3902 = vmax.f32 %v3678, 0.0
        %v3903 = vmax.f32 %v3680, 0.0
        %v3904 = vmax.f32 %v3103, 0.0
        %v3905 = vmax.f32 %v3105, 0.0
        %v3906 = vmax.f32 %v3296, 0.0
        %v3907 = vmax.f32 %v3298, 0.0
        %v3908 = vmax.f32 %v3489, 0.0
        %v3909 = vmax.f32 %v3491, 0.0
        %v3910 = vmax.f32 %v3682, 0.0
        %v3911 = vmax.f32 %v3684, 0.0
        %v3912 = vmax.f32 %v3109, 0.0
        %v3913 = vmax.f32 %v3111, 0.0
        %v3914 = vmax.f32 %v3302, 0.0
        %v3915 = vmax.f32 %v3304, 0.0
        %v3916 = vmax.f32 %v3495, 0.0
        %v3917 = vmax.f32 %v3497, 0.0
        %v3918 = vmax.f32 %v3688, 0.0
        %v3919 = vmax.f32 %v3690, 0.0
        %v3920 = vmax.f32 %v3113, 0.0
        %v3921 = vmax.f32 %v3115, 0.0
        %v3922 = vmax.f32 %v3306, 0.0
        %v3923 = vmax.f32 %v3308, 0.0
        %v3924 = vmax.f32 %v3499, 0.0
        %v3925 = vmax.f32 %v3501, 0.0
        %v3926 = vmax.f32 %v3692, 0.0
        %v3927 = vmax.f32 %v3694, 0.0
        %v3928 = vmax.f32 %v3119, 0.0
        %v3929 = vmax.f32 %v3121, 0.0
        %v3930 = vmax.f32 %v3312, 0.0
        %v3931 = vmax.f32 %v3314, 0.0
        %v3932 = vmax.f32 %v3505, 0.0
        %v3933 = vmax.f32 %v3507, 0.0
        %v3934 = vmax.f32 %v3698, 0.0
        %v3935 = vmax.f32 %v3700, 0.0
        %v3936 = vmax.f32 %v3123, 0.0
        %v3937 = vmax.f32 %v3125, 0.0
        %v3938 = vmax.f32 %v3316, 0.0
        %v3939 = vmax.f32 %v3318, 0.0
        %v3940 = vmax.f32 %v3509, 0.0
        %v3941 = vmax.f32 %v3511, 0.0
        %v3942 = vmax.f32 %v3702, 0.0
        %v3943 = vmax.f32 %v3704, 0.0
        %v3944 = vmax.f32 %v3129, 0.0
        %v3945 = vmax.f32 %v3131, 0.0
        %v3946 = vmax.f32 %v3322, 0.0
        %v3947 = vmax.f32 %v3324, 0.0
        %v3948 = vmax.f32 %v3515, 0.0
        %v3949 = vmax.f32 %v3517, 0.0
        %v3950 = vmax.f32 %v3708, 0.0
        %v3951 = vmax.f32 %v3710, 0.0
        %v3952 = vmax.f32 %v3133, 0.0
        %v3953 = vmax.f32 %v3135, 0.0
        %v3954 = vmax.f32 %v3326, 0.0
        %v3955 = vmax.f32 %v3328, 0.0
        %v3956 = vmax.f32 %v3519, 0.0
        %v3957 = vmax.f32 %v3521, 0.0
        %v3958 = vmax.f32 %v3712, 0.0
        %v3959 = vmax.f32 %v3714, 0.0
        %v3960 = vmax.f32 %v3139, 0.0
        %v3961 = vmax.f32 %v3141, 0.0
        %v3962 = vmax.f32 %v3332, 0.0
        %v3963 = vmax.f32 %v3334, 0.0
        %v3964 = vmax.f32 %v3525, 0.0
        %v3965 = vmax.f32 %v3527, 0.0
        %v3966 = vmax.f32 %v3718, 0.0
        %v3967 = vmax.f32 %v3720, 0.0
        %v3968 = vmax.f32 %v3143, 0.0
        %v3969 = vmax.f32 %v3145, 0.0
        %v3970 = vmax.f32 %v3336, 0.0
        %v3971 = vmax.f32 %v3338, 0.0
        %v3972 = vmax.f32 %v3529, 0.0
        %v3973 = vmax.f32 %v3531, 0.0
        %v3974 = vmax.f32 %v3722, 0.0
        %v3975 = vmax.f32 %v3724, 0.0
        %v3976 = vmax.f32 %v3149, 0.0
        %v3977 = vmax.f32 %v3151, 0.0
        %v3978 = vmax.f32 %v3342, 0.0
        %v3979 = vmax.f32 %v3344, 0.0
        %v3980 = vmax.f32 %v3535, 0.0
        %v3981 = vmax.f32 %v3537, 0.0
        %v3982 = vmax.f32 %v3728, 0.0
        %v3983 = vmax.f32 %v3730, 0.0
        %v3984 = vmax.f32 %v3153, 0.0
        %v3985 = vmax.f32 %v3155, 0.0
        %v3986 = vmax.f32 %v3346, 0.0
        %v3987 = vmax.f32 %v3348, 0.0
        %v3988 = vmax.f32 %v3539, 0.0
        %v3989 = vmax.f32 %v3541, 0.0
        %v3990 = vmax.f32 %v3732, 0.0
        %v3991 = vmax.f32 %v3734, 0.0
        %v3992 = vpack.c.bf16 %v3744, %v3736
        %v3993 = vpack.c.bf16 %v3745, %v3737
        %v3994 = vpack.c.bf16 %v3746, %v3738
        %v3995 = vpack.c.bf16 %v3747, %v3739
        %v3996 = vpack.c.bf16 %v3748, %v3740
        %v3997 = vpack.c.bf16 %v3749, %v3741
        %v3998 = vpack.c.bf16 %v3750, %v3742
        %v3999 = vpack.c.bf16 %v3751, %v3743
        %v4000 = vpack.c.bf16 %v3760, %v3752
        %v4001 = vpack.c.bf16 %v3761, %v3753
        %v4002 = vpack.c.bf16 %v3762, %v3754
        %v4003 = vpack.c.bf16 %v3763, %v3755
        %v4004 = vpack.c.bf16 %v3764, %v3756
        %v4005 = vpack.c.bf16 %v3765, %v3757
        %v4006 = vpack.c.bf16 %v3766, %v3758
        %v4007 = vpack.c.bf16 %v3767, %v3759
        %v4008 = vpack.c.bf16 %v3776, %v3768
        %v4009 = vpack.c.bf16 %v3777, %v3769
        %v4010 = vpack.c.bf16 %v3778, %v3770
        %v4011 = vpack.c.bf16 %v3779, %v3771
        %v4012 = vpack.c.bf16 %v3780, %v3772
        %v4013 = vpack.c.bf16 %v3781, %v3773
        %v4014 = vpack.c.bf16 %v3782, %v3774
        %v4015 = vpack.c.bf16 %v3783, %v3775
        %v4016 = vpack.c.bf16 %v3792, %v3784
        %v4017 = vpack.c.bf16 %v3793, %v3785
        %v4018 = vpack.c.bf16 %v3794, %v3786
        %v4019 = vpack.c.bf16 %v3795, %v3787
        %v4020 = vpack.c.bf16 %v3796, %v3788
        %v4021 = vpack.c.bf16 %v3797, %v3789
        %v4022 = vpack.c.bf16 %v3798, %v3790
        %v4023 = vpack.c.bf16 %v3799, %v3791
        %v4024 = vpack.c.bf16 %v3808, %v3800
        %v4025 = vpack.c.bf16 %v3809, %v3801
        %v4026 = vpack.c.bf16 %v3810, %v3802
        %v4027 = vpack.c.bf16 %v3811, %v3803
        %v4028 = vpack.c.bf16 %v3812, %v3804
        %v4029 = vpack.c.bf16 %v3813, %v3805
        %v4030 = vpack.c.bf16 %v3814, %v3806
        %v4031 = vpack.c.bf16 %v3815, %v3807
        %v4032 = vpack.c.bf16 %v3824, %v3816
        %v4033 = vpack.c.bf16 %v3825, %v3817
        %v4034 = vpack.c.bf16 %v3826, %v3818
        %v4035 = vpack.c.bf16 %v3827, %v3819
        %v4036 = vpack.c.bf16 %v3828, %v3820
        %v4037 = vpack.c.bf16 %v3829, %v3821
        %v4038 = vpack.c.bf16 %v3830, %v3822
        %v4039 = vpack.c.bf16 %v3831, %v3823
        %v4040 = vpack.c.bf16 %v3840, %v3832
        %v4041 = vpack.c.bf16 %v3841, %v3833
        %v4042 = vpack.c.bf16 %v3842, %v3834
        %v4043 = vpack.c.bf16 %v3843, %v3835
        %v4044 = vpack.c.bf16 %v3844, %v3836
        %v4045 = vpack.c.bf16 %v3845, %v3837
        %v4046 = vpack.c.bf16 %v3846, %v3838
        %v4047 = vpack.c.bf16 %v3847, %v3839
        %v4048 = vpack.c.bf16 %v3856, %v3848
        %v4049 = vpack.c.bf16 %v3857, %v3849
        %v4050 = vpack.c.bf16 %v3858, %v3850
        %v4051 = vpack.c.bf16 %v3859, %v3851
        %v4052 = vpack.c.bf16 %v3860, %v3852
        %v4053 = vpack.c.bf16 %v3861, %v3853
        %v4054 = vpack.c.bf16 %v3862, %v3854
        %v4055 = vpack.c.bf16 %v3863, %v3855
        %v4056 = vpack.c.bf16 %v3872, %v3864
        %v4057 = vpack.c.bf16 %v3873, %v3865
        %v4058 = vpack.c.bf16 %v3874, %v3866
        %v4059 = vpack.c.bf16 %v3875, %v3867
        %v4060 = vpack.c.bf16 %v3876, %v3868
        %v4061 = vpack.c.bf16 %v3877, %v3869
        %v4062 = vpack.c.bf16 %v3878, %v3870
        %v4063 = vpack.c.bf16 %v3879, %v3871
        %v4064 = vpack.c.bf16 %v3888, %v3880
        %v4065 = vpack.c.bf16 %v3889, %v3881
        %v4066 = vpack.c.bf16 %v3890, %v3882
        %v4067 = vpack.c.bf16 %v3891, %v3883
        %v4068 = vpack.c.bf16 %v3892, %v3884
        %v4069 = vpack.c.bf16 %v3893, %v3885
        %v4070 = vpack.c.bf16 %v3894, %v3886
        %v4071 = vpack.c.bf16 %v3895, %v3887
        %v4072 = vpack.c.bf16 %v3904, %v3896
        %v4073 = vpack.c.bf16 %v3905, %v3897
        %v4074 = vpack.c.bf16 %v3906, %v3898
        %v4075 = vpack.c.bf16 %v3907, %v3899
        %v4076 = vpack.c.bf16 %v3908, %v3900
        %v4077 = vpack.c.bf16 %v3909, %v3901
        %v4078 = vpack.c.bf16 %v3910, %v3902
        %v4079 = vpack.c.bf16 %v3911, %v3903
        %v4080 = vpack.c.bf16 %v3920, %v3912
        %v4081 = vpack.c.bf16 %v3921, %v3913
        %v4082 = vpack.c.bf16 %v3922, %v3914
        %v4083 = vpack.c.bf16 %v3923, %v3915
        %v4084 = vpack.c.bf16 %v3924, %v3916
        %v4085 = vpack.c.bf16 %v3925, %v3917
        %v4086 = vpack.c.bf16 %v3926, %v3918
        %v4087 = vpack.c.bf16 %v3927, %v3919
        %v4088 = vpack.c.bf16 %v3936, %v3928
        %v4089 = vpack.c.bf16 %v3937, %v3929
        %v4090 = vpack.c.bf16 %v3938, %v3930
        %v4091 = vpack.c.bf16 %v3939, %v3931
        %v4092 = vpack.c.bf16 %v3940, %v3932
        %v4093 = vpack.c.bf16 %v3941, %v3933
        %v4094 = vpack.c.bf16 %v3942, %v3934
        %v4095 = vpack.c.bf16 %v3943, %v3935
        %v4096 = vpack.c.bf16 %v3952, %v3944
        %v4097 = vpack.c.bf16 %v3953, %v3945
        %v4098 = vpack.c.bf16 %v3954, %v3946
        %v4099 = vpack.c.bf16 %v3955, %v3947
        %v4100 = vpack.c.bf16 %v3956, %v3948
        %v4101 = vpack.c.bf16 %v3957, %v3949
        %v4102 = vpack.c.bf16 %v3958, %v3950
        %v4103 = vpack.c.bf16 %v3959, %v3951
        %v4104 = vpack.c.bf16 %v3968, %v3960
        %v4105 = vpack.c.bf16 %v3969, %v3961
        %v4106 = vpack.c.bf16 %v3970, %v3962
        %v4107 = vpack.c.bf16 %v3971, %v3963
        %v4108 = vpack.c.bf16 %v3972, %v3964
        %v4109 = vpack.c.bf16 %v3973, %v3965
        %v4110 = vpack.c.bf16 %v3974, %v3966
        %v4111 = vpack.c.bf16 %v3975, %v3967
        %v4112 = vpack.c.bf16 %v3984, %v3976
        %v4113 = vpack.c.bf16 %v3985, %v3977
        %v4114 = vpack.c.bf16 %v3986, %v3978
        %v4115 = vpack.c.bf16 %v3987, %v3979
        %v4116 = vpack.c.bf16 %v3988, %v3980
        %v4117 = vpack.c.bf16 %v3989, %v3981
        %v4118 = vpack.c.bf16 %v3990, %v3982
        %v4119 = vpack.c.bf16 %v3991, %v3983
        %v4120 = vld [vmem:[%s4] sm:$0xff]
        %v4121 = vld [vmem:[%s4 + $0x8] sm:$0xff]
        %v4122 = vld [vmem:[%s4 + $0x10] sm:$0xff]
        %v4123 = vld [vmem:[%s4 + $0x18] sm:$0xff]
        %v4124 = vld [vmem:[%s4 + $0x20] sm:$0xff]
        %v4125 = vld [vmem:[%s4 + $0x28] sm:$0xff]
        %v4126 = vld [vmem:[%s4 + $0x30] sm:$0xff]
        %v4127 = vld [vmem:[%s4 + $0x38] sm:$0xff]
        %v4128 = vld [vmem:[%s4 + $0x40] sm:$0xff]
        %v4129 = vld [vmem:[%s4 + $0x48] sm:$0xff]
        %v4130 = vld [vmem:[%s4 + $0x50] sm:$0xff]
        %v4131 = vld [vmem:[%s4 + $0x58] sm:$0xff]
        %v4132 = vld [vmem:[%s4 + $0x60] sm:$0xff]
        %v4133 = vld [vmem:[%s4 + $0x68] sm:$0xff]
        %v4134 = vld [vmem:[%s4 + $0x70] sm:$0xff]
        %v4135 = vld [vmem:[%s4 + $0x78] sm:$0xff]
        %v4136 = vld [vmem:[%s4 + $0x80] sm:$0xff]
        %v4137 = vld [vmem:[%s4 + $0x88] sm:$0xff]
        %v4138 = vld [vmem:[%s4 + $0x90] sm:$0xff]
        %v4139 = vld [vmem:[%s4 + $0x98] sm:$0xff]
        %v4140 = vld [vmem:[%s4 + $0xa0] sm:$0xff]
        %v4141 = vld [vmem:[%s4 + $0xa8] sm:$0xff]
        %v4142 = vld [vmem:[%s4 + $0xb0] sm:$0xff]
        %v4143 = vld [vmem:[%s4 + $0xb8] sm:$0xff]
        %v4144 = vld [vmem:[%s4 + $0xc0] sm:$0xff]
        %v4145 = vld [vmem:[%s4 + $0xc8] sm:$0xff]
        %v4146 = vld [vmem:[%s4 + $0xd0] sm:$0xff]
        %v4147 = vld [vmem:[%s4 + $0xd8] sm:$0xff]
        %v4148 = vld [vmem:[%s4 + $0xe0] sm:$0xff]
        %v4149 = vld [vmem:[%s4 + $0xe8] sm:$0xff]
        %v4150 = vld [vmem:[%s4 + $0xf0] sm:$0xff]
        %v4151 = vld [vmem:[%s4 + $0xf8] sm:$0xff]
        %v4152 = vld [vmem:[%s5] sm:$0xff]
        %v4153 = vld [vmem:[%s5 + $0x8] sm:$0xff]
        %v4154 = vld [vmem:[%s5 + $0x10] sm:$0xff]
        %v4155 = vld [vmem:[%s5 + $0x18] sm:$0xff]
        %v4156 = vld [vmem:[%s5 + $0x20] sm:$0xff]
        %v4157 = vld [vmem:[%s5 + $0x28] sm:$0xff]
        %v4158 = vld [vmem:[%s5 + $0x30] sm:$0xff]
        %v4159 = vld [vmem:[%s5 + $0x38] sm:$0xff]
        %v4160 = vld [vmem:[%s5 + $0x40] sm:$0xff]
        %v4161 = vld [vmem:[%s5 + $0x48] sm:$0xff]
        %v4162 = vld [vmem:[%s5 + $0x50] sm:$0xff]
        %v4163 = vld [vmem:[%s5 + $0x58] sm:$0xff]
        %v4164 = vld [vmem:[%s5 + $0x60] sm:$0xff]
        %v4165 = vld [vmem:[%s5 + $0x68] sm:$0xff]
        %v4166 = vld [vmem:[%s5 + $0x70] sm:$0xff]
        %v4167 = vld [vmem:[%s5 + $0x78] sm:$0xff]
        %v4168 = vld [vmem:[%s5 + $0x80] sm:$0xff]
        %v4169 = vld [vmem:[%s5 + $0x88] sm:$0xff]
        %v4170 = vld [vmem:[%s5 + $0x90] sm:$0xff]
        %v4171 = vld [vmem:[%s5 + $0x98] sm:$0xff]
        %v4172 = vld [vmem:[%s5 + $0xa0] sm:$0xff]
        %v4173 = vld [vmem:[%s5 + $0xa8] sm:$0xff]
        %v4174 = vld [vmem:[%s5 + $0xb0] sm:$0xff]
        %v4175 = vld [vmem:[%s5 + $0xb8] sm:$0xff]
        %v4176 = vld [vmem:[%s5 + $0xc0] sm:$0xff]
        %v4177 = vld [vmem:[%s5 + $0xc8] sm:$0xff]
        %v4178 = vld [vmem:[%s5 + $0xd0] sm:$0xff]
        %v4179 = vld [vmem:[%s5 + $0xd8] sm:$0xff]
        %v4180 = vld [vmem:[%s5 + $0xe0] sm:$0xff]
        %v4181 = vld [vmem:[%s5 + $0xe8] sm:$0xff]
        %v4182 = vld [vmem:[%s5 + $0xf0] sm:$0xff]
        %v4183 = vld [vmem:[%s5 + $0xf8] sm:$0xff]
        %4185 = vset.pattern.permute.xlu0 0
        %4186 = vperm.xlu0 %4185, %v4152
        %v4187 = vpop.permute.xlu0 %4186
        %4190 = vset.pattern.permute.xlu0 0
        %4191 = vperm.xlu0 %4190, %v4153
        %v4192 = vpop.permute.xlu0 %4191
        %4195 = vset.pattern.permute.xlu0 0
        %4196 = vperm.xlu0 %4195, %v4154
        %v4197 = vpop.permute.xlu0 %4196
        %4200 = vset.pattern.permute.xlu0 0
        %4201 = vperm.xlu0 %4200, %v4155
        %v4202 = vpop.permute.xlu0 %4201
        %4205 = vset.pattern.permute.xlu0 0
        %4206 = vperm.xlu0 %4205, %v4156
        %v4207 = vpop.permute.xlu0 %4206
        %4210 = vset.pattern.permute.xlu0 0
        %4211 = vperm.xlu0 %4210, %v4157
        %v4212 = vpop.permute.xlu0 %4211
        %4215 = vset.pattern.permute.xlu0 0
        %4216 = vperm.xlu0 %4215, %v4158
        %v4217 = vpop.permute.xlu0 %4216
        %4220 = vset.pattern.permute.xlu0 0
        %4221 = vperm.xlu0 %4220, %v4159
        %v4222 = vpop.permute.xlu0 %4221
        %4225 = vset.pattern.permute.xlu0 0
        %4226 = vperm.xlu0 %4225, %v4160
        %v4227 = vpop.permute.xlu0 %4226
        %4230 = vset.pattern.permute.xlu0 0
        %4231 = vperm.xlu0 %4230, %v4161
        %v4232 = vpop.permute.xlu0 %4231
        %4235 = vset.pattern.permute.xlu0 0
        %4236 = vperm.xlu0 %4235, %v4162
        %v4237 = vpop.permute.xlu0 %4236
        %4240 = vset.pattern.permute.xlu0 0
        %4241 = vperm.xlu0 %4240, %v4163
        %v4242 = vpop.permute.xlu0 %4241
        %4245 = vset.pattern.permute.xlu0 0
        %4246 = vperm.xlu0 %4245, %v4164
        %v4247 = vpop.permute.xlu0 %4246
        %4250 = vset.pattern.permute.xlu0 0
        %4251 = vperm.xlu0 %4250, %v4165
        %v4252 = vpop.permute.xlu0 %4251
        %4255 = vset.pattern.permute.xlu0 0
        %4256 = vperm.xlu0 %4255, %v4166
        %v4257 = vpop.permute.xlu0 %4256
        %4260 = vset.pattern.permute.xlu0 0
        %4261 = vperm.xlu0 %4260, %v4167
        %v4262 = vpop.permute.xlu0 %4261
        %4265 = vset.pattern.permute.xlu0 0
        %4266 = vperm.xlu0 %4265, %v4168
        %v4267 = vpop.permute.xlu0 %4266
        %4270 = vset.pattern.permute.xlu0 0
        %4271 = vperm.xlu0 %4270, %v4169
        %v4272 = vpop.permute.xlu0 %4271
        %4275 = vset.pattern.permute.xlu0 0
        %4276 = vperm.xlu0 %4275, %v4170
        %v4277 = vpop.permute.xlu0 %4276
        %4280 = vset.pattern.permute.xlu0 0
        %4281 = vperm.xlu0 %4280, %v4171
        %v4282 = vpop.permute.xlu0 %4281
        %4285 = vset.pattern.permute.xlu0 0
        %4286 = vperm.xlu0 %4285, %v4172
        %v4287 = vpop.permute.xlu0 %4286
        %4290 = vset.pattern.permute.xlu0 0
        %4291 = vperm.xlu0 %4290, %v4173
        %v4292 = vpop.permute.xlu0 %4291
        %4295 = vset.pattern.permute.xlu0 0
        %4296 = vperm.xlu0 %4295, %v4174
        %v4297 = vpop.permute.xlu0 %4296
        %4300 = vset.pattern.permute.xlu0 0
        %4301 = vperm.xlu0 %4300, %v4175
        %v4302 = vpop.permute.xlu0 %4301
        %4305 = vset.pattern.permute.xlu0 0
        %4306 = vperm.xlu0 %4305, %v4176
        %v4307 = vpop.permute.xlu0 %4306
        %4310 = vset.pattern.permute.xlu0 0
        %4311 = vperm.xlu0 %4310, %v4177
        %v4312 = vpop.permute.xlu0 %4311
        %4315 = vset.pattern.permute.xlu0 0
        %4316 = vperm.xlu0 %4315, %v4178
        %v4317 = vpop.permute.xlu0 %4316
        %4320 = vset.pattern.permute.xlu0 0
        %4321 = vperm.xlu0 %4320, %v4179
        %v4322 = vpop.permute.xlu0 %4321
        %4325 = vset.pattern.permute.xlu0 0
        %4326 = vperm.xlu0 %4325, %v4180
        %v4327 = vpop.permute.xlu0 %4326
        %4330 = vset.pattern.permute.xlu0 0
        %4331 = vperm.xlu0 %4330, %v4181
        %v4332 = vpop.permute.xlu0 %4331
        %4335 = vset.pattern.permute.xlu0 0
        %4336 = vperm.xlu0 %4335, %v4182
        %v4337 = vpop.permute.xlu0 %4336
        %4340 = vset.pattern.permute.xlu0 0
        %4341 = vperm.xlu0 %4340, %v4183
        %v4342 = vpop.permute.xlu0 %4341
        %v4376 = vunpack.c.l.b16 %v4120
        %v4377 = vunpack.c.h.b16 %v4120
        %v4378 = vunpack.c.l.b16 %v4121
        %v4379 = vunpack.c.h.b16 %v4121
        %v4380 = vunpack.c.l.b16 %v4122
        %v4381 = vunpack.c.h.b16 %v4122
        %v4382 = vunpack.c.l.b16 %v4123
        %v4383 = vunpack.c.h.b16 %v4123
        %v4384 = vunpack.c.l.b16 %v4124
        %v4385 = vunpack.c.h.b16 %v4124
        %v4386 = vunpack.c.l.b16 %v4125
        %v4387 = vunpack.c.h.b16 %v4125
        %v4388 = vunpack.c.l.b16 %v4126
        %v4389 = vunpack.c.h.b16 %v4126
        %v4390 = vunpack.c.l.b16 %v4127
        %v4391 = vunpack.c.h.b16 %v4127
        %v4392 = vunpack.c.l.b16 %v4128
        %v4393 = vunpack.c.h.b16 %v4128
        %v4394 = vunpack.c.l.b16 %v4129
        %v4395 = vunpack.c.h.b16 %v4129
        %v4396 = vunpack.c.l.b16 %v4130
        %v4397 = vunpack.c.h.b16 %v4130
        %v4398 = vunpack.c.l.b16 %v4131
        %v4399 = vunpack.c.h.b16 %v4131
        %v4400 = vunpack.c.l.b16 %v4132
        %v4401 = vunpack.c.h.b16 %v4132
        %v4402 = vunpack.c.l.b16 %v4133
        %v4403 = vunpack.c.h.b16 %v4133
        %v4404 = vunpack.c.l.b16 %v4134
        %v4405 = vunpack.c.h.b16 %v4134
        %v4406 = vunpack.c.l.b16 %v4135
        %v4407 = vunpack.c.h.b16 %v4135
        %v4408 = vunpack.c.l.b16 %v4136
        %v4409 = vunpack.c.h.b16 %v4136
        %v4410 = vunpack.c.l.b16 %v4137
        %v4411 = vunpack.c.h.b16 %v4137
        %v4412 = vunpack.c.l.b16 %v4138
        %v4413 = vunpack.c.h.b16 %v4138
        %v4414 = vunpack.c.l.b16 %v4139
        %v4415 = vunpack.c.h.b16 %v4139
        %v4416 = vunpack.c.l.b16 %v4140
        %v4417 = vunpack.c.h.b16 %v4140
        %v4418 = vunpack.c.l.b16 %v4141
        %v4419 = vunpack.c.h.b16 %v4141
        %v4420 = vunpack.c.l.b16 %v4142
        %v4421 = vunpack.c.h.b16 %v4142
        %v4422 = vunpack.c.l.b16 %v4143
        %v4423 = vunpack.c.h.b16 %v4143
        %v4424 = vunpack.c.l.b16 %v4144
        %v4425 = vunpack.c.h.b16 %v4144
        %v4426 = vunpack.c.l.b16 %v4145
        %v4427 = vunpack.c.h.b16 %v4145
        %v4428 = vunpack.c.l.b16 %v4146
        %v4429 = vunpack.c.h.b16 %v4146
        %v4430 = vunpack.c.l.b16 %v4147
        %v4431 = vunpack.c.h.b16 %v4147
        %v4432 = vunpack.c.l.b16 %v4148
        %v4433 = vunpack.c.h.b16 %v4148
        %v4434 = vunpack.c.l.b16 %v4149
        %v4435 = vunpack.c.h.b16 %v4149
        %v4436 = vunpack.c.l.b16 %v4150
        %v4437 = vunpack.c.h.b16 %v4150
        %v4438 = vunpack.c.l.b16 %v4151
        %v4439 = vunpack.c.h.b16 %v4151
        %v4440 = vpack.c.b16 %v4378, %v4376
        %v4441 = vpack.c.b16 %v4379, %v4377
        %v4442 = vpack.c.b16 %v4382, %v4380
        %v4443 = vpack.c.b16 %v4383, %v4381
        %v4444 = vpack.c.b16 %v4386, %v4384
        %v4445 = vpack.c.b16 %v4387, %v4385
        %v4446 = vpack.c.b16 %v4390, %v4388
        %v4447 = vpack.c.b16 %v4391, %v4389
        %v4448 = vpack.c.b16 %v4394, %v4392
        %v4449 = vpack.c.b16 %v4395, %v4393
        %v4450 = vpack.c.b16 %v4398, %v4396
        %v4451 = vpack.c.b16 %v4399, %v4397
        %v4452 = vpack.c.b16 %v4402, %v4400
        %v4453 = vpack.c.b16 %v4403, %v4401
        %v4454 = vpack.c.b16 %v4406, %v4404
        %v4455 = vpack.c.b16 %v4407, %v4405
        %v4456 = vpack.c.b16 %v4410, %v4408
        %v4457 = vpack.c.b16 %v4411, %v4409
        %v4458 = vpack.c.b16 %v4414, %v4412
        %v4459 = vpack.c.b16 %v4415, %v4413
        %v4460 = vpack.c.b16 %v4418, %v4416
        %v4461 = vpack.c.b16 %v4419, %v4417
        %v4462 = vpack.c.b16 %v4422, %v4420
        %v4463 = vpack.c.b16 %v4423, %v4421
        %v4464 = vpack.c.b16 %v4426, %v4424
        %v4465 = vpack.c.b16 %v4427, %v4425
        %v4466 = vpack.c.b16 %v4430, %v4428
        %v4467 = vpack.c.b16 %v4431, %v4429
        %v4468 = vpack.c.b16 %v4434, %v4432
        %v4469 = vpack.c.b16 %v4435, %v4433
        %v4470 = vpack.c.b16 %v4438, %v4436
        %v4471 = vpack.c.b16 %v4439, %v4437
        %4504 = vmatprep.subr.bf16.mxu0 %v4049
        %4505 = vmatpush1.bf16.msra.mxu0 %v4048
        %4506 = vmatprep.subr.bf16.mxu0 %v4041
        %4507 = vmatpush1.bf16.msra.mxu0 %v4040
        %4508 = vmatprep.subr.bf16.mxu0 %v4033
        %4509 = vmatpush1.bf16.msra.mxu0 %v4032
        %4510 = vmatprep.subr.bf16.mxu0 %v4025
        %4511 = vmatpush1.bf16.msra.mxu0 %v4024
        %4512 = vmatprep.subr.bf16.mxu0 %v4017
        %4513 = vmatpush1.bf16.msra.mxu0 %v4016
        %4514 = vmatprep.subr.bf16.mxu0 %v4009
        %4515 = vmatpush1.bf16.msra.mxu0 %v4008
        %4516 = vmatprep.subr.bf16.mxu0 %v4001
        %4517 = vmatpush1.bf16.msra.mxu0 %v4000
        %4518 = vmatprep.subr.bf16.mxu0 %v3993
        %4519 = vmatpush1.bf16.msra.mxu0 %v3992
        %4520 = vmatprep.subr.bf16.mxu0 %v4113
        %4521 = vmatpush2.bf16.msra.mxu0 %v4112
        %4522 = vmatprep.subr.bf16.mxu0 %v4105
        %4523 = vmatpush2.bf16.msra.mxu0 %v4104
        %4524 = vmatprep.subr.bf16.mxu0 %v4097
        %4525 = vmatpush2.bf16.msra.mxu0 %v4096
        %4526 = vmatprep.subr.bf16.mxu0 %v4089
        %4527 = vmatpush2.bf16.msra.mxu0 %v4088
        %4528 = vmatprep.subr.bf16.mxu0 %v4081
        %4529 = vmatpush2.bf16.msra.mxu0 %v4080
        %4530 = vmatprep.subr.bf16.mxu0 %v4073
        %4531 = vmatpush2.bf16.msra.mxu0 %v4072
        %4532 = vmatprep.subr.bf16.mxu0 %v4065
        %4533 = vmatpush2.bf16.msra.mxu0 %v4064
        %4534 = vmatprep.subr.bf16.mxu0 %v4057
        %4535 = vmatpush2.bf16.msra.mxu0 %v4056
        %4536 = vmatprep.mubr.bf16.mxu0 %v4441
        %4537 = vmatmul.mubr.bf16.gmra.mxu0 %v4440
        %v4538 = vpop.f32.mrf.mxu0
        %v4539 = vadd.f32 %v4187, %v4538
        %v4540 = vpop.f32.mrf.mxu0
        %v4541 = vadd.f32 %v4187, %v4540
        %v4542 = vpop.f32.mrf.mxu0
        %v4543 = vadd.f32 %v4192, %v4542
        %v4544 = vpop.f32.mrf.mxu0
        %v4545 = vadd.f32 %v4192, %v4544
        %4546 = vmatprep.mubr.bf16.mxu0 %v4443
        %4547 = vmatmul.mubr.bf16.gmra.mxu0 %v4442
        %v4548 = vpop.f32.mrf.mxu0
        %v4549 = vadd.f32 %v4197, %v4548
        %v4550 = vpop.f32.mrf.mxu0
        %v4551 = vadd.f32 %v4197, %v4550
        %v4552 = vpop.f32.mrf.mxu0
        %v4553 = vadd.f32 %v4202, %v4552
        %v4554 = vpop.f32.mrf.mxu0
        %v4555 = vadd.f32 %v4202, %v4554
        %4556 = vmatprep.mubr.bf16.mxu0 %v4445
        %4557 = vmatmul.mubr.bf16.gmra.mxu0 %v4444
        %v4558 = vpop.f32.mrf.mxu0
        %v4559 = vadd.f32 %v4207, %v4558
        %v4560 = vpop.f32.mrf.mxu0
        %v4561 = vadd.f32 %v4207, %v4560
        %v4562 = vpop.f32.mrf.mxu0
        %v4563 = vadd.f32 %v4212, %v4562
        %v4564 = vpop.f32.mrf.mxu0
        %v4565 = vadd.f32 %v4212, %v4564
        %4566 = vmatprep.mubr.bf16.mxu0 %v4447
        %4567 = vmatmul.mubr.bf16.gmra.mxu0 %v4446
        %v4568 = vpop.f32.mrf.mxu0
        %v4569 = vadd.f32 %v4217, %v4568
        %v4570 = vpop.f32.mrf.mxu0
        %v4571 = vadd.f32 %v4217, %v4570
        %v4572 = vpop.f32.mrf.mxu0
        %v4573 = vadd.f32 %v4222, %v4572
        %v4574 = vpop.f32.mrf.mxu0
        %v4575 = vadd.f32 %v4222, %v4574
        %4576 = vmatprep.mubr.bf16.mxu0 %v4449
        %4577 = vmatmul.mubr.bf16.gmra.mxu0 %v4448
        %v4578 = vpop.f32.mrf.mxu0
        %v4579 = vadd.f32 %v4227, %v4578
        %v4580 = vpop.f32.mrf.mxu0
        %v4581 = vadd.f32 %v4227, %v4580
        %v4582 = vpop.f32.mrf.mxu0
        %v4583 = vadd.f32 %v4232, %v4582
        %v4584 = vpop.f32.mrf.mxu0
        %v4585 = vadd.f32 %v4232, %v4584
        %4586 = vmatprep.mubr.bf16.mxu0 %v4451
        %4587 = vmatmul.mubr.bf16.gmra.mxu0 %v4450
        %v4588 = vpop.f32.mrf.mxu0
        %v4589 = vadd.f32 %v4237, %v4588
        %v4590 = vpop.f32.mrf.mxu0
        %v4591 = vadd.f32 %v4237, %v4590
        %v4592 = vpop.f32.mrf.mxu0
        %v4593 = vadd.f32 %v4242, %v4592
        %v4594 = vpop.f32.mrf.mxu0
        %v4595 = vadd.f32 %v4242, %v4594
        %4596 = vmatprep.mubr.bf16.mxu0 %v4453
        %4597 = vmatmul.mubr.bf16.gmra.mxu0 %v4452
        %v4598 = vpop.f32.mrf.mxu0
        %v4599 = vadd.f32 %v4247, %v4598
        %v4600 = vpop.f32.mrf.mxu0
        %v4601 = vadd.f32 %v4247, %v4600
        %v4602 = vpop.f32.mrf.mxu0
        %v4603 = vadd.f32 %v4252, %v4602
        %v4604 = vpop.f32.mrf.mxu0
        %v4605 = vadd.f32 %v4252, %v4604
        %4606 = vmatprep.mubr.bf16.mxu0 %v4455
        %4607 = vmatmul.mubr.bf16.gmra.mxu0 %v4454
        %v4608 = vpop.f32.mrf.mxu0
        %v4609 = vadd.f32 %v4257, %v4608
        %v4610 = vpop.f32.mrf.mxu0
        %v4611 = vadd.f32 %v4257, %v4610
        %v4612 = vpop.f32.mrf.mxu0
        %v4613 = vadd.f32 %v4262, %v4612
        %v4614 = vpop.f32.mrf.mxu0
        %v4615 = vadd.f32 %v4262, %v4614
        %4616 = vmatprep.mubr.bf16.mxu0 %v4457
        %4617 = vmatmul.mubr.bf16.gmra.mxu0 %v4456
        %v4618 = vpop.f32.mrf.mxu0
        %v4619 = vadd.f32 %v4267, %v4618
        %v4620 = vpop.f32.mrf.mxu0
        %v4621 = vadd.f32 %v4267, %v4620
        %v4622 = vpop.f32.mrf.mxu0
        %v4623 = vadd.f32 %v4272, %v4622
        %v4624 = vpop.f32.mrf.mxu0
        %v4625 = vadd.f32 %v4272, %v4624
        %4626 = vmatprep.mubr.bf16.mxu0 %v4459
        %4627 = vmatmul.mubr.bf16.gmra.mxu0 %v4458
        %v4628 = vpop.f32.mrf.mxu0
        %v4629 = vadd.f32 %v4277, %v4628
        %v4630 = vpop.f32.mrf.mxu0
        %v4631 = vadd.f32 %v4277, %v4630
        %v4632 = vpop.f32.mrf.mxu0
        %v4633 = vadd.f32 %v4282, %v4632
        %v4634 = vpop.f32.mrf.mxu0
        %v4635 = vadd.f32 %v4282, %v4634
        %4636 = vmatprep.mubr.bf16.mxu0 %v4461
        %4637 = vmatmul.mubr.bf16.gmra.mxu0 %v4460
        %v4638 = vpop.f32.mrf.mxu0
        %v4639 = vadd.f32 %v4287, %v4638
        %v4640 = vpop.f32.mrf.mxu0
        %v4641 = vadd.f32 %v4287, %v4640
        %v4642 = vpop.f32.mrf.mxu0
        %v4643 = vadd.f32 %v4292, %v4642
        %v4644 = vpop.f32.mrf.mxu0
        %v4645 = vadd.f32 %v4292, %v4644
        %4646 = vmatprep.mubr.bf16.mxu0 %v4463
        %4647 = vmatmul.mubr.bf16.gmra.mxu0 %v4462
        %v4648 = vpop.f32.mrf.mxu0
        %v4649 = vadd.f32 %v4297, %v4648
        %v4650 = vpop.f32.mrf.mxu0
        %v4651 = vadd.f32 %v4297, %v4650
        %v4652 = vpop.f32.mrf.mxu0
        %v4653 = vadd.f32 %v4302, %v4652
        %v4654 = vpop.f32.mrf.mxu0
        %v4655 = vadd.f32 %v4302, %v4654
        %4656 = vmatprep.mubr.bf16.mxu0 %v4465
        %4657 = vmatmul.mubr.bf16.gmra.mxu0 %v4464
        %v4658 = vpop.f32.mrf.mxu0
        %v4659 = vadd.f32 %v4307, %v4658
        %v4660 = vpop.f32.mrf.mxu0
        %v4661 = vadd.f32 %v4307, %v4660
        %v4662 = vpop.f32.mrf.mxu0
        %v4663 = vadd.f32 %v4312, %v4662
        %v4664 = vpop.f32.mrf.mxu0
        %v4665 = vadd.f32 %v4312, %v4664
        %4666 = vmatprep.mubr.bf16.mxu0 %v4467
        %4667 = vmatmul.mubr.bf16.gmra.mxu0 %v4466
        %v4668 = vpop.f32.mrf.mxu0
        %v4669 = vadd.f32 %v4317, %v4668
        %v4670 = vpop.f32.mrf.mxu0
        %v4671 = vadd.f32 %v4317, %v4670
        %v4672 = vpop.f32.mrf.mxu0
        %v4673 = vadd.f32 %v4322, %v4672
        %v4674 = vpop.f32.mrf.mxu0
        %v4675 = vadd.f32 %v4322, %v4674
        %4676 = vmatprep.mubr.bf16.mxu0 %v4469
        %4677 = vmatmul.mubr.bf16.gmra.mxu0 %v4468
        %v4678 = vpop.f32.mrf.mxu0
        %v4679 = vadd.f32 %v4327, %v4678
        %v4680 = vpop.f32.mrf.mxu0
        %v4681 = vadd.f32 %v4327, %v4680
        %v4682 = vpop.f32.mrf.mxu0
        %v4683 = vadd.f32 %v4332, %v4682
        %v4684 = vpop.f32.mrf.mxu0
        %v4685 = vadd.f32 %v4332, %v4684
        %4686 = vmatprep.mubr.bf16.mxu0 %v4471
        %4687 = vmatmul.mubr.bf16.gmra.mxu0 %v4470
        %v4688 = vpop.f32.mrf.mxu0
        %v4689 = vadd.f32 %v4337, %v4688
        %v4690 = vpop.f32.mrf.mxu0
        %v4691 = vadd.f32 %v4337, %v4690
        %v4692 = vpop.f32.mrf.mxu0
        %v4693 = vadd.f32 %v4342, %v4692
        %v4694 = vpop.f32.mrf.mxu0
        %v4695 = vadd.f32 %v4342, %v4694
        %4696 = vdwg.mxu0
        %4697 = vmatprep.subr.bf16.mxu0 %v4051
        %4698 = vmatpush1.bf16.msra.mxu0 %v4050
        %4699 = vmatprep.subr.bf16.mxu0 %v4043
        %4700 = vmatpush1.bf16.msra.mxu0 %v4042
        %4701 = vmatprep.subr.bf16.mxu0 %v4035
        %4702 = vmatpush1.bf16.msra.mxu0 %v4034
        %4703 = vmatprep.subr.bf16.mxu0 %v4027
        %4704 = vmatpush1.bf16.msra.mxu0 %v4026
        %4705 = vmatprep.subr.bf16.mxu0 %v4019
        %4706 = vmatpush1.bf16.msra.mxu0 %v4018
        %4707 = vmatprep.subr.bf16.mxu0 %v4011
        %4708 = vmatpush1.bf16.msra.mxu0 %v4010
        %4709 = vmatprep.subr.bf16.mxu0 %v4003
        %4710 = vmatpush1.bf16.msra.mxu0 %v4002
        %4711 = vmatprep.subr.bf16.mxu0 %v3995
        %4712 = vmatpush1.bf16.msra.mxu0 %v3994
        %4713 = vmatprep.subr.bf16.mxu0 %v4115
        %4714 = vmatpush2.bf16.msra.mxu0 %v4114
        %4715 = vmatprep.subr.bf16.mxu0 %v4107
        %4716 = vmatpush2.bf16.msra.mxu0 %v4106
        %4717 = vmatprep.subr.bf16.mxu0 %v4099
        %4718 = vmatpush2.bf16.msra.mxu0 %v4098
        %4719 = vmatprep.subr.bf16.mxu0 %v4091
        %4720 = vmatpush2.bf16.msra.mxu0 %v4090
        %4721 = vmatprep.subr.bf16.mxu0 %v4083
        %4722 = vmatpush2.bf16.msra.mxu0 %v4082
        %4723 = vmatprep.subr.bf16.mxu0 %v4075
        %4724 = vmatpush2.bf16.msra.mxu0 %v4074
        %4725 = vmatprep.subr.bf16.mxu0 %v4067
        %4726 = vmatpush2.bf16.msra.mxu0 %v4066
        %4727 = vmatprep.subr.bf16.mxu0 %v4059
        %4728 = vmatpush2.bf16.msra.mxu0 %v4058
        %4729 = vmatprep.mubr.bf16.mxu0 %v4441
        %4730 = vmatmul.mubr.bf16.gmra.mxu0 %v4440
        %v4731 = vpop.f32.mrf.mxu0
        %v4732 = vadd.f32 %v4187, %v4731
        %v4733 = vpop.f32.mrf.mxu0
        %v4734 = vadd.f32 %v4187, %v4733
        %v4735 = vpop.f32.mrf.mxu0
        %v4736 = vadd.f32 %v4192, %v4735
        %v4737 = vpop.f32.mrf.mxu0
        %v4738 = vadd.f32 %v4192, %v4737
        %4739 = vmatprep.mubr.bf16.mxu0 %v4443
        %4740 = vmatmul.mubr.bf16.gmra.mxu0 %v4442
        %v4741 = vpop.f32.mrf.mxu0
        %v4742 = vadd.f32 %v4197, %v4741
        %v4743 = vpop.f32.mrf.mxu0
        %v4744 = vadd.f32 %v4197, %v4743
        %v4745 = vpop.f32.mrf.mxu0
        %v4746 = vadd.f32 %v4202, %v4745
        %v4747 = vpop.f32.mrf.mxu0
        %v4748 = vadd.f32 %v4202, %v4747
        %4749 = vmatprep.mubr.bf16.mxu0 %v4445
        %4750 = vmatmul.mubr.bf16.gmra.mxu0 %v4444
        %v4751 = vpop.f32.mrf.mxu0
        %v4752 = vadd.f32 %v4207, %v4751
        %v4753 = vpop.f32.mrf.mxu0
        %v4754 = vadd.f32 %v4207, %v4753
        %v4755 = vpop.f32.mrf.mxu0
        %v4756 = vadd.f32 %v4212, %v4755
        %v4757 = vpop.f32.mrf.mxu0
        %v4758 = vadd.f32 %v4212, %v4757
        %4759 = vmatprep.mubr.bf16.mxu0 %v4447
        %4760 = vmatmul.mubr.bf16.gmra.mxu0 %v4446
        %v4761 = vpop.f32.mrf.mxu0
        %v4762 = vadd.f32 %v4217, %v4761
        %v4763 = vpop.f32.mrf.mxu0
        %v4764 = vadd.f32 %v4217, %v4763
        %v4765 = vpop.f32.mrf.mxu0
        %v4766 = vadd.f32 %v4222, %v4765
        %v4767 = vpop.f32.mrf.mxu0
        %v4768 = vadd.f32 %v4222, %v4767
        %4769 = vmatprep.mubr.bf16.mxu0 %v4449
        %4770 = vmatmul.mubr.bf16.gmra.mxu0 %v4448
        %v4771 = vpop.f32.mrf.mxu0
        %v4772 = vadd.f32 %v4227, %v4771
        %v4773 = vpop.f32.mrf.mxu0
        %v4774 = vadd.f32 %v4227, %v4773
        %v4775 = vpop.f32.mrf.mxu0
        %v4776 = vadd.f32 %v4232, %v4775
        %v4777 = vpop.f32.mrf.mxu0
        %v4778 = vadd.f32 %v4232, %v4777
        %4779 = vmatprep.mubr.bf16.mxu0 %v4451
        %4780 = vmatmul.mubr.bf16.gmra.mxu0 %v4450
        %v4781 = vpop.f32.mrf.mxu0
        %v4782 = vadd.f32 %v4237, %v4781
        %v4783 = vpop.f32.mrf.mxu0
        %v4784 = vadd.f32 %v4237, %v4783
        %v4785 = vpop.f32.mrf.mxu0
        %v4786 = vadd.f32 %v4242, %v4785
        %v4787 = vpop.f32.mrf.mxu0
        %v4788 = vadd.f32 %v4242, %v4787
        %4789 = vmatprep.mubr.bf16.mxu0 %v4453
        %4790 = vmatmul.mubr.bf16.gmra.mxu0 %v4452
        %v4791 = vpop.f32.mrf.mxu0
        %v4792 = vadd.f32 %v4247, %v4791
        %v4793 = vpop.f32.mrf.mxu0
        %v4794 = vadd.f32 %v4247, %v4793
        %v4795 = vpop.f32.mrf.mxu0
        %v4796 = vadd.f32 %v4252, %v4795
        %v4797 = vpop.f32.mrf.mxu0
        %v4798 = vadd.f32 %v4252, %v4797
        %4799 = vmatprep.mubr.bf16.mxu0 %v4455
        %4800 = vmatmul.mubr.bf16.gmra.mxu0 %v4454
        %v4801 = vpop.f32.mrf.mxu0
        %v4802 = vadd.f32 %v4257, %v4801
        %v4803 = vpop.f32.mrf.mxu0
        %v4804 = vadd.f32 %v4257, %v4803
        %v4805 = vpop.f32.mrf.mxu0
        %v4806 = vadd.f32 %v4262, %v4805
        %v4807 = vpop.f32.mrf.mxu0
        %v4808 = vadd.f32 %v4262, %v4807
        %4809 = vmatprep.mubr.bf16.mxu0 %v4457
        %4810 = vmatmul.mubr.bf16.gmra.mxu0 %v4456
        %v4811 = vpop.f32.mrf.mxu0
        %v4812 = vadd.f32 %v4267, %v4811
        %v4813 = vpop.f32.mrf.mxu0
        %v4814 = vadd.f32 %v4267, %v4813
        %v4815 = vpop.f32.mrf.mxu0
        %v4816 = vadd.f32 %v4272, %v4815
        %v4817 = vpop.f32.mrf.mxu0
        %v4818 = vadd.f32 %v4272, %v4817
        %4819 = vmatprep.mubr.bf16.mxu0 %v4459
        %4820 = vmatmul.mubr.bf16.gmra.mxu0 %v4458
        %v4821 = vpop.f32.mrf.mxu0
        %v4822 = vadd.f32 %v4277, %v4821
        %v4823 = vpop.f32.mrf.mxu0
        %v4824 = vadd.f32 %v4277, %v4823
        %v4825 = vpop.f32.mrf.mxu0
        %v4826 = vadd.f32 %v4282, %v4825
        %v4827 = vpop.f32.mrf.mxu0
        %v4828 = vadd.f32 %v4282, %v4827
        %4829 = vmatprep.mubr.bf16.mxu0 %v4461
        %4830 = vmatmul.mubr.bf16.gmra.mxu0 %v4460
        %v4831 = vpop.f32.mrf.mxu0
        %v4832 = vadd.f32 %v4287, %v4831
        %v4833 = vpop.f32.mrf.mxu0
        %v4834 = vadd.f32 %v4287, %v4833
        %v4835 = vpop.f32.mrf.mxu0
        %v4836 = vadd.f32 %v4292, %v4835
        %v4837 = vpop.f32.mrf.mxu0
        %v4838 = vadd.f32 %v4292, %v4837
        %4839 = vmatprep.mubr.bf16.mxu0 %v4463
        %4840 = vmatmul.mubr.bf16.gmra.mxu0 %v4462
        %v4841 = vpop.f32.mrf.mxu0
        %v4842 = vadd.f32 %v4297, %v4841
        %v4843 = vpop.f32.mrf.mxu0
        %v4844 = vadd.f32 %v4297, %v4843
        %v4845 = vpop.f32.mrf.mxu0
        %v4846 = vadd.f32 %v4302, %v4845
        %v4847 = vpop.f32.mrf.mxu0
        %v4848 = vadd.f32 %v4302, %v4847
        %4849 = vmatprep.mubr.bf16.mxu0 %v4465
        %4850 = vmatmul.mubr.bf16.gmra.mxu0 %v4464
        %v4851 = vpop.f32.mrf.mxu0
        %v4852 = vadd.f32 %v4307, %v4851
        %v4853 = vpop.f32.mrf.mxu0
        %v4854 = vadd.f32 %v4307, %v4853
        %v4855 = vpop.f32.mrf.mxu0
        %v4856 = vadd.f32 %v4312, %v4855
        %v4857 = vpop.f32.mrf.mxu0
        %v4858 = vadd.f32 %v4312, %v4857
        %4859 = vmatprep.mubr.bf16.mxu0 %v4467
        %4860 = vmatmul.mubr.bf16.gmra.mxu0 %v4466
        %v4861 = vpop.f32.mrf.mxu0
        %v4862 = vadd.f32 %v4317, %v4861
        %v4863 = vpop.f32.mrf.mxu0
        %v4864 = vadd.f32 %v4317, %v4863
        %v4865 = vpop.f32.mrf.mxu0
        %v4866 = vadd.f32 %v4322, %v4865
        %v4867 = vpop.f32.mrf.mxu0
        %v4868 = vadd.f32 %v4322, %v4867
        %4869 = vmatprep.mubr.bf16.mxu0 %v4469
        %4870 = vmatmul.mubr.bf16.gmra.mxu0 %v4468
        %v4871 = vpop.f32.mrf.mxu0
        %v4872 = vadd.f32 %v4327, %v4871
        %v4873 = vpop.f32.mrf.mxu0
        %v4874 = vadd.f32 %v4327, %v4873
        %v4875 = vpop.f32.mrf.mxu0
        %v4876 = vadd.f32 %v4332, %v4875
        %v4877 = vpop.f32.mrf.mxu0
        %v4878 = vadd.f32 %v4332, %v4877
        %4879 = vmatprep.mubr.bf16.mxu0 %v4471
        %4880 = vmatmul.mubr.bf16.gmra.mxu0 %v4470
        %v4881 = vpop.f32.mrf.mxu0
        %v4882 = vadd.f32 %v4337, %v4881
        %v4883 = vpop.f32.mrf.mxu0
        %v4884 = vadd.f32 %v4337, %v4883
        %v4885 = vpop.f32.mrf.mxu0
        %v4886 = vadd.f32 %v4342, %v4885
        %v4887 = vpop.f32.mrf.mxu0
        %v4888 = vadd.f32 %v4342, %v4887
        %4889 = vdwg.mxu0
        %4890 = vmatprep.subr.bf16.mxu0 %v4053
        %4891 = vmatpush1.bf16.msra.mxu0 %v4052
        %4892 = vmatprep.subr.bf16.mxu0 %v4045
        %4893 = vmatpush1.bf16.msra.mxu0 %v4044
        %4894 = vmatprep.subr.bf16.mxu0 %v4037
        %4895 = vmatpush1.bf16.msra.mxu0 %v4036
        %4896 = vmatprep.subr.bf16.mxu0 %v4029
        %4897 = vmatpush1.bf16.msra.mxu0 %v4028
        %4898 = vmatprep.subr.bf16.mxu0 %v4021
        %4899 = vmatpush1.bf16.msra.mxu0 %v4020
        %4900 = vmatprep.subr.bf16.mxu0 %v4013
        %4901 = vmatpush1.bf16.msra.mxu0 %v4012
        %4902 = vmatprep.subr.bf16.mxu0 %v4005
        %4903 = vmatpush1.bf16.msra.mxu0 %v4004
        %4904 = vmatprep.subr.bf16.mxu0 %v3997
        %4905 = vmatpush1.bf16.msra.mxu0 %v3996
        %4906 = vmatprep.subr.bf16.mxu0 %v4117
        %4907 = vmatpush2.bf16.msra.mxu0 %v4116
        %4908 = vmatprep.subr.bf16.mxu0 %v4109
        %4909 = vmatpush2.bf16.msra.mxu0 %v4108
        %4910 = vmatprep.subr.bf16.mxu0 %v4101
        %4911 = vmatpush2.bf16.msra.mxu0 %v4100
        %4912 = vmatprep.subr.bf16.mxu0 %v4093
        %4913 = vmatpush2.bf16.msra.mxu0 %v4092
        %4914 = vmatprep.subr.bf16.mxu0 %v4085
        %4915 = vmatpush2.bf16.msra.mxu0 %v4084
        %4916 = vmatprep.subr.bf16.mxu0 %v4077
        %4917 = vmatpush2.bf16.msra.mxu0 %v4076
        %4918 = vmatprep.subr.bf16.mxu0 %v4069
        %4919 = vmatpush2.bf16.msra.mxu0 %v4068
        %4920 = vmatprep.subr.bf16.mxu0 %v4061
        %4921 = vmatpush2.bf16.msra.mxu0 %v4060
        %4922 = vmatprep.mubr.bf16.mxu0 %v4441
        %4923 = vmatmul.mubr.bf16.gmra.mxu0 %v4440
        %v4924 = vpop.f32.mrf.mxu0
        %v4925 = vadd.f32 %v4187, %v4924
        %v4926 = vpop.f32.mrf.mxu0
        %v4927 = vadd.f32 %v4187, %v4926
        %v4928 = vpop.f32.mrf.mxu0
        %v4929 = vadd.f32 %v4192, %v4928
        %v4930 = vpop.f32.mrf.mxu0
        %v4931 = vadd.f32 %v4192, %v4930
        %4932 = vmatprep.mubr.bf16.mxu0 %v4443
        %4933 = vmatmul.mubr.bf16.gmra.mxu0 %v4442
        %v4934 = vpop.f32.mrf.mxu0
        %v4935 = vadd.f32 %v4197, %v4934
        %v4936 = vpop.f32.mrf.mxu0
        %v4937 = vadd.f32 %v4197, %v4936
        %v4938 = vpop.f32.mrf.mxu0
        %v4939 = vadd.f32 %v4202, %v4938
        %v4940 = vpop.f32.mrf.mxu0
        %v4941 = vadd.f32 %v4202, %v4940
        %4942 = vmatprep.mubr.bf16.mxu0 %v4445
        %4943 = vmatmul.mubr.bf16.gmra.mxu0 %v4444
        %v4944 = vpop.f32.mrf.mxu0
        %v4945 = vadd.f32 %v4207, %v4944
        %v4946 = vpop.f32.mrf.mxu0
        %v4947 = vadd.f32 %v4207, %v4946
        %v4948 = vpop.f32.mrf.mxu0
        %v4949 = vadd.f32 %v4212, %v4948
        %v4950 = vpop.f32.mrf.mxu0
        %v4951 = vadd.f32 %v4212, %v4950
        %4952 = vmatprep.mubr.bf16.mxu0 %v4447
        %4953 = vmatmul.mubr.bf16.gmra.mxu0 %v4446
        %v4954 = vpop.f32.mrf.mxu0
        %v4955 = vadd.f32 %v4217, %v4954
        %v4956 = vpop.f32.mrf.mxu0
        %v4957 = vadd.f32 %v4217, %v4956
        %v4958 = vpop.f32.mrf.mxu0
        %v4959 = vadd.f32 %v4222, %v4958
        %v4960 = vpop.f32.mrf.mxu0
        %v4961 = vadd.f32 %v4222, %v4960
        %4962 = vmatprep.mubr.bf16.mxu0 %v4449
        %4963 = vmatmul.mubr.bf16.gmra.mxu0 %v4448
        %v4964 = vpop.f32.mrf.mxu0
        %v4965 = vadd.f32 %v4227, %v4964
        %v4966 = vpop.f32.mrf.mxu0
        %v4967 = vadd.f32 %v4227, %v4966
        %v4968 = vpop.f32.mrf.mxu0
        %v4969 = vadd.f32 %v4232, %v4968
        %v4970 = vpop.f32.mrf.mxu0
        %v4971 = vadd.f32 %v4232, %v4970
        %4972 = vmatprep.mubr.bf16.mxu0 %v4451
        %4973 = vmatmul.mubr.bf16.gmra.mxu0 %v4450
        %v4974 = vpop.f32.mrf.mxu0
        %v4975 = vadd.f32 %v4237, %v4974
        %v4976 = vpop.f32.mrf.mxu0
        %v4977 = vadd.f32 %v4237, %v4976
        %v4978 = vpop.f32.mrf.mxu0
        %v4979 = vadd.f32 %v4242, %v4978
        %v4980 = vpop.f32.mrf.mxu0
        %v4981 = vadd.f32 %v4242, %v4980
        %4982 = vmatprep.mubr.bf16.mxu0 %v4453
        %4983 = vmatmul.mubr.bf16.gmra.mxu0 %v4452
        %v4984 = vpop.f32.mrf.mxu0
        %v4985 = vadd.f32 %v4247, %v4984
        %v4986 = vpop.f32.mrf.mxu0
        %v4987 = vadd.f32 %v4247, %v4986
        %v4988 = vpop.f32.mrf.mxu0
        %v4989 = vadd.f32 %v4252, %v4988
        %v4990 = vpop.f32.mrf.mxu0
        %v4991 = vadd.f32 %v4252, %v4990
        %4992 = vmatprep.mubr.bf16.mxu0 %v4455
        %4993 = vmatmul.mubr.bf16.gmra.mxu0 %v4454
        %v4994 = vpop.f32.mrf.mxu0
        %v4995 = vadd.f32 %v4257, %v4994
        %v4996 = vpop.f32.mrf.mxu0
        %v4997 = vadd.f32 %v4257, %v4996
        %v4998 = vpop.f32.mrf.mxu0
        %v4999 = vadd.f32 %v4262, %v4998
        %v5000 = vpop.f32.mrf.mxu0
        %v5001 = vadd.f32 %v4262, %v5000
        %5002 = vmatprep.mubr.bf16.mxu0 %v4457
        %5003 = vmatmul.mubr.bf16.gmra.mxu0 %v4456
        %v5004 = vpop.f32.mrf.mxu0
        %v5005 = vadd.f32 %v4267, %v5004
        %v5006 = vpop.f32.mrf.mxu0
        %v5007 = vadd.f32 %v4267, %v5006
        %v5008 = vpop.f32.mrf.mxu0
        %v5009 = vadd.f32 %v4272, %v5008
        %v5010 = vpop.f32.mrf.mxu0
        %v5011 = vadd.f32 %v4272, %v5010
        %5012 = vmatprep.mubr.bf16.mxu0 %v4459
        %5013 = vmatmul.mubr.bf16.gmra.mxu0 %v4458
        %v5014 = vpop.f32.mrf.mxu0
        %v5015 = vadd.f32 %v4277, %v5014
        %v5016 = vpop.f32.mrf.mxu0
        %v5017 = vadd.f32 %v4277, %v5016
        %v5018 = vpop.f32.mrf.mxu0
        %v5019 = vadd.f32 %v4282, %v5018
        %v5020 = vpop.f32.mrf.mxu0
        %v5021 = vadd.f32 %v4282, %v5020
        %5022 = vmatprep.mubr.bf16.mxu0 %v4461
        %5023 = vmatmul.mubr.bf16.gmra.mxu0 %v4460
        %v5024 = vpop.f32.mrf.mxu0
        %v5025 = vadd.f32 %v4287, %v5024
        %v5026 = vpop.f32.mrf.mxu0
        %v5027 = vadd.f32 %v4287, %v5026
        %v5028 = vpop.f32.mrf.mxu0
        %v5029 = vadd.f32 %v4292, %v5028
        %v5030 = vpop.f32.mrf.mxu0
        %v5031 = vadd.f32 %v4292, %v5030
        %5032 = vmatprep.mubr.bf16.mxu0 %v4463
        %5033 = vmatmul.mubr.bf16.gmra.mxu0 %v4462
        %v5034 = vpop.f32.mrf.mxu0
        %v5035 = vadd.f32 %v4297, %v5034
        %v5036 = vpop.f32.mrf.mxu0
        %v5037 = vadd.f32 %v4297, %v5036
        %v5038 = vpop.f32.mrf.mxu0
        %v5039 = vadd.f32 %v4302, %v5038
        %v5040 = vpop.f32.mrf.mxu0
        %v5041 = vadd.f32 %v4302, %v5040
        %5042 = vmatprep.mubr.bf16.mxu0 %v4465
        %5043 = vmatmul.mubr.bf16.gmra.mxu0 %v4464
        %v5044 = vpop.f32.mrf.mxu0
        %v5045 = vadd.f32 %v4307, %v5044
        %v5046 = vpop.f32.mrf.mxu0
        %v5047 = vadd.f32 %v4307, %v5046
        %v5048 = vpop.f32.mrf.mxu0
        %v5049 = vadd.f32 %v4312, %v5048
        %v5050 = vpop.f32.mrf.mxu0
        %v5051 = vadd.f32 %v4312, %v5050
        %5052 = vmatprep.mubr.bf16.mxu0 %v4467
        %5053 = vmatmul.mubr.bf16.gmra.mxu0 %v4466
        %v5054 = vpop.f32.mrf.mxu0
        %v5055 = vadd.f32 %v4317, %v5054
        %v5056 = vpop.f32.mrf.mxu0
        %v5057 = vadd.f32 %v4317, %v5056
        %v5058 = vpop.f32.mrf.mxu0
        %v5059 = vadd.f32 %v4322, %v5058
        %v5060 = vpop.f32.mrf.mxu0
        %v5061 = vadd.f32 %v4322, %v5060
        %5062 = vmatprep.mubr.bf16.mxu0 %v4469
        %5063 = vmatmul.mubr.bf16.gmra.mxu0 %v4468
        %v5064 = vpop.f32.mrf.mxu0
        %v5065 = vadd.f32 %v4327, %v5064
        %v5066 = vpop.f32.mrf.mxu0
        %v5067 = vadd.f32 %v4327, %v5066
        %v5068 = vpop.f32.mrf.mxu0
        %v5069 = vadd.f32 %v4332, %v5068
        %v5070 = vpop.f32.mrf.mxu0
        %v5071 = vadd.f32 %v4332, %v5070
        %5072 = vmatprep.mubr.bf16.mxu0 %v4471
        %5073 = vmatmul.mubr.bf16.gmra.mxu0 %v4470
        %v5074 = vpop.f32.mrf.mxu0
        %v5075 = vadd.f32 %v4337, %v5074
        %v5076 = vpop.f32.mrf.mxu0
        %v5077 = vadd.f32 %v4337, %v5076
        %v5078 = vpop.f32.mrf.mxu0
        %v5079 = vadd.f32 %v4342, %v5078
        %v5080 = vpop.f32.mrf.mxu0
        %v5081 = vadd.f32 %v4342, %v5080
        %5082 = vdwg.mxu0
        %5083 = vmatprep.subr.bf16.mxu0 %v4055
        %5084 = vmatpush1.bf16.msra.mxu0 %v4054
        %5085 = vmatprep.subr.bf16.mxu0 %v4047
        %5086 = vmatpush1.bf16.msra.mxu0 %v4046
        %5087 = vmatprep.subr.bf16.mxu0 %v4039
        %5088 = vmatpush1.bf16.msra.mxu0 %v4038
        %5089 = vmatprep.subr.bf16.mxu0 %v4031
        %5090 = vmatpush1.bf16.msra.mxu0 %v4030
        %5091 = vmatprep.subr.bf16.mxu0 %v4023
        %5092 = vmatpush1.bf16.msra.mxu0 %v4022
        %5093 = vmatprep.subr.bf16.mxu0 %v4015
        %5094 = vmatpush1.bf16.msra.mxu0 %v4014
        %5095 = vmatprep.subr.bf16.mxu0 %v4007
        %5096 = vmatpush1.bf16.msra.mxu0 %v4006
        %5097 = vmatprep.subr.bf16.mxu0 %v3999
        %5098 = vmatpush1.bf16.msra.mxu0 %v3998
        %5099 = vmatprep.subr.bf16.mxu0 %v4119
        %5100 = vmatpush2.bf16.msra.mxu0 %v4118
        %5101 = vmatprep.subr.bf16.mxu0 %v4111
        %5102 = vmatpush2.bf16.msra.mxu0 %v4110
        %5103 = vmatprep.subr.bf16.mxu0 %v4103
        %5104 = vmatpush2.bf16.msra.mxu0 %v4102
        %5105 = vmatprep.subr.bf16.mxu0 %v4095
        %5106 = vmatpush2.bf16.msra.mxu0 %v4094
        %5107 = vmatprep.subr.bf16.mxu0 %v4087
        %5108 = vmatpush2.bf16.msra.mxu0 %v4086
        %5109 = vmatprep.subr.bf16.mxu0 %v4079
        %5110 = vmatpush2.bf16.msra.mxu0 %v4078
        %5111 = vmatprep.subr.bf16.mxu0 %v4071
        %5112 = vmatpush2.bf16.msra.mxu0 %v4070
        %5113 = vmatprep.subr.bf16.mxu0 %v4063
        %5114 = vmatpush2.bf16.msra.mxu0 %v4062
        %5115 = vmatprep.mubr.bf16.mxu0 %v4441
        %5116 = vmatmul.mubr.bf16.gmra.mxu0 %v4440
        %v5117 = vpop.f32.mrf.mxu0
        %v5118 = vadd.f32 %v4187, %v5117
        %v5119 = vpop.f32.mrf.mxu0
        %v5120 = vadd.f32 %v4187, %v5119
        %v5121 = vpop.f32.mrf.mxu0
        %v5122 = vadd.f32 %v4192, %v5121
        %v5123 = vpop.f32.mrf.mxu0
        %v5124 = vadd.f32 %v4192, %v5123
        %5125 = vmatprep.mubr.bf16.mxu0 %v4443
        %5126 = vmatmul.mubr.bf16.gmra.mxu0 %v4442
        %v5127 = vpop.f32.mrf.mxu0
        %v5128 = vadd.f32 %v4197, %v5127
        %v5129 = vpop.f32.mrf.mxu0
        %v5130 = vadd.f32 %v4197, %v5129
        %v5131 = vpop.f32.mrf.mxu0
        %v5132 = vadd.f32 %v4202, %v5131
        %v5133 = vpop.f32.mrf.mxu0
        %v5134 = vadd.f32 %v4202, %v5133
        %5135 = vmatprep.mubr.bf16.mxu0 %v4445
        %5136 = vmatmul.mubr.bf16.gmra.mxu0 %v4444
        %v5137 = vpop.f32.mrf.mxu0
        %v5138 = vadd.f32 %v4207, %v5137
        %v5139 = vpop.f32.mrf.mxu0
        %v5140 = vadd.f32 %v4207, %v5139
        %v5141 = vpop.f32.mrf.mxu0
        %v5142 = vadd.f32 %v4212, %v5141
        %v5143 = vpop.f32.mrf.mxu0
        %v5144 = vadd.f32 %v4212, %v5143
        %5145 = vmatprep.mubr.bf16.mxu0 %v4447
        %5146 = vmatmul.mubr.bf16.gmra.mxu0 %v4446
        %v5147 = vpop.f32.mrf.mxu0
        %v5148 = vadd.f32 %v4217, %v5147
        %v5149 = vpop.f32.mrf.mxu0
        %v5150 = vadd.f32 %v4217, %v5149
        %v5151 = vpop.f32.mrf.mxu0
        %v5152 = vadd.f32 %v4222, %v5151
        %v5153 = vpop.f32.mrf.mxu0
        %v5154 = vadd.f32 %v4222, %v5153
        %5155 = vmatprep.mubr.bf16.mxu0 %v4449
        %5156 = vmatmul.mubr.bf16.gmra.mxu0 %v4448
        %v5157 = vpop.f32.mrf.mxu0
        %v5158 = vadd.f32 %v4227, %v5157
        %v5159 = vpop.f32.mrf.mxu0
        %v5160 = vadd.f32 %v4227, %v5159
        %v5161 = vpop.f32.mrf.mxu0
        %v5162 = vadd.f32 %v4232, %v5161
        %v5163 = vpop.f32.mrf.mxu0
        %v5164 = vadd.f32 %v4232, %v5163
        %5165 = vmatprep.mubr.bf16.mxu0 %v4451
        %5166 = vmatmul.mubr.bf16.gmra.mxu0 %v4450
        %v5167 = vpop.f32.mrf.mxu0
        %v5168 = vadd.f32 %v4237, %v5167
        %v5169 = vpop.f32.mrf.mxu0
        %v5170 = vadd.f32 %v4237, %v5169
        %v5171 = vpop.f32.mrf.mxu0
        %v5172 = vadd.f32 %v4242, %v5171
        %v5173 = vpop.f32.mrf.mxu0
        %v5174 = vadd.f32 %v4242, %v5173
        %5175 = vmatprep.mubr.bf16.mxu0 %v4453
        %5176 = vmatmul.mubr.bf16.gmra.mxu0 %v4452
        %v5177 = vpop.f32.mrf.mxu0
        %v5178 = vadd.f32 %v4247, %v5177
        %v5179 = vpop.f32.mrf.mxu0
        %v5180 = vadd.f32 %v4247, %v5179
        %v5181 = vpop.f32.mrf.mxu0
        %v5182 = vadd.f32 %v4252, %v5181
        %v5183 = vpop.f32.mrf.mxu0
        %v5184 = vadd.f32 %v4252, %v5183
        %5185 = vmatprep.mubr.bf16.mxu0 %v4455
        %5186 = vmatmul.mubr.bf16.gmra.mxu0 %v4454
        %v5187 = vpop.f32.mrf.mxu0
        %v5188 = vadd.f32 %v4257, %v5187
        %v5189 = vpop.f32.mrf.mxu0
        %v5190 = vadd.f32 %v4257, %v5189
        %v5191 = vpop.f32.mrf.mxu0
        %v5192 = vadd.f32 %v4262, %v5191
        %v5193 = vpop.f32.mrf.mxu0
        %v5194 = vadd.f32 %v4262, %v5193
        %5195 = vmatprep.mubr.bf16.mxu0 %v4457
        %5196 = vmatmul.mubr.bf16.gmra.mxu0 %v4456
        %v5197 = vpop.f32.mrf.mxu0
        %v5198 = vadd.f32 %v4267, %v5197
        %v5199 = vpop.f32.mrf.mxu0
        %v5200 = vadd.f32 %v4267, %v5199
        %v5201 = vpop.f32.mrf.mxu0
        %v5202 = vadd.f32 %v4272, %v5201
        %v5203 = vpop.f32.mrf.mxu0
        %v5204 = vadd.f32 %v4272, %v5203
        %5205 = vmatprep.mubr.bf16.mxu0 %v4459
        %5206 = vmatmul.mubr.bf16.gmra.mxu0 %v4458
        %v5207 = vpop.f32.mrf.mxu0
        %v5208 = vadd.f32 %v4277, %v5207
        %v5209 = vpop.f32.mrf.mxu0
        %v5210 = vadd.f32 %v4277, %v5209
        %v5211 = vpop.f32.mrf.mxu0
        %v5212 = vadd.f32 %v4282, %v5211
        %v5213 = vpop.f32.mrf.mxu0
        %v5214 = vadd.f32 %v4282, %v5213
        %5215 = vmatprep.mubr.bf16.mxu0 %v4461
        %5216 = vmatmul.mubr.bf16.gmra.mxu0 %v4460
        %v5217 = vpop.f32.mrf.mxu0
        %v5218 = vadd.f32 %v4287, %v5217
        %v5219 = vpop.f32.mrf.mxu0
        %v5220 = vadd.f32 %v4287, %v5219
        %v5221 = vpop.f32.mrf.mxu0
        %v5222 = vadd.f32 %v4292, %v5221
        %v5223 = vpop.f32.mrf.mxu0
        %v5224 = vadd.f32 %v4292, %v5223
        %5225 = vmatprep.mubr.bf16.mxu0 %v4463
        %5226 = vmatmul.mubr.bf16.gmra.mxu0 %v4462
        %v5227 = vpop.f32.mrf.mxu0
        %v5228 = vadd.f32 %v4297, %v5227
        %v5229 = vpop.f32.mrf.mxu0
        %v5230 = vadd.f32 %v4297, %v5229
        %v5231 = vpop.f32.mrf.mxu0
        %v5232 = vadd.f32 %v4302, %v5231
        %v5233 = vpop.f32.mrf.mxu0
        %v5234 = vadd.f32 %v4302, %v5233
        %5235 = vmatprep.mubr.bf16.mxu0 %v4465
        %5236 = vmatmul.mubr.bf16.gmra.mxu0 %v4464
        %v5237 = vpop.f32.mrf.mxu0
        %v5238 = vadd.f32 %v4307, %v5237
        %v5239 = vpop.f32.mrf.mxu0
        %v5240 = vadd.f32 %v4307, %v5239
        %v5241 = vpop.f32.mrf.mxu0
        %v5242 = vadd.f32 %v4312, %v5241
        %v5243 = vpop.f32.mrf.mxu0
        %v5244 = vadd.f32 %v4312, %v5243
        %5245 = vmatprep.mubr.bf16.mxu0 %v4467
        %5246 = vmatmul.mubr.bf16.gmra.mxu0 %v4466
        %v5247 = vpop.f32.mrf.mxu0
        %v5248 = vadd.f32 %v4317, %v5247
        %v5249 = vpop.f32.mrf.mxu0
        %v5250 = vadd.f32 %v4317, %v5249
        %v5251 = vpop.f32.mrf.mxu0
        %v5252 = vadd.f32 %v4322, %v5251
        %v5253 = vpop.f32.mrf.mxu0
        %v5254 = vadd.f32 %v4322, %v5253
        %5255 = vmatprep.mubr.bf16.mxu0 %v4469
        %5256 = vmatmul.mubr.bf16.gmra.mxu0 %v4468
        %v5257 = vpop.f32.mrf.mxu0
        %v5258 = vadd.f32 %v4327, %v5257
        %v5259 = vpop.f32.mrf.mxu0
        %v5260 = vadd.f32 %v4327, %v5259
        %v5261 = vpop.f32.mrf.mxu0
        %v5262 = vadd.f32 %v4332, %v5261
        %v5263 = vpop.f32.mrf.mxu0
        %v5264 = vadd.f32 %v4332, %v5263
        %5265 = vmatprep.mubr.bf16.mxu0 %v4471
        %5266 = vmatmul.mubr.bf16.gmra.mxu0 %v4470
        %v5267 = vpop.f32.mrf.mxu0
        %v5268 = vadd.f32 %v4337, %v5267
        %v5269 = vpop.f32.mrf.mxu0
        %v5270 = vadd.f32 %v4337, %v5269
        %v5271 = vpop.f32.mrf.mxu0
        %v5272 = vadd.f32 %v4342, %v5271
        %v5273 = vpop.f32.mrf.mxu0
        %v5274 = vadd.f32 %v4342, %v5273
        %5275 = vdwg.mxu0
        %v5276 = vmax.f32 %v4539, 0.0
        %v5277 = vmax.f32 %v4541, 0.0
        %v5278 = vmax.f32 %v4732, 0.0
        %v5279 = vmax.f32 %v4734, 0.0
        %v5280 = vmax.f32 %v4925, 0.0
        %v5281 = vmax.f32 %v4927, 0.0
        %v5282 = vmax.f32 %v5118, 0.0
        %v5283 = vmax.f32 %v5120, 0.0
        %v5284 = vmax.f32 %v4543, 0.0
        %v5285 = vmax.f32 %v4545, 0.0
        %v5286 = vmax.f32 %v4736, 0.0
        %v5287 = vmax.f32 %v4738, 0.0
        %v5288 = vmax.f32 %v4929, 0.0
        %v5289 = vmax.f32 %v4931, 0.0
        %v5290 = vmax.f32 %v5122, 0.0
        %v5291 = vmax.f32 %v5124, 0.0
        %v5292 = vmax.f32 %v4549, 0.0
        %v5293 = vmax.f32 %v4551, 0.0
        %v5294 = vmax.f32 %v4742, 0.0
        %v5295 = vmax.f32 %v4744, 0.0
        %v5296 = vmax.f32 %v4935, 0.0
        %v5297 = vmax.f32 %v4937, 0.0
        %v5298 = vmax.f32 %v5128, 0.0
        %v5299 = vmax.f32 %v5130, 0.0
        %v5300 = vmax.f32 %v4553, 0.0
        %v5301 = vmax.f32 %v4555, 0.0
        %v5302 = vmax.f32 %v4746, 0.0
        %v5303 = vmax.f32 %v4748, 0.0
        %v5304 = vmax.f32 %v4939, 0.0
        %v5305 = vmax.f32 %v4941, 0.0
        %v5306 = vmax.f32 %v5132, 0.0
        %v5307 = vmax.f32 %v5134, 0.0
        %v5308 = vmax.f32 %v4559, 0.0
        %v5309 = vmax.f32 %v4561, 0.0
        %v5310 = vmax.f32 %v4752, 0.0
        %v5311 = vmax.f32 %v4754, 0.0
        %v5312 = vmax.f32 %v4945, 0.0
        %v5313 = vmax.f32 %v4947, 0.0
        %v5314 = vmax.f32 %v5138, 0.0
        %v5315 = vmax.f32 %v5140, 0.0
        %v5316 = vmax.f32 %v4563, 0.0
        %v5317 = vmax.f32 %v4565, 0.0
        %v5318 = vmax.f32 %v4756, 0.0
        %v5319 = vmax.f32 %v4758, 0.0
        %v5320 = vmax.f32 %v4949, 0.0
        %v5321 = vmax.f32 %v4951, 0.0
        %v5322 = vmax.f32 %v5142, 0.0
        %v5323 = vmax.f32 %v5144, 0.0
        %v5324 = vmax.f32 %v4569, 0.0
        %v5325 = vmax.f32 %v4571, 0.0
        %v5326 = vmax.f32 %v4762, 0.0
        %v5327 = vmax.f32 %v4764, 0.0
        %v5328 = vmax.f32 %v4955, 0.0
        %v5329 = vmax.f32 %v4957, 0.0
        %v5330 = vmax.f32 %v5148, 0.0
        %v5331 = vmax.f32 %v5150, 0.0
        %v5332 = vmax.f32 %v4573, 0.0
        %v5333 = vmax.f32 %v4575, 0.0
        %v5334 = vmax.f32 %v4766, 0.0
        %v5335 = vmax.f32 %v4768, 0.0
        %v5336 = vmax.f32 %v4959, 0.0
        %v5337 = vmax.f32 %v4961, 0.0
        %v5338 = vmax.f32 %v5152, 0.0
        %v5339 = vmax.f32 %v5154, 0.0
        %v5340 = vmax.f32 %v4579, 0.0
        %v5341 = vmax.f32 %v4581, 0.0
        %v5342 = vmax.f32 %v4772, 0.0
        %v5343 = vmax.f32 %v4774, 0.0
        %v5344 = vmax.f32 %v4965, 0.0
        %v5345 = vmax.f32 %v4967, 0.0
        %v5346 = vmax.f32 %v5158, 0.0
        %v5347 = vmax.f32 %v5160, 0.0
        %v5348 = vmax.f32 %v4583, 0.0
        %v5349 = vmax.f32 %v4585, 0.0
        %v5350 = vmax.f32 %v4776, 0.0
        %v5351 = vmax.f32 %v4778, 0.0
        %v5352 = vmax.f32 %v4969, 0.0
        %v5353 = vmax.f32 %v4971, 0.0
        %v5354 = vmax.f32 %v5162, 0.0
        %v5355 = vmax.f32 %v5164, 0.0
        %v5356 = vmax.f32 %v4589, 0.0
        %v5357 = vmax.f32 %v4591, 0.0
        %v5358 = vmax.f32 %v4782, 0.0
        %v5359 = vmax.f32 %v4784, 0.0
        %v5360 = vmax.f32 %v4975, 0.0
        %v5361 = vmax.f32 %v4977, 0.0
        %v5362 = vmax.f32 %v5168, 0.0
        %v5363 = vmax.f32 %v5170, 0.0
        %v5364 = vmax.f32 %v4593, 0.0
        %v5365 = vmax.f32 %v4595, 0.0
        %v5366 = vmax.f32 %v4786, 0.0
        %v5367 = vmax.f32 %v4788, 0.0
        %v5368 = vmax.f32 %v4979, 0.0
        %v5369 = vmax.f32 %v4981, 0.0
        %v5370 = vmax.f32 %v5172, 0.0
        %v5371 = vmax.f32 %v5174, 0.0
        %v5372 = vmax.f32 %v4599, 0.0
        %v5373 = vmax.f32 %v4601, 0.0
        %v5374 = vmax.f32 %v4792, 0.0
        %v5375 = vmax.f32 %v4794, 0.0
        %v5376 = vmax.f32 %v4985, 0.0
        %v5377 = vmax.f32 %v4987, 0.0
        %v5378 = vmax.f32 %v5178, 0.0
        %v5379 = vmax.f32 %v5180, 0.0
        %v5380 = vmax.f32 %v4603, 0.0
        %v5381 = vmax.f32 %v4605, 0.0
        %v5382 = vmax.f32 %v4796, 0.0
        %v5383 = vmax.f32 %v4798, 0.0
        %v5384 = vmax.f32 %v4989, 0.0
        %v5385 = vmax.f32 %v4991, 0.0
        %v5386 = vmax.f32 %v5182, 0.0
        %v5387 = vmax.f32 %v5184, 0.0
        %v5388 = vmax.f32 %v4609, 0.0
        %v5389 = vmax.f32 %v4611, 0.0
        %v5390 = vmax.f32 %v4802, 0.0
        %v5391 = vmax.f32 %v4804, 0.0
        %v5392 = vmax.f32 %v4995, 0.0
        %v5393 = vmax.f32 %v4997, 0.0
        %v5394 = vmax.f32 %v5188, 0.0
        %v5395 = vmax.f32 %v5190, 0.0
        %v5396 = vmax.f32 %v4613, 0.0
        %v5397 = vmax.f32 %v4615, 0.0
        %v5398 = vmax.f32 %v4806, 0.0
        %v5399 = vmax.f32 %v4808, 0.0
        %v5400 = vmax.f32 %v4999, 0.0
        %v5401 = vmax.f32 %v5001, 0.0
        %v5402 = vmax.f32 %v5192, 0.0
        %v5403 = vmax.f32 %v5194, 0.0
        %v5404 = vmax.f32 %v4619, 0.0
        %v5405 = vmax.f32 %v4621, 0.0
        %v5406 = vmax.f32 %v4812, 0.0
        %v5407 = vmax.f32 %v4814, 0.0
        %v5408 = vmax.f32 %v5005, 0.0
        %v5409 = vmax.f32 %v5007, 0.0
        %v5410 = vmax.f32 %v5198, 0.0
        %v5411 = vmax.f32 %v5200, 0.0
        %v5412 = vmax.f32 %v4623, 0.0
        %v5413 = vmax.f32 %v4625, 0.0
        %v5414 = vmax.f32 %v4816, 0.0
        %v5415 = vmax.f32 %v4818, 0.0
        %v5416 = vmax.f32 %v5009, 0.0
        %v5417 = vmax.f32 %v5011, 0.0
        %v5418 = vmax.f32 %v5202, 0.0
        %v5419 = vmax.f32 %v5204, 0.0
        %v5420 = vmax.f32 %v4629, 0.0
        %v5421 = vmax.f32 %v4631, 0.0
        %v5422 = vmax.f32 %v4822, 0.0
        %v5423 = vmax.f32 %v4824, 0.0
        %v5424 = vmax.f32 %v5015, 0.0
        %v5425 = vmax.f32 %v5017, 0.0
        %v5426 = vmax.f32 %v5208, 0.0
        %v5427 = vmax.f32 %v5210, 0.0
        %v5428 = vmax.f32 %v4633, 0.0
        %v5429 = vmax.f32 %v4635, 0.0
        %v5430 = vmax.f32 %v4826, 0.0
        %v5431 = vmax.f32 %v4828, 0.0
        %v5432 = vmax.f32 %v5019, 0.0
        %v5433 = vmax.f32 %v5021, 0.0
        %v5434 = vmax.f32 %v5212, 0.0
        %v5435 = vmax.f32 %v5214, 0.0
        %v5436 = vmax.f32 %v4639, 0.0
        %v5437 = vmax.f32 %v4641, 0.0
        %v5438 = vmax.f32 %v4832, 0.0
        %v5439 = vmax.f32 %v4834, 0.0
        %v5440 = vmax.f32 %v5025, 0.0
        %v5441 = vmax.f32 %v5027, 0.0
        %v5442 = vmax.f32 %v5218, 0.0
        %v5443 = vmax.f32 %v5220, 0.0
        %v5444 = vmax.f32 %v4643, 0.0
        %v5445 = vmax.f32 %v4645, 0.0
        %v5446 = vmax.f32 %v4836, 0.0
        %v5447 = vmax.f32 %v4838, 0.0
        %v5448 = vmax.f32 %v5029, 0.0
        %v5449 = vmax.f32 %v5031, 0.0
        %v5450 = vmax.f32 %v5222, 0.0
        %v5451 = vmax.f32 %v5224, 0.0
        %v5452 = vmax.f32 %v4649, 0.0
        %v5453 = vmax.f32 %v4651, 0.0
        %v5454 = vmax.f32 %v4842, 0.0
        %v5455 = vmax.f32 %v4844, 0.0
        %v5456 = vmax.f32 %v5035, 0.0
        %v5457 = vmax.f32 %v5037, 0.0
        %v5458 = vmax.f32 %v5228, 0.0
        %v5459 = vmax.f32 %v5230, 0.0
        %v5460 = vmax.f32 %v4653, 0.0
        %v5461 = vmax.f32 %v4655, 0.0
        %v5462 = vmax.f32 %v4846, 0.0
        %v5463 = vmax.f32 %v4848, 0.0
        %v5464 = vmax.f32 %v5039, 0.0
        %v5465 = vmax.f32 %v5041, 0.0
        %v5466 = vmax.f32 %v5232, 0.0
        %v5467 = vmax.f32 %v5234, 0.0
        %v5468 = vmax.f32 %v4659, 0.0
        %v5469 = vmax.f32 %v4661, 0.0
        %v5470 = vmax.f32 %v4852, 0.0
        %v5471 = vmax.f32 %v4854, 0.0
        %v5472 = vmax.f32 %v5045, 0.0
        %v5473 = vmax.f32 %v5047, 0.0
        %v5474 = vmax.f32 %v5238, 0.0
        %v5475 = vmax.f32 %v5240, 0.0
        %v5476 = vmax.f32 %v4663, 0.0
        %v5477 = vmax.f32 %v4665, 0.0
        %v5478 = vmax.f32 %v4856, 0.0
        %v5479 = vmax.f32 %v4858, 0.0
        %v5480 = vmax.f32 %v5049, 0.0
        %v5481 = vmax.f32 %v5051, 0.0
        %v5482 = vmax.f32 %v5242, 0.0
        %v5483 = vmax.f32 %v5244, 0.0
        %v5484 = vmax.f32 %v4669, 0.0
        %v5485 = vmax.f32 %v4671, 0.0
        %v5486 = vmax.f32 %v4862, 0.0
        %v5487 = vmax.f32 %v4864, 0.0
        %v5488 = vmax.f32 %v5055, 0.0
        %v5489 = vmax.f32 %v5057, 0.0
        %v5490 = vmax.f32 %v5248, 0.0
        %v5491 = vmax.f32 %v5250, 0.0
        %v5492 = vmax.f32 %v4673, 0.0
        %v5493 = vmax.f32 %v4675, 0.0
        %v5494 = vmax.f32 %v4866, 0.0
        %v5495 = vmax.f32 %v4868, 0.0
        %v5496 = vmax.f32 %v5059, 0.0
        %v5497 = vmax.f32 %v5061, 0.0
        %v5498 = vmax.f32 %v5252, 0.0
        %v5499 = vmax.f32 %v5254, 0.0
        %v5500 = vmax.f32 %v4679, 0.0
        %v5501 = vmax.f32 %v4681, 0.0
        %v5502 = vmax.f32 %v4872, 0.0
        %v5503 = vmax.f32 %v4874, 0.0
        %v5504 = vmax.f32 %v5065, 0.0
        %v5505 = vmax.f32 %v5067, 0.0
        %v5506 = vmax.f32 %v5258, 0.0
        %v5507 = vmax.f32 %v5260, 0.0
        %v5508 = vmax.f32 %v4683, 0.0
        %v5509 = vmax.f32 %v4685, 0.0
        %v5510 = vmax.f32 %v4876, 0.0
        %v5511 = vmax.f32 %v4878, 0.0
        %v5512 = vmax.f32 %v5069, 0.0
        %v5513 = vmax.f32 %v5071, 0.0
        %v5514 = vmax.f32 %v5262, 0.0
        %v5515 = vmax.f32 %v5264, 0.0
        %v5516 = vmax.f32 %v4689, 0.0
        %v5517 = vmax.f32 %v4691, 0.0
        %v5518 = vmax.f32 %v4882, 0.0
        %v5519 = vmax.f32 %v4884, 0.0
        %v5520 = vmax.f32 %v5075, 0.0
        %v5521 = vmax.f32 %v5077, 0.0
        %v5522 = vmax.f32 %v5268, 0.0
        %v5523 = vmax.f32 %v5270, 0.0
        %v5524 = vmax.f32 %v4693, 0.0
        %v5525 = vmax.f32 %v4695, 0.0
        %v5526 = vmax.f32 %v4886, 0.0
        %v5527 = vmax.f32 %v4888, 0.0
        %v5528 = vmax.f32 %v5079, 0.0
        %v5529 = vmax.f32 %v5081, 0.0
        %v5530 = vmax.f32 %v5272, 0.0
        %v5531 = vmax.f32 %v5274, 0.0
        %v5532 = vpack.c.bf16 %v5284, %v5276
        %v5533 = vpack.c.bf16 %v5285, %v5277
        %v5534 = vpack.c.bf16 %v5286, %v5278
        %v5535 = vpack.c.bf16 %v5287, %v5279
        %v5536 = vpack.c.bf16 %v5288, %v5280
        %v5537 = vpack.c.bf16 %v5289, %v5281
        %v5538 = vpack.c.bf16 %v5290, %v5282
        %v5539 = vpack.c.bf16 %v5291, %v5283
        %v5540 = vpack.c.bf16 %v5300, %v5292
        %v5541 = vpack.c.bf16 %v5301, %v5293
        %v5542 = vpack.c.bf16 %v5302, %v5294
        %v5543 = vpack.c.bf16 %v5303, %v5295
        %v5544 = vpack.c.bf16 %v5304, %v5296
        %v5545 = vpack.c.bf16 %v5305, %v5297
        %v5546 = vpack.c.bf16 %v5306, %v5298
        %v5547 = vpack.c.bf16 %v5307, %v5299
        %v5548 = vpack.c.bf16 %v5316, %v5308
        %v5549 = vpack.c.bf16 %v5317, %v5309
        %v5550 = vpack.c.bf16 %v5318, %v5310
        %v5551 = vpack.c.bf16 %v5319, %v5311
        %v5552 = vpack.c.bf16 %v5320, %v5312
        %v5553 = vpack.c.bf16 %v5321, %v5313
        %v5554 = vpack.c.bf16 %v5322, %v5314
        %v5555 = vpack.c.bf16 %v5323, %v5315
        %v5556 = vpack.c.bf16 %v5332, %v5324
        %v5557 = vpack.c.bf16 %v5333, %v5325
        %v5558 = vpack.c.bf16 %v5334, %v5326
        %v5559 = vpack.c.bf16 %v5335, %v5327
        %v5560 = vpack.c.bf16 %v5336, %v5328
        %v5561 = vpack.c.bf16 %v5337, %v5329
        %v5562 = vpack.c.bf16 %v5338, %v5330
        %v5563 = vpack.c.bf16 %v5339, %v5331
        %v5564 = vpack.c.bf16 %v5348, %v5340
        %v5565 = vpack.c.bf16 %v5349, %v5341
        %v5566 = vpack.c.bf16 %v5350, %v5342
        %v5567 = vpack.c.bf16 %v5351, %v5343
        %v5568 = vpack.c.bf16 %v5352, %v5344
        %v5569 = vpack.c.bf16 %v5353, %v5345
        %v5570 = vpack.c.bf16 %v5354, %v5346
        %v5571 = vpack.c.bf16 %v5355, %v5347
        %v5572 = vpack.c.bf16 %v5364, %v5356
        %v5573 = vpack.c.bf16 %v5365, %v5357
        %v5574 = vpack.c.bf16 %v5366, %v5358
        %v5575 = vpack.c.bf16 %v5367, %v5359
        %v5576 = vpack.c.bf16 %v5368, %v5360
        %v5577 = vpack.c.bf16 %v5369, %v5361
        %v5578 = vpack.c.bf16 %v5370, %v5362
        %v5579 = vpack.c.bf16 %v5371, %v5363
        %v5580 = vpack.c.bf16 %v5380, %v5372
        %v5581 = vpack.c.bf16 %v5381, %v5373
        %v5582 = vpack.c.bf16 %v5382, %v5374
        %v5583 = vpack.c.bf16 %v5383, %v5375
        %v5584 = vpack.c.bf16 %v5384, %v5376
        %v5585 = vpack.c.bf16 %v5385, %v5377
        %v5586 = vpack.c.bf16 %v5386, %v5378
        %v5587 = vpack.c.bf16 %v5387, %v5379
        %v5588 = vpack.c.bf16 %v5396, %v5388
        %v5589 = vpack.c.bf16 %v5397, %v5389
        %v5590 = vpack.c.bf16 %v5398, %v5390
        %v5591 = vpack.c.bf16 %v5399, %v5391
        %v5592 = vpack.c.bf16 %v5400, %v5392
        %v5593 = vpack.c.bf16 %v5401, %v5393
        %v5594 = vpack.c.bf16 %v5402, %v5394
        %v5595 = vpack.c.bf16 %v5403, %v5395
        %v5596 = vpack.c.bf16 %v5412, %v5404
        %v5597 = vpack.c.bf16 %v5413, %v5405
        %v5598 = vpack.c.bf16 %v5414, %v5406
        %v5599 = vpack.c.bf16 %v5415, %v5407
        %v5600 = vpack.c.bf16 %v5416, %v5408
        %v5601 = vpack.c.bf16 %v5417, %v5409
        %v5602 = vpack.c.bf16 %v5418, %v5410
        %v5603 = vpack.c.bf16 %v5419, %v5411
        %v5604 = vpack.c.bf16 %v5428, %v5420
        %v5605 = vpack.c.bf16 %v5429, %v5421
        %v5606 = vpack.c.bf16 %v5430, %v5422
        %v5607 = vpack.c.bf16 %v5431, %v5423
        %v5608 = vpack.c.bf16 %v5432, %v5424
        %v5609 = vpack.c.bf16 %v5433, %v5425
        %v5610 = vpack.c.bf16 %v5434, %v5426
        %v5611 = vpack.c.bf16 %v5435, %v5427
        %v5612 = vpack.c.bf16 %v5444, %v5436
        %v5613 = vpack.c.bf16 %v5445, %v5437
        %v5614 = vpack.c.bf16 %v5446, %v5438
        %v5615 = vpack.c.bf16 %v5447, %v5439
        %v5616 = vpack.c.bf16 %v5448, %v5440
        %v5617 = vpack.c.bf16 %v5449, %v5441
        %v5618 = vpack.c.bf16 %v5450, %v5442
        %v5619 = vpack.c.bf16 %v5451, %v5443
        %v5620 = vpack.c.bf16 %v5460, %v5452
        %v5621 = vpack.c.bf16 %v5461, %v5453
        %v5622 = vpack.c.bf16 %v5462, %v5454
        %v5623 = vpack.c.bf16 %v5463, %v5455
        %v5624 = vpack.c.bf16 %v5464, %v5456
        %v5625 = vpack.c.bf16 %v5465, %v5457
        %v5626 = vpack.c.bf16 %v5466, %v5458
        %v5627 = vpack.c.bf16 %v5467, %v5459
        %v5628 = vpack.c.bf16 %v5476, %v5468
        %v5629 = vpack.c.bf16 %v5477, %v5469
        %v5630 = vpack.c.bf16 %v5478, %v5470
        %v5631 = vpack.c.bf16 %v5479, %v5471
        %v5632 = vpack.c.bf16 %v5480, %v5472
        %v5633 = vpack.c.bf16 %v5481, %v5473
        %v5634 = vpack.c.bf16 %v5482, %v5474
        %v5635 = vpack.c.bf16 %v5483, %v5475
        %v5636 = vpack.c.bf16 %v5492, %v5484
        %v5637 = vpack.c.bf16 %v5493, %v5485
        %v5638 = vpack.c.bf16 %v5494, %v5486
        %v5639 = vpack.c.bf16 %v5495, %v5487
        %v5640 = vpack.c.bf16 %v5496, %v5488
        %v5641 = vpack.c.bf16 %v5497, %v5489
        %v5642 = vpack.c.bf16 %v5498, %v5490
        %v5643 = vpack.c.bf16 %v5499, %v5491
        %v5644 = vpack.c.bf16 %v5508, %v5500
        %v5645 = vpack.c.bf16 %v5509, %v5501
        %v5646 = vpack.c.bf16 %v5510, %v5502
        %v5647 = vpack.c.bf16 %v5511, %v5503
        %v5648 = vpack.c.bf16 %v5512, %v5504
        %v5649 = vpack.c.bf16 %v5513, %v5505
        %v5650 = vpack.c.bf16 %v5514, %v5506
        %v5651 = vpack.c.bf16 %v5515, %v5507
        %v5652 = vpack.c.bf16 %v5524, %v5516
        %v5653 = vpack.c.bf16 %v5525, %v5517
        %v5654 = vpack.c.bf16 %v5526, %v5518
        %v5655 = vpack.c.bf16 %v5527, %v5519
        %v5656 = vpack.c.bf16 %v5528, %v5520
        %v5657 = vpack.c.bf16 %v5529, %v5521
        %v5658 = vpack.c.bf16 %v5530, %v5522
        %v5659 = vpack.c.bf16 %v5531, %v5523
        %v5660 = vld [vmem:[%s6] sm:$0xff]
        %v5661 = vld [vmem:[%s6 + $0x8] sm:$0xff]
        %v5662 = vld [vmem:[%s6 + $0x10] sm:$0xff]
        %v5663 = vld [vmem:[%s6 + $0x18] sm:$0xff]
        %v5664 = vld [vmem:[%s6 + $0x20] sm:$0xff]
        %v5665 = vld [vmem:[%s6 + $0x28] sm:$0xff]
        %v5666 = vld [vmem:[%s6 + $0x30] sm:$0xff]
        %v5667 = vld [vmem:[%s6 + $0x38] sm:$0xff]
        %v5668 = vld [vmem:[%s6 + $0x40] sm:$0xff]
        %v5669 = vld [vmem:[%s6 + $0x48] sm:$0xff]
        %v5670 = vld [vmem:[%s6 + $0x50] sm:$0xff]
        %v5671 = vld [vmem:[%s6 + $0x58] sm:$0xff]
        %v5672 = vld [vmem:[%s6 + $0x60] sm:$0xff]
        %v5673 = vld [vmem:[%s6 + $0x68] sm:$0xff]
        %v5674 = vld [vmem:[%s6 + $0x70] sm:$0xff]
        %v5675 = vld [vmem:[%s6 + $0x78] sm:$0xff]
        %v5676 = vld [vmem:[%s6 + $0x80] sm:$0xff]
        %v5677 = vld [vmem:[%s6 + $0x88] sm:$0xff]
        %v5678 = vld [vmem:[%s6 + $0x90] sm:$0xff]
        %v5679 = vld [vmem:[%s6 + $0x98] sm:$0xff]
        %v5680 = vld [vmem:[%s6 + $0xa0] sm:$0xff]
        %v5681 = vld [vmem:[%s6 + $0xa8] sm:$0xff]
        %v5682 = vld [vmem:[%s6 + $0xb0] sm:$0xff]
        %v5683 = vld [vmem:[%s6 + $0xb8] sm:$0xff]
        %v5684 = vld [vmem:[%s6 + $0xc0] sm:$0xff]
        %v5685 = vld [vmem:[%s6 + $0xc8] sm:$0xff]
        %v5686 = vld [vmem:[%s6 + $0xd0] sm:$0xff]
        %v5687 = vld [vmem:[%s6 + $0xd8] sm:$0xff]
        %v5688 = vld [vmem:[%s6 + $0xe0] sm:$0xff]
        %v5689 = vld [vmem:[%s6 + $0xe8] sm:$0xff]
        %v5690 = vld [vmem:[%s6 + $0xf0] sm:$0xff]
        %v5691 = vld [vmem:[%s6 + $0xf8] sm:$0xff]
        %v5692 = vld [vmem:[%s7] sm:$0xff]
        %v5693 = vld [vmem:[%s7 + $0x8] sm:$0xff]
        %v5694 = vld [vmem:[%s7 + $0x10] sm:$0xff]
        %v5695 = vld [vmem:[%s7 + $0x18] sm:$0xff]
        %v5696 = vld [vmem:[%s7 + $0x20] sm:$0xff]
        %v5697 = vld [vmem:[%s7 + $0x28] sm:$0xff]
        %v5698 = vld [vmem:[%s7 + $0x30] sm:$0xff]
        %v5699 = vld [vmem:[%s7 + $0x38] sm:$0xff]
        %v5700 = vld [vmem:[%s7 + $0x40] sm:$0xff]
        %v5701 = vld [vmem:[%s7 + $0x48] sm:$0xff]
        %v5702 = vld [vmem:[%s7 + $0x50] sm:$0xff]
        %v5703 = vld [vmem:[%s7 + $0x58] sm:$0xff]
        %v5704 = vld [vmem:[%s7 + $0x60] sm:$0xff]
        %v5705 = vld [vmem:[%s7 + $0x68] sm:$0xff]
        %v5706 = vld [vmem:[%s7 + $0x70] sm:$0xff]
        %v5707 = vld [vmem:[%s7 + $0x78] sm:$0xff]
        %v5708 = vld [vmem:[%s7 + $0x80] sm:$0xff]
        %v5709 = vld [vmem:[%s7 + $0x88] sm:$0xff]
        %v5710 = vld [vmem:[%s7 + $0x90] sm:$0xff]
        %v5711 = vld [vmem:[%s7 + $0x98] sm:$0xff]
        %v5712 = vld [vmem:[%s7 + $0xa0] sm:$0xff]
        %v5713 = vld [vmem:[%s7 + $0xa8] sm:$0xff]
        %v5714 = vld [vmem:[%s7 + $0xb0] sm:$0xff]
        %v5715 = vld [vmem:[%s7 + $0xb8] sm:$0xff]
        %v5716 = vld [vmem:[%s7 + $0xc0] sm:$0xff]
        %v5717 = vld [vmem:[%s7 + $0xc8] sm:$0xff]
        %v5718 = vld [vmem:[%s7 + $0xd0] sm:$0xff]
        %v5719 = vld [vmem:[%s7 + $0xd8] sm:$0xff]
        %v5720 = vld [vmem:[%s7 + $0xe0] sm:$0xff]
        %v5721 = vld [vmem:[%s7 + $0xe8] sm:$0xff]
        %v5722 = vld [vmem:[%s7 + $0xf0] sm:$0xff]
        %v5723 = vld [vmem:[%s7 + $0xf8] sm:$0xff]
        %5725 = vset.pattern.permute.xlu0 0
        %5726 = vperm.xlu0 %5725, %v5692
        %v5727 = vpop.permute.xlu0 %5726
        %5730 = vset.pattern.permute.xlu0 0
        %5731 = vperm.xlu0 %5730, %v5693
        %v5732 = vpop.permute.xlu0 %5731
        %5735 = vset.pattern.permute.xlu0 0
        %5736 = vperm.xlu0 %5735, %v5694
        %v5737 = vpop.permute.xlu0 %5736
        %5740 = vset.pattern.permute.xlu0 0
        %5741 = vperm.xlu0 %5740, %v5695
        %v5742 = vpop.permute.xlu0 %5741
        %5745 = vset.pattern.permute.xlu0 0
        %5746 = vperm.xlu0 %5745, %v5696
        %v5747 = vpop.permute.xlu0 %5746
        %5750 = vset.pattern.permute.xlu0 0
        %5751 = vperm.xlu0 %5750, %v5697
        %v5752 = vpop.permute.xlu0 %5751
        %5755 = vset.pattern.permute.xlu0 0
        %5756 = vperm.xlu0 %5755, %v5698
        %v5757 = vpop.permute.xlu0 %5756
        %5760 = vset.pattern.permute.xlu0 0
        %5761 = vperm.xlu0 %5760, %v5699
        %v5762 = vpop.permute.xlu0 %5761
        %5765 = vset.pattern.permute.xlu0 0
        %5766 = vperm.xlu0 %5765, %v5700
        %v5767 = vpop.permute.xlu0 %5766
        %5770 = vset.pattern.permute.xlu0 0
        %5771 = vperm.xlu0 %5770, %v5701
        %v5772 = vpop.permute.xlu0 %5771
        %5775 = vset.pattern.permute.xlu0 0
        %5776 = vperm.xlu0 %5775, %v5702
        %v5777 = vpop.permute.xlu0 %5776
        %5780 = vset.pattern.permute.xlu0 0
        %5781 = vperm.xlu0 %5780, %v5703
        %v5782 = vpop.permute.xlu0 %5781
        %5785 = vset.pattern.permute.xlu0 0
        %5786 = vperm.xlu0 %5785, %v5704
        %v5787 = vpop.permute.xlu0 %5786
        %5790 = vset.pattern.permute.xlu0 0
        %5791 = vperm.xlu0 %5790, %v5705
        %v5792 = vpop.permute.xlu0 %5791
        %5795 = vset.pattern.permute.xlu0 0
        %5796 = vperm.xlu0 %5795, %v5706
        %v5797 = vpop.permute.xlu0 %5796
        %5800 = vset.pattern.permute.xlu0 0
        %5801 = vperm.xlu0 %5800, %v5707
        %v5802 = vpop.permute.xlu0 %5801
        %5805 = vset.pattern.permute.xlu0 0
        %5806 = vperm.xlu0 %5805, %v5708
        %v5807 = vpop.permute.xlu0 %5806
        %5810 = vset.pattern.permute.xlu0 0
        %5811 = vperm.xlu0 %5810, %v5709
        %v5812 = vpop.permute.xlu0 %5811
        %5815 = vset.pattern.permute.xlu0 0
        %5816 = vperm.xlu0 %5815, %v5710
        %v5817 = vpop.permute.xlu0 %5816
        %5820 = vset.pattern.permute.xlu0 0
        %5821 = vperm.xlu0 %5820, %v5711
        %v5822 = vpop.permute.xlu0 %5821
        %5825 = vset.pattern.permute.xlu0 0
        %5826 = vperm.xlu0 %5825, %v5712
        %v5827 = vpop.permute.xlu0 %5826
        %5830 = vset.pattern.permute.xlu0 0
        %5831 = vperm.xlu0 %5830, %v5713
        %v5832 = vpop.permute.xlu0 %5831
        %5835 = vset.pattern.permute.xlu0 0
        %5836 = vperm.xlu0 %5835, %v5714
        %v5837 = vpop.permute.xlu0 %5836
        %5840 = vset.pattern.permute.xlu0 0
        %5841 = vperm.xlu0 %5840, %v5715
        %v5842 = vpop.permute.xlu0 %5841
        %5845 = vset.pattern.permute.xlu0 0
        %5846 = vperm.xlu0 %5845, %v5716
        %v5847 = vpop.permute.xlu0 %5846
        %5850 = vset.pattern.permute.xlu0 0
        %5851 = vperm.xlu0 %5850, %v5717
        %v5852 = vpop.permute.xlu0 %5851
        %5855 = vset.pattern.permute.xlu0 0
        %5856 = vperm.xlu0 %5855, %v5718
        %v5857 = vpop.permute.xlu0 %5856
        %5860 = vset.pattern.permute.xlu0 0
        %5861 = vperm.xlu0 %5860, %v5719
        %v5862 = vpop.permute.xlu0 %5861
        %5865 = vset.pattern.permute.xlu0 0
        %5866 = vperm.xlu0 %5865, %v5720
        %v5867 = vpop.permute.xlu0 %5866
        %5870 = vset.pattern.permute.xlu0 0
        %5871 = vperm.xlu0 %5870, %v5721
        %v5872 = vpop.permute.xlu0 %5871
        %5875 = vset.pattern.permute.xlu0 0
        %5876 = vperm.xlu0 %5875, %v5722
        %v5877 = vpop.permute.xlu0 %5876
        %5880 = vset.pattern.permute.xlu0 0
        %5881 = vperm.xlu0 %5880, %v5723
        %v5882 = vpop.permute.xlu0 %5881
        %v5916 = vunpack.c.l.b16 %v5660
        %v5917 = vunpack.c.h.b16 %v5660
        %v5918 = vunpack.c.l.b16 %v5661
        %v5919 = vunpack.c.h.b16 %v5661
        %v5920 = vunpack.c.l.b16 %v5662
        %v5921 = vunpack.c.h.b16 %v5662
        %v5922 = vunpack.c.l.b16 %v5663
        %v5923 = vunpack.c.h.b16 %v5663
        %v5924 = vunpack.c.l.b16 %v5664
        %v5925 = vunpack.c.h.b16 %v5664
        %v5926 = vunpack.c.l.b16 %v5665
        %v5927 = vunpack.c.h.b16 %v5665
        %v5928 = vunpack.c.l.b16 %v5666
        %v5929 = vunpack.c.h.b16 %v5666
        %v5930 = vunpack.c.l.b16 %v5667
        %v5931 = vunpack.c.h.b16 %v5667
        %v5932 = vunpack.c.l.b16 %v5668
        %v5933 = vunpack.c.h.b16 %v5668
        %v5934 = vunpack.c.l.b16 %v5669
        %v5935 = vunpack.c.h.b16 %v5669
        %v5936 = vunpack.c.l.b16 %v5670
        %v5937 = vunpack.c.h.b16 %v5670
        %v5938 = vunpack.c.l.b16 %v5671
        %v5939 = vunpack.c.h.b16 %v5671
        %v5940 = vunpack.c.l.b16 %v5672
        %v5941 = vunpack.c.h.b16 %v5672
        %v5942 = vunpack.c.l.b16 %v5673
        %v5943 = vunpack.c.h.b16 %v5673
        %v5944 = vunpack.c.l.b16 %v5674
        %v5945 = vunpack.c.h.b16 %v5674
        %v5946 = vunpack.c.l.b16 %v5675
        %v5947 = vunpack.c.h.b16 %v5675
        %v5948 = vunpack.c.l.b16 %v5676
        %v5949 = vunpack.c.h.b16 %v5676
        %v5950 = vunpack.c.l.b16 %v5677
        %v5951 = vunpack.c.h.b16 %v5677
        %v5952 = vunpack.c.l.b16 %v5678
        %v5953 = vunpack.c.h.b16 %v5678
        %v5954 = vunpack.c.l.b16 %v5679
        %v5955 = vunpack.c.h.b16 %v5679
        %v5956 = vunpack.c.l.b16 %v5680
        %v5957 = vunpack.c.h.b16 %v5680
        %v5958 = vunpack.c.l.b16 %v5681
        %v5959 = vunpack.c.h.b16 %v5681
        %v5960 = vunpack.c.l.b16 %v5682
        %v5961 = vunpack.c.h.b16 %v5682
        %v5962 = vunpack.c.l.b16 %v5683
        %v5963 = vunpack.c.h.b16 %v5683
        %v5964 = vunpack.c.l.b16 %v5684
        %v5965 = vunpack.c.h.b16 %v5684
        %v5966 = vunpack.c.l.b16 %v5685
        %v5967 = vunpack.c.h.b16 %v5685
        %v5968 = vunpack.c.l.b16 %v5686
        %v5969 = vunpack.c.h.b16 %v5686
        %v5970 = vunpack.c.l.b16 %v5687
        %v5971 = vunpack.c.h.b16 %v5687
        %v5972 = vunpack.c.l.b16 %v5688
        %v5973 = vunpack.c.h.b16 %v5688
        %v5974 = vunpack.c.l.b16 %v5689
        %v5975 = vunpack.c.h.b16 %v5689
        %v5976 = vunpack.c.l.b16 %v5690
        %v5977 = vunpack.c.h.b16 %v5690
        %v5978 = vunpack.c.l.b16 %v5691
        %v5979 = vunpack.c.h.b16 %v5691
        %v5980 = vpack.c.b16 %v5918, %v5916
        %v5981 = vpack.c.b16 %v5919, %v5917
        %v5982 = vpack.c.b16 %v5922, %v5920
        %v5983 = vpack.c.b16 %v5923, %v5921
        %v5984 = vpack.c.b16 %v5926, %v5924
        %v5985 = vpack.c.b16 %v5927, %v5925
        %v5986 = vpack.c.b16 %v5930, %v5928
        %v5987 = vpack.c.b16 %v5931, %v5929
        %v5988 = vpack.c.b16 %v5934, %v5932
        %v5989 = vpack.c.b16 %v5935, %v5933
        %v5990 = vpack.c.b16 %v5938, %v5936
        %v5991 = vpack.c.b16 %v5939, %v5937
        %v5992 = vpack.c.b16 %v5942, %v5940
        %v5993 = vpack.c.b16 %v5943, %v5941
        %v5994 = vpack.c.b16 %v5946, %v5944
        %v5995 = vpack.c.b16 %v5947, %v5945
        %v5996 = vpack.c.b16 %v5950, %v5948
        %v5997 = vpack.c.b16 %v5951, %v5949
        %v5998 = vpack.c.b16 %v5954, %v5952
        %v5999 = vpack.c.b16 %v5955, %v5953
        %v6000 = vpack.c.b16 %v5958, %v5956
        %v6001 = vpack.c.b16 %v5959, %v5957
        %v6002 = vpack.c.b16 %v5962, %v5960
        %v6003 = vpack.c.b16 %v5963, %v5961
        %v6004 = vpack.c.b16 %v5966, %v5964
        %v6005 = vpack.c.b16 %v5967, %v5965
        %v6006 = vpack.c.b16 %v5970, %v5968
        %v6007 = vpack.c.b16 %v5971, %v5969
        %v6008 = vpack.c.b16 %v5974, %v5972
        %v6009 = vpack.c.b16 %v5975, %v5973
        %v6010 = vpack.c.b16 %v5978, %v5976
        %v6011 = vpack.c.b16 %v5979, %v5977
        %6044 = vmatprep.subr.bf16.mxu0 %v5589
        %6045 = vmatpush1.bf16.msra.mxu0 %v5588
        %6046 = vmatprep.subr.bf16.mxu0 %v5581
        %6047 = vmatpush1.bf16.msra.mxu0 %v5580
        %6048 = vmatprep.subr.bf16.mxu0 %v5573
        %6049 = vmatpush1.bf16.msra.mxu0 %v5572
        %6050 = vmatprep.subr.bf16.mxu0 %v5565
        %6051 = vmatpush1.bf16.msra.mxu0 %v5564
        %6052 = vmatprep.subr.bf16.mxu0 %v5557
        %6053 = vmatpush1.bf16.msra.mxu0 %v5556
        %6054 = vmatprep.subr.bf16.mxu0 %v5549
        %6055 = vmatpush1.bf16.msra.mxu0 %v5548
        %6056 = vmatprep.subr.bf16.mxu0 %v5541
        %6057 = vmatpush1.bf16.msra.mxu0 %v5540
        %6058 = vmatprep.subr.bf16.mxu0 %v5533
        %6059 = vmatpush1.bf16.msra.mxu0 %v5532
        %6060 = vmatprep.subr.bf16.mxu0 %v5653
        %6061 = vmatpush2.bf16.msra.mxu0 %v5652
        %6062 = vmatprep.subr.bf16.mxu0 %v5645
        %6063 = vmatpush2.bf16.msra.mxu0 %v5644
        %6064 = vmatprep.subr.bf16.mxu0 %v5637
        %6065 = vmatpush2.bf16.msra.mxu0 %v5636
        %6066 = vmatprep.subr.bf16.mxu0 %v5629
        %6067 = vmatpush2.bf16.msra.mxu0 %v5628
        %6068 = vmatprep.subr.bf16.mxu0 %v5621
        %6069 = vmatpush2.bf16.msra.mxu0 %v5620
        %6070 = vmatprep.subr.bf16.mxu0 %v5613
        %6071 = vmatpush2.bf16.msra.mxu0 %v5612
        %6072 = vmatprep.subr.bf16.mxu0 %v5605
        %6073 = vmatpush2.bf16.msra.mxu0 %v5604
        %6074 = vmatprep.subr.bf16.mxu0 %v5597
        %6075 = vmatpush2.bf16.msra.mxu0 %v5596
        %6076 = vmatprep.mubr.bf16.mxu0 %v5981
        %6077 = vmatmul.mubr.bf16.gmra.mxu0 %v5980
        %v6078 = vpop.f32.mrf.mxu0
        %v6079 = vadd.f32 %v5727, %v6078
        %v6080 = vpop.f32.mrf.mxu0
        %v6081 = vadd.f32 %v5727, %v6080
        %v6082 = vpop.f32.mrf.mxu0
        %v6083 = vadd.f32 %v5732, %v6082
        %v6084 = vpop.f32.mrf.mxu0
        %v6085 = vadd.f32 %v5732, %v6084
        %6086 = vmatprep.mubr.bf16.mxu0 %v5983
        %6087 = vmatmul.mubr.bf16.gmra.mxu0 %v5982
        %v6088 = vpop.f32.mrf.mxu0
        %v6089 = vadd.f32 %v5737, %v6088
        %v6090 = vpop.f32.mrf.mxu0
        %v6091 = vadd.f32 %v5737, %v6090
        %v6092 = vpop.f32.mrf.mxu0
        %v6093 = vadd.f32 %v5742, %v6092
        %v6094 = vpop.f32.mrf.mxu0
        %v6095 = vadd.f32 %v5742, %v6094
        %6096 = vmatprep.mubr.bf16.mxu0 %v5985
        %6097 = vmatmul.mubr.bf16.gmra.mxu0 %v5984
        %v6098 = vpop.f32.mrf.mxu0
        %v6099 = vadd.f32 %v5747, %v6098
        %v6100 = vpop.f32.mrf.mxu0
        %v6101 = vadd.f32 %v5747, %v6100
        %v6102 = vpop.f32.mrf.mxu0
        %v6103 = vadd.f32 %v5752, %v6102
        %v6104 = vpop.f32.mrf.mxu0
        %v6105 = vadd.f32 %v5752, %v6104
        %6106 = vmatprep.mubr.bf16.mxu0 %v5987
        %6107 = vmatmul.mubr.bf16.gmra.mxu0 %v5986
        %v6108 = vpop.f32.mrf.mxu0
        %v6109 = vadd.f32 %v5757, %v6108
        %v6110 = vpop.f32.mrf.mxu0
        %v6111 = vadd.f32 %v5757, %v6110
        %v6112 = vpop.f32.mrf.mxu0
        %v6113 = vadd.f32 %v5762, %v6112
        %v6114 = vpop.f32.mrf.mxu0
        %v6115 = vadd.f32 %v5762, %v6114
        %6116 = vmatprep.mubr.bf16.mxu0 %v5989
        %6117 = vmatmul.mubr.bf16.gmra.mxu0 %v5988
        %v6118 = vpop.f32.mrf.mxu0
        %v6119 = vadd.f32 %v5767, %v6118
        %v6120 = vpop.f32.mrf.mxu0
        %v6121 = vadd.f32 %v5767, %v6120
        %v6122 = vpop.f32.mrf.mxu0
        %v6123 = vadd.f32 %v5772, %v6122
        %v6124 = vpop.f32.mrf.mxu0
        %v6125 = vadd.f32 %v5772, %v6124
        %6126 = vmatprep.mubr.bf16.mxu0 %v5991
        %6127 = vmatmul.mubr.bf16.gmra.mxu0 %v5990
        %v6128 = vpop.f32.mrf.mxu0
        %v6129 = vadd.f32 %v5777, %v6128
        %v6130 = vpop.f32.mrf.mxu0
        %v6131 = vadd.f32 %v5777, %v6130
        %v6132 = vpop.f32.mrf.mxu0
        %v6133 = vadd.f32 %v5782, %v6132
        %v6134 = vpop.f32.mrf.mxu0
        %v6135 = vadd.f32 %v5782, %v6134
        %6136 = vmatprep.mubr.bf16.mxu0 %v5993
        %6137 = vmatmul.mubr.bf16.gmra.mxu0 %v5992
        %v6138 = vpop.f32.mrf.mxu0
        %v6139 = vadd.f32 %v5787, %v6138
        %v6140 = vpop.f32.mrf.mxu0
        %v6141 = vadd.f32 %v5787, %v6140
        %v6142 = vpop.f32.mrf.mxu0
        %v6143 = vadd.f32 %v5792, %v6142
        %v6144 = vpop.f32.mrf.mxu0
        %v6145 = vadd.f32 %v5792, %v6144
        %6146 = vmatprep.mubr.bf16.mxu0 %v5995
        %6147 = vmatmul.mubr.bf16.gmra.mxu0 %v5994
        %v6148 = vpop.f32.mrf.mxu0
        %v6149 = vadd.f32 %v5797, %v6148
        %v6150 = vpop.f32.mrf.mxu0
        %v6151 = vadd.f32 %v5797, %v6150
        %v6152 = vpop.f32.mrf.mxu0
        %v6153 = vadd.f32 %v5802, %v6152
        %v6154 = vpop.f32.mrf.mxu0
        %v6155 = vadd.f32 %v5802, %v6154
        %6156 = vmatprep.mubr.bf16.mxu0 %v5997
        %6157 = vmatmul.mubr.bf16.gmra.mxu0 %v5996
        %v6158 = vpop.f32.mrf.mxu0
        %v6159 = vadd.f32 %v5807, %v6158
        %v6160 = vpop.f32.mrf.mxu0
        %v6161 = vadd.f32 %v5807, %v6160
        %v6162 = vpop.f32.mrf.mxu0
        %v6163 = vadd.f32 %v5812, %v6162
        %v6164 = vpop.f32.mrf.mxu0
        %v6165 = vadd.f32 %v5812, %v6164
        %6166 = vmatprep.mubr.bf16.mxu0 %v5999
        %6167 = vmatmul.mubr.bf16.gmra.mxu0 %v5998
        %v6168 = vpop.f32.mrf.mxu0
        %v6169 = vadd.f32 %v5817, %v6168
        %v6170 = vpop.f32.mrf.mxu0
        %v6171 = vadd.f32 %v5817, %v6170
        %v6172 = vpop.f32.mrf.mxu0
        %v6173 = vadd.f32 %v5822, %v6172
        %v6174 = vpop.f32.mrf.mxu0
        %v6175 = vadd.f32 %v5822, %v6174
        %6176 = vmatprep.mubr.bf16.mxu0 %v6001
        %6177 = vmatmul.mubr.bf16.gmra.mxu0 %v6000
        %v6178 = vpop.f32.mrf.mxu0
        %v6179 = vadd.f32 %v5827, %v6178
        %v6180 = vpop.f32.mrf.mxu0
        %v6181 = vadd.f32 %v5827, %v6180
        %v6182 = vpop.f32.mrf.mxu0
        %v6183 = vadd.f32 %v5832, %v6182
        %v6184 = vpop.f32.mrf.mxu0
        %v6185 = vadd.f32 %v5832, %v6184
        %6186 = vmatprep.mubr.bf16.mxu0 %v6003
        %6187 = vmatmul.mubr.bf16.gmra.mxu0 %v6002
        %v6188 = vpop.f32.mrf.mxu0
        %v6189 = vadd.f32 %v5837, %v6188
        %v6190 = vpop.f32.mrf.mxu0
        %v6191 = vadd.f32 %v5837, %v6190
        %v6192 = vpop.f32.mrf.mxu0
        %v6193 = vadd.f32 %v5842, %v6192
        %v6194 = vpop.f32.mrf.mxu0
        %v6195 = vadd.f32 %v5842, %v6194
        %6196 = vmatprep.mubr.bf16.mxu0 %v6005
        %6197 = vmatmul.mubr.bf16.gmra.mxu0 %v6004
        %v6198 = vpop.f32.mrf.mxu0
        %v6199 = vadd.f32 %v5847, %v6198
        %v6200 = vpop.f32.mrf.mxu0
        %v6201 = vadd.f32 %v5847, %v6200
        %v6202 = vpop.f32.mrf.mxu0
        %v6203 = vadd.f32 %v5852, %v6202
        %v6204 = vpop.f32.mrf.mxu0
        %v6205 = vadd.f32 %v5852, %v6204
        %6206 = vmatprep.mubr.bf16.mxu0 %v6007
        %6207 = vmatmul.mubr.bf16.gmra.mxu0 %v6006
        %v6208 = vpop.f32.mrf.mxu0
        %v6209 = vadd.f32 %v5857, %v6208
        %v6210 = vpop.f32.mrf.mxu0
        %v6211 = vadd.f32 %v5857, %v6210
        %v6212 = vpop.f32.mrf.mxu0
        %v6213 = vadd.f32 %v5862, %v6212
        %v6214 = vpop.f32.mrf.mxu0
        %v6215 = vadd.f32 %v5862, %v6214
        %6216 = vmatprep.mubr.bf16.mxu0 %v6009
        %6217 = vmatmul.mubr.bf16.gmra.mxu0 %v6008
        %v6218 = vpop.f32.mrf.mxu0
        %v6219 = vadd.f32 %v5867, %v6218
        %v6220 = vpop.f32.mrf.mxu0
        %v6221 = vadd.f32 %v5867, %v6220
        %v6222 = vpop.f32.mrf.mxu0
        %v6223 = vadd.f32 %v5872, %v6222
        %v6224 = vpop.f32.mrf.mxu0
        %v6225 = vadd.f32 %v5872, %v6224
        %6226 = vmatprep.mubr.bf16.mxu0 %v6011
        %6227 = vmatmul.mubr.bf16.gmra.mxu0 %v6010
        %v6228 = vpop.f32.mrf.mxu0
        %v6229 = vadd.f32 %v5877, %v6228
        %v6230 = vpop.f32.mrf.mxu0
        %v6231 = vadd.f32 %v5877, %v6230
        %v6232 = vpop.f32.mrf.mxu0
        %v6233 = vadd.f32 %v5882, %v6232
        %v6234 = vpop.f32.mrf.mxu0
        %v6235 = vadd.f32 %v5882, %v6234
        %6236 = vdwg.mxu0
        %6237 = vmatprep.subr.bf16.mxu0 %v5591
        %6238 = vmatpush1.bf16.msra.mxu0 %v5590
        %6239 = vmatprep.subr.bf16.mxu0 %v5583
        %6240 = vmatpush1.bf16.msra.mxu0 %v5582
        %6241 = vmatprep.subr.bf16.mxu0 %v5575
        %6242 = vmatpush1.bf16.msra.mxu0 %v5574
        %6243 = vmatprep.subr.bf16.mxu0 %v5567
        %6244 = vmatpush1.bf16.msra.mxu0 %v5566
        %6245 = vmatprep.subr.bf16.mxu0 %v5559
        %6246 = vmatpush1.bf16.msra.mxu0 %v5558
        %6247 = vmatprep.subr.bf16.mxu0 %v5551
        %6248 = vmatpush1.bf16.msra.mxu0 %v5550
        %6249 = vmatprep.subr.bf16.mxu0 %v5543
        %6250 = vmatpush1.bf16.msra.mxu0 %v5542
        %6251 = vmatprep.subr.bf16.mxu0 %v5535
        %6252 = vmatpush1.bf16.msra.mxu0 %v5534
        %6253 = vmatprep.subr.bf16.mxu0 %v5655
        %6254 = vmatpush2.bf16.msra.mxu0 %v5654
        %6255 = vmatprep.subr.bf16.mxu0 %v5647
        %6256 = vmatpush2.bf16.msra.mxu0 %v5646
        %6257 = vmatprep.subr.bf16.mxu0 %v5639
        %6258 = vmatpush2.bf16.msra.mxu0 %v5638
        %6259 = vmatprep.subr.bf16.mxu0 %v5631
        %6260 = vmatpush2.bf16.msra.mxu0 %v5630
        %6261 = vmatprep.subr.bf16.mxu0 %v5623
        %6262 = vmatpush2.bf16.msra.mxu0 %v5622
        %6263 = vmatprep.subr.bf16.mxu0 %v5615
        %6264 = vmatpush2.bf16.msra.mxu0 %v5614
        %6265 = vmatprep.subr.bf16.mxu0 %v5607
        %6266 = vmatpush2.bf16.msra.mxu0 %v5606
        %6267 = vmatprep.subr.bf16.mxu0 %v5599
        %6268 = vmatpush2.bf16.msra.mxu0 %v5598
        %6269 = vmatprep.mubr.bf16.mxu0 %v5981
        %6270 = vmatmul.mubr.bf16.gmra.mxu0 %v5980
        %v6271 = vpop.f32.mrf.mxu0
        %v6272 = vadd.f32 %v5727, %v6271
        %v6273 = vpop.f32.mrf.mxu0
        %v6274 = vadd.f32 %v5727, %v6273
        %v6275 = vpop.f32.mrf.mxu0
        %v6276 = vadd.f32 %v5732, %v6275
        %v6277 = vpop.f32.mrf.mxu0
        %v6278 = vadd.f32 %v5732, %v6277
        %6279 = vmatprep.mubr.bf16.mxu0 %v5983
        %6280 = vmatmul.mubr.bf16.gmra.mxu0 %v5982
        %v6281 = vpop.f32.mrf.mxu0
        %v6282 = vadd.f32 %v5737, %v6281
        %v6283 = vpop.f32.mrf.mxu0
        %v6284 = vadd.f32 %v5737, %v6283
        %v6285 = vpop.f32.mrf.mxu0
        %v6286 = vadd.f32 %v5742, %v6285
        %v6287 = vpop.f32.mrf.mxu0
        %v6288 = vadd.f32 %v5742, %v6287
        %6289 = vmatprep.mubr.bf16.mxu0 %v5985
        %6290 = vmatmul.mubr.bf16.gmra.mxu0 %v5984
        %v6291 = vpop.f32.mrf.mxu0
        %v6292 = vadd.f32 %v5747, %v6291
        %v6293 = vpop.f32.mrf.mxu0
        %v6294 = vadd.f32 %v5747, %v6293
        %v6295 = vpop.f32.mrf.mxu0
        %v6296 = vadd.f32 %v5752, %v6295
        %v6297 = vpop.f32.mrf.mxu0
        %v6298 = vadd.f32 %v5752, %v6297
        %6299 = vmatprep.mubr.bf16.mxu0 %v5987
        %6300 = vmatmul.mubr.bf16.gmra.mxu0 %v5986
        %v6301 = vpop.f32.mrf.mxu0
        %v6302 = vadd.f32 %v5757, %v6301
        %v6303 = vpop.f32.mrf.mxu0
        %v6304 = vadd.f32 %v5757, %v6303
        %v6305 = vpop.f32.mrf.mxu0
        %v6306 = vadd.f32 %v5762, %v6305
        %v6307 = vpop.f32.mrf.mxu0
        %v6308 = vadd.f32 %v5762, %v6307
        %6309 = vmatprep.mubr.bf16.mxu0 %v5989
        %6310 = vmatmul.mubr.bf16.gmra.mxu0 %v5988
        %v6311 = vpop.f32.mrf.mxu0
        %v6312 = vadd.f32 %v5767, %v6311
        %v6313 = vpop.f32.mrf.mxu0
        %v6314 = vadd.f32 %v5767, %v6313
        %v6315 = vpop.f32.mrf.mxu0
        %v6316 = vadd.f32 %v5772, %v6315
        %v6317 = vpop.f32.mrf.mxu0
        %v6318 = vadd.f32 %v5772, %v6317
        %6319 = vmatprep.mubr.bf16.mxu0 %v5991
        %6320 = vmatmul.mubr.bf16.gmra.mxu0 %v5990
        %v6321 = vpop.f32.mrf.mxu0
        %v6322 = vadd.f32 %v5777, %v6321
        %v6323 = vpop.f32.mrf.mxu0
        %v6324 = vadd.f32 %v5777, %v6323
        %v6325 = vpop.f32.mrf.mxu0
        %v6326 = vadd.f32 %v5782, %v6325
        %v6327 = vpop.f32.mrf.mxu0
        %v6328 = vadd.f32 %v5782, %v6327
        %6329 = vmatprep.mubr.bf16.mxu0 %v5993
        %6330 = vmatmul.mubr.bf16.gmra.mxu0 %v5992
        %v6331 = vpop.f32.mrf.mxu0
        %v6332 = vadd.f32 %v5787, %v6331
        %v6333 = vpop.f32.mrf.mxu0
        %v6334 = vadd.f32 %v5787, %v6333
        %v6335 = vpop.f32.mrf.mxu0
        %v6336 = vadd.f32 %v5792, %v6335
        %v6337 = vpop.f32.mrf.mxu0
        %v6338 = vadd.f32 %v5792, %v6337
        %6339 = vmatprep.mubr.bf16.mxu0 %v5995
        %6340 = vmatmul.mubr.bf16.gmra.mxu0 %v5994
        %v6341 = vpop.f32.mrf.mxu0
        %v6342 = vadd.f32 %v5797, %v6341
        %v6343 = vpop.f32.mrf.mxu0
        %v6344 = vadd.f32 %v5797, %v6343
        %v6345 = vpop.f32.mrf.mxu0
        %v6346 = vadd.f32 %v5802, %v6345
        %v6347 = vpop.f32.mrf.mxu0
        %v6348 = vadd.f32 %v5802, %v6347
        %6349 = vmatprep.mubr.bf16.mxu0 %v5997
        %6350 = vmatmul.mubr.bf16.gmra.mxu0 %v5996
        %v6351 = vpop.f32.mrf.mxu0
        %v6352 = vadd.f32 %v5807, %v6351
        %v6353 = vpop.f32.mrf.mxu0
        %v6354 = vadd.f32 %v5807, %v6353
        %v6355 = vpop.f32.mrf.mxu0
        %v6356 = vadd.f32 %v5812, %v6355
        %v6357 = vpop.f32.mrf.mxu0
        %v6358 = vadd.f32 %v5812, %v6357
        %6359 = vmatprep.mubr.bf16.mxu0 %v5999
        %6360 = vmatmul.mubr.bf16.gmra.mxu0 %v5998
        %v6361 = vpop.f32.mrf.mxu0
        %v6362 = vadd.f32 %v5817, %v6361
        %v6363 = vpop.f32.mrf.mxu0
        %v6364 = vadd.f32 %v5817, %v6363
        %v6365 = vpop.f32.mrf.mxu0
        %v6366 = vadd.f32 %v5822, %v6365
        %v6367 = vpop.f32.mrf.mxu0
        %v6368 = vadd.f32 %v5822, %v6367
        %6369 = vmatprep.mubr.bf16.mxu0 %v6001
        %6370 = vmatmul.mubr.bf16.gmra.mxu0 %v6000
        %v6371 = vpop.f32.mrf.mxu0
        %v6372 = vadd.f32 %v5827, %v6371
        %v6373 = vpop.f32.mrf.mxu0
        %v6374 = vadd.f32 %v5827, %v6373
        %v6375 = vpop.f32.mrf.mxu0
        %v6376 = vadd.f32 %v5832, %v6375
        %v6377 = vpop.f32.mrf.mxu0
        %v6378 = vadd.f32 %v5832, %v6377
        %6379 = vmatprep.mubr.bf16.mxu0 %v6003
        %6380 = vmatmul.mubr.bf16.gmra.mxu0 %v6002
        %v6381 = vpop.f32.mrf.mxu0
        %v6382 = vadd.f32 %v5837, %v6381
        %v6383 = vpop.f32.mrf.mxu0
        %v6384 = vadd.f32 %v5837, %v6383
        %v6385 = vpop.f32.mrf.mxu0
        %v6386 = vadd.f32 %v5842, %v6385
        %v6387 = vpop.f32.mrf.mxu0
        %v6388 = vadd.f32 %v5842, %v6387
        %6389 = vmatprep.mubr.bf16.mxu0 %v6005
        %6390 = vmatmul.mubr.bf16.gmra.mxu0 %v6004
        %v6391 = vpop.f32.mrf.mxu0
        %v6392 = vadd.f32 %v5847, %v6391
        %v6393 = vpop.f32.mrf.mxu0
        %v6394 = vadd.f32 %v5847, %v6393
        %v6395 = vpop.f32.mrf.mxu0
        %v6396 = vadd.f32 %v5852, %v6395
        %v6397 = vpop.f32.mrf.mxu0
        %v6398 = vadd.f32 %v5852, %v6397
        %6399 = vmatprep.mubr.bf16.mxu0 %v6007
        %6400 = vmatmul.mubr.bf16.gmra.mxu0 %v6006
        %v6401 = vpop.f32.mrf.mxu0
        %v6402 = vadd.f32 %v5857, %v6401
        %v6403 = vpop.f32.mrf.mxu0
        %v6404 = vadd.f32 %v5857, %v6403
        %v6405 = vpop.f32.mrf.mxu0
        %v6406 = vadd.f32 %v5862, %v6405
        %v6407 = vpop.f32.mrf.mxu0
        %v6408 = vadd.f32 %v5862, %v6407
        %6409 = vmatprep.mubr.bf16.mxu0 %v6009
        %6410 = vmatmul.mubr.bf16.gmra.mxu0 %v6008
        %v6411 = vpop.f32.mrf.mxu0
        %v6412 = vadd.f32 %v5867, %v6411
        %v6413 = vpop.f32.mrf.mxu0
        %v6414 = vadd.f32 %v5867, %v6413
        %v6415 = vpop.f32.mrf.mxu0
        %v6416 = vadd.f32 %v5872, %v6415
        %v6417 = vpop.f32.mrf.mxu0
        %v6418 = vadd.f32 %v5872, %v6417
        %6419 = vmatprep.mubr.bf16.mxu0 %v6011
        %6420 = vmatmul.mubr.bf16.gmra.mxu0 %v6010
        %v6421 = vpop.f32.mrf.mxu0
        %v6422 = vadd.f32 %v5877, %v6421
        %v6423 = vpop.f32.mrf.mxu0
        %v6424 = vadd.f32 %v5877, %v6423
        %v6425 = vpop.f32.mrf.mxu0
        %v6426 = vadd.f32 %v5882, %v6425
        %v6427 = vpop.f32.mrf.mxu0
        %v6428 = vadd.f32 %v5882, %v6427
        %6429 = vdwg.mxu0
        %6430 = vmatprep.subr.bf16.mxu0 %v5593
        %6431 = vmatpush1.bf16.msra.mxu0 %v5592
        %6432 = vmatprep.subr.bf16.mxu0 %v5585
        %6433 = vmatpush1.bf16.msra.mxu0 %v5584
        %6434 = vmatprep.subr.bf16.mxu0 %v5577
        %6435 = vmatpush1.bf16.msra.mxu0 %v5576
        %6436 = vmatprep.subr.bf16.mxu0 %v5569
        %6437 = vmatpush1.bf16.msra.mxu0 %v5568
        %6438 = vmatprep.subr.bf16.mxu0 %v5561
        %6439 = vmatpush1.bf16.msra.mxu0 %v5560
        %6440 = vmatprep.subr.bf16.mxu0 %v5553
        %6441 = vmatpush1.bf16.msra.mxu0 %v5552
        %6442 = vmatprep.subr.bf16.mxu0 %v5545
        %6443 = vmatpush1.bf16.msra.mxu0 %v5544
        %6444 = vmatprep.subr.bf16.mxu0 %v5537
        %6445 = vmatpush1.bf16.msra.mxu0 %v5536
        %6446 = vmatprep.subr.bf16.mxu0 %v5657
        %6447 = vmatpush2.bf16.msra.mxu0 %v5656
        %6448 = vmatprep.subr.bf16.mxu0 %v5649
        %6449 = vmatpush2.bf16.msra.mxu0 %v5648
        %6450 = vmatprep.subr.bf16.mxu0 %v5641
        %6451 = vmatpush2.bf16.msra.mxu0 %v5640
        %6452 = vmatprep.subr.bf16.mxu0 %v5633
        %6453 = vmatpush2.bf16.msra.mxu0 %v5632
        %6454 = vmatprep.subr.bf16.mxu0 %v5625
        %6455 = vmatpush2.bf16.msra.mxu0 %v5624
        %6456 = vmatprep.subr.bf16.mxu0 %v5617
        %6457 = vmatpush2.bf16.msra.mxu0 %v5616
        %6458 = vmatprep.subr.bf16.mxu0 %v5609
        %6459 = vmatpush2.bf16.msra.mxu0 %v5608
        %6460 = vmatprep.subr.bf16.mxu0 %v5601
        %6461 = vmatpush2.bf16.msra.mxu0 %v5600
        %6462 = vmatprep.mubr.bf16.mxu0 %v5981
        %6463 = vmatmul.mubr.bf16.gmra.mxu0 %v5980
        %v6464 = vpop.f32.mrf.mxu0
        %v6465 = vadd.f32 %v5727, %v6464
        %v6466 = vpop.f32.mrf.mxu0
        %v6467 = vadd.f32 %v5727, %v6466
        %v6468 = vpop.f32.mrf.mxu0
        %v6469 = vadd.f32 %v5732, %v6468
        %v6470 = vpop.f32.mrf.mxu0
        %v6471 = vadd.f32 %v5732, %v6470
        %6472 = vmatprep.mubr.bf16.mxu0 %v5983
        %6473 = vmatmul.mubr.bf16.gmra.mxu0 %v5982
        %v6474 = vpop.f32.mrf.mxu0
        %v6475 = vadd.f32 %v5737, %v6474
        %v6476 = vpop.f32.mrf.mxu0
        %v6477 = vadd.f32 %v5737, %v6476
        %v6478 = vpop.f32.mrf.mxu0
        %v6479 = vadd.f32 %v5742, %v6478
        %v6480 = vpop.f32.mrf.mxu0
        %v6481 = vadd.f32 %v5742, %v6480
        %6482 = vmatprep.mubr.bf16.mxu0 %v5985
        %6483 = vmatmul.mubr.bf16.gmra.mxu0 %v5984
        %v6484 = vpop.f32.mrf.mxu0
        %v6485 = vadd.f32 %v5747, %v6484
        %v6486 = vpop.f32.mrf.mxu0
        %v6487 = vadd.f32 %v5747, %v6486
        %v6488 = vpop.f32.mrf.mxu0
        %v6489 = vadd.f32 %v5752, %v6488
        %v6490 = vpop.f32.mrf.mxu0
        %v6491 = vadd.f32 %v5752, %v6490
        %6492 = vmatprep.mubr.bf16.mxu0 %v5987
        %6493 = vmatmul.mubr.bf16.gmra.mxu0 %v5986
        %v6494 = vpop.f32.mrf.mxu0
        %v6495 = vadd.f32 %v5757, %v6494
        %v6496 = vpop.f32.mrf.mxu0
        %v6497 = vadd.f32 %v5757, %v6496
        %v6498 = vpop.f32.mrf.mxu0
        %v6499 = vadd.f32 %v5762, %v6498
        %v6500 = vpop.f32.mrf.mxu0
        %v6501 = vadd.f32 %v5762, %v6500
        %6502 = vmatprep.mubr.bf16.mxu0 %v5989
        %6503 = vmatmul.mubr.bf16.gmra.mxu0 %v5988
        %v6504 = vpop.f32.mrf.mxu0
        %v6505 = vadd.f32 %v5767, %v6504
        %v6506 = vpop.f32.mrf.mxu0
        %v6507 = vadd.f32 %v5767, %v6506
        %v6508 = vpop.f32.mrf.mxu0
        %v6509 = vadd.f32 %v5772, %v6508
        %v6510 = vpop.f32.mrf.mxu0
        %v6511 = vadd.f32 %v5772, %v6510
        %6512 = vmatprep.mubr.bf16.mxu0 %v5991
        %6513 = vmatmul.mubr.bf16.gmra.mxu0 %v5990
        %v6514 = vpop.f32.mrf.mxu0
        %v6515 = vadd.f32 %v5777, %v6514
        %v6516 = vpop.f32.mrf.mxu0
        %v6517 = vadd.f32 %v5777, %v6516
        %v6518 = vpop.f32.mrf.mxu0
        %v6519 = vadd.f32 %v5782, %v6518
        %v6520 = vpop.f32.mrf.mxu0
        %v6521 = vadd.f32 %v5782, %v6520
        %6522 = vmatprep.mubr.bf16.mxu0 %v5993
        %6523 = vmatmul.mubr.bf16.gmra.mxu0 %v5992
        %v6524 = vpop.f32.mrf.mxu0
        %v6525 = vadd.f32 %v5787, %v6524
        %v6526 = vpop.f32.mrf.mxu0
        %v6527 = vadd.f32 %v5787, %v6526
        %v6528 = vpop.f32.mrf.mxu0
        %v6529 = vadd.f32 %v5792, %v6528
        %v6530 = vpop.f32.mrf.mxu0
        %v6531 = vadd.f32 %v5792, %v6530
        %6532 = vmatprep.mubr.bf16.mxu0 %v5995
        %6533 = vmatmul.mubr.bf16.gmra.mxu0 %v5994
        %v6534 = vpop.f32.mrf.mxu0
        %v6535 = vadd.f32 %v5797, %v6534
        %v6536 = vpop.f32.mrf.mxu0
        %v6537 = vadd.f32 %v5797, %v6536
        %v6538 = vpop.f32.mrf.mxu0
        %v6539 = vadd.f32 %v5802, %v6538
        %v6540 = vpop.f32.mrf.mxu0
        %v6541 = vadd.f32 %v5802, %v6540
        %6542 = vmatprep.mubr.bf16.mxu0 %v5997
        %6543 = vmatmul.mubr.bf16.gmra.mxu0 %v5996
        %v6544 = vpop.f32.mrf.mxu0
        %v6545 = vadd.f32 %v5807, %v6544
        %v6546 = vpop.f32.mrf.mxu0
        %v6547 = vadd.f32 %v5807, %v6546
        %v6548 = vpop.f32.mrf.mxu0
        %v6549 = vadd.f32 %v5812, %v6548
        %v6550 = vpop.f32.mrf.mxu0
        %v6551 = vadd.f32 %v5812, %v6550
        %6552 = vmatprep.mubr.bf16.mxu0 %v5999
        %6553 = vmatmul.mubr.bf16.gmra.mxu0 %v5998
        %v6554 = vpop.f32.mrf.mxu0
        %v6555 = vadd.f32 %v5817, %v6554
        %v6556 = vpop.f32.mrf.mxu0
        %v6557 = vadd.f32 %v5817, %v6556
        %v6558 = vpop.f32.mrf.mxu0
        %v6559 = vadd.f32 %v5822, %v6558
        %v6560 = vpop.f32.mrf.mxu0
        %v6561 = vadd.f32 %v5822, %v6560
        %6562 = vmatprep.mubr.bf16.mxu0 %v6001
        %6563 = vmatmul.mubr.bf16.gmra.mxu0 %v6000
        %v6564 = vpop.f32.mrf.mxu0
        %v6565 = vadd.f32 %v5827, %v6564
        %v6566 = vpop.f32.mrf.mxu0
        %v6567 = vadd.f32 %v5827, %v6566
        %v6568 = vpop.f32.mrf.mxu0
        %v6569 = vadd.f32 %v5832, %v6568
        %v6570 = vpop.f32.mrf.mxu0
        %v6571 = vadd.f32 %v5832, %v6570
        %6572 = vmatprep.mubr.bf16.mxu0 %v6003
        %6573 = vmatmul.mubr.bf16.gmra.mxu0 %v6002
        %v6574 = vpop.f32.mrf.mxu0
        %v6575 = vadd.f32 %v5837, %v6574
        %v6576 = vpop.f32.mrf.mxu0
        %v6577 = vadd.f32 %v5837, %v6576
        %v6578 = vpop.f32.mrf.mxu0
        %v6579 = vadd.f32 %v5842, %v6578
        %v6580 = vpop.f32.mrf.mxu0
        %v6581 = vadd.f32 %v5842, %v6580
        %6582 = vmatprep.mubr.bf16.mxu0 %v6005
        %6583 = vmatmul.mubr.bf16.gmra.mxu0 %v6004
        %v6584 = vpop.f32.mrf.mxu0
        %v6585 = vadd.f32 %v5847, %v6584
        %v6586 = vpop.f32.mrf.mxu0
        %v6587 = vadd.f32 %v5847, %v6586
        %v6588 = vpop.f32.mrf.mxu0
        %v6589 = vadd.f32 %v5852, %v6588
        %v6590 = vpop.f32.mrf.mxu0
        %v6591 = vadd.f32 %v5852, %v6590
        %6592 = vmatprep.mubr.bf16.mxu0 %v6007
        %6593 = vmatmul.mubr.bf16.gmra.mxu0 %v6006
        %v6594 = vpop.f32.mrf.mxu0
        %v6595 = vadd.f32 %v5857, %v6594
        %v6596 = vpop.f32.mrf.mxu0
        %v6597 = vadd.f32 %v5857, %v6596
        %v6598 = vpop.f32.mrf.mxu0
        %v6599 = vadd.f32 %v5862, %v6598
        %v6600 = vpop.f32.mrf.mxu0
        %v6601 = vadd.f32 %v5862, %v6600
        %6602 = vmatprep.mubr.bf16.mxu0 %v6009
        %6603 = vmatmul.mubr.bf16.gmra.mxu0 %v6008
        %v6604 = vpop.f32.mrf.mxu0
        %v6605 = vadd.f32 %v5867, %v6604
        %v6606 = vpop.f32.mrf.mxu0
        %v6607 = vadd.f32 %v5867, %v6606
        %v6608 = vpop.f32.mrf.mxu0
        %v6609 = vadd.f32 %v5872, %v6608
        %v6610 = vpop.f32.mrf.mxu0
        %v6611 = vadd.f32 %v5872, %v6610
        %6612 = vmatprep.mubr.bf16.mxu0 %v6011
        %6613 = vmatmul.mubr.bf16.gmra.mxu0 %v6010
        %v6614 = vpop.f32.mrf.mxu0
        %v6615 = vadd.f32 %v5877, %v6614
        %v6616 = vpop.f32.mrf.mxu0
        %v6617 = vadd.f32 %v5877, %v6616
        %v6618 = vpop.f32.mrf.mxu0
        %v6619 = vadd.f32 %v5882, %v6618
        %v6620 = vpop.f32.mrf.mxu0
        %v6621 = vadd.f32 %v5882, %v6620
        %6622 = vdwg.mxu0
        %6623 = vmatprep.subr.bf16.mxu0 %v5595
        %6624 = vmatpush1.bf16.msra.mxu0 %v5594
        %6625 = vmatprep.subr.bf16.mxu0 %v5587
        %6626 = vmatpush1.bf16.msra.mxu0 %v5586
        %6627 = vmatprep.subr.bf16.mxu0 %v5579
        %6628 = vmatpush1.bf16.msra.mxu0 %v5578
        %6629 = vmatprep.subr.bf16.mxu0 %v5571
        %6630 = vmatpush1.bf16.msra.mxu0 %v5570
        %6631 = vmatprep.subr.bf16.mxu0 %v5563
        %6632 = vmatpush1.bf16.msra.mxu0 %v5562
        %6633 = vmatprep.subr.bf16.mxu0 %v5555
        %6634 = vmatpush1.bf16.msra.mxu0 %v5554
        %6635 = vmatprep.subr.bf16.mxu0 %v5547
        %6636 = vmatpush1.bf16.msra.mxu0 %v5546
        %6637 = vmatprep.subr.bf16.mxu0 %v5539
        %6638 = vmatpush1.bf16.msra.mxu0 %v5538
        %6639 = vmatprep.subr.bf16.mxu0 %v5659
        %6640 = vmatpush2.bf16.msra.mxu0 %v5658
        %6641 = vmatprep.subr.bf16.mxu0 %v5651
        %6642 = vmatpush2.bf16.msra.mxu0 %v5650
        %6643 = vmatprep.subr.bf16.mxu0 %v5643
        %6644 = vmatpush2.bf16.msra.mxu0 %v5642
        %6645 = vmatprep.subr.bf16.mxu0 %v5635
        %6646 = vmatpush2.bf16.msra.mxu0 %v5634
        %6647 = vmatprep.subr.bf16.mxu0 %v5627
        %6648 = vmatpush2.bf16.msra.mxu0 %v5626
        %6649 = vmatprep.subr.bf16.mxu0 %v5619
        %6650 = vmatpush2.bf16.msra.mxu0 %v5618
        %6651 = vmatprep.subr.bf16.mxu0 %v5611
        %6652 = vmatpush2.bf16.msra.mxu0 %v5610
        %6653 = vmatprep.subr.bf16.mxu0 %v5603
        %6654 = vmatpush2.bf16.msra.mxu0 %v5602
        %6655 = vmatprep.mubr.bf16.mxu0 %v5981
        %6656 = vmatmul.mubr.bf16.gmra.mxu0 %v5980
        %v6657 = vpop.f32.mrf.mxu0
        %v6658 = vadd.f32 %v5727, %v6657
        %v6659 = vpop.f32.mrf.mxu0
        %v6660 = vadd.f32 %v5727, %v6659
        %v6661 = vpop.f32.mrf.mxu0
        %v6662 = vadd.f32 %v5732, %v6661
        %v6663 = vpop.f32.mrf.mxu0
        %v6664 = vadd.f32 %v5732, %v6663
        %6665 = vmatprep.mubr.bf16.mxu0 %v5983
        %6666 = vmatmul.mubr.bf16.gmra.mxu0 %v5982
        %v6667 = vpop.f32.mrf.mxu0
        %v6668 = vadd.f32 %v5737, %v6667
        %v6669 = vpop.f32.mrf.mxu0
        %v6670 = vadd.f32 %v5737, %v6669
        %v6671 = vpop.f32.mrf.mxu0
        %v6672 = vadd.f32 %v5742, %v6671
        %v6673 = vpop.f32.mrf.mxu0
        %v6674 = vadd.f32 %v5742, %v6673
        %6675 = vmatprep.mubr.bf16.mxu0 %v5985
        %6676 = vmatmul.mubr.bf16.gmra.mxu0 %v5984
        %v6677 = vpop.f32.mrf.mxu0
        %v6678 = vadd.f32 %v5747, %v6677
        %v6679 = vpop.f32.mrf.mxu0
        %v6680 = vadd.f32 %v5747, %v6679
        %v6681 = vpop.f32.mrf.mxu0
        %v6682 = vadd.f32 %v5752, %v6681
        %v6683 = vpop.f32.mrf.mxu0
        %v6684 = vadd.f32 %v5752, %v6683
        %6685 = vmatprep.mubr.bf16.mxu0 %v5987
        %6686 = vmatmul.mubr.bf16.gmra.mxu0 %v5986
        %v6687 = vpop.f32.mrf.mxu0
        %v6688 = vadd.f32 %v5757, %v6687
        %v6689 = vpop.f32.mrf.mxu0
        %v6690 = vadd.f32 %v5757, %v6689
        %v6691 = vpop.f32.mrf.mxu0
        %v6692 = vadd.f32 %v5762, %v6691
        %v6693 = vpop.f32.mrf.mxu0
        %v6694 = vadd.f32 %v5762, %v6693
        %6695 = vmatprep.mubr.bf16.mxu0 %v5989
        %6696 = vmatmul.mubr.bf16.gmra.mxu0 %v5988
        %v6697 = vpop.f32.mrf.mxu0
        %v6698 = vadd.f32 %v5767, %v6697
        %v6699 = vpop.f32.mrf.mxu0
        %v6700 = vadd.f32 %v5767, %v6699
        %v6701 = vpop.f32.mrf.mxu0
        %v6702 = vadd.f32 %v5772, %v6701
        %v6703 = vpop.f32.mrf.mxu0
        %v6704 = vadd.f32 %v5772, %v6703
        %6705 = vmatprep.mubr.bf16.mxu0 %v5991
        %6706 = vmatmul.mubr.bf16.gmra.mxu0 %v5990
        %v6707 = vpop.f32.mrf.mxu0
        %v6708 = vadd.f32 %v5777, %v6707
        %v6709 = vpop.f32.mrf.mxu0
        %v6710 = vadd.f32 %v5777, %v6709
        %v6711 = vpop.f32.mrf.mxu0
        %v6712 = vadd.f32 %v5782, %v6711
        %v6713 = vpop.f32.mrf.mxu0
        %v6714 = vadd.f32 %v5782, %v6713
        %6715 = vmatprep.mubr.bf16.mxu0 %v5993
        %6716 = vmatmul.mubr.bf16.gmra.mxu0 %v5992
        %v6717 = vpop.f32.mrf.mxu0
        %v6718 = vadd.f32 %v5787, %v6717
        %v6719 = vpop.f32.mrf.mxu0
        %v6720 = vadd.f32 %v5787, %v6719
        %v6721 = vpop.f32.mrf.mxu0
        %v6722 = vadd.f32 %v5792, %v6721
        %v6723 = vpop.f32.mrf.mxu0
        %v6724 = vadd.f32 %v5792, %v6723
        %6725 = vmatprep.mubr.bf16.mxu0 %v5995
        %6726 = vmatmul.mubr.bf16.gmra.mxu0 %v5994
        %v6727 = vpop.f32.mrf.mxu0
        %v6728 = vadd.f32 %v5797, %v6727
        %v6729 = vpop.f32.mrf.mxu0
        %v6730 = vadd.f32 %v5797, %v6729
        %v6731 = vpop.f32.mrf.mxu0
        %v6732 = vadd.f32 %v5802, %v6731
        %v6733 = vpop.f32.mrf.mxu0
        %v6734 = vadd.f32 %v5802, %v6733
        %6735 = vmatprep.mubr.bf16.mxu0 %v5997
        %6736 = vmatmul.mubr.bf16.gmra.mxu0 %v5996
        %v6737 = vpop.f32.mrf.mxu0
        %v6738 = vadd.f32 %v5807, %v6737
        %v6739 = vpop.f32.mrf.mxu0
        %v6740 = vadd.f32 %v5807, %v6739
        %v6741 = vpop.f32.mrf.mxu0
        %v6742 = vadd.f32 %v5812, %v6741
        %v6743 = vpop.f32.mrf.mxu0
        %v6744 = vadd.f32 %v5812, %v6743
        %6745 = vmatprep.mubr.bf16.mxu0 %v5999
        %6746 = vmatmul.mubr.bf16.gmra.mxu0 %v5998
        %v6747 = vpop.f32.mrf.mxu0
        %v6748 = vadd.f32 %v5817, %v6747
        %v6749 = vpop.f32.mrf.mxu0
        %v6750 = vadd.f32 %v5817, %v6749
        %v6751 = vpop.f32.mrf.mxu0
        %v6752 = vadd.f32 %v5822, %v6751
        %v6753 = vpop.f32.mrf.mxu0
        %v6754 = vadd.f32 %v5822, %v6753
        %6755 = vmatprep.mubr.bf16.mxu0 %v6001
        %6756 = vmatmul.mubr.bf16.gmra.mxu0 %v6000
        %v6757 = vpop.f32.mrf.mxu0
        %v6758 = vadd.f32 %v5827, %v6757
        %v6759 = vpop.f32.mrf.mxu0
        %v6760 = vadd.f32 %v5827, %v6759
        %v6761 = vpop.f32.mrf.mxu0
        %v6762 = vadd.f32 %v5832, %v6761
        %v6763 = vpop.f32.mrf.mxu0
        %v6764 = vadd.f32 %v5832, %v6763
        %6765 = vmatprep.mubr.bf16.mxu0 %v6003
        %6766 = vmatmul.mubr.bf16.gmra.mxu0 %v6002
        %v6767 = vpop.f32.mrf.mxu0
        %v6768 = vadd.f32 %v5837, %v6767
        %v6769 = vpop.f32.mrf.mxu0
        %v6770 = vadd.f32 %v5837, %v6769
        %v6771 = vpop.f32.mrf.mxu0
        %v6772 = vadd.f32 %v5842, %v6771
        %v6773 = vpop.f32.mrf.mxu0
        %v6774 = vadd.f32 %v5842, %v6773
        %6775 = vmatprep.mubr.bf16.mxu0 %v6005
        %6776 = vmatmul.mubr.bf16.gmra.mxu0 %v6004
        %v6777 = vpop.f32.mrf.mxu0
        %v6778 = vadd.f32 %v5847, %v6777
        %v6779 = vpop.f32.mrf.mxu0
        %v6780 = vadd.f32 %v5847, %v6779
        %v6781 = vpop.f32.mrf.mxu0
        %v6782 = vadd.f32 %v5852, %v6781
        %v6783 = vpop.f32.mrf.mxu0
        %v6784 = vadd.f32 %v5852, %v6783
        %6785 = vmatprep.mubr.bf16.mxu0 %v6007
        %6786 = vmatmul.mubr.bf16.gmra.mxu0 %v6006
        %v6787 = vpop.f32.mrf.mxu0
        %v6788 = vadd.f32 %v5857, %v6787
        %v6789 = vpop.f32.mrf.mxu0
        %v6790 = vadd.f32 %v5857, %v6789
        %v6791 = vpop.f32.mrf.mxu0
        %v6792 = vadd.f32 %v5862, %v6791
        %v6793 = vpop.f32.mrf.mxu0
        %v6794 = vadd.f32 %v5862, %v6793
        %6795 = vmatprep.mubr.bf16.mxu0 %v6009
        %6796 = vmatmul.mubr.bf16.gmra.mxu0 %v6008
        %v6797 = vpop.f32.mrf.mxu0
        %v6798 = vadd.f32 %v5867, %v6797
        %v6799 = vpop.f32.mrf.mxu0
        %v6800 = vadd.f32 %v5867, %v6799
        %v6801 = vpop.f32.mrf.mxu0
        %v6802 = vadd.f32 %v5872, %v6801
        %v6803 = vpop.f32.mrf.mxu0
        %v6804 = vadd.f32 %v5872, %v6803
        %6805 = vmatprep.mubr.bf16.mxu0 %v6011
        %6806 = vmatmul.mubr.bf16.gmra.mxu0 %v6010
        %v6807 = vpop.f32.mrf.mxu0
        %v6808 = vadd.f32 %v5877, %v6807
        %v6809 = vpop.f32.mrf.mxu0
        %v6810 = vadd.f32 %v5877, %v6809
        %v6811 = vpop.f32.mrf.mxu0
        %v6812 = vadd.f32 %v5882, %v6811
        %v6813 = vpop.f32.mrf.mxu0
        %v6814 = vadd.f32 %v5882, %v6813
        %6815 = vdwg.mxu0
        %v6816 = vmax.f32 %v6079, 0.0
        %v6817 = vmax.f32 %v6081, 0.0
        %v6818 = vmax.f32 %v6272, 0.0
        %v6819 = vmax.f32 %v6274, 0.0
        %v6820 = vmax.f32 %v6465, 0.0
        %v6821 = vmax.f32 %v6467, 0.0
        %v6822 = vmax.f32 %v6658, 0.0
        %v6823 = vmax.f32 %v6660, 0.0
        %v6824 = vmax.f32 %v6083, 0.0
        %v6825 = vmax.f32 %v6085, 0.0
        %v6826 = vmax.f32 %v6276, 0.0
        %v6827 = vmax.f32 %v6278, 0.0
        %v6828 = vmax.f32 %v6469, 0.0
        %v6829 = vmax.f32 %v6471, 0.0
        %v6830 = vmax.f32 %v6662, 0.0
        %v6831 = vmax.f32 %v6664, 0.0
        %v6832 = vmax.f32 %v6089, 0.0
        %v6833 = vmax.f32 %v6091, 0.0
        %v6834 = vmax.f32 %v6282, 0.0
        %v6835 = vmax.f32 %v6284, 0.0
        %v6836 = vmax.f32 %v6475, 0.0
        %v6837 = vmax.f32 %v6477, 0.0
        %v6838 = vmax.f32 %v6668, 0.0
        %v6839 = vmax.f32 %v6670, 0.0
        %v6840 = vmax.f32 %v6093, 0.0
        %v6841 = vmax.f32 %v6095, 0.0
        %v6842 = vmax.f32 %v6286, 0.0
        %v6843 = vmax.f32 %v6288, 0.0
        %v6844 = vmax.f32 %v6479, 0.0
        %v6845 = vmax.f32 %v6481, 0.0
        %v6846 = vmax.f32 %v6672, 0.0
        %v6847 = vmax.f32 %v6674, 0.0
        %v6848 = vmax.f32 %v6099, 0.0
        %v6849 = vmax.f32 %v6101, 0.0
        %v6850 = vmax.f32 %v6292, 0.0
        %v6851 = vmax.f32 %v6294, 0.0
        %v6852 = vmax.f32 %v6485, 0.0
        %v6853 = vmax.f32 %v6487, 0.0
        %v6854 = vmax.f32 %v6678, 0.0
        %v6855 = vmax.f32 %v6680, 0.0
        %v6856 = vmax.f32 %v6103, 0.0
        %v6857 = vmax.f32 %v6105, 0.0
        %v6858 = vmax.f32 %v6296, 0.0
        %v6859 = vmax.f32 %v6298, 0.0
        %v6860 = vmax.f32 %v6489, 0.0
        %v6861 = vmax.f32 %v6491, 0.0
        %v6862 = vmax.f32 %v6682, 0.0
        %v6863 = vmax.f32 %v6684, 0.0
        %v6864 = vmax.f32 %v6109, 0.0
        %v6865 = vmax.f32 %v6111, 0.0
        %v6866 = vmax.f32 %v6302, 0.0
        %v6867 = vmax.f32 %v6304, 0.0
        %v6868 = vmax.f32 %v6495, 0.0
        %v6869 = vmax.f32 %v6497, 0.0
        %v6870 = vmax.f32 %v6688, 0.0
        %v6871 = vmax.f32 %v6690, 0.0
        %v6872 = vmax.f32 %v6113, 0.0
        %v6873 = vmax.f32 %v6115, 0.0
        %v6874 = vmax.f32 %v6306, 0.0
        %v6875 = vmax.f32 %v6308, 0.0
        %v6876 = vmax.f32 %v6499, 0.0
        %v6877 = vmax.f32 %v6501, 0.0
        %v6878 = vmax.f32 %v6692, 0.0
        %v6879 = vmax.f32 %v6694, 0.0
        %v6880 = vmax.f32 %v6119, 0.0
        %v6881 = vmax.f32 %v6121, 0.0
        %v6882 = vmax.f32 %v6312, 0.0
        %v6883 = vmax.f32 %v6314, 0.0
        %v6884 = vmax.f32 %v6505, 0.0
        %v6885 = vmax.f32 %v6507, 0.0
        %v6886 = vmax.f32 %v6698, 0.0
        %v6887 = vmax.f32 %v6700, 0.0
        %v6888 = vmax.f32 %v6123, 0.0
        %v6889 = vmax.f32 %v6125, 0.0
        %v6890 = vmax.f32 %v6316, 0.0
        %v6891 = vmax.f32 %v6318, 0.0
        %v6892 = vmax.f32 %v6509, 0.0
        %v6893 = vmax.f32 %v6511, 0.0
        %v6894 = vmax.f32 %v6702, 0.0
        %v6895 = vmax.f32 %v6704, 0.0
        %v6896 = vmax.f32 %v6129, 0.0
        %v6897 = vmax.f32 %v6131, 0.0
        %v6898 = vmax.f32 %v6322, 0.0
        %v6899 = vmax.f32 %v6324, 0.0
        %v6900 = vmax.f32 %v6515, 0.0
        %v6901 = vmax.f32 %v6517, 0.0
        %v6902 = vmax.f32 %v6708, 0.0
        %v6903 = vmax.f32 %v6710, 0.0
        %v6904 = vmax.f32 %v6133, 0.0
        %v6905 = vmax.f32 %v6135, 0.0
        %v6906 = vmax.f32 %v6326, 0.0
        %v6907 = vmax.f32 %v6328, 0.0
        %v6908 = vmax.f32 %v6519, 0.0
        %v6909 = vmax.f32 %v6521, 0.0
        %v6910 = vmax.f32 %v6712, 0.0
        %v6911 = vmax.f32 %v6714, 0.0
        %v6912 = vmax.f32 %v6139, 0.0
        %v6913 = vmax.f32 %v6141, 0.0
        %v6914 = vmax.f32 %v6332, 0.0
        %v6915 = vmax.f32 %v6334, 0.0
        %v6916 = vmax.f32 %v6525, 0.0
        %v6917 = vmax.f32 %v6527, 0.0
        %v6918 = vmax.f32 %v6718, 0.0
        %v6919 = vmax.f32 %v6720, 0.0
        %v6920 = vmax.f32 %v6143, 0.0
        %v6921 = vmax.f32 %v6145, 0.0
        %v6922 = vmax.f32 %v6336, 0.0
        %v6923 = vmax.f32 %v6338, 0.0
        %v6924 = vmax.f32 %v6529, 0.0
        %v6925 = vmax.f32 %v6531, 0.0
        %v6926 = vmax.f32 %v6722, 0.0
        %v6927 = vmax.f32 %v6724, 0.0
        %v6928 = vmax.f32 %v6149, 0.0
        %v6929 = vmax.f32 %v6151, 0.0
        %v6930 = vmax.f32 %v6342, 0.0
        %v6931 = vmax.f32 %v6344, 0.0
        %v6932 = vmax.f32 %v6535, 0.0
        %v6933 = vmax.f32 %v6537, 0.0
        %v6934 = vmax.f32 %v6728, 0.0
        %v6935 = vmax.f32 %v6730, 0.0
        %v6936 = vmax.f32 %v6153, 0.0
        %v6937 = vmax.f32 %v6155, 0.0
        %v6938 = vmax.f32 %v6346, 0.0
        %v6939 = vmax.f32 %v6348, 0.0
        %v6940 = vmax.f32 %v6539, 0.0
        %v6941 = vmax.f32 %v6541, 0.0
        %v6942 = vmax.f32 %v6732, 0.0
        %v6943 = vmax.f32 %v6734, 0.0
        %v6944 = vmax.f32 %v6159, 0.0
        %v6945 = vmax.f32 %v6161, 0.0
        %v6946 = vmax.f32 %v6352, 0.0
        %v6947 = vmax.f32 %v6354, 0.0
        %v6948 = vmax.f32 %v6545, 0.0
        %v6949 = vmax.f32 %v6547, 0.0
        %v6950 = vmax.f32 %v6738, 0.0
        %v6951 = vmax.f32 %v6740, 0.0
        %v6952 = vmax.f32 %v6163, 0.0
        %v6953 = vmax.f32 %v6165, 0.0
        %v6954 = vmax.f32 %v6356, 0.0
        %v6955 = vmax.f32 %v6358, 0.0
        %v6956 = vmax.f32 %v6549, 0.0
        %v6957 = vmax.f32 %v6551, 0.0
        %v6958 = vmax.f32 %v6742, 0.0
        %v6959 = vmax.f32 %v6744, 0.0
        %v6960 = vmax.f32 %v6169, 0.0
        %v6961 = vmax.f32 %v6171, 0.0
        %v6962 = vmax.f32 %v6362, 0.0
        %v6963 = vmax.f32 %v6364, 0.0
        %v6964 = vmax.f32 %v6555, 0.0
        %v6965 = vmax.f32 %v6557, 0.0
        %v6966 = vmax.f32 %v6748, 0.0
        %v6967 = vmax.f32 %v6750, 0.0
        %v6968 = vmax.f32 %v6173, 0.0
        %v6969 = vmax.f32 %v6175, 0.0
        %v6970 = vmax.f32 %v6366, 0.0
        %v6971 = vmax.f32 %v6368, 0.0
        %v6972 = vmax.f32 %v6559, 0.0
        %v6973 = vmax.f32 %v6561, 0.0
        %v6974 = vmax.f32 %v6752, 0.0
        %v6975 = vmax.f32 %v6754, 0.0
        %v6976 = vmax.f32 %v6179, 0.0
        %v6977 = vmax.f32 %v6181, 0.0
        %v6978 = vmax.f32 %v6372, 0.0
        %v6979 = vmax.f32 %v6374, 0.0
        %v6980 = vmax.f32 %v6565, 0.0
        %v6981 = vmax.f32 %v6567, 0.0
        %v6982 = vmax.f32 %v6758, 0.0
        %v6983 = vmax.f32 %v6760, 0.0
        %v6984 = vmax.f32 %v6183, 0.0
        %v6985 = vmax.f32 %v6185, 0.0
        %v6986 = vmax.f32 %v6376, 0.0
        %v6987 = vmax.f32 %v6378, 0.0
        %v6988 = vmax.f32 %v6569, 0.0
        %v6989 = vmax.f32 %v6571, 0.0
        %v6990 = vmax.f32 %v6762, 0.0
        %v6991 = vmax.f32 %v6764, 0.0
        %v6992 = vmax.f32 %v6189, 0.0
        %v6993 = vmax.f32 %v6191, 0.0
        %v6994 = vmax.f32 %v6382, 0.0
        %v6995 = vmax.f32 %v6384, 0.0
        %v6996 = vmax.f32 %v6575, 0.0
        %v6997 = vmax.f32 %v6577, 0.0
        %v6998 = vmax.f32 %v6768, 0.0
        %v6999 = vmax.f32 %v6770, 0.0
        %v7000 = vmax.f32 %v6193, 0.0
        %v7001 = vmax.f32 %v6195, 0.0
        %v7002 = vmax.f32 %v6386, 0.0
        %v7003 = vmax.f32 %v6388, 0.0
        %v7004 = vmax.f32 %v6579, 0.0
        %v7005 = vmax.f32 %v6581, 0.0
        %v7006 = vmax.f32 %v6772, 0.0
        %v7007 = vmax.f32 %v6774, 0.0
        %v7008 = vmax.f32 %v6199, 0.0
        %v7009 = vmax.f32 %v6201, 0.0
        %v7010 = vmax.f32 %v6392, 0.0
        %v7011 = vmax.f32 %v6394, 0.0
        %v7012 = vmax.f32 %v6585, 0.0
        %v7013 = vmax.f32 %v6587, 0.0
        %v7014 = vmax.f32 %v6778, 0.0
        %v7015 = vmax.f32 %v6780, 0.0
        %v7016 = vmax.f32 %v6203, 0.0
        %v7017 = vmax.f32 %v6205, 0.0
        %v7018 = vmax.f32 %v6396, 0.0
        %v7019 = vmax.f32 %v6398, 0.0
        %v7020 = vmax.f32 %v6589, 0.0
        %v7021 = vmax.f32 %v6591, 0.0
        %v7022 = vmax.f32 %v6782, 0.0
        %v7023 = vmax.f32 %v6784, 0.0
        %v7024 = vmax.f32 %v6209, 0.0
        %v7025 = vmax.f32 %v6211, 0.0
        %v7026 = vmax.f32 %v6402, 0.0
        %v7027 = vmax.f32 %v6404, 0.0
        %v7028 = vmax.f32 %v6595, 0.0
        %v7029 = vmax.f32 %v6597, 0.0
        %v7030 = vmax.f32 %v6788, 0.0
        %v7031 = vmax.f32 %v6790, 0.0
        %v7032 = vmax.f32 %v6213, 0.0
        %v7033 = vmax.f32 %v6215, 0.0
        %v7034 = vmax.f32 %v6406, 0.0
        %v7035 = vmax.f32 %v6408, 0.0
        %v7036 = vmax.f32 %v6599, 0.0
        %v7037 = vmax.f32 %v6601, 0.0
        %v7038 = vmax.f32 %v6792, 0.0
        %v7039 = vmax.f32 %v6794, 0.0
        %v7040 = vmax.f32 %v6219, 0.0
        %v7041 = vmax.f32 %v6221, 0.0
        %v7042 = vmax.f32 %v6412, 0.0
        %v7043 = vmax.f32 %v6414, 0.0
        %v7044 = vmax.f32 %v6605, 0.0
        %v7045 = vmax.f32 %v6607, 0.0
        %v7046 = vmax.f32 %v6798, 0.0
        %v7047 = vmax.f32 %v6800, 0.0
        %v7048 = vmax.f32 %v6223, 0.0
        %v7049 = vmax.f32 %v6225, 0.0
        %v7050 = vmax.f32 %v6416, 0.0
        %v7051 = vmax.f32 %v6418, 0.0
        %v7052 = vmax.f32 %v6609, 0.0
        %v7053 = vmax.f32 %v6611, 0.0
        %v7054 = vmax.f32 %v6802, 0.0
        %v7055 = vmax.f32 %v6804, 0.0
        %v7056 = vmax.f32 %v6229, 0.0
        %v7057 = vmax.f32 %v6231, 0.0
        %v7058 = vmax.f32 %v6422, 0.0
        %v7059 = vmax.f32 %v6424, 0.0
        %v7060 = vmax.f32 %v6615, 0.0
        %v7061 = vmax.f32 %v6617, 0.0
        %v7062 = vmax.f32 %v6808, 0.0
        %v7063 = vmax.f32 %v6810, 0.0
        %v7064 = vmax.f32 %v6233, 0.0
        %v7065 = vmax.f32 %v6235, 0.0
        %v7066 = vmax.f32 %v6426, 0.0
        %v7067 = vmax.f32 %v6428, 0.0
        %v7068 = vmax.f32 %v6619, 0.0
        %v7069 = vmax.f32 %v6621, 0.0
        %v7070 = vmax.f32 %v6812, 0.0
        %v7071 = vmax.f32 %v6814, 0.0
        %v7072 = vpack.c.bf16 %v6824, %v6816
        %v7073 = vpack.c.bf16 %v6825, %v6817
        %v7074 = vpack.c.bf16 %v6826, %v6818
        %v7075 = vpack.c.bf16 %v6827, %v6819
        %v7076 = vpack.c.bf16 %v6828, %v6820
        %v7077 = vpack.c.bf16 %v6829, %v6821
        %v7078 = vpack.c.bf16 %v6830, %v6822
        %v7079 = vpack.c.bf16 %v6831, %v6823
        %v7080 = vpack.c.bf16 %v6840, %v6832
        %v7081 = vpack.c.bf16 %v6841, %v6833
        %v7082 = vpack.c.bf16 %v6842, %v6834
        %v7083 = vpack.c.bf16 %v6843, %v6835
        %v7084 = vpack.c.bf16 %v6844, %v6836
        %v7085 = vpack.c.bf16 %v6845, %v6837
        %v7086 = vpack.c.bf16 %v6846, %v6838
        %v7087 = vpack.c.bf16 %v6847, %v6839
        %v7088 = vpack.c.bf16 %v6856, %v6848
        %v7089 = vpack.c.bf16 %v6857, %v6849
        %v7090 = vpack.c.bf16 %v6858, %v6850
        %v7091 = vpack.c.bf16 %v6859, %v6851
        %v7092 = vpack.c.bf16 %v6860, %v6852
        %v7093 = vpack.c.bf16 %v6861, %v6853
        %v7094 = vpack.c.bf16 %v6862, %v6854
        %v7095 = vpack.c.bf16 %v6863, %v6855
        %v7096 = vpack.c.bf16 %v6872, %v6864
        %v7097 = vpack.c.bf16 %v6873, %v6865
        %v7098 = vpack.c.bf16 %v6874, %v6866
        %v7099 = vpack.c.bf16 %v6875, %v6867
        %v7100 = vpack.c.bf16 %v6876, %v6868
        %v7101 = vpack.c.bf16 %v6877, %v6869
        %v7102 = vpack.c.bf16 %v6878, %v6870
        %v7103 = vpack.c.bf16 %v6879, %v6871
        %v7104 = vpack.c.bf16 %v6888, %v6880
        %v7105 = vpack.c.bf16 %v6889, %v6881
        %v7106 = vpack.c.bf16 %v6890, %v6882
        %v7107 = vpack.c.bf16 %v6891, %v6883
        %v7108 = vpack.c.bf16 %v6892, %v6884
        %v7109 = vpack.c.bf16 %v6893, %v6885
        %v7110 = vpack.c.bf16 %v6894, %v6886
        %v7111 = vpack.c.bf16 %v6895, %v6887
        %v7112 = vpack.c.bf16 %v6904, %v6896
        %v7113 = vpack.c.bf16 %v6905, %v6897
        %v7114 = vpack.c.bf16 %v6906, %v6898
        %v7115 = vpack.c.bf16 %v6907, %v6899
        %v7116 = vpack.c.bf16 %v6908, %v6900
        %v7117 = vpack.c.bf16 %v6909, %v6901
        %v7118 = vpack.c.bf16 %v6910, %v6902
        %v7119 = vpack.c.bf16 %v6911, %v6903
        %v7120 = vpack.c.bf16 %v6920, %v6912
        %v7121 = vpack.c.bf16 %v6921, %v6913
        %v7122 = vpack.c.bf16 %v6922, %v6914
        %v7123 = vpack.c.bf16 %v6923, %v6915
        %v7124 = vpack.c.bf16 %v6924, %v6916
        %v7125 = vpack.c.bf16 %v6925, %v6917
        %v7126 = vpack.c.bf16 %v6926, %v6918
        %v7127 = vpack.c.bf16 %v6927, %v6919
        %v7128 = vpack.c.bf16 %v6936, %v6928
        %v7129 = vpack.c.bf16 %v6937, %v6929
        %v7130 = vpack.c.bf16 %v6938, %v6930
        %v7131 = vpack.c.bf16 %v6939, %v6931
        %v7132 = vpack.c.bf16 %v6940, %v6932
        %v7133 = vpack.c.bf16 %v6941, %v6933
        %v7134 = vpack.c.bf16 %v6942, %v6934
        %v7135 = vpack.c.bf16 %v6943, %v6935
        %v7136 = vpack.c.bf16 %v6952, %v6944
        %v7137 = vpack.c.bf16 %v6953, %v6945
        %v7138 = vpack.c.bf16 %v6954, %v6946
        %v7139 = vpack.c.bf16 %v6955, %v6947
        %v7140 = vpack.c.bf16 %v6956, %v6948
        %v7141 = vpack.c.bf16 %v6957, %v6949
        %v7142 = vpack.c.bf16 %v6958, %v6950
        %v7143 = vpack.c.bf16 %v6959, %v6951
        %v7144 = vpack.c.bf16 %v6968, %v6960
        %v7145 = vpack.c.bf16 %v6969, %v6961
        %v7146 = vpack.c.bf16 %v6970, %v6962
        %v7147 = vpack.c.bf16 %v6971, %v6963
        %v7148 = vpack.c.bf16 %v6972, %v6964
        %v7149 = vpack.c.bf16 %v6973, %v6965
        %v7150 = vpack.c.bf16 %v6974, %v6966
        %v7151 = vpack.c.bf16 %v6975, %v6967
        %v7152 = vpack.c.bf16 %v6984, %v6976
        %v7153 = vpack.c.bf16 %v6985, %v6977
        %v7154 = vpack.c.bf16 %v6986, %v6978
        %v7155 = vpack.c.bf16 %v6987, %v6979
        %v7156 = vpack.c.bf16 %v6988, %v6980
        %v7157 = vpack.c.bf16 %v6989, %v6981
        %v7158 = vpack.c.bf16 %v6990, %v6982
        %v7159 = vpack.c.bf16 %v6991, %v6983
        %v7160 = vpack.c.bf16 %v7000, %v6992
        %v7161 = vpack.c.bf16 %v7001, %v6993
        %v7162 = vpack.c.bf16 %v7002, %v6994
        %v7163 = vpack.c.bf16 %v7003, %v6995
        %v7164 = vpack.c.bf16 %v7004, %v6996
        %v7165 = vpack.c.bf16 %v7005, %v6997
        %v7166 = vpack.c.bf16 %v7006, %v6998
        %v7167 = vpack.c.bf16 %v7007, %v6999
        %v7168 = vpack.c.bf16 %v7016, %v7008
        %v7169 = vpack.c.bf16 %v7017, %v7009
        %v7170 = vpack.c.bf16 %v7018, %v7010
        %v7171 = vpack.c.bf16 %v7019, %v7011
        %v7172 = vpack.c.bf16 %v7020, %v7012
        %v7173 = vpack.c.bf16 %v7021, %v7013
        %v7174 = vpack.c.bf16 %v7022, %v7014
        %v7175 = vpack.c.bf16 %v7023, %v7015
        %v7176 = vpack.c.bf16 %v7032, %v7024
        %v7177 = vpack.c.bf16 %v7033, %v7025
        %v7178 = vpack.c.bf16 %v7034, %v7026
        %v7179 = vpack.c.bf16 %v7035, %v7027
        %v7180 = vpack.c.bf16 %v7036, %v7028
        %v7181 = vpack.c.bf16 %v7037, %v7029
        %v7182 = vpack.c.bf16 %v7038, %v7030
        %v7183 = vpack.c.bf16 %v7039, %v7031
        %v7184 = vpack.c.bf16 %v7048, %v7040
        %v7185 = vpack.c.bf16 %v7049, %v7041
        %v7186 = vpack.c.bf16 %v7050, %v7042
        %v7187 = vpack.c.bf16 %v7051, %v7043
        %v7188 = vpack.c.bf16 %v7052, %v7044
        %v7189 = vpack.c.bf16 %v7053, %v7045
        %v7190 = vpack.c.bf16 %v7054, %v7046
        %v7191 = vpack.c.bf16 %v7055, %v7047
        %v7192 = vpack.c.bf16 %v7064, %v7056
        %v7193 = vpack.c.bf16 %v7065, %v7057
        %v7194 = vpack.c.bf16 %v7066, %v7058
        %v7195 = vpack.c.bf16 %v7067, %v7059
        %v7196 = vpack.c.bf16 %v7068, %v7060
        %v7197 = vpack.c.bf16 %v7069, %v7061
        %v7198 = vpack.c.bf16 %v7070, %v7062
        %v7199 = vpack.c.bf16 %v7071, %v7063
        %v7200 = vld [vmem:[%s8] sm:$0xff]
        %v7201 = vld [vmem:[%s8 + $0x8] sm:$0xff]
        %v7202 = vld [vmem:[%s8 + $0x10] sm:$0xff]
        %v7203 = vld [vmem:[%s8 + $0x18] sm:$0xff]
        %v7204 = vld [vmem:[%s8 + $0x20] sm:$0xff]
        %v7205 = vld [vmem:[%s8 + $0x28] sm:$0xff]
        %v7206 = vld [vmem:[%s8 + $0x30] sm:$0xff]
        %v7207 = vld [vmem:[%s8 + $0x38] sm:$0xff]
        %v7208 = vld [vmem:[%s8 + $0x40] sm:$0xff]
        %v7209 = vld [vmem:[%s8 + $0x48] sm:$0xff]
        %v7210 = vld [vmem:[%s8 + $0x50] sm:$0xff]
        %v7211 = vld [vmem:[%s8 + $0x58] sm:$0xff]
        %v7212 = vld [vmem:[%s8 + $0x60] sm:$0xff]
        %v7213 = vld [vmem:[%s8 + $0x68] sm:$0xff]
        %v7214 = vld [vmem:[%s8 + $0x70] sm:$0xff]
        %v7215 = vld [vmem:[%s8 + $0x78] sm:$0xff]
        %v7216 = vld [vmem:[%s8 + $0x80] sm:$0xff]
        %v7217 = vld [vmem:[%s8 + $0x88] sm:$0xff]
        %v7218 = vld [vmem:[%s8 + $0x90] sm:$0xff]
        %v7219 = vld [vmem:[%s8 + $0x98] sm:$0xff]
        %v7220 = vld [vmem:[%s8 + $0xa0] sm:$0xff]
        %v7221 = vld [vmem:[%s8 + $0xa8] sm:$0xff]
        %v7222 = vld [vmem:[%s8 + $0xb0] sm:$0xff]
        %v7223 = vld [vmem:[%s8 + $0xb8] sm:$0xff]
        %v7224 = vld [vmem:[%s8 + $0xc0] sm:$0xff]
        %v7225 = vld [vmem:[%s8 + $0xc8] sm:$0xff]
        %v7226 = vld [vmem:[%s8 + $0xd0] sm:$0xff]
        %v7227 = vld [vmem:[%s8 + $0xd8] sm:$0xff]
        %v7228 = vld [vmem:[%s8 + $0xe0] sm:$0xff]
        %v7229 = vld [vmem:[%s8 + $0xe8] sm:$0xff]
        %v7230 = vld [vmem:[%s8 + $0xf0] sm:$0xff]
        %v7231 = vld [vmem:[%s8 + $0xf8] sm:$0xff]
        %v7232 = vld [vmem:[%s9] sm:$0xff]
        %v7233 = vld [vmem:[%s9 + $0x8] sm:$0xff]
        %v7234 = vld [vmem:[%s9 + $0x10] sm:$0xff]
        %v7235 = vld [vmem:[%s9 + $0x18] sm:$0xff]
        %v7236 = vld [vmem:[%s9 + $0x20] sm:$0xff]
        %v7237 = vld [vmem:[%s9 + $0x28] sm:$0xff]
        %v7238 = vld [vmem:[%s9 + $0x30] sm:$0xff]
        %v7239 = vld [vmem:[%s9 + $0x38] sm:$0xff]
        %v7240 = vld [vmem:[%s9 + $0x40] sm:$0xff]
        %v7241 = vld [vmem:[%s9 + $0x48] sm:$0xff]
        %v7242 = vld [vmem:[%s9 + $0x50] sm:$0xff]
        %v7243 = vld [vmem:[%s9 + $0x58] sm:$0xff]
        %v7244 = vld [vmem:[%s9 + $0x60] sm:$0xff]
        %v7245 = vld [vmem:[%s9 + $0x68] sm:$0xff]
        %v7246 = vld [vmem:[%s9 + $0x70] sm:$0xff]
        %v7247 = vld [vmem:[%s9 + $0x78] sm:$0xff]
        %v7248 = vld [vmem:[%s9 + $0x80] sm:$0xff]
        %v7249 = vld [vmem:[%s9 + $0x88] sm:$0xff]
        %v7250 = vld [vmem:[%s9 + $0x90] sm:$0xff]
        %v7251 = vld [vmem:[%s9 + $0x98] sm:$0xff]
        %v7252 = vld [vmem:[%s9 + $0xa0] sm:$0xff]
        %v7253 = vld [vmem:[%s9 + $0xa8] sm:$0xff]
        %v7254 = vld [vmem:[%s9 + $0xb0] sm:$0xff]
        %v7255 = vld [vmem:[%s9 + $0xb8] sm:$0xff]
        %v7256 = vld [vmem:[%s9 + $0xc0] sm:$0xff]
        %v7257 = vld [vmem:[%s9 + $0xc8] sm:$0xff]
        %v7258 = vld [vmem:[%s9 + $0xd0] sm:$0xff]
        %v7259 = vld [vmem:[%s9 + $0xd8] sm:$0xff]
        %v7260 = vld [vmem:[%s9 + $0xe0] sm:$0xff]
        %v7261 = vld [vmem:[%s9 + $0xe8] sm:$0xff]
        %v7262 = vld [vmem:[%s9 + $0xf0] sm:$0xff]
        %v7263 = vld [vmem:[%s9 + $0xf8] sm:$0xff]
        %7265 = vset.pattern.permute.xlu0 0
        %7266 = vperm.xlu0 %7265, %v7232
        %v7267 = vpop.permute.xlu0 %7266
        %7270 = vset.pattern.permute.xlu0 0
        %7271 = vperm.xlu0 %7270, %v7233
        %v7272 = vpop.permute.xlu0 %7271
        %7275 = vset.pattern.permute.xlu0 0
        %7276 = vperm.xlu0 %7275, %v7234
        %v7277 = vpop.permute.xlu0 %7276
        %7280 = vset.pattern.permute.xlu0 0
        %7281 = vperm.xlu0 %7280, %v7235
        %v7282 = vpop.permute.xlu0 %7281
        %7285 = vset.pattern.permute.xlu0 0
        %7286 = vperm.xlu0 %7285, %v7236
        %v7287 = vpop.permute.xlu0 %7286
        %7290 = vset.pattern.permute.xlu0 0
        %7291 = vperm.xlu0 %7290, %v7237
        %v7292 = vpop.permute.xlu0 %7291
        %7295 = vset.pattern.permute.xlu0 0
        %7296 = vperm.xlu0 %7295, %v7238
        %v7297 = vpop.permute.xlu0 %7296
        %7300 = vset.pattern.permute.xlu0 0
        %7301 = vperm.xlu0 %7300, %v7239
        %v7302 = vpop.permute.xlu0 %7301
        %7305 = vset.pattern.permute.xlu0 0
        %7306 = vperm.xlu0 %7305, %v7240
        %v7307 = vpop.permute.xlu0 %7306
        %7310 = vset.pattern.permute.xlu0 0
        %7311 = vperm.xlu0 %7310, %v7241
        %v7312 = vpop.permute.xlu0 %7311
        %7315 = vset.pattern.permute.xlu0 0
        %7316 = vperm.xlu0 %7315, %v7242
        %v7317 = vpop.permute.xlu0 %7316
        %7320 = vset.pattern.permute.xlu0 0
        %7321 = vperm.xlu0 %7320, %v7243
        %v7322 = vpop.permute.xlu0 %7321
        %7325 = vset.pattern.permute.xlu0 0
        %7326 = vperm.xlu0 %7325, %v7244
        %v7327 = vpop.permute.xlu0 %7326
        %7330 = vset.pattern.permute.xlu0 0
        %7331 = vperm.xlu0 %7330, %v7245
        %v7332 = vpop.permute.xlu0 %7331
        %7335 = vset.pattern.permute.xlu0 0
        %7336 = vperm.xlu0 %7335, %v7246
        %v7337 = vpop.permute.xlu0 %7336
        %7340 = vset.pattern.permute.xlu0 0
        %7341 = vperm.xlu0 %7340, %v7247
        %v7342 = vpop.permute.xlu0 %7341
        %7345 = vset.pattern.permute.xlu0 0
        %7346 = vperm.xlu0 %7345, %v7248
        %v7347 = vpop.permute.xlu0 %7346
        %7350 = vset.pattern.permute.xlu0 0
        %7351 = vperm.xlu0 %7350, %v7249
        %v7352 = vpop.permute.xlu0 %7351
        %7355 = vset.pattern.permute.xlu0 0
        %7356 = vperm.xlu0 %7355, %v7250
        %v7357 = vpop.permute.xlu0 %7356
        %7360 = vset.pattern.permute.xlu0 0
        %7361 = vperm.xlu0 %7360, %v7251
        %v7362 = vpop.permute.xlu0 %7361
        %7365 = vset.pattern.permute.xlu0 0
        %7366 = vperm.xlu0 %7365, %v7252
        %v7367 = vpop.permute.xlu0 %7366
        %7370 = vset.pattern.permute.xlu0 0
        %7371 = vperm.xlu0 %7370, %v7253
        %v7372 = vpop.permute.xlu0 %7371
        %7375 = vset.pattern.permute.xlu0 0
        %7376 = vperm.xlu0 %7375, %v7254
        %v7377 = vpop.permute.xlu0 %7376
        %7380 = vset.pattern.permute.xlu0 0
        %7381 = vperm.xlu0 %7380, %v7255
        %v7382 = vpop.permute.xlu0 %7381
        %7385 = vset.pattern.permute.xlu0 0
        %7386 = vperm.xlu0 %7385, %v7256
        %v7387 = vpop.permute.xlu0 %7386
        %7390 = vset.pattern.permute.xlu0 0
        %7391 = vperm.xlu0 %7390, %v7257
        %v7392 = vpop.permute.xlu0 %7391
        %7395 = vset.pattern.permute.xlu0 0
        %7396 = vperm.xlu0 %7395, %v7258
        %v7397 = vpop.permute.xlu0 %7396
        %7400 = vset.pattern.permute.xlu0 0
        %7401 = vperm.xlu0 %7400, %v7259
        %v7402 = vpop.permute.xlu0 %7401
        %7405 = vset.pattern.permute.xlu0 0
        %7406 = vperm.xlu0 %7405, %v7260
        %v7407 = vpop.permute.xlu0 %7406
        %7410 = vset.pattern.permute.xlu0 0
        %7411 = vperm.xlu0 %7410, %v7261
        %v7412 = vpop.permute.xlu0 %7411
        %7415 = vset.pattern.permute.xlu0 0
        %7416 = vperm.xlu0 %7415, %v7262
        %v7417 = vpop.permute.xlu0 %7416
        %7420 = vset.pattern.permute.xlu0 0
        %7421 = vperm.xlu0 %7420, %v7263
        %v7422 = vpop.permute.xlu0 %7421
        %v7456 = vunpack.c.l.b16 %v7200
        %v7457 = vunpack.c.h.b16 %v7200
        %v7458 = vunpack.c.l.b16 %v7201
        %v7459 = vunpack.c.h.b16 %v7201
        %v7460 = vunpack.c.l.b16 %v7202
        %v7461 = vunpack.c.h.b16 %v7202
        %v7462 = vunpack.c.l.b16 %v7203
        %v7463 = vunpack.c.h.b16 %v7203
        %v7464 = vunpack.c.l.b16 %v7204
        %v7465 = vunpack.c.h.b16 %v7204
        %v7466 = vunpack.c.l.b16 %v7205
        %v7467 = vunpack.c.h.b16 %v7205
        %v7468 = vunpack.c.l.b16 %v7206
        %v7469 = vunpack.c.h.b16 %v7206
        %v7470 = vunpack.c.l.b16 %v7207
        %v7471 = vunpack.c.h.b16 %v7207
        %v7472 = vunpack.c.l.b16 %v7208
        %v7473 = vunpack.c.h.b16 %v7208
        %v7474 = vunpack.c.l.b16 %v7209
        %v7475 = vunpack.c.h.b16 %v7209
        %v7476 = vunpack.c.l.b16 %v7210
        %v7477 = vunpack.c.h.b16 %v7210
        %v7478 = vunpack.c.l.b16 %v7211
        %v7479 = vunpack.c.h.b16 %v7211
        %v7480 = vunpack.c.l.b16 %v7212
        %v7481 = vunpack.c.h.b16 %v7212
        %v7482 = vunpack.c.l.b16 %v7213
        %v7483 = vunpack.c.h.b16 %v7213
        %v7484 = vunpack.c.l.b16 %v7214
        %v7485 = vunpack.c.h.b16 %v7214
        %v7486 = vunpack.c.l.b16 %v7215
        %v7487 = vunpack.c.h.b16 %v7215
        %v7488 = vunpack.c.l.b16 %v7216
        %v7489 = vunpack.c.h.b16 %v7216
        %v7490 = vunpack.c.l.b16 %v7217
        %v7491 = vunpack.c.h.b16 %v7217
        %v7492 = vunpack.c.l.b16 %v7218
        %v7493 = vunpack.c.h.b16 %v7218
        %v7494 = vunpack.c.l.b16 %v7219
        %v7495 = vunpack.c.h.b16 %v7219
        %v7496 = vunpack.c.l.b16 %v7220
        %v7497 = vunpack.c.h.b16 %v7220
        %v7498 = vunpack.c.l.b16 %v7221
        %v7499 = vunpack.c.h.b16 %v7221
        %v7500 = vunpack.c.l.b16 %v7222
        %v7501 = vunpack.c.h.b16 %v7222
        %v7502 = vunpack.c.l.b16 %v7223
        %v7503 = vunpack.c.h.b16 %v7223
        %v7504 = vunpack.c.l.b16 %v7224
        %v7505 = vunpack.c.h.b16 %v7224
        %v7506 = vunpack.c.l.b16 %v7225
        %v7507 = vunpack.c.h.b16 %v7225
        %v7508 = vunpack.c.l.b16 %v7226
        %v7509 = vunpack.c.h.b16 %v7226
        %v7510 = vunpack.c.l.b16 %v7227
        %v7511 = vunpack.c.h.b16 %v7227
        %v7512 = vunpack.c.l.b16 %v7228
        %v7513 = vunpack.c.h.b16 %v7228
        %v7514 = vunpack.c.l.b16 %v7229
        %v7515 = vunpack.c.h.b16 %v7229
        %v7516 = vunpack.c.l.b16 %v7230
        %v7517 = vunpack.c.h.b16 %v7230
        %v7518 = vunpack.c.l.b16 %v7231
        %v7519 = vunpack.c.h.b16 %v7231
        %v7520 = vpack.c.b16 %v7458, %v7456
        %v7521 = vpack.c.b16 %v7459, %v7457
        %v7522 = vpack.c.b16 %v7462, %v7460
        %v7523 = vpack.c.b16 %v7463, %v7461
        %v7524 = vpack.c.b16 %v7466, %v7464
        %v7525 = vpack.c.b16 %v7467, %v7465
        %v7526 = vpack.c.b16 %v7470, %v7468
        %v7527 = vpack.c.b16 %v7471, %v7469
        %v7528 = vpack.c.b16 %v7474, %v7472
        %v7529 = vpack.c.b16 %v7475, %v7473
        %v7530 = vpack.c.b16 %v7478, %v7476
        %v7531 = vpack.c.b16 %v7479, %v7477
        %v7532 = vpack.c.b16 %v7482, %v7480
        %v7533 = vpack.c.b16 %v7483, %v7481
        %v7534 = vpack.c.b16 %v7486, %v7484
        %v7535 = vpack.c.b16 %v7487, %v7485
        %v7536 = vpack.c.b16 %v7490, %v7488
        %v7537 = vpack.c.b16 %v7491, %v7489
        %v7538 = vpack.c.b16 %v7494, %v7492
        %v7539 = vpack.c.b16 %v7495, %v7493
        %v7540 = vpack.c.b16 %v7498, %v7496
        %v7541 = vpack.c.b16 %v7499, %v7497
        %v7542 = vpack.c.b16 %v7502, %v7500
        %v7543 = vpack.c.b16 %v7503, %v7501
        %v7544 = vpack.c.b16 %v7506, %v7504
        %v7545 = vpack.c.b16 %v7507, %v7505
        %v7546 = vpack.c.b16 %v7510, %v7508
        %v7547 = vpack.c.b16 %v7511, %v7509
        %v7548 = vpack.c.b16 %v7514, %v7512
        %v7549 = vpack.c.b16 %v7515, %v7513
        %v7550 = vpack.c.b16 %v7518, %v7516
        %v7551 = vpack.c.b16 %v7519, %v7517
        %7584 = vmatprep.subr.bf16.mxu0 %v7129
        %7585 = vmatpush1.bf16.msra.mxu0 %v7128
        %7586 = vmatprep.subr.bf16.mxu0 %v7121
        %7587 = vmatpush1.bf16.msra.mxu0 %v7120
        %7588 = vmatprep.subr.bf16.mxu0 %v7113
        %7589 = vmatpush1.bf16.msra.mxu0 %v7112
        %7590 = vmatprep.subr.bf16.mxu0 %v7105
        %7591 = vmatpush1.bf16.msra.mxu0 %v7104
        %7592 = vmatprep.subr.bf16.mxu0 %v7097
        %7593 = vmatpush1.bf16.msra.mxu0 %v7096
        %7594 = vmatprep.subr.bf16.mxu0 %v7089
        %7595 = vmatpush1.bf16.msra.mxu0 %v7088
        %7596 = vmatprep.subr.bf16.mxu0 %v7081
        %7597 = vmatpush1.bf16.msra.mxu0 %v7080
        %7598 = vmatprep.subr.bf16.mxu0 %v7073
        %7599 = vmatpush1.bf16.msra.mxu0 %v7072
        %7600 = vmatprep.subr.bf16.mxu0 %v7193
        %7601 = vmatpush2.bf16.msra.mxu0 %v7192
        %7602 = vmatprep.subr.bf16.mxu0 %v7185
        %7603 = vmatpush2.bf16.msra.mxu0 %v7184
        %7604 = vmatprep.subr.bf16.mxu0 %v7177
        %7605 = vmatpush2.bf16.msra.mxu0 %v7176
        %7606 = vmatprep.subr.bf16.mxu0 %v7169
        %7607 = vmatpush2.bf16.msra.mxu0 %v7168
        %7608 = vmatprep.subr.bf16.mxu0 %v7161
        %7609 = vmatpush2.bf16.msra.mxu0 %v7160
        %7610 = vmatprep.subr.bf16.mxu0 %v7153
        %7611 = vmatpush2.bf16.msra.mxu0 %v7152
        %7612 = vmatprep.subr.bf16.mxu0 %v7145
        %7613 = vmatpush2.bf16.msra.mxu0 %v7144
        %7614 = vmatprep.subr.bf16.mxu0 %v7137
        %7615 = vmatpush2.bf16.msra.mxu0 %v7136
        %7616 = vmatprep.mubr.bf16.mxu0 %v7521
        %7617 = vmatmul.mubr.bf16.gmra.mxu0 %v7520
        %v7618 = vpop.f32.mrf.mxu0
        %v7619 = vadd.f32 %v7267, %v7618
        %v7620 = vpop.f32.mrf.mxu0
        %v7621 = vadd.f32 %v7267, %v7620
        %v7622 = vpop.f32.mrf.mxu0
        %v7623 = vadd.f32 %v7272, %v7622
        %v7624 = vpop.f32.mrf.mxu0
        %v7625 = vadd.f32 %v7272, %v7624
        %7626 = vmatprep.mubr.bf16.mxu0 %v7523
        %7627 = vmatmul.mubr.bf16.gmra.mxu0 %v7522
        %v7628 = vpop.f32.mrf.mxu0
        %v7629 = vadd.f32 %v7277, %v7628
        %v7630 = vpop.f32.mrf.mxu0
        %v7631 = vadd.f32 %v7277, %v7630
        %v7632 = vpop.f32.mrf.mxu0
        %v7633 = vadd.f32 %v7282, %v7632
        %v7634 = vpop.f32.mrf.mxu0
        %v7635 = vadd.f32 %v7282, %v7634
        %7636 = vmatprep.mubr.bf16.mxu0 %v7525
        %7637 = vmatmul.mubr.bf16.gmra.mxu0 %v7524
        %v7638 = vpop.f32.mrf.mxu0
        %v7639 = vadd.f32 %v7287, %v7638
        %v7640 = vpop.f32.mrf.mxu0
        %v7641 = vadd.f32 %v7287, %v7640
        %v7642 = vpop.f32.mrf.mxu0
        %v7643 = vadd.f32 %v7292, %v7642
        %v7644 = vpop.f32.mrf.mxu0
        %v7645 = vadd.f32 %v7292, %v7644
        %7646 = vmatprep.mubr.bf16.mxu0 %v7527
        %7647 = vmatmul.mubr.bf16.gmra.mxu0 %v7526
        %v7648 = vpop.f32.mrf.mxu0
        %v7649 = vadd.f32 %v7297, %v7648
        %v7650 = vpop.f32.mrf.mxu0
        %v7651 = vadd.f32 %v7297, %v7650
        %v7652 = vpop.f32.mrf.mxu0
        %v7653 = vadd.f32 %v7302, %v7652
        %v7654 = vpop.f32.mrf.mxu0
        %v7655 = vadd.f32 %v7302, %v7654
        %7656 = vmatprep.mubr.bf16.mxu0 %v7529
        %7657 = vmatmul.mubr.bf16.gmra.mxu0 %v7528
        %v7658 = vpop.f32.mrf.mxu0
        %v7659 = vadd.f32 %v7307, %v7658
        %v7660 = vpop.f32.mrf.mxu0
        %v7661 = vadd.f32 %v7307, %v7660
        %v7662 = vpop.f32.mrf.mxu0
        %v7663 = vadd.f32 %v7312, %v7662
        %v7664 = vpop.f32.mrf.mxu0
        %v7665 = vadd.f32 %v7312, %v7664
        %7666 = vmatprep.mubr.bf16.mxu0 %v7531
        %7667 = vmatmul.mubr.bf16.gmra.mxu0 %v7530
        %v7668 = vpop.f32.mrf.mxu0
        %v7669 = vadd.f32 %v7317, %v7668
        %v7670 = vpop.f32.mrf.mxu0
        %v7671 = vadd.f32 %v7317, %v7670
        %v7672 = vpop.f32.mrf.mxu0
        %v7673 = vadd.f32 %v7322, %v7672
        %v7674 = vpop.f32.mrf.mxu0
        %v7675 = vadd.f32 %v7322, %v7674
        %7676 = vmatprep.mubr.bf16.mxu0 %v7533
        %7677 = vmatmul.mubr.bf16.gmra.mxu0 %v7532
        %v7678 = vpop.f32.mrf.mxu0
        %v7679 = vadd.f32 %v7327, %v7678
        %v7680 = vpop.f32.mrf.mxu0
        %v7681 = vadd.f32 %v7327, %v7680
        %v7682 = vpop.f32.mrf.mxu0
        %v7683 = vadd.f32 %v7332, %v7682
        %v7684 = vpop.f32.mrf.mxu0
        %v7685 = vadd.f32 %v7332, %v7684
        %7686 = vmatprep.mubr.bf16.mxu0 %v7535
        %7687 = vmatmul.mubr.bf16.gmra.mxu0 %v7534
        %v7688 = vpop.f32.mrf.mxu0
        %v7689 = vadd.f32 %v7337, %v7688
        %v7690 = vpop.f32.mrf.mxu0
        %v7691 = vadd.f32 %v7337, %v7690
        %v7692 = vpop.f32.mrf.mxu0
        %v7693 = vadd.f32 %v7342, %v7692
        %v7694 = vpop.f32.mrf.mxu0
        %v7695 = vadd.f32 %v7342, %v7694
        %7696 = vmatprep.mubr.bf16.mxu0 %v7537
        %7697 = vmatmul.mubr.bf16.gmra.mxu0 %v7536
        %v7698 = vpop.f32.mrf.mxu0
        %v7699 = vadd.f32 %v7347, %v7698
        %v7700 = vpop.f32.mrf.mxu0
        %v7701 = vadd.f32 %v7347, %v7700
        %v7702 = vpop.f32.mrf.mxu0
        %v7703 = vadd.f32 %v7352, %v7702
        %v7704 = vpop.f32.mrf.mxu0
        %v7705 = vadd.f32 %v7352, %v7704
        %7706 = vmatprep.mubr.bf16.mxu0 %v7539
        %7707 = vmatmul.mubr.bf16.gmra.mxu0 %v7538
        %v7708 = vpop.f32.mrf.mxu0
        %v7709 = vadd.f32 %v7357, %v7708
        %v7710 = vpop.f32.mrf.mxu0
        %v7711 = vadd.f32 %v7357, %v7710
        %v7712 = vpop.f32.mrf.mxu0
        %v7713 = vadd.f32 %v7362, %v7712
        %v7714 = vpop.f32.mrf.mxu0
        %v7715 = vadd.f32 %v7362, %v7714
        %7716 = vmatprep.mubr.bf16.mxu0 %v7541
        %7717 = vmatmul.mubr.bf16.gmra.mxu0 %v7540
        %v7718 = vpop.f32.mrf.mxu0
        %v7719 = vadd.f32 %v7367, %v7718
        %v7720 = vpop.f32.mrf.mxu0
        %v7721 = vadd.f32 %v7367, %v7720
        %v7722 = vpop.f32.mrf.mxu0
        %v7723 = vadd.f32 %v7372, %v7722
        %v7724 = vpop.f32.mrf.mxu0
        %v7725 = vadd.f32 %v7372, %v7724
        %7726 = vmatprep.mubr.bf16.mxu0 %v7543
        %7727 = vmatmul.mubr.bf16.gmra.mxu0 %v7542
        %v7728 = vpop.f32.mrf.mxu0
        %v7729 = vadd.f32 %v7377, %v7728
        %v7730 = vpop.f32.mrf.mxu0
        %v7731 = vadd.f32 %v7377, %v7730
        %v7732 = vpop.f32.mrf.mxu0
        %v7733 = vadd.f32 %v7382, %v7732
        %v7734 = vpop.f32.mrf.mxu0
        %v7735 = vadd.f32 %v7382, %v7734
        %7736 = vmatprep.mubr.bf16.mxu0 %v7545
        %7737 = vmatmul.mubr.bf16.gmra.mxu0 %v7544
        %v7738 = vpop.f32.mrf.mxu0
        %v7739 = vadd.f32 %v7387, %v7738
        %v7740 = vpop.f32.mrf.mxu0
        %v7741 = vadd.f32 %v7387, %v7740
        %v7742 = vpop.f32.mrf.mxu0
        %v7743 = vadd.f32 %v7392, %v7742
        %v7744 = vpop.f32.mrf.mxu0
        %v7745 = vadd.f32 %v7392, %v7744
        %7746 = vmatprep.mubr.bf16.mxu0 %v7547
        %7747 = vmatmul.mubr.bf16.gmra.mxu0 %v7546
        %v7748 = vpop.f32.mrf.mxu0
        %v7749 = vadd.f32 %v7397, %v7748
        %v7750 = vpop.f32.mrf.mxu0
        %v7751 = vadd.f32 %v7397, %v7750
        %v7752 = vpop.f32.mrf.mxu0
        %v7753 = vadd.f32 %v7402, %v7752
        %v7754 = vpop.f32.mrf.mxu0
        %v7755 = vadd.f32 %v7402, %v7754
        %7756 = vmatprep.mubr.bf16.mxu0 %v7549
        %7757 = vmatmul.mubr.bf16.gmra.mxu0 %v7548
        %v7758 = vpop.f32.mrf.mxu0
        %v7759 = vadd.f32 %v7407, %v7758
        %v7760 = vpop.f32.mrf.mxu0
        %v7761 = vadd.f32 %v7407, %v7760
        %v7762 = vpop.f32.mrf.mxu0
        %v7763 = vadd.f32 %v7412, %v7762
        %v7764 = vpop.f32.mrf.mxu0
        %v7765 = vadd.f32 %v7412, %v7764
        %7766 = vmatprep.mubr.bf16.mxu0 %v7551
        %7767 = vmatmul.mubr.bf16.gmra.mxu0 %v7550
        %v7768 = vpop.f32.mrf.mxu0
        %v7769 = vadd.f32 %v7417, %v7768
        %v7770 = vpop.f32.mrf.mxu0
        %v7771 = vadd.f32 %v7417, %v7770
        %v7772 = vpop.f32.mrf.mxu0
        %v7773 = vadd.f32 %v7422, %v7772
        %v7774 = vpop.f32.mrf.mxu0
        %v7775 = vadd.f32 %v7422, %v7774
        %7776 = vdwg.mxu0
        %7777 = vmatprep.subr.bf16.mxu0 %v7131
        %7778 = vmatpush1.bf16.msra.mxu0 %v7130
        %7779 = vmatprep.subr.bf16.mxu0 %v7123
        %7780 = vmatpush1.bf16.msra.mxu0 %v7122
        %7781 = vmatprep.subr.bf16.mxu0 %v7115
        %7782 = vmatpush1.bf16.msra.mxu0 %v7114
        %7783 = vmatprep.subr.bf16.mxu0 %v7107
        %7784 = vmatpush1.bf16.msra.mxu0 %v7106
        %7785 = vmatprep.subr.bf16.mxu0 %v7099
        %7786 = vmatpush1.bf16.msra.mxu0 %v7098
        %7787 = vmatprep.subr.bf16.mxu0 %v7091
        %7788 = vmatpush1.bf16.msra.mxu0 %v7090
        %7789 = vmatprep.subr.bf16.mxu0 %v7083
        %7790 = vmatpush1.bf16.msra.mxu0 %v7082
        %7791 = vmatprep.subr.bf16.mxu0 %v7075
        %7792 = vmatpush1.bf16.msra.mxu0 %v7074
        %7793 = vmatprep.subr.bf16.mxu0 %v7195
        %7794 = vmatpush2.bf16.msra.mxu0 %v7194
        %7795 = vmatprep.subr.bf16.mxu0 %v7187
        %7796 = vmatpush2.bf16.msra.mxu0 %v7186
        %7797 = vmatprep.subr.bf16.mxu0 %v7179
        %7798 = vmatpush2.bf16.msra.mxu0 %v7178
        %7799 = vmatprep.subr.bf16.mxu0 %v7171
        %7800 = vmatpush2.bf16.msra.mxu0 %v7170
        %7801 = vmatprep.subr.bf16.mxu0 %v7163
        %7802 = vmatpush2.bf16.msra.mxu0 %v7162
        %7803 = vmatprep.subr.bf16.mxu0 %v7155
        %7804 = vmatpush2.bf16.msra.mxu0 %v7154
        %7805 = vmatprep.subr.bf16.mxu0 %v7147
        %7806 = vmatpush2.bf16.msra.mxu0 %v7146
        %7807 = vmatprep.subr.bf16.mxu0 %v7139
        %7808 = vmatpush2.bf16.msra.mxu0 %v7138
        %7809 = vmatprep.mubr.bf16.mxu0 %v7521
        %7810 = vmatmul.mubr.bf16.gmra.mxu0 %v7520
        %v7811 = vpop.f32.mrf.mxu0
        %v7812 = vadd.f32 %v7267, %v7811
        %v7813 = vpop.f32.mrf.mxu0
        %v7814 = vadd.f32 %v7267, %v7813
        %v7815 = vpop.f32.mrf.mxu0
        %v7816 = vadd.f32 %v7272, %v7815
        %v7817 = vpop.f32.mrf.mxu0
        %v7818 = vadd.f32 %v7272, %v7817
        %7819 = vmatprep.mubr.bf16.mxu0 %v7523
        %7820 = vmatmul.mubr.bf16.gmra.mxu0 %v7522
        %v7821 = vpop.f32.mrf.mxu0
        %v7822 = vadd.f32 %v7277, %v7821
        %v7823 = vpop.f32.mrf.mxu0
        %v7824 = vadd.f32 %v7277, %v7823
        %v7825 = vpop.f32.mrf.mxu0
        %v7826 = vadd.f32 %v7282, %v7825
        %v7827 = vpop.f32.mrf.mxu0
        %v7828 = vadd.f32 %v7282, %v7827
        %7829 = vmatprep.mubr.bf16.mxu0 %v7525
        %7830 = vmatmul.mubr.bf16.gmra.mxu0 %v7524
        %v7831 = vpop.f32.mrf.mxu0
        %v7832 = vadd.f32 %v7287, %v7831
        %v7833 = vpop.f32.mrf.mxu0
        %v7834 = vadd.f32 %v7287, %v7833
        %v7835 = vpop.f32.mrf.mxu0
        %v7836 = vadd.f32 %v7292, %v7835
        %v7837 = vpop.f32.mrf.mxu0
        %v7838 = vadd.f32 %v7292, %v7837
        %7839 = vmatprep.mubr.bf16.mxu0 %v7527
        %7840 = vmatmul.mubr.bf16.gmra.mxu0 %v7526
        %v7841 = vpop.f32.mrf.mxu0
        %v7842 = vadd.f32 %v7297, %v7841
        %v7843 = vpop.f32.mrf.mxu0
        %v7844 = vadd.f32 %v7297, %v7843
        %v7845 = vpop.f32.mrf.mxu0
        %v7846 = vadd.f32 %v7302, %v7845
        %v7847 = vpop.f32.mrf.mxu0
        %v7848 = vadd.f32 %v7302, %v7847
        %7849 = vmatprep.mubr.bf16.mxu0 %v7529
        %7850 = vmatmul.mubr.bf16.gmra.mxu0 %v7528
        %v7851 = vpop.f32.mrf.mxu0
        %v7852 = vadd.f32 %v7307, %v7851
        %v7853 = vpop.f32.mrf.mxu0
        %v7854 = vadd.f32 %v7307, %v7853
        %v7855 = vpop.f32.mrf.mxu0
        %v7856 = vadd.f32 %v7312, %v7855
        %v7857 = vpop.f32.mrf.mxu0
        %v7858 = vadd.f32 %v7312, %v7857
        %7859 = vmatprep.mubr.bf16.mxu0 %v7531
        %7860 = vmatmul.mubr.bf16.gmra.mxu0 %v7530
        %v7861 = vpop.f32.mrf.mxu0
        %v7862 = vadd.f32 %v7317, %v7861
        %v7863 = vpop.f32.mrf.mxu0
        %v7864 = vadd.f32 %v7317, %v7863
        %v7865 = vpop.f32.mrf.mxu0
        %v7866 = vadd.f32 %v7322, %v7865
        %v7867 = vpop.f32.mrf.mxu0
        %v7868 = vadd.f32 %v7322, %v7867
        %7869 = vmatprep.mubr.bf16.mxu0 %v7533
        %7870 = vmatmul.mubr.bf16.gmra.mxu0 %v7532
        %v7871 = vpop.f32.mrf.mxu0
        %v7872 = vadd.f32 %v7327, %v7871
        %v7873 = vpop.f32.mrf.mxu0
        %v7874 = vadd.f32 %v7327, %v7873
        %v7875 = vpop.f32.mrf.mxu0
        %v7876 = vadd.f32 %v7332, %v7875
        %v7877 = vpop.f32.mrf.mxu0
        %v7878 = vadd.f32 %v7332, %v7877
        %7879 = vmatprep.mubr.bf16.mxu0 %v7535
        %7880 = vmatmul.mubr.bf16.gmra.mxu0 %v7534
        %v7881 = vpop.f32.mrf.mxu0
        %v7882 = vadd.f32 %v7337, %v7881
        %v7883 = vpop.f32.mrf.mxu0
        %v7884 = vadd.f32 %v7337, %v7883
        %v7885 = vpop.f32.mrf.mxu0
        %v7886 = vadd.f32 %v7342, %v7885
        %v7887 = vpop.f32.mrf.mxu0
        %v7888 = vadd.f32 %v7342, %v7887
        %7889 = vmatprep.mubr.bf16.mxu0 %v7537
        %7890 = vmatmul.mubr.bf16.gmra.mxu0 %v7536
        %v7891 = vpop.f32.mrf.mxu0
        %v7892 = vadd.f32 %v7347, %v7891
        %v7893 = vpop.f32.mrf.mxu0
        %v7894 = vadd.f32 %v7347, %v7893
        %v7895 = vpop.f32.mrf.mxu0
        %v7896 = vadd.f32 %v7352, %v7895
        %v7897 = vpop.f32.mrf.mxu0
        %v7898 = vadd.f32 %v7352, %v7897
        %7899 = vmatprep.mubr.bf16.mxu0 %v7539
        %7900 = vmatmul.mubr.bf16.gmra.mxu0 %v7538
        %v7901 = vpop.f32.mrf.mxu0
        %v7902 = vadd.f32 %v7357, %v7901
        %v7903 = vpop.f32.mrf.mxu0
        %v7904 = vadd.f32 %v7357, %v7903
        %v7905 = vpop.f32.mrf.mxu0
        %v7906 = vadd.f32 %v7362, %v7905
        %v7907 = vpop.f32.mrf.mxu0
        %v7908 = vadd.f32 %v7362, %v7907
        %7909 = vmatprep.mubr.bf16.mxu0 %v7541
        %7910 = vmatmul.mubr.bf16.gmra.mxu0 %v7540
        %v7911 = vpop.f32.mrf.mxu0
        %v7912 = vadd.f32 %v7367, %v7911
        %v7913 = vpop.f32.mrf.mxu0
        %v7914 = vadd.f32 %v7367, %v7913
        %v7915 = vpop.f32.mrf.mxu0
        %v7916 = vadd.f32 %v7372, %v7915
        %v7917 = vpop.f32.mrf.mxu0
        %v7918 = vadd.f32 %v7372, %v7917
        %7919 = vmatprep.mubr.bf16.mxu0 %v7543
        %7920 = vmatmul.mubr.bf16.gmra.mxu0 %v7542
        %v7921 = vpop.f32.mrf.mxu0
        %v7922 = vadd.f32 %v7377, %v7921
        %v7923 = vpop.f32.mrf.mxu0
        %v7924 = vadd.f32 %v7377, %v7923
        %v7925 = vpop.f32.mrf.mxu0
        %v7926 = vadd.f32 %v7382, %v7925
        %v7927 = vpop.f32.mrf.mxu0
        %v7928 = vadd.f32 %v7382, %v7927
        %7929 = vmatprep.mubr.bf16.mxu0 %v7545
        %7930 = vmatmul.mubr.bf16.gmra.mxu0 %v7544
        %v7931 = vpop.f32.mrf.mxu0
        %v7932 = vadd.f32 %v7387, %v7931
        %v7933 = vpop.f32.mrf.mxu0
        %v7934 = vadd.f32 %v7387, %v7933
        %v7935 = vpop.f32.mrf.mxu0
        %v7936 = vadd.f32 %v7392, %v7935
        %v7937 = vpop.f32.mrf.mxu0
        %v7938 = vadd.f32 %v7392, %v7937
        %7939 = vmatprep.mubr.bf16.mxu0 %v7547
        %7940 = vmatmul.mubr.bf16.gmra.mxu0 %v7546
        %v7941 = vpop.f32.mrf.mxu0
        %v7942 = vadd.f32 %v7397, %v7941
        %v7943 = vpop.f32.mrf.mxu0
        %v7944 = vadd.f32 %v7397, %v7943
        %v7945 = vpop.f32.mrf.mxu0
        %v7946 = vadd.f32 %v7402, %v7945
        %v7947 = vpop.f32.mrf.mxu0
        %v7948 = vadd.f32 %v7402, %v7947
        %7949 = vmatprep.mubr.bf16.mxu0 %v7549
        %7950 = vmatmul.mubr.bf16.gmra.mxu0 %v7548
        %v7951 = vpop.f32.mrf.mxu0
        %v7952 = vadd.f32 %v7407, %v7951
        %v7953 = vpop.f32.mrf.mxu0
        %v7954 = vadd.f32 %v7407, %v7953
        %v7955 = vpop.f32.mrf.mxu0
        %v7956 = vadd.f32 %v7412, %v7955
        %v7957 = vpop.f32.mrf.mxu0
        %v7958 = vadd.f32 %v7412, %v7957
        %7959 = vmatprep.mubr.bf16.mxu0 %v7551
        %7960 = vmatmul.mubr.bf16.gmra.mxu0 %v7550
        %v7961 = vpop.f32.mrf.mxu0
        %v7962 = vadd.f32 %v7417, %v7961
        %v7963 = vpop.f32.mrf.mxu0
        %v7964 = vadd.f32 %v7417, %v7963
        %v7965 = vpop.f32.mrf.mxu0
        %v7966 = vadd.f32 %v7422, %v7965
        %v7967 = vpop.f32.mrf.mxu0
        %v7968 = vadd.f32 %v7422, %v7967
        %7969 = vdwg.mxu0
        %7970 = vmatprep.subr.bf16.mxu0 %v7133
        %7971 = vmatpush1.bf16.msra.mxu0 %v7132
        %7972 = vmatprep.subr.bf16.mxu0 %v7125
        %7973 = vmatpush1.bf16.msra.mxu0 %v7124
        %7974 = vmatprep.subr.bf16.mxu0 %v7117
        %7975 = vmatpush1.bf16.msra.mxu0 %v7116
        %7976 = vmatprep.subr.bf16.mxu0 %v7109
        %7977 = vmatpush1.bf16.msra.mxu0 %v7108
        %7978 = vmatprep.subr.bf16.mxu0 %v7101
        %7979 = vmatpush1.bf16.msra.mxu0 %v7100
        %7980 = vmatprep.subr.bf16.mxu0 %v7093
        %7981 = vmatpush1.bf16.msra.mxu0 %v7092
        %7982 = vmatprep.subr.bf16.mxu0 %v7085
        %7983 = vmatpush1.bf16.msra.mxu0 %v7084
        %7984 = vmatprep.subr.bf16.mxu0 %v7077
        %7985 = vmatpush1.bf16.msra.mxu0 %v7076
        %7986 = vmatprep.subr.bf16.mxu0 %v7197
        %7987 = vmatpush2.bf16.msra.mxu0 %v7196
        %7988 = vmatprep.subr.bf16.mxu0 %v7189
        %7989 = vmatpush2.bf16.msra.mxu0 %v7188
        %7990 = vmatprep.subr.bf16.mxu0 %v7181
        %7991 = vmatpush2.bf16.msra.mxu0 %v7180
        %7992 = vmatprep.subr.bf16.mxu0 %v7173
        %7993 = vmatpush2.bf16.msra.mxu0 %v7172
        %7994 = vmatprep.subr.bf16.mxu0 %v7165
        %7995 = vmatpush2.bf16.msra.mxu0 %v7164
        %7996 = vmatprep.subr.bf16.mxu0 %v7157
        %7997 = vmatpush2.bf16.msra.mxu0 %v7156
        %7998 = vmatprep.subr.bf16.mxu0 %v7149
        %7999 = vmatpush2.bf16.msra.mxu0 %v7148
        %8000 = vmatprep.subr.bf16.mxu0 %v7141
        %8001 = vmatpush2.bf16.msra.mxu0 %v7140
        %8002 = vmatprep.mubr.bf16.mxu0 %v7521
        %8003 = vmatmul.mubr.bf16.gmra.mxu0 %v7520
        %v8004 = vpop.f32.mrf.mxu0
        %v8005 = vadd.f32 %v7267, %v8004
        %v8006 = vpop.f32.mrf.mxu0
        %v8007 = vadd.f32 %v7267, %v8006
        %v8008 = vpop.f32.mrf.mxu0
        %v8009 = vadd.f32 %v7272, %v8008
        %v8010 = vpop.f32.mrf.mxu0
        %v8011 = vadd.f32 %v7272, %v8010
        %8012 = vmatprep.mubr.bf16.mxu0 %v7523
        %8013 = vmatmul.mubr.bf16.gmra.mxu0 %v7522
        %v8014 = vpop.f32.mrf.mxu0
        %v8015 = vadd.f32 %v7277, %v8014
        %v8016 = vpop.f32.mrf.mxu0
        %v8017 = vadd.f32 %v7277, %v8016
        %v8018 = vpop.f32.mrf.mxu0
        %v8019 = vadd.f32 %v7282, %v8018
        %v8020 = vpop.f32.mrf.mxu0
        %v8021 = vadd.f32 %v7282, %v8020
        %8022 = vmatprep.mubr.bf16.mxu0 %v7525
        %8023 = vmatmul.mubr.bf16.gmra.mxu0 %v7524
        %v8024 = vpop.f32.mrf.mxu0
        %v8025 = vadd.f32 %v7287, %v8024
        %v8026 = vpop.f32.mrf.mxu0
        %v8027 = vadd.f32 %v7287, %v8026
        %v8028 = vpop.f32.mrf.mxu0
        %v8029 = vadd.f32 %v7292, %v8028
        %v8030 = vpop.f32.mrf.mxu0
        %v8031 = vadd.f32 %v7292, %v8030
        %8032 = vmatprep.mubr.bf16.mxu0 %v7527
        %8033 = vmatmul.mubr.bf16.gmra.mxu0 %v7526
        %v8034 = vpop.f32.mrf.mxu0
        %v8035 = vadd.f32 %v7297, %v8034
        %v8036 = vpop.f32.mrf.mxu0
        %v8037 = vadd.f32 %v7297, %v8036
        %v8038 = vpop.f32.mrf.mxu0
        %v8039 = vadd.f32 %v7302, %v8038
        %v8040 = vpop.f32.mrf.mxu0
        %v8041 = vadd.f32 %v7302, %v8040
        %8042 = vmatprep.mubr.bf16.mxu0 %v7529
        %8043 = vmatmul.mubr.bf16.gmra.mxu0 %v7528
        %v8044 = vpop.f32.mrf.mxu0
        %v8045 = vadd.f32 %v7307, %v8044
        %v8046 = vpop.f32.mrf.mxu0
        %v8047 = vadd.f32 %v7307, %v8046
        %v8048 = vpop.f32.mrf.mxu0
        %v8049 = vadd.f32 %v7312, %v8048
        %v8050 = vpop.f32.mrf.mxu0
        %v8051 = vadd.f32 %v7312, %v8050
        %8052 = vmatprep.mubr.bf16.mxu0 %v7531
        %8053 = vmatmul.mubr.bf16.gmra.mxu0 %v7530
        %v8054 = vpop.f32.mrf.mxu0
        %v8055 = vadd.f32 %v7317, %v8054
        %v8056 = vpop.f32.mrf.mxu0
        %v8057 = vadd.f32 %v7317, %v8056
        %v8058 = vpop.f32.mrf.mxu0
        %v8059 = vadd.f32 %v7322, %v8058
        %v8060 = vpop.f32.mrf.mxu0
        %v8061 = vadd.f32 %v7322, %v8060
        %8062 = vmatprep.mubr.bf16.mxu0 %v7533
        %8063 = vmatmul.mubr.bf16.gmra.mxu0 %v7532
        %v8064 = vpop.f32.mrf.mxu0
        %v8065 = vadd.f32 %v7327, %v8064
        %v8066 = vpop.f32.mrf.mxu0
        %v8067 = vadd.f32 %v7327, %v8066
        %v8068 = vpop.f32.mrf.mxu0
        %v8069 = vadd.f32 %v7332, %v8068
        %v8070 = vpop.f32.mrf.mxu0
        %v8071 = vadd.f32 %v7332, %v8070
        %8072 = vmatprep.mubr.bf16.mxu0 %v7535
        %8073 = vmatmul.mubr.bf16.gmra.mxu0 %v7534
        %v8074 = vpop.f32.mrf.mxu0
        %v8075 = vadd.f32 %v7337, %v8074
        %v8076 = vpop.f32.mrf.mxu0
        %v8077 = vadd.f32 %v7337, %v8076
        %v8078 = vpop.f32.mrf.mxu0
        %v8079 = vadd.f32 %v7342, %v8078
        %v8080 = vpop.f32.mrf.mxu0
        %v8081 = vadd.f32 %v7342, %v8080
        %8082 = vmatprep.mubr.bf16.mxu0 %v7537
        %8083 = vmatmul.mubr.bf16.gmra.mxu0 %v7536
        %v8084 = vpop.f32.mrf.mxu0
        %v8085 = vadd.f32 %v7347, %v8084
        %v8086 = vpop.f32.mrf.mxu0
        %v8087 = vadd.f32 %v7347, %v8086
        %v8088 = vpop.f32.mrf.mxu0
        %v8089 = vadd.f32 %v7352, %v8088
        %v8090 = vpop.f32.mrf.mxu0
        %v8091 = vadd.f32 %v7352, %v8090
        %8092 = vmatprep.mubr.bf16.mxu0 %v7539
        %8093 = vmatmul.mubr.bf16.gmra.mxu0 %v7538
        %v8094 = vpop.f32.mrf.mxu0
        %v8095 = vadd.f32 %v7357, %v8094
        %v8096 = vpop.f32.mrf.mxu0
        %v8097 = vadd.f32 %v7357, %v8096
        %v8098 = vpop.f32.mrf.mxu0
        %v8099 = vadd.f32 %v7362, %v8098
        %v8100 = vpop.f32.mrf.mxu0
        %v8101 = vadd.f32 %v7362, %v8100
        %8102 = vmatprep.mubr.bf16.mxu0 %v7541
        %8103 = vmatmul.mubr.bf16.gmra.mxu0 %v7540
        %v8104 = vpop.f32.mrf.mxu0
        %v8105 = vadd.f32 %v7367, %v8104
        %v8106 = vpop.f32.mrf.mxu0
        %v8107 = vadd.f32 %v7367, %v8106
        %v8108 = vpop.f32.mrf.mxu0
        %v8109 = vadd.f32 %v7372, %v8108
        %v8110 = vpop.f32.mrf.mxu0
        %v8111 = vadd.f32 %v7372, %v8110
        %8112 = vmatprep.mubr.bf16.mxu0 %v7543
        %8113 = vmatmul.mubr.bf16.gmra.mxu0 %v7542
        %v8114 = vpop.f32.mrf.mxu0
        %v8115 = vadd.f32 %v7377, %v8114
        %v8116 = vpop.f32.mrf.mxu0
        %v8117 = vadd.f32 %v7377, %v8116
        %v8118 = vpop.f32.mrf.mxu0
        %v8119 = vadd.f32 %v7382, %v8118
        %v8120 = vpop.f32.mrf.mxu0
        %v8121 = vadd.f32 %v7382, %v8120
        %8122 = vmatprep.mubr.bf16.mxu0 %v7545
        %8123 = vmatmul.mubr.bf16.gmra.mxu0 %v7544
        %v8124 = vpop.f32.mrf.mxu0
        %v8125 = vadd.f32 %v7387, %v8124
        %v8126 = vpop.f32.mrf.mxu0
        %v8127 = vadd.f32 %v7387, %v8126
        %v8128 = vpop.f32.mrf.mxu0
        %v8129 = vadd.f32 %v7392, %v8128
        %v8130 = vpop.f32.mrf.mxu0
        %v8131 = vadd.f32 %v7392, %v8130
        %8132 = vmatprep.mubr.bf16.mxu0 %v7547
        %8133 = vmatmul.mubr.bf16.gmra.mxu0 %v7546
        %v8134 = vpop.f32.mrf.mxu0
        %v8135 = vadd.f32 %v7397, %v8134
        %v8136 = vpop.f32.mrf.mxu0
        %v8137 = vadd.f32 %v7397, %v8136
        %v8138 = vpop.f32.mrf.mxu0
        %v8139 = vadd.f32 %v7402, %v8138
        %v8140 = vpop.f32.mrf.mxu0
        %v8141 = vadd.f32 %v7402, %v8140
        %8142 = vmatprep.mubr.bf16.mxu0 %v7549
        %8143 = vmatmul.mubr.bf16.gmra.mxu0 %v7548
        %v8144 = vpop.f32.mrf.mxu0
        %v8145 = vadd.f32 %v7407, %v8144
        %v8146 = vpop.f32.mrf.mxu0
        %v8147 = vadd.f32 %v7407, %v8146
        %v8148 = vpop.f32.mrf.mxu0
        %v8149 = vadd.f32 %v7412, %v8148
        %v8150 = vpop.f32.mrf.mxu0
        %v8151 = vadd.f32 %v7412, %v8150
        %8152 = vmatprep.mubr.bf16.mxu0 %v7551
        %8153 = vmatmul.mubr.bf16.gmra.mxu0 %v7550
        %v8154 = vpop.f32.mrf.mxu0
        %v8155 = vadd.f32 %v7417, %v8154
        %v8156 = vpop.f32.mrf.mxu0
        %v8157 = vadd.f32 %v7417, %v8156
        %v8158 = vpop.f32.mrf.mxu0
        %v8159 = vadd.f32 %v7422, %v8158
        %v8160 = vpop.f32.mrf.mxu0
        %v8161 = vadd.f32 %v7422, %v8160
        %8162 = vdwg.mxu0
        %8163 = vmatprep.subr.bf16.mxu0 %v7135
        %8164 = vmatpush1.bf16.msra.mxu0 %v7134
        %8165 = vmatprep.subr.bf16.mxu0 %v7127
        %8166 = vmatpush1.bf16.msra.mxu0 %v7126
        %8167 = vmatprep.subr.bf16.mxu0 %v7119
        %8168 = vmatpush1.bf16.msra.mxu0 %v7118
        %8169 = vmatprep.subr.bf16.mxu0 %v7111
        %8170 = vmatpush1.bf16.msra.mxu0 %v7110
        %8171 = vmatprep.subr.bf16.mxu0 %v7103
        %8172 = vmatpush1.bf16.msra.mxu0 %v7102
        %8173 = vmatprep.subr.bf16.mxu0 %v7095
        %8174 = vmatpush1.bf16.msra.mxu0 %v7094
        %8175 = vmatprep.subr.bf16.mxu0 %v7087
        %8176 = vmatpush1.bf16.msra.mxu0 %v7086
        %8177 = vmatprep.subr.bf16.mxu0 %v7079
        %8178 = vmatpush1.bf16.msra.mxu0 %v7078
        %8179 = vmatprep.subr.bf16.mxu0 %v7199
        %8180 = vmatpush2.bf16.msra.mxu0 %v7198
        %8181 = vmatprep.subr.bf16.mxu0 %v7191
        %8182 = vmatpush2.bf16.msra.mxu0 %v7190
        %8183 = vmatprep.subr.bf16.mxu0 %v7183
        %8184 = vmatpush2.bf16.msra.mxu0 %v7182
        %8185 = vmatprep.subr.bf16.mxu0 %v7175
        %8186 = vmatpush2.bf16.msra.mxu0 %v7174
        %8187 = vmatprep.subr.bf16.mxu0 %v7167
        %8188 = vmatpush2.bf16.msra.mxu0 %v7166
        %8189 = vmatprep.subr.bf16.mxu0 %v7159
        %8190 = vmatpush2.bf16.msra.mxu0 %v7158
        %8191 = vmatprep.subr.bf16.mxu0 %v7151
        %8192 = vmatpush2.bf16.msra.mxu0 %v7150
        %8193 = vmatprep.subr.bf16.mxu0 %v7143
        %8194 = vmatpush2.bf16.msra.mxu0 %v7142
        %8195 = vmatprep.mubr.bf16.mxu0 %v7521
        %8196 = vmatmul.mubr.bf16.gmra.mxu0 %v7520
        %v8197 = vpop.f32.mrf.mxu0
        %v8198 = vadd.f32 %v7267, %v8197
        %v8199 = vpop.f32.mrf.mxu0
        %v8200 = vadd.f32 %v7267, %v8199
        %v8201 = vpop.f32.mrf.mxu0
        %v8202 = vadd.f32 %v7272, %v8201
        %v8203 = vpop.f32.mrf.mxu0
        %v8204 = vadd.f32 %v7272, %v8203
        %8205 = vmatprep.mubr.bf16.mxu0 %v7523
        %8206 = vmatmul.mubr.bf16.gmra.mxu0 %v7522
        %v8207 = vpop.f32.mrf.mxu0
        %v8208 = vadd.f32 %v7277, %v8207
        %v8209 = vpop.f32.mrf.mxu0
        %v8210 = vadd.f32 %v7277, %v8209
        %v8211 = vpop.f32.mrf.mxu0
        %v8212 = vadd.f32 %v7282, %v8211
        %v8213 = vpop.f32.mrf.mxu0
        %v8214 = vadd.f32 %v7282, %v8213
        %8215 = vmatprep.mubr.bf16.mxu0 %v7525
        %8216 = vmatmul.mubr.bf16.gmra.mxu0 %v7524
        %v8217 = vpop.f32.mrf.mxu0
        %v8218 = vadd.f32 %v7287, %v8217
        %v8219 = vpop.f32.mrf.mxu0
        %v8220 = vadd.f32 %v7287, %v8219
        %v8221 = vpop.f32.mrf.mxu0
        %v8222 = vadd.f32 %v7292, %v8221
        %v8223 = vpop.f32.mrf.mxu0
        %v8224 = vadd.f32 %v7292, %v8223
        %8225 = vmatprep.mubr.bf16.mxu0 %v7527
        %8226 = vmatmul.mubr.bf16.gmra.mxu0 %v7526
        %v8227 = vpop.f32.mrf.mxu0
        %v8228 = vadd.f32 %v7297, %v8227
        %v8229 = vpop.f32.mrf.mxu0
        %v8230 = vadd.f32 %v7297, %v8229
        %v8231 = vpop.f32.mrf.mxu0
        %v8232 = vadd.f32 %v7302, %v8231
        %v8233 = vpop.f32.mrf.mxu0
        %v8234 = vadd.f32 %v7302, %v8233
        %8235 = vmatprep.mubr.bf16.mxu0 %v7529
        %8236 = vmatmul.mubr.bf16.gmra.mxu0 %v7528
        %v8237 = vpop.f32.mrf.mxu0
        %v8238 = vadd.f32 %v7307, %v8237
        %v8239 = vpop.f32.mrf.mxu0
        %v8240 = vadd.f32 %v7307, %v8239
        %v8241 = vpop.f32.mrf.mxu0
        %v8242 = vadd.f32 %v7312, %v8241
        %v8243 = vpop.f32.mrf.mxu0
        %v8244 = vadd.f32 %v7312, %v8243
        %8245 = vmatprep.mubr.bf16.mxu0 %v7531
        %8246 = vmatmul.mubr.bf16.gmra.mxu0 %v7530
        %v8247 = vpop.f32.mrf.mxu0
        %v8248 = vadd.f32 %v7317, %v8247
        %v8249 = vpop.f32.mrf.mxu0
        %v8250 = vadd.f32 %v7317, %v8249
        %v8251 = vpop.f32.mrf.mxu0
        %v8252 = vadd.f32 %v7322, %v8251
        %v8253 = vpop.f32.mrf.mxu0
        %v8254 = vadd.f32 %v7322, %v8253
        %8255 = vmatprep.mubr.bf16.mxu0 %v7533
        %8256 = vmatmul.mubr.bf16.gmra.mxu0 %v7532
        %v8257 = vpop.f32.mrf.mxu0
        %v8258 = vadd.f32 %v7327, %v8257
        %v8259 = vpop.f32.mrf.mxu0
        %v8260 = vadd.f32 %v7327, %v8259
        %v8261 = vpop.f32.mrf.mxu0
        %v8262 = vadd.f32 %v7332, %v8261
        %v8263 = vpop.f32.mrf.mxu0
        %v8264 = vadd.f32 %v7332, %v8263
        %8265 = vmatprep.mubr.bf16.mxu0 %v7535
        %8266 = vmatmul.mubr.bf16.gmra.mxu0 %v7534
        %v8267 = vpop.f32.mrf.mxu0
        %v8268 = vadd.f32 %v7337, %v8267
        %v8269 = vpop.f32.mrf.mxu0
        %v8270 = vadd.f32 %v7337, %v8269
        %v8271 = vpop.f32.mrf.mxu0
        %v8272 = vadd.f32 %v7342, %v8271
        %v8273 = vpop.f32.mrf.mxu0
        %v8274 = vadd.f32 %v7342, %v8273
        %8275 = vmatprep.mubr.bf16.mxu0 %v7537
        %8276 = vmatmul.mubr.bf16.gmra.mxu0 %v7536
        %v8277 = vpop.f32.mrf.mxu0
        %v8278 = vadd.f32 %v7347, %v8277
        %v8279 = vpop.f32.mrf.mxu0
        %v8280 = vadd.f32 %v7347, %v8279
        %v8281 = vpop.f32.mrf.mxu0
        %v8282 = vadd.f32 %v7352, %v8281
        %v8283 = vpop.f32.mrf.mxu0
        %v8284 = vadd.f32 %v7352, %v8283
        %8285 = vmatprep.mubr.bf16.mxu0 %v7539
        %8286 = vmatmul.mubr.bf16.gmra.mxu0 %v7538
        %v8287 = vpop.f32.mrf.mxu0
        %v8288 = vadd.f32 %v7357, %v8287
        %v8289 = vpop.f32.mrf.mxu0
        %v8290 = vadd.f32 %v7357, %v8289
        %v8291 = vpop.f32.mrf.mxu0
        %v8292 = vadd.f32 %v7362, %v8291
        %v8293 = vpop.f32.mrf.mxu0
        %v8294 = vadd.f32 %v7362, %v8293
        %8295 = vmatprep.mubr.bf16.mxu0 %v7541
        %8296 = vmatmul.mubr.bf16.gmra.mxu0 %v7540
        %v8297 = vpop.f32.mrf.mxu0
        %v8298 = vadd.f32 %v7367, %v8297
        %v8299 = vpop.f32.mrf.mxu0
        %v8300 = vadd.f32 %v7367, %v8299
        %v8301 = vpop.f32.mrf.mxu0
        %v8302 = vadd.f32 %v7372, %v8301
        %v8303 = vpop.f32.mrf.mxu0
        %v8304 = vadd.f32 %v7372, %v8303
        %8305 = vmatprep.mubr.bf16.mxu0 %v7543
        %8306 = vmatmul.mubr.bf16.gmra.mxu0 %v7542
        %v8307 = vpop.f32.mrf.mxu0
        %v8308 = vadd.f32 %v7377, %v8307
        %v8309 = vpop.f32.mrf.mxu0
        %v8310 = vadd.f32 %v7377, %v8309
        %v8311 = vpop.f32.mrf.mxu0
        %v8312 = vadd.f32 %v7382, %v8311
        %v8313 = vpop.f32.mrf.mxu0
        %v8314 = vadd.f32 %v7382, %v8313
        %8315 = vmatprep.mubr.bf16.mxu0 %v7545
        %8316 = vmatmul.mubr.bf16.gmra.mxu0 %v7544
        %v8317 = vpop.f32.mrf.mxu0
        %v8318 = vadd.f32 %v7387, %v8317
        %v8319 = vpop.f32.mrf.mxu0
        %v8320 = vadd.f32 %v7387, %v8319
        %v8321 = vpop.f32.mrf.mxu0
        %v8322 = vadd.f32 %v7392, %v8321
        %v8323 = vpop.f32.mrf.mxu0
        %v8324 = vadd.f32 %v7392, %v8323
        %8325 = vmatprep.mubr.bf16.mxu0 %v7547
        %8326 = vmatmul.mubr.bf16.gmra.mxu0 %v7546
        %v8327 = vpop.f32.mrf.mxu0
        %v8328 = vadd.f32 %v7397, %v8327
        %v8329 = vpop.f32.mrf.mxu0
        %v8330 = vadd.f32 %v7397, %v8329
        %v8331 = vpop.f32.mrf.mxu0
        %v8332 = vadd.f32 %v7402, %v8331
        %v8333 = vpop.f32.mrf.mxu0
        %v8334 = vadd.f32 %v7402, %v8333
        %8335 = vmatprep.mubr.bf16.mxu0 %v7549
        %8336 = vmatmul.mubr.bf16.gmra.mxu0 %v7548
        %v8337 = vpop.f32.mrf.mxu0
        %v8338 = vadd.f32 %v7407, %v8337
        %v8339 = vpop.f32.mrf.mxu0
        %v8340 = vadd.f32 %v7407, %v8339
        %v8341 = vpop.f32.mrf.mxu0
        %v8342 = vadd.f32 %v7412, %v8341
        %v8343 = vpop.f32.mrf.mxu0
        %v8344 = vadd.f32 %v7412, %v8343
        %8345 = vmatprep.mubr.bf16.mxu0 %v7551
        %8346 = vmatmul.mubr.bf16.gmra.mxu0 %v7550
        %v8347 = vpop.f32.mrf.mxu0
        %v8348 = vadd.f32 %v7417, %v8347
        %v8349 = vpop.f32.mrf.mxu0
        %v8350 = vadd.f32 %v7417, %v8349
        %v8351 = vpop.f32.mrf.mxu0
        %v8352 = vadd.f32 %v7422, %v8351
        %v8353 = vpop.f32.mrf.mxu0
        %v8354 = vadd.f32 %v7422, %v8353
        %8355 = vdwg.mxu0
        %v8356 = vmax.f32 %v7619, 0.0
        %v8357 = vmax.f32 %v7621, 0.0
        %v8358 = vmax.f32 %v7812, 0.0
        %v8359 = vmax.f32 %v7814, 0.0
        %v8360 = vmax.f32 %v8005, 0.0
        %v8361 = vmax.f32 %v8007, 0.0
        %v8362 = vmax.f32 %v8198, 0.0
        %v8363 = vmax.f32 %v8200, 0.0
        %v8364 = vmax.f32 %v7623, 0.0
        %v8365 = vmax.f32 %v7625, 0.0
        %v8366 = vmax.f32 %v7816, 0.0
        %v8367 = vmax.f32 %v7818, 0.0
        %v8368 = vmax.f32 %v8009, 0.0
        %v8369 = vmax.f32 %v8011, 0.0
        %v8370 = vmax.f32 %v8202, 0.0
        %v8371 = vmax.f32 %v8204, 0.0
        %v8372 = vmax.f32 %v7629, 0.0
        %v8373 = vmax.f32 %v7631, 0.0
        %v8374 = vmax.f32 %v7822, 0.0
        %v8375 = vmax.f32 %v7824, 0.0
        %v8376 = vmax.f32 %v8015, 0.0
        %v8377 = vmax.f32 %v8017, 0.0
        %v8378 = vmax.f32 %v8208, 0.0
        %v8379 = vmax.f32 %v8210, 0.0
        %v8380 = vmax.f32 %v7633, 0.0
        %v8381 = vmax.f32 %v7635, 0.0
        %v8382 = vmax.f32 %v7826, 0.0
        %v8383 = vmax.f32 %v7828, 0.0
        %v8384 = vmax.f32 %v8019, 0.0
        %v8385 = vmax.f32 %v8021, 0.0
        %v8386 = vmax.f32 %v8212, 0.0
        %v8387 = vmax.f32 %v8214, 0.0
        %v8388 = vmax.f32 %v7639, 0.0
        %v8389 = vmax.f32 %v7641, 0.0
        %v8390 = vmax.f32 %v7832, 0.0
        %v8391 = vmax.f32 %v7834, 0.0
        %v8392 = vmax.f32 %v8025, 0.0
        %v8393 = vmax.f32 %v8027, 0.0
        %v8394 = vmax.f32 %v8218, 0.0
        %v8395 = vmax.f32 %v8220, 0.0
        %v8396 = vmax.f32 %v7643, 0.0
        %v8397 = vmax.f32 %v7645, 0.0
        %v8398 = vmax.f32 %v7836, 0.0
        %v8399 = vmax.f32 %v7838, 0.0
        %v8400 = vmax.f32 %v8029, 0.0
        %v8401 = vmax.f32 %v8031, 0.0
        %v8402 = vmax.f32 %v8222, 0.0
        %v8403 = vmax.f32 %v8224, 0.0
        %v8404 = vmax.f32 %v7649, 0.0
        %v8405 = vmax.f32 %v7651, 0.0
        %v8406 = vmax.f32 %v7842, 0.0
        %v8407 = vmax.f32 %v7844, 0.0
        %v8408 = vmax.f32 %v8035, 0.0
        %v8409 = vmax.f32 %v8037, 0.0
        %v8410 = vmax.f32 %v8228, 0.0
        %v8411 = vmax.f32 %v8230, 0.0
        %v8412 = vmax.f32 %v7653, 0.0
        %v8413 = vmax.f32 %v7655, 0.0
        %v8414 = vmax.f32 %v7846, 0.0
        %v8415 = vmax.f32 %v7848, 0.0
        %v8416 = vmax.f32 %v8039, 0.0
        %v8417 = vmax.f32 %v8041, 0.0
        %v8418 = vmax.f32 %v8232, 0.0
        %v8419 = vmax.f32 %v8234, 0.0
        %v8420 = vmax.f32 %v7659, 0.0
        %v8421 = vmax.f32 %v7661, 0.0
        %v8422 = vmax.f32 %v7852, 0.0
        %v8423 = vmax.f32 %v7854, 0.0
        %v8424 = vmax.f32 %v8045, 0.0
        %v8425 = vmax.f32 %v8047, 0.0
        %v8426 = vmax.f32 %v8238, 0.0
        %v8427 = vmax.f32 %v8240, 0.0
        %v8428 = vmax.f32 %v7663, 0.0
        %v8429 = vmax.f32 %v7665, 0.0
        %v8430 = vmax.f32 %v7856, 0.0
        %v8431 = vmax.f32 %v7858, 0.0
        %v8432 = vmax.f32 %v8049, 0.0
        %v8433 = vmax.f32 %v8051, 0.0
        %v8434 = vmax.f32 %v8242, 0.0
        %v8435 = vmax.f32 %v8244, 0.0
        %v8436 = vmax.f32 %v7669, 0.0
        %v8437 = vmax.f32 %v7671, 0.0
        %v8438 = vmax.f32 %v7862, 0.0
        %v8439 = vmax.f32 %v7864, 0.0
        %v8440 = vmax.f32 %v8055, 0.0
        %v8441 = vmax.f32 %v8057, 0.0
        %v8442 = vmax.f32 %v8248, 0.0
        %v8443 = vmax.f32 %v8250, 0.0
        %v8444 = vmax.f32 %v7673, 0.0
        %v8445 = vmax.f32 %v7675, 0.0
        %v8446 = vmax.f32 %v7866, 0.0
        %v8447 = vmax.f32 %v7868, 0.0
        %v8448 = vmax.f32 %v8059, 0.0
        %v8449 = vmax.f32 %v8061, 0.0
        %v8450 = vmax.f32 %v8252, 0.0
        %v8451 = vmax.f32 %v8254, 0.0
        %v8452 = vmax.f32 %v7679, 0.0
        %v8453 = vmax.f32 %v7681, 0.0
        %v8454 = vmax.f32 %v7872, 0.0
        %v8455 = vmax.f32 %v7874, 0.0
        %v8456 = vmax.f32 %v8065, 0.0
        %v8457 = vmax.f32 %v8067, 0.0
        %v8458 = vmax.f32 %v8258, 0.0
        %v8459 = vmax.f32 %v8260, 0.0
        %v8460 = vmax.f32 %v7683, 0.0
        %v8461 = vmax.f32 %v7685, 0.0
        %v8462 = vmax.f32 %v7876, 0.0
        %v8463 = vmax.f32 %v7878, 0.0
        %v8464 = vmax.f32 %v8069, 0.0
        %v8465 = vmax.f32 %v8071, 0.0
        %v8466 = vmax.f32 %v8262, 0.0
        %v8467 = vmax.f32 %v8264, 0.0
        %v8468 = vmax.f32 %v7689, 0.0
        %v8469 = vmax.f32 %v7691, 0.0
        %v8470 = vmax.f32 %v7882, 0.0
        %v8471 = vmax.f32 %v7884, 0.0
        %v8472 = vmax.f32 %v8075, 0.0
        %v8473 = vmax.f32 %v8077, 0.0
        %v8474 = vmax.f32 %v8268, 0.0
        %v8475 = vmax.f32 %v8270, 0.0
        %v8476 = vmax.f32 %v7693, 0.0
        %v8477 = vmax.f32 %v7695, 0.0
        %v8478 = vmax.f32 %v7886, 0.0
        %v8479 = vmax.f32 %v7888, 0.0
        %v8480 = vmax.f32 %v8079, 0.0
        %v8481 = vmax.f32 %v8081, 0.0
        %v8482 = vmax.f32 %v8272, 0.0
        %v8483 = vmax.f32 %v8274, 0.0
        %v8484 = vmax.f32 %v7699, 0.0
        %v8485 = vmax.f32 %v7701, 0.0
        %v8486 = vmax.f32 %v7892, 0.0
        %v8487 = vmax.f32 %v7894, 0.0
        %v8488 = vmax.f32 %v8085, 0.0
        %v8489 = vmax.f32 %v8087, 0.0
        %v8490 = vmax.f32 %v8278, 0.0
        %v8491 = vmax.f32 %v8280, 0.0
        %v8492 = vmax.f32 %v7703, 0.0
        %v8493 = vmax.f32 %v7705, 0.0
        %v8494 = vmax.f32 %v7896, 0.0
        %v8495 = vmax.f32 %v7898, 0.0
        %v8496 = vmax.f32 %v8089, 0.0
        %v8497 = vmax.f32 %v8091, 0.0
        %v8498 = vmax.f32 %v8282, 0.0
        %v8499 = vmax.f32 %v8284, 0.0
        %v8500 = vmax.f32 %v7709, 0.0
        %v8501 = vmax.f32 %v7711, 0.0
        %v8502 = vmax.f32 %v7902, 0.0
        %v8503 = vmax.f32 %v7904, 0.0
        %v8504 = vmax.f32 %v8095, 0.0
        %v8505 = vmax.f32 %v8097, 0.0
        %v8506 = vmax.f32 %v8288, 0.0
        %v8507 = vmax.f32 %v8290, 0.0
        %v8508 = vmax.f32 %v7713, 0.0
        %v8509 = vmax.f32 %v7715, 0.0
        %v8510 = vmax.f32 %v7906, 0.0
        %v8511 = vmax.f32 %v7908, 0.0
        %v8512 = vmax.f32 %v8099, 0.0
        %v8513 = vmax.f32 %v8101, 0.0
        %v8514 = vmax.f32 %v8292, 0.0
        %v8515 = vmax.f32 %v8294, 0.0
        %v8516 = vmax.f32 %v7719, 0.0
        %v8517 = vmax.f32 %v7721, 0.0
        %v8518 = vmax.f32 %v7912, 0.0
        %v8519 = vmax.f32 %v7914, 0.0
        %v8520 = vmax.f32 %v8105, 0.0
        %v8521 = vmax.f32 %v8107, 0.0
        %v8522 = vmax.f32 %v8298, 0.0
        %v8523 = vmax.f32 %v8300, 0.0
        %v8524 = vmax.f32 %v7723, 0.0
        %v8525 = vmax.f32 %v7725, 0.0
        %v8526 = vmax.f32 %v7916, 0.0
        %v8527 = vmax.f32 %v7918, 0.0
        %v8528 = vmax.f32 %v8109, 0.0
        %v8529 = vmax.f32 %v8111, 0.0
        %v8530 = vmax.f32 %v8302, 0.0
        %v8531 = vmax.f32 %v8304, 0.0
        %v8532 = vmax.f32 %v7729, 0.0
        %v8533 = vmax.f32 %v7731, 0.0
        %v8534 = vmax.f32 %v7922, 0.0
        %v8535 = vmax.f32 %v7924, 0.0
        %v8536 = vmax.f32 %v8115, 0.0
        %v8537 = vmax.f32 %v8117, 0.0
        %v8538 = vmax.f32 %v8308, 0.0
        %v8539 = vmax.f32 %v8310, 0.0
        %v8540 = vmax.f32 %v7733, 0.0
        %v8541 = vmax.f32 %v7735, 0.0
        %v8542 = vmax.f32 %v7926, 0.0
        %v8543 = vmax.f32 %v7928, 0.0
        %v8544 = vmax.f32 %v8119, 0.0
        %v8545 = vmax.f32 %v8121, 0.0
        %v8546 = vmax.f32 %v8312, 0.0
        %v8547 = vmax.f32 %v8314, 0.0
        %v8548 = vmax.f32 %v7739, 0.0
        %v8549 = vmax.f32 %v7741, 0.0
        %v8550 = vmax.f32 %v7932, 0.0
        %v8551 = vmax.f32 %v7934, 0.0
        %v8552 = vmax.f32 %v8125, 0.0
        %v8553 = vmax.f32 %v8127, 0.0
        %v8554 = vmax.f32 %v8318, 0.0
        %v8555 = vmax.f32 %v8320, 0.0
        %v8556 = vmax.f32 %v7743, 0.0
        %v8557 = vmax.f32 %v7745, 0.0
        %v8558 = vmax.f32 %v7936, 0.0
        %v8559 = vmax.f32 %v7938, 0.0
        %v8560 = vmax.f32 %v8129, 0.0
        %v8561 = vmax.f32 %v8131, 0.0
        %v8562 = vmax.f32 %v8322, 0.0
        %v8563 = vmax.f32 %v8324, 0.0
        %v8564 = vmax.f32 %v7749, 0.0
        %v8565 = vmax.f32 %v7751, 0.0
        %v8566 = vmax.f32 %v7942, 0.0
        %v8567 = vmax.f32 %v7944, 0.0
        %v8568 = vmax.f32 %v8135, 0.0
        %v8569 = vmax.f32 %v8137, 0.0
        %v8570 = vmax.f32 %v8328, 0.0
        %v8571 = vmax.f32 %v8330, 0.0
        %v8572 = vmax.f32 %v7753, 0.0
        %v8573 = vmax.f32 %v7755, 0.0
        %v8574 = vmax.f32 %v7946, 0.0
        %v8575 = vmax.f32 %v7948, 0.0
        %v8576 = vmax.f32 %v8139, 0.0
        %v8577 = vmax.f32 %v8141, 0.0
        %v8578 = vmax.f32 %v8332, 0.0
        %v8579 = vmax.f32 %v8334, 0.0
        %v8580 = vmax.f32 %v7759, 0.0
        %v8581 = vmax.f32 %v7761, 0.0
        %v8582 = vmax.f32 %v7952, 0.0
        %v8583 = vmax.f32 %v7954, 0.0
        %v8584 = vmax.f32 %v8145, 0.0
        %v8585 = vmax.f32 %v8147, 0.0
        %v8586 = vmax.f32 %v8338, 0.0
        %v8587 = vmax.f32 %v8340, 0.0
        %v8588 = vmax.f32 %v7763, 0.0
        %v8589 = vmax.f32 %v7765, 0.0
        %v8590 = vmax.f32 %v7956, 0.0
        %v8591 = vmax.f32 %v7958, 0.0
        %v8592 = vmax.f32 %v8149, 0.0
        %v8593 = vmax.f32 %v8151, 0.0
        %v8594 = vmax.f32 %v8342, 0.0
        %v8595 = vmax.f32 %v8344, 0.0
        %v8596 = vmax.f32 %v7769, 0.0
        %v8597 = vmax.f32 %v7771, 0.0
        %v8598 = vmax.f32 %v7962, 0.0
        %v8599 = vmax.f32 %v7964, 0.0
        %v8600 = vmax.f32 %v8155, 0.0
        %v8601 = vmax.f32 %v8157, 0.0
        %v8602 = vmax.f32 %v8348, 0.0
        %v8603 = vmax.f32 %v8350, 0.0
        %v8604 = vmax.f32 %v7773, 0.0
        %v8605 = vmax.f32 %v7775, 0.0
        %v8606 = vmax.f32 %v7966, 0.0
        %v8607 = vmax.f32 %v7968, 0.0
        %v8608 = vmax.f32 %v8159, 0.0
        %v8609 = vmax.f32 %v8161, 0.0
        %v8610 = vmax.f32 %v8352, 0.0
        %v8611 = vmax.f32 %v8354, 0.0
        %v8612 = vpack.c.bf16 %v8364, %v8356
        %v8613 = vpack.c.bf16 %v8365, %v8357
        %v8614 = vpack.c.bf16 %v8366, %v8358
        %v8615 = vpack.c.bf16 %v8367, %v8359
        %v8616 = vpack.c.bf16 %v8368, %v8360
        %v8617 = vpack.c.bf16 %v8369, %v8361
        %v8618 = vpack.c.bf16 %v8370, %v8362
        %v8619 = vpack.c.bf16 %v8371, %v8363
        %v8620 = vpack.c.bf16 %v8380, %v8372
        %v8621 = vpack.c.bf16 %v8381, %v8373
        %v8622 = vpack.c.bf16 %v8382, %v8374
        %v8623 = vpack.c.bf16 %v8383, %v8375
        %v8624 = vpack.c.bf16 %v8384, %v8376
        %v8625 = vpack.c.bf16 %v8385, %v8377
        %v8626 = vpack.c.bf16 %v8386, %v8378
        %v8627 = vpack.c.bf16 %v8387, %v8379
        %v8628 = vpack.c.bf16 %v8396, %v8388
        %v8629 = vpack.c.bf16 %v8397, %v8389
        %v8630 = vpack.c.bf16 %v8398, %v8390
        %v8631 = vpack.c.bf16 %v8399, %v8391
        %v8632 = vpack.c.bf16 %v8400, %v8392
        %v8633 = vpack.c.bf16 %v8401, %v8393
        %v8634 = vpack.c.bf16 %v8402, %v8394
        %v8635 = vpack.c.bf16 %v8403, %v8395
        %v8636 = vpack.c.bf16 %v8412, %v8404
        %v8637 = vpack.c.bf16 %v8413, %v8405
        %v8638 = vpack.c.bf16 %v8414, %v8406
        %v8639 = vpack.c.bf16 %v8415, %v8407
        %v8640 = vpack.c.bf16 %v8416, %v8408
        %v8641 = vpack.c.bf16 %v8417, %v8409
        %v8642 = vpack.c.bf16 %v8418, %v8410
        %v8643 = vpack.c.bf16 %v8419, %v8411
        %v8644 = vpack.c.bf16 %v8428, %v8420
        %v8645 = vpack.c.bf16 %v8429, %v8421
        %v8646 = vpack.c.bf16 %v8430, %v8422
        %v8647 = vpack.c.bf16 %v8431, %v8423
        %v8648 = vpack.c.bf16 %v8432, %v8424
        %v8649 = vpack.c.bf16 %v8433, %v8425
        %v8650 = vpack.c.bf16 %v8434, %v8426
        %v8651 = vpack.c.bf16 %v8435, %v8427
        %v8652 = vpack.c.bf16 %v8444, %v8436
        %v8653 = vpack.c.bf16 %v8445, %v8437
        %v8654 = vpack.c.bf16 %v8446, %v8438
        %v8655 = vpack.c.bf16 %v8447, %v8439
        %v8656 = vpack.c.bf16 %v8448, %v8440
        %v8657 = vpack.c.bf16 %v8449, %v8441
        %v8658 = vpack.c.bf16 %v8450, %v8442
        %v8659 = vpack.c.bf16 %v8451, %v8443
        %v8660 = vpack.c.bf16 %v8460, %v8452
        %v8661 = vpack.c.bf16 %v8461, %v8453
        %v8662 = vpack.c.bf16 %v8462, %v8454
        %v8663 = vpack.c.bf16 %v8463, %v8455
        %v8664 = vpack.c.bf16 %v8464, %v8456
        %v8665 = vpack.c.bf16 %v8465, %v8457
        %v8666 = vpack.c.bf16 %v8466, %v8458
        %v8667 = vpack.c.bf16 %v8467, %v8459
        %v8668 = vpack.c.bf16 %v8476, %v8468
        %v8669 = vpack.c.bf16 %v8477, %v8469
        %v8670 = vpack.c.bf16 %v8478, %v8470
        %v8671 = vpack.c.bf16 %v8479, %v8471
        %v8672 = vpack.c.bf16 %v8480, %v8472
        %v8673 = vpack.c.bf16 %v8481, %v8473
        %v8674 = vpack.c.bf16 %v8482, %v8474
        %v8675 = vpack.c.bf16 %v8483, %v8475
        %v8676 = vpack.c.bf16 %v8492, %v8484
        %v8677 = vpack.c.bf16 %v8493, %v8485
        %v8678 = vpack.c.bf16 %v8494, %v8486
        %v8679 = vpack.c.bf16 %v8495, %v8487
        %v8680 = vpack.c.bf16 %v8496, %v8488
        %v8681 = vpack.c.bf16 %v8497, %v8489
        %v8682 = vpack.c.bf16 %v8498, %v8490
        %v8683 = vpack.c.bf16 %v8499, %v8491
        %v8684 = vpack.c.bf16 %v8508, %v8500
        %v8685 = vpack.c.bf16 %v8509, %v8501
        %v8686 = vpack.c.bf16 %v8510, %v8502
        %v8687 = vpack.c.bf16 %v8511, %v8503
        %v8688 = vpack.c.bf16 %v8512, %v8504
        %v8689 = vpack.c.bf16 %v8513, %v8505
        %v8690 = vpack.c.bf16 %v8514, %v8506
        %v8691 = vpack.c.bf16 %v8515, %v8507
        %v8692 = vpack.c.bf16 %v8524, %v8516
        %v8693 = vpack.c.bf16 %v8525, %v8517
        %v8694 = vpack.c.bf16 %v8526, %v8518
        %v8695 = vpack.c.bf16 %v8527, %v8519
        %v8696 = vpack.c.bf16 %v8528, %v8520
        %v8697 = vpack.c.bf16 %v8529, %v8521
        %v8698 = vpack.c.bf16 %v8530, %v8522
        %v8699 = vpack.c.bf16 %v8531, %v8523
        %v8700 = vpack.c.bf16 %v8540, %v8532
        %v8701 = vpack.c.bf16 %v8541, %v8533
        %v8702 = vpack.c.bf16 %v8542, %v8534
        %v8703 = vpack.c.bf16 %v8543, %v8535
        %v8704 = vpack.c.bf16 %v8544, %v8536
        %v8705 = vpack.c.bf16 %v8545, %v8537
        %v8706 = vpack.c.bf16 %v8546, %v8538
        %v8707 = vpack.c.bf16 %v8547, %v8539
        %v8708 = vpack.c.bf16 %v8556, %v8548
        %v8709 = vpack.c.bf16 %v8557, %v8549
        %v8710 = vpack.c.bf16 %v8558, %v8550
        %v8711 = vpack.c.bf16 %v8559, %v8551
        %v8712 = vpack.c.bf16 %v8560, %v8552
        %v8713 = vpack.c.bf16 %v8561, %v8553
        %v8714 = vpack.c.bf16 %v8562, %v8554
        %v8715 = vpack.c.bf16 %v8563, %v8555
        %v8716 = vpack.c.bf16 %v8572, %v8564
        %v8717 = vpack.c.bf16 %v8573, %v8565
        %v8718 = vpack.c.bf16 %v8574, %v8566
        %v8719 = vpack.c.bf16 %v8575, %v8567
        %v8720 = vpack.c.bf16 %v8576, %v8568
        %v8721 = vpack.c.bf16 %v8577, %v8569
        %v8722 = vpack.c.bf16 %v8578, %v8570
        %v8723 = vpack.c.bf16 %v8579, %v8571
        %v8724 = vpack.c.bf16 %v8588, %v8580
        %v8725 = vpack.c.bf16 %v8589, %v8581
        %v8726 = vpack.c.bf16 %v8590, %v8582
        %v8727 = vpack.c.bf16 %v8591, %v8583
        %v8728 = vpack.c.bf16 %v8592, %v8584
        %v8729 = vpack.c.bf16 %v8593, %v8585
        %v8730 = vpack.c.bf16 %v8594, %v8586
        %v8731 = vpack.c.bf16 %v8595, %v8587
        %v8732 = vpack.c.bf16 %v8604, %v8596
        %v8733 = vpack.c.bf16 %v8605, %v8597
        %v8734 = vpack.c.bf16 %v8606, %v8598
        %v8735 = vpack.c.bf16 %v8607, %v8599
        %v8736 = vpack.c.bf16 %v8608, %v8600
        %v8737 = vpack.c.bf16 %v8609, %v8601
        %v8738 = vpack.c.bf16 %v8610, %v8602
        %v8739 = vpack.c.bf16 %v8611, %v8603
        %v8740 = vld [vmem:[%s10] sm:$0xf]
        %v8741 = vld [vmem:[%s11] sm:$0x7]
        %8743 = vset.pattern.permute.xlu0 0
        %8744 = vperm.xlu0 %8743, %v8741
        %v8745 = vpop.permute.xlu0 %8744
        %v8749 = vunpack.c.l.s4 1983009808
        %v8750 = vunpack.c.0.s8 %v8749
        %v8751 = vlaneseq
        %v8752 = vshrl.u32 %v8751, 7
        %v8753 = vsub.s32 %v8750, %v8752
        %v8754 = vrot.slane %v8740, %v8753
        %v8755 = vcombine.high %v8754, %v8754
        %8758 = vmatprep.subr.bf16.mxu0 %v8669
        %8759 = vmatpush1.bf16.msra.mxu0 %v8668
        %8760 = vmatprep.subr.bf16.mxu0 %v8661
        %8761 = vmatpush1.bf16.msra.mxu0 %v8660
        %8762 = vmatprep.subr.bf16.mxu0 %v8653
        %8763 = vmatpush1.bf16.msra.mxu0 %v8652
        %8764 = vmatprep.subr.bf16.mxu0 %v8645
        %8765 = vmatpush1.bf16.msra.mxu0 %v8644
        %8766 = vmatprep.subr.bf16.mxu0 %v8637
        %8767 = vmatpush1.bf16.msra.mxu0 %v8636
        %8768 = vmatprep.subr.bf16.mxu0 %v8629
        %8769 = vmatpush1.bf16.msra.mxu0 %v8628
        %8770 = vmatprep.subr.bf16.mxu0 %v8621
        %8771 = vmatpush1.bf16.msra.mxu0 %v8620
        %8772 = vmatprep.subr.bf16.mxu0 %v8613
        %8773 = vmatpush1.bf16.msra.mxu0 %v8612
        %8774 = vmatprep.subr.bf16.mxu0 %v8733
        %8775 = vmatpush2.bf16.msra.mxu0 %v8732
        %8776 = vmatprep.subr.bf16.mxu0 %v8725
        %8777 = vmatpush2.bf16.msra.mxu0 %v8724
        %8778 = vmatprep.subr.bf16.mxu0 %v8717
        %8779 = vmatpush2.bf16.msra.mxu0 %v8716
        %8780 = vmatprep.subr.bf16.mxu0 %v8709
        %8781 = vmatpush2.bf16.msra.mxu0 %v8708
        %8782 = vmatprep.subr.bf16.mxu0 %v8701
        %8783 = vmatpush2.bf16.msra.mxu0 %v8700
        %8784 = vmatprep.subr.bf16.mxu0 %v8693
        %8785 = vmatpush2.bf16.msra.mxu0 %v8692
        %8786 = vmatprep.subr.bf16.mxu0 %v8685
        %8787 = vmatpush2.bf16.msra.mxu0 %v8684
        %8788 = vmatprep.subr.bf16.mxu0 %v8677
        %8789 = vmatpush2.bf16.msra.mxu0 %v8676
        %8790 = vmatprep.mubr.bf16.mxu0 %v8755
        %8791 = vmatmul.mubr.bf16.gmra.mxu0 %v8754
        %v8792 = vpop.f32.mrf.mxu0
        %v8793 = vadd.f32 %v8745, %v8792
        %v8794 = vpop.f32.mrf.mxu0
        %v8795 = vadd.f32 %v8745, %v8794
        %v8796 = vpop.f32.mrf.mxu0
        %v8797 = vpop.f32.mrf.mxu0
        %8798 = vdwg.mxu0
        %8799 = vmatprep.subr.bf16.mxu0 %v8671
        %8800 = vmatpush1.bf16.msra.mxu0 %v8670
        %8801 = vmatprep.subr.bf16.mxu0 %v8663
        %8802 = vmatpush1.bf16.msra.mxu0 %v8662
        %8803 = vmatprep.subr.bf16.mxu0 %v8655
        %8804 = vmatpush1.bf16.msra.mxu0 %v8654
        %8805 = vmatprep.subr.bf16.mxu0 %v8647
        %8806 = vmatpush1.bf16.msra.mxu0 %v8646
        %8807 = vmatprep.subr.bf16.mxu0 %v8639
        %8808 = vmatpush1.bf16.msra.mxu0 %v8638
        %8809 = vmatprep.subr.bf16.mxu0 %v8631
        %8810 = vmatpush1.bf16.msra.mxu0 %v8630
        %8811 = vmatprep.subr.bf16.mxu0 %v8623
        %8812 = vmatpush1.bf16.msra.mxu0 %v8622
        %8813 = vmatprep.subr.bf16.mxu0 %v8615
        %8814 = vmatpush1.bf16.msra.mxu0 %v8614
        %8815 = vmatprep.subr.bf16.mxu0 %v8735
        %8816 = vmatpush2.bf16.msra.mxu0 %v8734
        %8817 = vmatprep.subr.bf16.mxu0 %v8727
        %8818 = vmatpush2.bf16.msra.mxu0 %v8726
        %8819 = vmatprep.subr.bf16.mxu0 %v8719
        %8820 = vmatpush2.bf16.msra.mxu0 %v8718
        %8821 = vmatprep.subr.bf16.mxu0 %v8711
        %8822 = vmatpush2.bf16.msra.mxu0 %v8710
        %8823 = vmatprep.subr.bf16.mxu0 %v8703
        %8824 = vmatpush2.bf16.msra.mxu0 %v8702
        %8825 = vmatprep.subr.bf16.mxu0 %v8695
        %8826 = vmatpush2.bf16.msra.mxu0 %v8694
        %8827 = vmatprep.subr.bf16.mxu0 %v8687
        %8828 = vmatpush2.bf16.msra.mxu0 %v8686
        %8829 = vmatprep.subr.bf16.mxu0 %v8679
        %8830 = vmatpush2.bf16.msra.mxu0 %v8678
        %8831 = vmatprep.mubr.bf16.mxu0 %v8755
        %8832 = vmatmul.mubr.bf16.gmra.mxu0 %v8754
        %v8833 = vpop.f32.mrf.mxu0
        %v8834 = vadd.f32 %v8745, %v8833
        %v8835 = vpop.f32.mrf.mxu0
        %v8836 = vadd.f32 %v8745, %v8835
        %v8837 = vpop.f32.mrf.mxu0
        %v8838 = vpop.f32.mrf.mxu0
        %8839 = vdwg.mxu0
        %8840 = vmatprep.subr.bf16.mxu0 %v8673
        %8841 = vmatpush1.bf16.msra.mxu0 %v8672
        %8842 = vmatprep.subr.bf16.mxu0 %v8665
        %8843 = vmatpush1.bf16.msra.mxu0 %v8664
        %8844 = vmatprep.subr.bf16.mxu0 %v8657
        %8845 = vmatpush1.bf16.msra.mxu0 %v8656
        %8846 = vmatprep.subr.bf16.mxu0 %v8649
        %8847 = vmatpush1.bf16.msra.mxu0 %v8648
        %8848 = vmatprep.subr.bf16.mxu0 %v8641
        %8849 = vmatpush1.bf16.msra.mxu0 %v8640
        %8850 = vmatprep.subr.bf16.mxu0 %v8633
        %8851 = vmatpush1.bf16.msra.mxu0 %v8632
        %8852 = vmatprep.subr.bf16.mxu0 %v8625
        %8853 = vmatpush1.bf16.msra.mxu0 %v8624
        %8854 = vmatprep.subr.bf16.mxu0 %v8617
        %8855 = vmatpush1.bf16.msra.mxu0 %v8616
        %8856 = vmatprep.subr.bf16.mxu0 %v8737
        %8857 = vmatpush2.bf16.msra.mxu0 %v8736
        %8858 = vmatprep.subr.bf16.mxu0 %v8729
        %8859 = vmatpush2.bf16.msra.mxu0 %v8728
        %8860 = vmatprep.subr.bf16.mxu0 %v8721
        %8861 = vmatpush2.bf16.msra.mxu0 %v8720
        %8862 = vmatprep.subr.bf16.mxu0 %v8713
        %8863 = vmatpush2.bf16.msra.mxu0 %v8712
        %8864 = vmatprep.subr.bf16.mxu0 %v8705
        %8865 = vmatpush2.bf16.msra.mxu0 %v8704
        %8866 = vmatprep.subr.bf16.mxu0 %v8697
        %8867 = vmatpush2.bf16.msra.mxu0 %v8696
        %8868 = vmatprep.subr.bf16.mxu0 %v8689
        %8869 = vmatpush2.bf16.msra.mxu0 %v8688
        %8870 = vmatprep.subr.bf16.mxu0 %v8681
        %8871 = vmatpush2.bf16.msra.mxu0 %v8680
        %8872 = vmatprep.mubr.bf16.mxu0 %v8755
        %8873 = vmatmul.mubr.bf16.gmra.mxu0 %v8754
        %v8874 = vpop.f32.mrf.mxu0
        %v8875 = vadd.f32 %v8745, %v8874
        %v8876 = vpop.f32.mrf.mxu0
        %v8877 = vadd.f32 %v8745, %v8876
        %v8878 = vpop.f32.mrf.mxu0
        %v8879 = vpop.f32.mrf.mxu0
        %8880 = vdwg.mxu0
        %8881 = vmatprep.subr.bf16.mxu0 %v8675
        %8882 = vmatpush1.bf16.msra.mxu0 %v8674
        %8883 = vmatprep.subr.bf16.mxu0 %v8667
        %8884 = vmatpush1.bf16.msra.mxu0 %v8666
        %8885 = vmatprep.subr.bf16.mxu0 %v8659
        %8886 = vmatpush1.bf16.msra.mxu0 %v8658
        %8887 = vmatprep.subr.bf16.mxu0 %v8651
        %8888 = vmatpush1.bf16.msra.mxu0 %v8650
        %8889 = vmatprep.subr.bf16.mxu0 %v8643
        %8890 = vmatpush1.bf16.msra.mxu0 %v8642
        %8891 = vmatprep.subr.bf16.mxu0 %v8635
        %8892 = vmatpush1.bf16.msra.mxu0 %v8634
        %8893 = vmatprep.subr.bf16.mxu0 %v8627
        %8894 = vmatpush1.bf16.msra.mxu0 %v8626
        %8895 = vmatprep.subr.bf16.mxu0 %v8619
        %8896 = vmatpush1.bf16.msra.mxu0 %v8618
        %8897 = vmatprep.subr.bf16.mxu0 %v8739
        %8898 = vmatpush2.bf16.msra.mxu0 %v8738
        %8899 = vmatprep.subr.bf16.mxu0 %v8731
        %8900 = vmatpush2.bf16.msra.mxu0 %v8730
        %8901 = vmatprep.subr.bf16.mxu0 %v8723
        %8902 = vmatpush2.bf16.msra.mxu0 %v8722
        %8903 = vmatprep.subr.bf16.mxu0 %v8715
        %8904 = vmatpush2.bf16.msra.mxu0 %v8714
        %8905 = vmatprep.subr.bf16.mxu0 %v8707
        %8906 = vmatpush2.bf16.msra.mxu0 %v8706
        %8907 = vmatprep.subr.bf16.mxu0 %v8699
        %8908 = vmatpush2.bf16.msra.mxu0 %v8698
        %8909 = vmatprep.subr.bf16.mxu0 %v8691
        %8910 = vmatpush2.bf16.msra.mxu0 %v8690
        %8911 = vmatprep.subr.bf16.mxu0 %v8683
        %8912 = vmatpush2.bf16.msra.mxu0 %v8682
        %8913 = vmatprep.mubr.bf16.mxu0 %v8755
        %8914 = vmatmul.mubr.bf16.gmra.mxu0 %v8754
        %v8915 = vpop.f32.mrf.mxu0
        %v8916 = vadd.f32 %v8745, %v8915
        %v8917 = vpop.f32.mrf.mxu0
        %v8918 = vadd.f32 %v8745, %v8917
        %v8919 = vpop.f32.mrf.mxu0
        %v8920 = vpop.f32.mrf.mxu0
        %8921 = vdwg.mxu0
        %v8922 = vxor.u32 %v8793, 2147483648
        %v8923 = vxor.u32 %v8795, 2147483648
        %v8924 = vxor.u32 %v8834, 2147483648
        %v8925 = vxor.u32 %v8836, 2147483648
        %v8926 = vxor.u32 %v8875, 2147483648
        %v8927 = vxor.u32 %v8877, 2147483648
        %v8928 = vxor.u32 %v8916, 2147483648
        %v8929 = vxor.u32 %v8918, 2147483648
        %v8930 = vmul.f32 %v8922, 1.442695
        %v8931 = vpow.pop %v8930
        %v8932 = vmul.f32 %v8923, 1.442695
        %v8933 = vpow.pop %v8932
        %v8934 = vmul.f32 %v8924, 1.442695
        %v8935 = vpow.pop %v8934
        %v8936 = vmul.f32 %v8925, 1.442695
        %v8937 = vpow.pop %v8936
        %v8938 = vmul.f32 %v8926, 1.442695
        %v8939 = vpow.pop %v8938
        %v8940 = vmul.f32 %v8927, 1.442695
        %v8941 = vpow.pop %v8940
        %v8942 = vmul.f32 %v8928, 1.442695
        %v8943 = vpow.pop %v8942
        %v8944 = vmul.f32 %v8929, 1.442695
        %v8945 = vpow.pop %v8944
        %v8946 = vadd.f32 %v8931, 1.0
        %v8947 = vadd.f32 %v8933, 1.0
        %v8948 = vadd.f32 %v8935, 1.0
        %v8949 = vadd.f32 %v8937, 1.0
        %v8950 = vadd.f32 %v8939, 1.0
        %v8951 = vadd.f32 %v8941, 1.0
        %v8952 = vadd.f32 %v8943, 1.0
        %v8953 = vadd.f32 %v8945, 1.0
        %v8954 = vrcp.pop %v8946
        %v8955 = vmul.f32 1.0, %v8954
        %v8956 = vrcp.pop %v8947
        %v8957 = vmul.f32 1.0, %v8956
        %v8958 = vrcp.pop %v8948
        %v8959 = vmul.f32 1.0, %v8958
        %v8960 = vrcp.pop %v8949
        %v8961 = vmul.f32 1.0, %v8960
        %v8962 = vrcp.pop %v8950
        %v8963 = vmul.f32 1.0, %v8962
        %v8964 = vrcp.pop %v8951
        %v8965 = vmul.f32 1.0, %v8964
        %v8966 = vrcp.pop %v8952
        %v8967 = vmul.f32 1.0, %v8966
        %v8968 = vrcp.pop %v8953
        %v8969 = vmul.f32 1.0, %v8968
        %v8978 = vcombine.low %v8955, %v8957
        %v8979 = vcombine.low %v8959, %v8961
        %v8980 = vcombine.low %v8963, %v8965
        %v8981 = vcombine.low %v8967, %v8969
        %8986 = vst [vmem:[%s442] sm:$0x77] %v8978
        %8987 = vst [vmem:[%s442 + $0x8] sm:$0x77] %v8979
        %8988 = vst [vmem:[%s442 + $0x10] sm:$0x77] %v8980
        %8989 = vst [vmem:[%s442 + $0x18] sm:$0x77] %v8981
        %s8990 = smul.u32 8, %s30
        %p8991 = scmp.lt.s32.totalorder %s29, 1
        %s8992 = scalar_select %p8991, %s29, 1
        %p8993 = scmp.lt.s32.totalorder %s8990, 7
        %s8994 = scalar_select %p8993, %s8990, 7
        %s8995 = smul.addr %s8992, 8
        %s8996 = sadd.s32 %s8994, %s8995
        %s8997 = smul.addr %s8996, 4
        %s8998 = scalar_lea.vmem %s12, %s8997
        // Predicated region
        $region77: #{tpu_custom_call.1} parent=67 // pred_check
          %p8999 = pneg %p309
        $region78: #{tpu_custom_call.1} parent=67 // pred_check_branch
          %9001 = sbr.rel (%p8999) target = $region80
        $region79: #{tpu_custom_call.1} parent=67 // pred_region
          %s9002 = smul.u32 8, %s30
        $region80: #{tpu_custom_call.1} parent=67 // pred_fallthru
          _
      $region68: #{tpu_custom_call.1} parent=5 // pred_fallthru
        _
      %p9003 = scmp.le.s32.totalorder 2, %s20
      // Predicated region
      $region81: #{tpu_custom_call.1} parent=5 // pred_check
        %p9004 = pneg %p9003
      $region82: #{tpu_custom_call.1} parent=5 // pred_check_branch
        %9006 = sbr.rel (%p9004) target = $region84
      $region83: #{tpu_custom_call.1} parent=5 // pred_region
        %s9007 = ssub.s32 %s20, 2
        // Predicated region
        $region85: #{tpu_custom_call.1} parent=83 // pred_check
          %p9008 = pneg %p315
        $region86: #{tpu_custom_call.1} parent=83 // pred_check_branch
          %9010 = sbr.rel (%p9008) target = $region88
        $region87: #{tpu_custom_call.1} parent=83 // pred_region
          %s9011 = smul.u32 8, %s32
          %p9012 = scmp.lt.s32.totalorder %s31, 1
          %s9013 = scalar_select %p9012, %s31, 1
          %p9014 = scmp.lt.s32.totalorder %s9011, 7
          %s9015 = scalar_select %p9014, %s9011, 7
          %s9016 = smul.addr %s9013, 8
          %s9017 = sadd.s32 %s9015, %s9016
          %s9018 = smul.addr %s9017, 4
          %s9019 = scalar_lea.vmem %s12, %s9018
        $region88: #{tpu_custom_call.1} parent=83 // pred_fallthru
          _
      $region84: #{tpu_custom_call.1} parent=5 // pred_fallthru
        _
    $region6: #{tpu_custom_call.1} parent=1 // loop_footer
      %s24 = sadd.s32 1, %s20
    $region7: #{tpu_custom_call.1} parent=1 // loop_footer_branch
      %19 = sbr.rel target = $region3
    $region8: #{tpu_custom_call.1} parent=1 // loop_exit
      _
    %9020 = vsyncpa [#allocation3], 1
    %s9021 = scalar_lea.sflag [#allocation3], 1
    %9022 = vsyncpa %s9021, 1
    %9023 = vsyncpa [#allocation5], 1

</llo_original>
